<compile_context>
chip_gen: v6e
topology: v6e:2x2x1
jax: 0.10.0
libtpu: 0.0.40
codegen_flags: <defaults>
</compile_context>

<pallas_src>
import jax
import jax.numpy as jnp
from jax.experimental import pallas as pl
from jax.experimental.pallas import tpu as pltpu


def _round_up(x, m):
    return (x + m - 1) // m * m


_VMEM_LIMIT = 32 * 1024 * 1024  # bytes; safe across v5e/v6e/v7x


# ----------------------------------------------------------------------------
# Kernel 1: out = relu(A @ B + bias)
#   A (tm, K) bf16 streamed over M, B (K, N) bf16 resident, bias (1, N) f32,
#   f32 accumulate, bf16 store.
# ----------------------------------------------------------------------------
def _matmul_bias_relu_kernel(a_ref, b_ref, bias_ref, o_ref):
    acc = jnp.dot(a_ref[...], b_ref[...], preferred_element_type=jnp.float32)
    o_ref[...] = jnp.maximum(acc + bias_ref[...], 0.0).astype(o_ref.dtype)


def matmul_bias_relu(a, b, bias, out_dtype=jnp.bfloat16, tm=512):
    """relu(a @ b + bias); a: (M, K) bf16, b: (K, N) bf16, bias: (1, N) f32."""
    M, K = a.shape
    Kb, N = b.shape
    assert K == Kb
    tm = min(tm, _round_up(M, 32))          # 32-aligned sublane tile
    grid = (pl.cdiv(M, tm),)
    return pl.pallas_call(
        _matmul_bias_relu_kernel,
        out_shape=jax.ShapeDtypeStruct((M, N), out_dtype),
        grid=grid,
        in_specs=[
            pl.BlockSpec((tm, K), lambda i: (i, 0)),   # A streamed over M
            pl.BlockSpec((K, N), lambda i: (0, 0)),    # weights resident
            pl.BlockSpec((1, N), lambda i: (0, 0)),    # bias resident
        ],
        out_specs=pl.BlockSpec((tm, N), lambda i: (i, 0)),
        compiler_params=pltpu.CompilerParams(
            dimension_semantics=("parallel",),
            vmem_limit_bytes=_VMEM_LIMIT,
        ),
    )(a, b, bias)


# ----------------------------------------------------------------------------
# Kernel 2: fused fc + critic head, N-tiled.
#   h_j = relu(A @ W[:, j] + b_j)                 stored bf16, lane-dense (tn=256)
#   v   = sum_j sum(h_j * cw_j, -1) + cb          f32, accumulated in VMEM scratch
# N axis is a reduction for v => "arbitrary"; M axis is "parallel".
# ----------------------------------------------------------------------------
def _fc_critic_kernel(a_ref, w_ref, b_ref, cw_ref, cb_ref, h_ref, v_ref, vacc_ref):
    j = pl.program_id(1)

    @pl.when(j == 0)
    def _():
        vacc_ref[...] = jnp.zeros_like(vacc_ref)

    h = jnp.dot(a_ref[...], w_ref[...], preferred_element_type=jnp.float32)
    h = jnp.maximum(h + b_ref[...], 0.0)
    h_ref[...] = h.astype(h_ref.dtype)
    vacc_ref[...] += jnp.sum(h * cw_ref[...], axis=1, keepdims=True)

    @pl.when(j == pl.num_programs(1) - 1)
    def _():
        v_ref[...] = vacc_ref[...] + cb_ref[...]


def fc_critic(a, w, b, cw, cb, tm=512, tn=256):
    M, K = a.shape
    _, N = w.shape
    tm = min(tm, _round_up(M, 32))
    if N % tn != 0:
        tn = N
    grid = (pl.cdiv(M, tm), N // tn)
    h, v = pl.pallas_call(
        _fc_critic_kernel,
        out_shape=(
            jax.ShapeDtypeStruct((M, N), jnp.bfloat16),   # hidden features
            jax.ShapeDtypeStruct((M, 1), jnp.float32),    # critic value
        ),
        grid=grid,
        in_specs=[
            pl.BlockSpec((tm, K), lambda i, j: (i, 0)),   # features (resident over j)
            pl.BlockSpec((K, tn), lambda i, j: (0, j)),   # fc weight N-block
            pl.BlockSpec((1, tn), lambda i, j: (0, j)),   # fc bias N-block
            pl.BlockSpec((1, tn), lambda i, j: (0, j)),   # critic weight N-block
            pl.BlockSpec((1, 1), lambda i, j: (0, 0)),    # critic bias
        ],
        out_specs=(
            pl.BlockSpec((tm, tn), lambda i, j: (i, j)),
            pl.BlockSpec((tm, 1), lambda i, j: (i, 0)),   # resident across j
        ),
        scratch_shapes=[pltpu.VMEM((tm, 1), jnp.float32)],
        compiler_params=pltpu.CompilerParams(
            dimension_semantics=("parallel", "arbitrary"),
            vmem_limit_bytes=_VMEM_LIMIT,
        ),
    )(a, w, b, cw, cb)
    return h, v


# ----------------------------------------------------------------------------
# Conv2d (valid padding, square stride) via bf16 im2col + fused Pallas matmul.
# Column order of the patch matrix is (c, kh, kw), matching PyTorch's
# (out_c, in_c, kh, kw) weight flattening.
# ----------------------------------------------------------------------------
def _im2col(x_nhwc, kh, kw, stride):
    n, h, w, c = x_nhwc.shape
    oh = (h - kh) // stride + 1
    ow = (w - kw) // stride + 1
    cols = []
    for i in range(kh):
        for j in range(kw):
            cols.append(x_nhwc[:, i:i + stride * oh:stride, j:j + stride * ow:stride, :])
    p = jnp.stack(cols, axis=-1)              # (n, oh, ow, c, kh*kw)
    p = p.reshape(n, oh, ow, c * kh * kw)     # K ordered (c, kh, kw)
    return p.reshape(n * oh * ow, c * kh * kw), oh, ow


def conv2d_relu(x_nhwc, w_mat, bias, kh, kw, stride, tm=512, out_dtype=jnp.bfloat16):
    """x_nhwc bf16, w_mat (c*kh*kw, oc) bf16 (scale pre-folded), bias (1, oc) f32."""
    patches, oh, ow = _im2col(x_nhwc, kh, kw, stride)
    y = matmul_bias_relu(patches, w_mat, bias, out_dtype=out_dtype, tm=tm)
    n = x_nhwc.shape[0]
    oc = w_mat.shape[1]
    return y.reshape(n, oh, ow, oc)


# ----------------------------------------------------------------------------
# Deterministic parameter init (orthogonal weights, zero biases), like the
# module's init_(..., nn.init.orthogonal_, constant 0, gain).
# ----------------------------------------------------------------------------
def _orthogonal(key, shape, gain=1.0):
    rows = shape[0]
    cols = 1
    for s in shape[1:]:
        cols *= s
    flat = (max(rows, cols), min(rows, cols))
    a = jax.random.normal(key, flat, jnp.float32)
    q, r = jnp.linalg.qr(a)
    q = q * jnp.where(jnp.diag(r) >= 0, 1.0, -1.0)
    if rows < cols:
        q = q.T
    return (gain * q[:rows, :cols]).reshape(shape)


def init_cnn_base_params(key, num_inputs, hidden_size=512):
    ks = jax.random.split(key, 5)
    g = float(jnp.sqrt(2.0))  # relu gain
    return {
        "conv1_w": _orthogonal(ks[0], (32, num_inputs, 8, 8), g),
        "conv1_b": jnp.zeros((32,), jnp.float32),
        "conv2_w": _orthogonal(ks[1], (64, 32, 4, 4), g),
        "conv2_b": jnp.zeros((64,), jnp.float32),
        "conv3_w": _orthogonal(ks[2], (32, 64, 3, 3), g),
        "conv3_b": jnp.zeros((32,), jnp.float32),
        "fc_w": _orthogonal(ks[3], (hidden_size, 32 * 7 * 7), g),
        "fc_b": jnp.zeros((hidden_size,), jnp.float32),
        "critic_w": _orthogonal(ks[4], (1, hidden_size), 1.0),
        "critic_b": jnp.zeros((1,), jnp.float32),
    }


def prepare_params(params, hidden_size=512):
    """One-time preprocessing of PyTorch-layout params into kernel-ready form:
    bf16 weight matrices, 1/255 folded into conv1, fc columns permuted to
    consume the NHWC flatten order (removes the runtime NCHW transpose)."""
    def conv_mat(w_oihw, scale=1.0):
        oc = w_oihw.shape[0]
        return (w_oihw.reshape(oc, -1).T * scale).astype(jnp.bfloat16)   # (K, oc)

    # fc weight: (hidden, 32*7*7) in (c, h, w) order -> (h, w, c) order, then (K, hidden)
    fc_w = params["fc_w"].reshape(hidden_size, 32, 7, 7)
    fc_w = jnp.transpose(fc_w, (0, 2, 3, 1)).reshape(hidden_size, 7 * 7 * 32)

    return {
        "conv1_w": conv_mat(params["conv1_w"], 1.0 / 255.0),   # /255 folded in
        "conv1_b": params["conv1_b"].reshape(1, -1).astype(jnp.float32),
        "conv2_w": conv_mat(params["conv2_w"]),
        "conv2_b": params["conv2_b"].reshape(1, -1).astype(jnp.float32),
        "conv3_w": conv_mat(params["conv3_w"]),
        "conv3_b": params["conv3_b"].reshape(1, -1).astype(jnp.float32),
        "fc_w": fc_w.T.astype(jnp.bfloat16),                    # (1568, hidden), NHWC order
        "fc_b": params["fc_b"].reshape(1, -1).astype(jnp.float32),
        "critic_w": params["critic_w"].reshape(1, -1).astype(jnp.float32),  # (1, hidden)
        "critic_b": params["critic_b"].reshape(1, 1).astype(jnp.float32),
    }


# ----------------------------------------------------------------------------
# CNNBase.forward equivalent (recurrent=False, est_value=False, fixed_beta=1).
# Returns (critic_linear(x), x, rnn_hxs, ones_like(masks) * fixed_beta).
# ----------------------------------------------------------------------------
def cnn_base_forward(prepared, inputs_nchw, rnn_hxs, masks, fixed_beta=1.0):
    # Cast to bf16 BEFORE the layout transpose (half the transpose traffic).
    x = jnp.transpose(inputs_nchw.astype(jnp.bfloat16), (0, 2, 3, 1))   # NCHW -> NHWC
    x = conv2d_relu(x, prepared["conv1_w"], prepared["conv1_b"], 8, 8, 4, tm=1024)
    x = conv2d_relu(x, prepared["conv2_w"], prepared["conv2_b"], 4, 4, 2, tm=512)
    x = conv2d_relu(x, prepared["conv3_w"], prepared["conv3_b"], 3, 3, 1, tm=512)
    n = x.shape[0]
    x_flat = x.reshape(n, -1)               # NHWC flatten; fc_w columns already permuted
    hidden, value = fc_critic(x_flat, prepared["fc_w"], prepared["fc_b"],
                              prepared["critic_w"], prepared["critic_b"],
                              tm=512, tn=256)
    beta_value = jnp.ones_like(masks) * fixed_beta                      # est_value=False path
    return value, hidden, rnn_hxs, beta_value


if __name__ == "__main__":
    key = jax.random.PRNGKey(0)
    pkey, ikey = jax.random.split(key)

    num_inputs = 4          # e.g. stacked Atari frames
    batch = 2
    params = init_cnn_base_params(pkey, num_inputs, hidden_size=512)
    prepared = prepare_params(params, hidden_size=512)

    # The module hard-codes Linear(32*7*7, hidden) => 84x84 spatial input.
    inputs = jax.random.uniform(ikey, (batch, num_inputs, 84, 84),
                                jnp.float32, minval=0.0, maxval=255.0)
    rnn_hxs = jnp.zeros((batch, 1), jnp.float32)   # recurrent_hidden_state_size == 1
    masks = jnp.ones((batch, 1), jnp.float32)

    forward = jax.jit(cnn_base_forward)
    value, feat, rnn_hxs_out, beta = forward(prepared, inputs, rnn_hxs, masks)
    jax.block_until_ready((value, feat, rnn_hxs_out, beta))

    assert value.shape == (batch, 1)
    assert feat.shape == (batch, 512)
    assert rnn_hxs_out.shape == (batch, 1)
    assert beta.shape == (batch, 1)
    assert bool(jnp.all(jnp.isfinite(value)))
    assert bool(jnp.all(jnp.isfinite(feat.astype(jnp.float32))))
    print("KERNEL_OK")
</pallas_src>

<mosaic_0001>
module attributes {stable_mosaic.version = 11 : i64} {
  func.func @_matmul_bias_relu_kernel(%arg0: i32, %arg1: memref<800x256xbf16, #tpu.memory_space<vmem>>, %arg2: memref<256x32xbf16, #tpu.memory_space<vmem>>, %arg3: memref<1x32xf32, #tpu.memory_space<vmem>>, %arg4: memref<800x32xbf16, #tpu.memory_space<vmem>>) attributes {dimension_semantics = [#tpu.dimension_semantics<parallel>], iteration_bounds = array<i64: 1>, scalar_prefetch = 0 : i64, scratch_operands = 0 : i64, tpu.core_type = #tpu.core_type<tc>, window_params = [{transform_indices = @transform_0, window_bounds = array<i64: 800, 256>}, {pipeline_mode = #tpu.pipeline_mode<synchronous>, transform_indices = @transform_1, window_bounds = array<i64: 256, 32>}, {pipeline_mode = #tpu.pipeline_mode<synchronous>, transform_indices = @transform_2, window_bounds = array<i64: 1, 32>}, {transform_indices = @transform_3, window_bounds = array<i64: 800, 32>}]} {
    %c0 = arith.constant 0 : index
    %c0_0 = arith.constant 0 : index
    %0 = vector.load %arg1[%c0, %c0_0] : memref<800x256xbf16, #tpu.memory_space<vmem>>, vector<800x256xbf16>
    %c0_1 = arith.constant 0 : index
    %c0_2 = arith.constant 0 : index
    %1 = vector.load %arg2[%c0_1, %c0_2] : memref<256x32xbf16, #tpu.memory_space<vmem>>, vector<256x32xbf16>
    %cst = arith.constant dense<0.000000e+00> : vector<800x32xf32>
    %2 = tpu.matmul %0, %1, %cst {dimension_numbers = #tpu.dot_dimension_numbers<[1], [0], [0], [1], [0, 0, 1, 1], [], []>} : vector<800x256xbf16>, vector<256x32xbf16>, vector<800x32xf32> -> vector<800x32xf32>
    %c0_3 = arith.constant 0 : index
    %c0_4 = arith.constant 0 : index
    %3 = vector.load %arg3[%c0_3, %c0_4] : memref<1x32xf32, #tpu.memory_space<vmem>>, vector<1x32xf32>
    %4 = vector.broadcast %3 : vector<1x32xf32> to vector<800x32xf32>
    %5 = arith.addf %2, %4 : vector<800x32xf32>
    %cst_5 = arith.constant 0.000000e+00 : f32
    %6 = vector.broadcast %cst_5 : f32 to vector<800x32xf32>
    %7 = arith.maximumf %5, %6 : vector<800x32xf32>
    %8 = arith.truncf %7 : vector<800x32xf32> to vector<800x32xbf16>
    %c0_6 = arith.constant 0 : index
    %c0_7 = arith.constant 0 : index
    %9 = vector.load %arg4[%c0_6, %c0_7] : memref<800x32xbf16, #tpu.memory_space<vmem>>, vector<800x32xbf16>
    tpu.vector_store %arg4[%c0_6, %c0_7], %8 {strides = array<i32>} : memref<800x32xbf16, #tpu.memory_space<vmem>>, vector<800x32xbf16>,
    return
  }
  func.func @transform_0(%arg0: i32) -> (i32, i32) {
    %c0_i32 = arith.constant 0 : i32
    %c0_i32_0 = arith.constant 0 : i32
    return %arg0, %c0_i32 : i32, i32
  }
  func.func @transform_1(%arg0: i32) -> (i32, i32) {
    %c0_i32 = arith.constant 0 : i32
    %c0_i32_0 = arith.constant 0 : i32
    %c0_i32_1 = arith.constant 0 : i32
    return %c0_i32, %c0_i32_0 : i32, i32
  }
  func.func @transform_2(%arg0: i32) -> (i32, i32) {
    %c0_i32 = arith.constant 0 : i32
    %c0_i32_0 = arith.constant 0 : i32
    %c0_i32_1 = arith.constant 0 : i32
    return %c0_i32, %c0_i32_0 : i32, i32
  }
  func.func @transform_3(%arg0: i32) -> (i32, i32) {
    %c0_i32 = arith.constant 0 : i32
    %c0_i32_0 = arith.constant 0 : i32
    return %arg0, %c0_i32 : i32, i32
  }
}

module attributes {stable_mosaic.version = 11 : i64} {
  func.func @_matmul_bias_relu_kernel(%arg0: i32, %arg1: memref<192x512xbf16, #tpu.memory_space<vmem>>, %arg2: memref<512x64xbf16, #tpu.memory_space<vmem>>, %arg3: memref<1x64xf32, #tpu.memory_space<vmem>>, %arg4: memref<192x64xbf16, #tpu.memory_space<vmem>>) attributes {dimension_semantics = [#tpu.dimension_semantics<parallel>], iteration_bounds = array<i64: 1>, scalar_prefetch = 0 : i64, scratch_operands = 0 : i64, tpu.core_type = #tpu.core_type<tc>, window_params = [{transform_indices = @transform_0, window_bounds = array<i64: 192, 512>}, {pipeline_mode = #tpu.pipeline_mode<synchronous>, transform_indices = @transform_1, window_bounds = array<i64: 512, 64>}, {pipeline_mode = #tpu.pipeline_mode<synchronous>, transform_indices = @transform_2, window_bounds = array<i64: 1, 64>}, {transform_indices = @transform_3, window_bounds = array<i64: 192, 64>}]} {
    %c0 = arith.constant 0 : index
    %c0_0 = arith.constant 0 : index
    %0 = vector.load %arg1[%c0, %c0_0] : memref<192x512xbf16, #tpu.memory_space<vmem>>, vector<192x512xbf16>
    %c0_1 = arith.constant 0 : index
    %c0_2 = arith.constant 0 : index
    %1 = vector.load %arg2[%c0_1, %c0_2] : memref<512x64xbf16, #tpu.memory_space<vmem>>, vector<512x64xbf16>
    %cst = arith.constant dense<0.000000e+00> : vector<192x64xf32>
    %2 = tpu.matmul %0, %1, %cst {dimension_numbers = #tpu.dot_dimension_numbers<[1], [0], [0], [1], [0, 0, 1, 1], [], []>} : vector<192x512xbf16>, vector<512x64xbf16>, vector<192x64xf32> -> vector<192x64xf32>
    %c0_3 = arith.constant 0 : index
    %c0_4 = arith.constant 0 : index
    %3 = vector.load %arg3[%c0_3, %c0_4] : memref<1x64xf32, #tpu.memory_space<vmem>>, vector<1x64xf32>
    %4 = vector.broadcast %3 : vector<1x64xf32> to vector<192x64xf32>
    %5 = arith.addf %2, %4 : vector<192x64xf32>
    %cst_5 = arith.constant 0.000000e+00 : f32
    %6 = vector.broadcast %cst_5 : f32 to vector<192x64xf32>
    %7 = arith.maximumf %5, %6 : vector<192x64xf32>
    %8 = arith.truncf %7 : vector<192x64xf32> to vector<192x64xbf16>
    %c0_6 = arith.constant 0 : index
    %c0_7 = arith.constant 0 : index
    %9 = vector.load %arg4[%c0_6, %c0_7] : memref<192x64xbf16, #tpu.memory_space<vmem>>, vector<192x64xbf16>
    tpu.vector_store %arg4[%c0_6, %c0_7], %8 {strides = array<i32>} : memref<192x64xbf16, #tpu.memory_space<vmem>>, vector<192x64xbf16>,
    return
  }
  func.func @transform_0(%arg0: i32) -> (i32, i32) {
    %c0_i32 = arith.constant 0 : i32
    %c0_i32_0 = arith.constant 0 : i32
    return %arg0, %c0_i32 : i32, i32
  }
  func.func @transform_1(%arg0: i32) -> (i32, i32) {
    %c0_i32 = arith.constant 0 : i32
    %c0_i32_0 = arith.constant 0 : i32
    %c0_i32_1 = arith.constant 0 : i32
    return %c0_i32, %c0_i32_0 : i32, i32
  }
  func.func @transform_2(%arg0: i32) -> (i32, i32) {
    %c0_i32 = arith.constant 0 : i32
    %c0_i32_0 = arith.constant 0 : i32
    %c0_i32_1 = arith.constant 0 : i32
    return %c0_i32, %c0_i32_0 : i32, i32
  }
  func.func @transform_3(%arg0: i32) -> (i32, i32) {
    %c0_i32 = arith.constant 0 : i32
    %c0_i32_0 = arith.constant 0 : i32
    return %arg0, %c0_i32 : i32, i32
  }
}

module attributes {stable_mosaic.version = 11 : i64} {
  func.func @_matmul_bias_relu_kernel(%arg0: i32, %arg1: memref<128x576xbf16, #tpu.memory_space<vmem>>, %arg2: memref<576x32xbf16, #tpu.memory_space<vmem>>, %arg3: memref<1x32xf32, #tpu.memory_space<vmem>>, %arg4: memref<128x32xbf16, #tpu.memory_space<vmem>>) attributes {dimension_semantics = [#tpu.dimension_semantics<parallel>], iteration_bounds = array<i64: 1>, scalar_prefetch = 0 : i64, scratch_operands = 0 : i64, tpu.core_type = #tpu.core_type<tc>, window_params = [{transform_indices = @transform_0, window_bounds = array<i64: 128, 576>}, {pipeline_mode = #tpu.pipeline_mode<synchronous>, transform_indices = @transform_1, window_bounds = array<i64: 576, 32>}, {pipeline_mode = #tpu.pipeline_mode<synchronous>, transform_indices = @transform_2, window_bounds = array<i64: 1, 32>}, {transform_indices = @transform_3, window_bounds = array<i64: 128, 32>}]} {
    %c0 = arith.constant 0 : index
    %c0_0 = arith.constant 0 : index
    %0 = vector.load %arg1[%c0, %c0_0] : memref<128x576xbf16, #tpu.memory_space<vmem>>, vector<128x576xbf16>
    %c0_1 = arith.constant 0 : index
    %c0_2 = arith.constant 0 : index
    %1 = vector.load %arg2[%c0_1, %c0_2] : memref<576x32xbf16, #tpu.memory_space<vmem>>, vector<576x32xbf16>
    %cst = arith.constant dense<0.000000e+00> : vector<128x32xf32>
    %2 = tpu.matmul %0, %1, %cst {dimension_numbers = #tpu.dot_dimension_numbers<[1], [0], [0], [1], [0, 0, 1, 1], [], []>} : vector<128x576xbf16>, vector<576x32xbf16>, vector<128x32xf32> -> vector<128x32xf32>
    %c0_3 = arith.constant 0 : index
    %c0_4 = arith.constant 0 : index
    %3 = vector.load %arg3[%c0_3, %c0_4] : memref<1x32xf32, #tpu.memory_space<vmem>>, vector<1x32xf32>
    %4 = vector.broadcast %3 : vector<1x32xf32> to vector<128x32xf32>
    %5 = arith.addf %2, %4 : vector<128x32xf32>
    %cst_5 = arith.constant 0.000000e+00 : f32
    %6 = vector.broadcast %cst_5 : f32 to vector<128x32xf32>
    %7 = arith.maximumf %5, %6 : vector<128x32xf32>
    %8 = arith.truncf %7 : vector<128x32xf32> to vector<128x32xbf16>
    %c0_6 = arith.constant 0 : index
    %c0_7 = arith.constant 0 : index
    %9 = vector.load %arg4[%c0_6, %c0_7] : memref<128x32xbf16, #tpu.memory_space<vmem>>, vector<128x32xbf16>
    tpu.vector_store %arg4[%c0_6, %c0_7], %8 {strides = array<i32>} : memref<128x32xbf16, #tpu.memory_space<vmem>>, vector<128x32xbf16>,
    return
  }
  func.func @transform_0(%arg0: i32) -> (i32, i32) {
    %c0_i32 = arith.constant 0 : i32
    %c0_i32_0 = arith.constant 0 : i32
    return %arg0, %c0_i32 : i32, i32
  }
  func.func @transform_1(%arg0: i32) -> (i32, i32) {
    %c0_i32 = arith.constant 0 : i32
    %c0_i32_0 = arith.constant 0 : i32
    %c0_i32_1 = arith.constant 0 : i32
    return %c0_i32, %c0_i32_0 : i32, i32
  }
  func.func @transform_2(%arg0: i32) -> (i32, i32) {
    %c0_i32 = arith.constant 0 : i32
    %c0_i32_0 = arith.constant 0 : i32
    %c0_i32_1 = arith.constant 0 : i32
    return %c0_i32, %c0_i32_0 : i32, i32
  }
  func.func @transform_3(%arg0: i32) -> (i32, i32) {
    %c0_i32 = arith.constant 0 : i32
    %c0_i32_0 = arith.constant 0 : i32
    return %arg0, %c0_i32 : i32, i32
  }
}

module attributes {stable_mosaic.version = 11 : i64} {
  func.func @_fc_critic_kernel(%arg0: i32, %arg1: i32, %arg2: memref<32x1568xbf16, #tpu.memory_space<vmem>>, %arg3: memref<1568x256xbf16, #tpu.memory_space<vmem>>, %arg4: memref<1x256xf32, #tpu.memory_space<vmem>>, %arg5: memref<1x256xf32, #tpu.memory_space<vmem>>, %arg6: memref<1x1xf32, #tpu.memory_space<vmem>>, %arg7: memref<32x256xbf16, #tpu.memory_space<vmem>>, %arg8: memref<32x1xf32, #tpu.memory_space<vmem>>, %arg9: memref<32x1xf32, #tpu.memory_space<vmem>>) attributes {dimension_semantics = [#tpu.dimension_semantics<parallel>, #tpu.dimension_semantics<arbitrary>], iteration_bounds = array<i64: 1, 2>, scalar_prefetch = 0 : i64, scratch_operands = 1 : i64, tpu.core_type = #tpu.core_type<tc>, window_params = [{transform_indices = @transform_0, window_bounds = array<i64: 32, 1568>}, {transform_indices = @transform_1, window_bounds = array<i64: 1568, 256>}, {transform_indices = @transform_2, window_bounds = array<i64: 1, 256>}, {transform_indices = @transform_3, window_bounds = array<i64: 1, 256>}, {pipeline_mode = #tpu.pipeline_mode<synchronous>, transform_indices = @transform_4, window_bounds = array<i64: 1, 1>}, {transform_indices = @transform_5, window_bounds = array<i64: 32, 256>}, {transform_indices = @transform_6, window_bounds = array<i64: 32, 1>}]} {
    %c0_i32 = arith.constant 0 : i32
    %0 = arith.cmpi eq, %arg1, %c0_i32 : i32
    %1 = arith.extui %0 : i1 to i32
    %c0_i32_0 = arith.constant 0 : i32
    %2 = arith.cmpi ne, %1, %c0_i32_0 : i32
    scf.if %2 {
      %cst_17 = arith.constant 0.000000e+00 : f32
      %24 = vector.broadcast %cst_17 : f32 to vector<32x1xf32>
      %c0_18 = arith.constant 0 : index
      %c0_19 = arith.constant 0 : index
      %25 = vector.load %arg9[%c0_18, %c0_19] : memref<32x1xf32, #tpu.memory_space<vmem>>, vector<32x1xf32>
      tpu.vector_store %arg9[%c0_18, %c0_19], %24 {strides = array<i32>} : memref<32x1xf32, #tpu.memory_space<vmem>>, vector<32x1xf32>,
    } else {
    }
    %c0 = arith.constant 0 : index
    %c0_1 = arith.constant 0 : index
    %3 = vector.load %arg2[%c0, %c0_1] : memref<32x1568xbf16, #tpu.memory_space<vmem>>, vector<32x1568xbf16>
    %c0_2 = arith.constant 0 : index
    %c0_3 = arith.constant 0 : index
    %4 = vector.load %arg3[%c0_2, %c0_3] : memref<1568x256xbf16, #tpu.memory_space<vmem>>, vector<1568x256xbf16>
    %cst = arith.constant dense<0.000000e+00> : vector<32x256xf32>
    %5 = tpu.matmul %3, %4, %cst {dimension_numbers = #tpu.dot_dimension_numbers<[1], [0], [0], [1], [0, 0, 1, 1], [], []>} : vector<32x1568xbf16>, vector<1568x256xbf16>, vector<32x256xf32> -> vector<32x256xf32>
    %c0_4 = arith.constant 0 : index
    %c0_5 = arith.constant 0 : index
    %6 = vector.load %arg4[%c0_4, %c0_5] : memref<1x256xf32, #tpu.memory_space<vmem>>, vector<1x256xf32>
    %7 = vector.broadcast %6 : vector<1x256xf32> to vector<32x256xf32>
    %8 = arith.addf %5, %7 : vector<32x256xf32>
    %cst_6 = arith.constant 0.000000e+00 : f32
    %9 = vector.broadcast %cst_6 : f32 to vector<32x256xf32>
    %10 = arith.maximumf %8, %9 : vector<32x256xf32>
    %11 = arith.truncf %10 : vector<32x256xf32> to vector<32x256xbf16>
    %c0_7 = arith.constant 0 : index
    %c0_8 = arith.constant 0 : index
    %12 = vector.load %arg7[%c0_7, %c0_8] : memref<32x256xbf16, #tpu.memory_space<vmem>>, vector<32x256xbf16>
    tpu.vector_store %arg7[%c0_7, %c0_8], %11 {strides = array<i32>} : memref<32x256xbf16, #tpu.memory_space<vmem>>, vector<32x256xbf16>,
    %c0_9 = arith.constant 0 : index
    %c0_10 = arith.constant 0 : index
    %13 = vector.load %arg9[%c0_9, %c0_10] : memref<32x1xf32, #tpu.memory_space<vmem>>, vector<32x1xf32>
    %c0_11 = arith.constant 0 : index
    %c0_12 = arith.constant 0 : index
    %14 = vector.load %arg5[%c0_11, %c0_12] : memref<1x256xf32, #tpu.memory_space<vmem>>, vector<1x256xf32>
    %15 = vector.broadcast %14 : vector<1x256xf32> to vector<32x256xf32>
    %16 = arith.mulf %10, %15 : vector<32x256xf32>
    %cst_13 = arith.constant dense<0.000000e+00> : vector<32xf32>
    %17 = vector.multi_reduction <add>, %16, %cst_13 [1] : vector<32x256xf32> to vector<32xf32>
    %18 = vector.shape_cast %17 : vector<32xf32> to vector<32x1xf32>
    %19 = arith.addf %13, %18 : vector<32x1xf32>
    %c0_14 = arith.constant 0 : index
    %c0_15 = arith.constant 0 : index
    %20 = vector.load %arg9[%c0_14, %c0_15] : memref<32x1xf32, #tpu.memory_space<vmem>>, vector<32x1xf32>
    tpu.vector_store %arg9[%c0_14, %c0_15], %19 {strides = array<i32>} : memref<32x1xf32, #tpu.memory_space<vmem>>, vector<32x1xf32>,
    %c1_i32 = arith.constant 1 : i32
    %21 = arith.cmpi eq, %arg1, %c1_i32 : i32
    %22 = arith.extui %21 : i1 to i32
    %c0_i32_16 = arith.constant 0 : i32
    %23 = arith.cmpi ne, %22, %c0_i32_16 : i32
    scf.if %23 {
      %c0_17 = arith.constant 0 : index
      %c0_18 = arith.constant 0 : index
      %24 = vector.load %arg9[%c0_17, %c0_18] : memref<32x1xf32, #tpu.memory_space<vmem>>, vector<32x1xf32>
      %c0_19 = arith.constant 0 : index
      %c0_20 = arith.constant 0 : index
      %25 = vector.load %arg6[%c0_19, %c0_20] : memref<1x1xf32, #tpu.memory_space<vmem>>, vector<1x1xf32>
      %26 = vector.broadcast %25 : vector<1x1xf32> to vector<32x1xf32>
      %27 = arith.addf %24, %26 : vector<32x1xf32>
      %c0_21 = arith.constant 0 : index
      %c0_22 = arith.constant 0 : index
      %28 = vector.load %arg8[%c0_21, %c0_22] : memref<32x1xf32, #tpu.memory_space<vmem>>, vector<32x1xf32>
      tpu.vector_store %arg8[%c0_21, %c0_22], %27 {strides = array<i32>} : memref<32x1xf32, #tpu.memory_space<vmem>>, vector<32x1xf32>,
    } else {
    }
    return
  }
  func.func @transform_0(%arg0: i32, %arg1: i32) -> (i32, i32) {
    %c0_i32 = arith.constant 0 : i32
    %c0_i32_0 = arith.constant 0 : i32
    return %arg0, %c0_i32 : i32, i32
  }
  func.func @transform_1(%arg0: i32, %arg1: i32) -> (i32, i32) {
    %c0_i32 = arith.constant 0 : i32
    %c0_i32_0 = arith.constant 0 : i32
    return %c0_i32, %arg1 : i32, i32
  }
  func.func @transform_2(%arg0: i32, %arg1: i32) -> (i32, i32) {
    %c0_i32 = arith.constant 0 : i32
    %c0_i32_0 = arith.constant 0 : i32
    return %c0_i32, %arg1 : i32, i32
  }
  func.func @transform_3(%arg0: i32, %arg1: i32) -> (i32, i32) {
    %c0_i32 = arith.constant 0 : i32
    %c0_i32_0 = arith.constant 0 : i32
    return %c0_i32, %arg1 : i32, i32
  }
  func.func @transform_4(%arg0: i32, %arg1: i32) -> (i32, i32) {
    %c0_i32 = arith.constant 0 : i32
    %c0_i32_0 = arith.constant 0 : i32
    %c0_i32_1 = arith.constant 0 : i32
    return %c0_i32, %c0_i32_0 : i32, i32
  }
  func.func @transform_5(%arg0: i32, %arg1: i32) -> (i32, i32) {
    %c0_i32 = arith.constant 0 : i32
    return %arg0, %arg1 : i32, i32
  }
  func.func @transform_6(%arg0: i32, %arg1: i32) -> (i32, i32) {
    %c0_i32 = arith.constant 0 : i32
    %c0_i32_0 = arith.constant 0 : i32
    return %arg0, %c0_i32 : i32, i32
  }
}

</mosaic_0001>

<llo_original>
// kernel: cnn_base_forward.4
$region0: #{cnn_base_forward.4}
  #allocation0 [shape = 'u32[]', space=smem, size = 0x4, offset = 0x4, fixed_abs, tag = 'smem constant byte address 0x4 - core index']
  #allocation1 [shape = 'u32[144,128]{1,0:T(1,128)}', space=vmem, size = 0x12000, scoped, tag = 'internal scratch']
  %s0 = inlined_call_operand.vmem [shape: bf16[800,256], index: 0, kind: input, shape index: {}]
  %s1 = inlined_call_operand.vmem [shape: bf16[256,32], index: 1, kind: input, shape index: {}]
  %s2 = inlined_call_operand.vmem [shape: f32[1,32], index: 2, kind: input, shape index: {}]
  %s3 = inlined_call_operand.vmem [shape: bf16[800,32], index: 3, kind: output, shape index: {}]
  %s4 = sld [smem:[#allocation0]]
  $region22: #{cnn_base_forward.4} parent=0
    _
  %s6 = ssub.s32 1, %s4
  %s7 = scalar_select 0, %s6, %s4
  // Predicated region
  $region2: #{cnn_base_forward.4} parent=0 // pred_check
    _
  $region3: #{cnn_base_forward.4} parent=0 // pred_check_branch
    %9 = sbr.rel (0) target = $region5
  $region4: #{cnn_base_forward.4} parent=0 // pred_region
    _
  $region5: #{cnn_base_forward.4} parent=0 // pred_fallthru
    _
  // Predicated region
  $region6: #{cnn_base_forward.4} parent=0 // pred_check
    _
  $region7: #{cnn_base_forward.4} parent=0 // pred_check_branch
    %11 = sbr.rel (0) target = $region9
  $region8: #{cnn_base_forward.4} parent=0 // pred_region
    _
  $region9: #{cnn_base_forward.4} parent=0 // pred_fallthru
    _
  // Predicated region
  $region10: #{cnn_base_forward.4} parent=0 // pred_check
    _
  $region11: #{cnn_base_forward.4} parent=0 // pred_check_branch
    %13 = sbr.rel (0) target = $region13
  $region12: #{cnn_base_forward.4} parent=0 // pred_region
    _
  $region13: #{cnn_base_forward.4} parent=0 // pred_fallthru
    _
  %v15 = vld [vmem:[%s0] sm:$0xff]
  %v16 = vld [vmem:[%s0 + $0x8] sm:$0xff]
  %v17 = vld [vmem:[%s0 + $0x10] sm:$0xff]
  %v18 = vld [vmem:[%s0 + $0x18] sm:$0xff]
  %v19 = vld [vmem:[%s0 + $0x20] sm:$0xff]
  %v20 = vld [vmem:[%s0 + $0x28] sm:$0xff]
  %v21 = vld [vmem:[%s0 + $0x30] sm:$0xff]
  %v22 = vld [vmem:[%s0 + $0x38] sm:$0xff]
  %v23 = vld [vmem:[%s0 + $0x40] sm:$0xff]
  %v24 = vld [vmem:[%s0 + $0x48] sm:$0xff]
  %v25 = vld [vmem:[%s0 + $0x50] sm:$0xff]
  %v26 = vld [vmem:[%s0 + $0x58] sm:$0xff]
  %v27 = vld [vmem:[%s0 + $0x60] sm:$0xff]
  %v28 = vld [vmem:[%s0 + $0x68] sm:$0xff]
  %v29 = vld [vmem:[%s0 + $0x70] sm:$0xff]
  %v30 = vld [vmem:[%s0 + $0x78] sm:$0xff]
  %v31 = vld [vmem:[%s0 + $0x80] sm:$0xff]
  %v32 = vld [vmem:[%s0 + $0x88] sm:$0xff]
  %v33 = vld [vmem:[%s0 + $0x90] sm:$0xff]
  %v34 = vld [vmem:[%s0 + $0x98] sm:$0xff]
  %v35 = vld [vmem:[%s0 + $0xa0] sm:$0xff]
  %v36 = vld [vmem:[%s0 + $0xa8] sm:$0xff]
  %v37 = vld [vmem:[%s0 + $0xb0] sm:$0xff]
  %v38 = vld [vmem:[%s0 + $0xb8] sm:$0xff]
  %v39 = vld [vmem:[%s0 + $0xc0] sm:$0xff]
  %v40 = vld [vmem:[%s0 + $0xc8] sm:$0xff]
  %v41 = vld [vmem:[%s0 + $0xd0] sm:$0xff]
  %v42 = vld [vmem:[%s0 + $0xd8] sm:$0xff]
  %v43 = vld [vmem:[%s0 + $0xe0] sm:$0xff]
  %v44 = vld [vmem:[%s0 + $0xe8] sm:$0xff]
  %v45 = vld [vmem:[%s0 + $0xf0] sm:$0xff]
  %v46 = vld [vmem:[%s0 + $0xf8] sm:$0xff]
  %v47 = vld [vmem:[%s0 + $0x100] sm:$0xff]
  %v48 = vld [vmem:[%s0 + $0x108] sm:$0xff]
  %v49 = vld [vmem:[%s0 + $0x110] sm:$0xff]
  %v50 = vld [vmem:[%s0 + $0x118] sm:$0xff]
  %v51 = vld [vmem:[%s0 + $0x120] sm:$0xff]
  %v52 = vld [vmem:[%s0 + $0x128] sm:$0xff]
  %v53 = vld [vmem:[%s0 + $0x130] sm:$0xff]
  %v54 = vld [vmem:[%s0 + $0x138] sm:$0xff]
  %v55 = vld [vmem:[%s0 + $0x140] sm:$0xff]
  %v56 = vld [vmem:[%s0 + $0x148] sm:$0xff]
  %v57 = vld [vmem:[%s0 + $0x150] sm:$0xff]
  %v58 = vld [vmem:[%s0 + $0x158] sm:$0xff]
  %v59 = vld [vmem:[%s0 + $0x160] sm:$0xff]
  %v60 = vld [vmem:[%s0 + $0x168] sm:$0xff]
  %v61 = vld [vmem:[%s0 + $0x170] sm:$0xff]
  %v62 = vld [vmem:[%s0 + $0x178] sm:$0xff]
  %v63 = vld [vmem:[%s0 + $0x180] sm:$0xff]
  %v64 = vld [vmem:[%s0 + $0x188] sm:$0xff]
  %v65 = vld [vmem:[%s0 + $0x190] sm:$0xff]
  %v66 = vld [vmem:[%s0 + $0x198] sm:$0xff]
  %v67 = vld [vmem:[%s0 + $0x1a0] sm:$0xff]
  %v68 = vld [vmem:[%s0 + $0x1a8] sm:$0xff]
  %v69 = vld [vmem:[%s0 + $0x1b0] sm:$0xff]
  %v70 = vld [vmem:[%s0 + $0x1b8] sm:$0xff]
  %v71 = vld [vmem:[%s0 + $0x1c0] sm:$0xff]
  %v72 = vld [vmem:[%s0 + $0x1c8] sm:$0xff]
  %v73 = vld [vmem:[%s0 + $0x1d0] sm:$0xff]
  %v74 = vld [vmem:[%s0 + $0x1d8] sm:$0xff]
  %v75 = vld [vmem:[%s0 + $0x1e0] sm:$0xff]
  %v76 = vld [vmem:[%s0 + $0x1e8] sm:$0xff]
  %v77 = vld [vmem:[%s0 + $0x1f0] sm:$0xff]
  %v78 = vld [vmem:[%s0 + $0x1f8] sm:$0xff]
  %v79 = vld [vmem:[%s0 + $0x200] sm:$0xff]
  %v80 = vld [vmem:[%s0 + $0x208] sm:$0xff]
  %v81 = vld [vmem:[%s0 + $0x210] sm:$0xff]
  %v82 = vld [vmem:[%s0 + $0x218] sm:$0xff]
  %v83 = vld [vmem:[%s0 + $0x220] sm:$0xff]
  %v84 = vld [vmem:[%s0 + $0x228] sm:$0xff]
  %v85 = vld [vmem:[%s0 + $0x230] sm:$0xff]
  %v86 = vld [vmem:[%s0 + $0x238] sm:$0xff]
  %v87 = vld [vmem:[%s0 + $0x240] sm:$0xff]
  %v88 = vld [vmem:[%s0 + $0x248] sm:$0xff]
  %v89 = vld [vmem:[%s0 + $0x250] sm:$0xff]
  %v90 = vld [vmem:[%s0 + $0x258] sm:$0xff]
  %v91 = vld [vmem:[%s0 + $0x260] sm:$0xff]
  %v92 = vld [vmem:[%s0 + $0x268] sm:$0xff]
  %v93 = vld [vmem:[%s0 + $0x270] sm:$0xff]
  %v94 = vld [vmem:[%s0 + $0x278] sm:$0xff]
  %v95 = vld [vmem:[%s0 + $0x280] sm:$0xff]
  %v96 = vld [vmem:[%s0 + $0x288] sm:$0xff]
  %v97 = vld [vmem:[%s0 + $0x290] sm:$0xff]
  %v98 = vld [vmem:[%s0 + $0x298] sm:$0xff]
  %v99 = vld [vmem:[%s0 + $0x2a0] sm:$0xff]
  %v100 = vld [vmem:[%s0 + $0x2a8] sm:$0xff]
  %v101 = vld [vmem:[%s0 + $0x2b0] sm:$0xff]
  %v102 = vld [vmem:[%s0 + $0x2b8] sm:$0xff]
  %v103 = vld [vmem:[%s0 + $0x2c0] sm:$0xff]
  %v104 = vld [vmem:[%s0 + $0x2c8] sm:$0xff]
  %v105 = vld [vmem:[%s0 + $0x2d0] sm:$0xff]
  %v106 = vld [vmem:[%s0 + $0x2d8] sm:$0xff]
  %v107 = vld [vmem:[%s0 + $0x2e0] sm:$0xff]
  %v108 = vld [vmem:[%s0 + $0x2e8] sm:$0xff]
  %v109 = vld [vmem:[%s0 + $0x2f0] sm:$0xff]
  %v110 = vld [vmem:[%s0 + $0x2f8] sm:$0xff]
  %v111 = vld [vmem:[%s0 + $0x300] sm:$0xff]
  %v112 = vld [vmem:[%s0 + $0x308] sm:$0xff]
  %v113 = vld [vmem:[%s0 + $0x310] sm:$0xff]
  %v114 = vld [vmem:[%s0 + $0x318] sm:$0xff]
  %v115 = vld [vmem:[%s1] sm:$0xf]
  %v116 = vld [vmem:[%s1 + $0x4] sm:$0xf]
  %v117 = vld [vmem:[%s1 + $0x8] sm:$0xf]
  %v118 = vld [vmem:[%s1 + $0xc] sm:$0xf]
  %v119 = vld [vmem:[%s1 + $0x10] sm:$0xf]
  %v120 = vld [vmem:[%s1 + $0x14] sm:$0xf]
  %v121 = vld [vmem:[%s1 + $0x18] sm:$0xf]
  %v122 = vld [vmem:[%s1 + $0x1c] sm:$0xf]
  %v123 = vld [vmem:[%s1 + $0x20] sm:$0xf]
  %v124 = vld [vmem:[%s1 + $0x24] sm:$0xf]
  %v125 = vld [vmem:[%s1 + $0x28] sm:$0xf]
  %v126 = vld [vmem:[%s1 + $0x2c] sm:$0xf]
  %v127 = vld [vmem:[%s1 + $0x30] sm:$0xf]
  %v128 = vld [vmem:[%s1 + $0x34] sm:$0xf]
  %v129 = vld [vmem:[%s1 + $0x38] sm:$0xf]
  %v130 = vld [vmem:[%s1 + $0x3c] sm:$0xf]
  %v131 = vld [vmem:[%s1 + $0x40] sm:$0xf]
  %v132 = vld [vmem:[%s1 + $0x44] sm:$0xf]
  %v133 = vld [vmem:[%s1 + $0x48] sm:$0xf]
  %v134 = vld [vmem:[%s1 + $0x4c] sm:$0xf]
  %v135 = vld [vmem:[%s1 + $0x50] sm:$0xf]
  %v136 = vld [vmem:[%s1 + $0x54] sm:$0xf]
  %v137 = vld [vmem:[%s1 + $0x58] sm:$0xf]
  %v138 = vld [vmem:[%s1 + $0x5c] sm:$0xf]
  %v139 = vld [vmem:[%s1 + $0x60] sm:$0xf]
  %v140 = vld [vmem:[%s1 + $0x64] sm:$0xf]
  %v141 = vld [vmem:[%s1 + $0x68] sm:$0xf]
  %v142 = vld [vmem:[%s1 + $0x6c] sm:$0xf]
  %v143 = vld [vmem:[%s1 + $0x70] sm:$0xf]
  %v144 = vld [vmem:[%s1 + $0x74] sm:$0xf]
  %v145 = vld [vmem:[%s1 + $0x78] sm:$0xf]
  %v146 = vld [vmem:[%s1 + $0x7c] sm:$0xf]
  %v147 = vld [vmem:[%s2] sm:$0x1]
  %v149 = vlaneseq
  %v150 = vshrl.u32 %v149, 7
  %v151 = vsub.s32 0, %v150
  %v152 = vrot.slane %v147, %v151
  %v254 = vunpack.c.l.b16 %v15
  %v255 = vunpack.c.h.b16 %v15
  %v256 = vunpack.c.l.b16 %v16
  %v257 = vunpack.c.h.b16 %v16
  %v258 = vunpack.c.l.b16 %v17
  %v259 = vunpack.c.h.b16 %v17
  %v260 = vunpack.c.l.b16 %v18
  %v261 = vunpack.c.h.b16 %v18
  %v262 = vunpack.c.l.b16 %v19
  %v263 = vunpack.c.h.b16 %v19
  %v264 = vunpack.c.l.b16 %v20
  %v265 = vunpack.c.h.b16 %v20
  %v266 = vunpack.c.l.b16 %v21
  %v267 = vunpack.c.h.b16 %v21
  %v268 = vunpack.c.l.b16 %v22
  %v269 = vunpack.c.h.b16 %v22
  %v270 = vunpack.c.l.b16 %v23
  %v271 = vunpack.c.h.b16 %v23
  %v272 = vunpack.c.l.b16 %v24
  %v273 = vunpack.c.h.b16 %v24
  %v274 = vunpack.c.l.b16 %v25
  %v275 = vunpack.c.h.b16 %v25
  %v276 = vunpack.c.l.b16 %v26
  %v277 = vunpack.c.h.b16 %v26
  %v278 = vunpack.c.l.b16 %v27
  %v279 = vunpack.c.h.b16 %v27
  %v280 = vunpack.c.l.b16 %v28
  %v281 = vunpack.c.h.b16 %v28
  %v282 = vunpack.c.l.b16 %v29
  %v283 = vunpack.c.h.b16 %v29
  %v284 = vunpack.c.l.b16 %v30
  %v285 = vunpack.c.h.b16 %v30
  %v286 = vunpack.c.l.b16 %v31
  %v287 = vunpack.c.h.b16 %v31
  %v288 = vunpack.c.l.b16 %v32
  %v289 = vunpack.c.h.b16 %v32
  %v290 = vunpack.c.l.b16 %v33
  %v291 = vunpack.c.h.b16 %v33
  %v292 = vunpack.c.l.b16 %v34
  %v293 = vunpack.c.h.b16 %v34
  %v294 = vunpack.c.l.b16 %v35
  %v295 = vunpack.c.h.b16 %v35
  %v296 = vunpack.c.l.b16 %v36
  %v297 = vunpack.c.h.b16 %v36
  %v298 = vunpack.c.l.b16 %v37
  %v299 = vunpack.c.h.b16 %v37
  %v300 = vunpack.c.l.b16 %v38
  %v301 = vunpack.c.h.b16 %v38
  %v302 = vunpack.c.l.b16 %v39
  %v303 = vunpack.c.h.b16 %v39
  %v304 = vunpack.c.l.b16 %v40
  %v305 = vunpack.c.h.b16 %v40
  %v306 = vunpack.c.l.b16 %v41
  %v307 = vunpack.c.h.b16 %v41
  %v308 = vunpack.c.l.b16 %v42
  %v309 = vunpack.c.h.b16 %v42
  %v310 = vunpack.c.l.b16 %v43
  %v311 = vunpack.c.h.b16 %v43
  %v312 = vunpack.c.l.b16 %v44
  %v313 = vunpack.c.h.b16 %v44
  %v314 = vunpack.c.l.b16 %v45
  %v315 = vunpack.c.h.b16 %v45
  %v316 = vunpack.c.l.b16 %v46
  %v317 = vunpack.c.h.b16 %v46
  %v318 = vunpack.c.l.b16 %v47
  %v319 = vunpack.c.h.b16 %v47
  %v320 = vunpack.c.l.b16 %v48
  %v321 = vunpack.c.h.b16 %v48
  %v322 = vunpack.c.l.b16 %v49
  %v323 = vunpack.c.h.b16 %v49
  %v324 = vunpack.c.l.b16 %v50
  %v325 = vunpack.c.h.b16 %v50
  %v326 = vunpack.c.l.b16 %v51
  %v327 = vunpack.c.h.b16 %v51
  %v328 = vunpack.c.l.b16 %v52
  %v329 = vunpack.c.h.b16 %v52
  %v330 = vunpack.c.l.b16 %v53
  %v331 = vunpack.c.h.b16 %v53
  %v332 = vunpack.c.l.b16 %v54
  %v333 = vunpack.c.h.b16 %v54
  %v334 = vunpack.c.l.b16 %v55
  %v335 = vunpack.c.h.b16 %v55
  %v336 = vunpack.c.l.b16 %v56
  %v337 = vunpack.c.h.b16 %v56
  %v338 = vunpack.c.l.b16 %v57
  %v339 = vunpack.c.h.b16 %v57
  %v340 = vunpack.c.l.b16 %v58
  %v341 = vunpack.c.h.b16 %v58
  %v342 = vunpack.c.l.b16 %v59
  %v343 = vunpack.c.h.b16 %v59
  %v344 = vunpack.c.l.b16 %v60
  %v345 = vunpack.c.h.b16 %v60
  %v346 = vunpack.c.l.b16 %v61
  %v347 = vunpack.c.h.b16 %v61
  %v348 = vunpack.c.l.b16 %v62
  %v349 = vunpack.c.h.b16 %v62
  %v350 = vunpack.c.l.b16 %v63
  %v351 = vunpack.c.h.b16 %v63
  %v352 = vunpack.c.l.b16 %v64
  %v353 = vunpack.c.h.b16 %v64
  %v354 = vunpack.c.l.b16 %v65
  %v355 = vunpack.c.h.b16 %v65
  %v356 = vunpack.c.l.b16 %v66
  %v357 = vunpack.c.h.b16 %v66
  %v358 = vunpack.c.l.b16 %v67
  %v359 = vunpack.c.h.b16 %v67
  %v360 = vunpack.c.l.b16 %v68
  %v361 = vunpack.c.h.b16 %v68
  %v362 = vunpack.c.l.b16 %v69
  %v363 = vunpack.c.h.b16 %v69
  %v364 = vunpack.c.l.b16 %v70
  %v365 = vunpack.c.h.b16 %v70
  %v366 = vunpack.c.l.b16 %v71
  %v367 = vunpack.c.h.b16 %v71
  %v368 = vunpack.c.l.b16 %v72
  %v369 = vunpack.c.h.b16 %v72
  %v370 = vunpack.c.l.b16 %v73
  %v371 = vunpack.c.h.b16 %v73
  %v372 = vunpack.c.l.b16 %v74
  %v373 = vunpack.c.h.b16 %v74
  %v374 = vunpack.c.l.b16 %v75
  %v375 = vunpack.c.h.b16 %v75
  %v376 = vunpack.c.l.b16 %v76
  %v377 = vunpack.c.h.b16 %v76
  %v378 = vunpack.c.l.b16 %v77
  %v379 = vunpack.c.h.b16 %v77
  %v380 = vunpack.c.l.b16 %v78
  %v381 = vunpack.c.h.b16 %v78
  %v382 = vunpack.c.l.b16 %v79
  %v383 = vunpack.c.h.b16 %v79
  %v384 = vunpack.c.l.b16 %v80
  %v385 = vunpack.c.h.b16 %v80
  %v386 = vunpack.c.l.b16 %v81
  %v387 = vunpack.c.h.b16 %v81
  %v388 = vunpack.c.l.b16 %v82
  %v389 = vunpack.c.h.b16 %v82
  %v390 = vunpack.c.l.b16 %v83
  %v391 = vunpack.c.h.b16 %v83
  %v392 = vunpack.c.l.b16 %v84
  %v393 = vunpack.c.h.b16 %v84
  %v394 = vunpack.c.l.b16 %v85
  %v395 = vunpack.c.h.b16 %v85
  %v396 = vunpack.c.l.b16 %v86
  %v397 = vunpack.c.h.b16 %v86
  %v398 = vunpack.c.l.b16 %v87
  %v399 = vunpack.c.h.b16 %v87
  %v400 = vunpack.c.l.b16 %v88
  %v401 = vunpack.c.h.b16 %v88
  %v402 = vunpack.c.l.b16 %v89
  %v403 = vunpack.c.h.b16 %v89
  %v404 = vunpack.c.l.b16 %v90
  %v405 = vunpack.c.h.b16 %v90
  %v406 = vunpack.c.l.b16 %v91
  %v407 = vunpack.c.h.b16 %v91
  %v408 = vunpack.c.l.b16 %v92
  %v409 = vunpack.c.h.b16 %v92
  %v410 = vunpack.c.l.b16 %v93
  %v411 = vunpack.c.h.b16 %v93
  %v412 = vunpack.c.l.b16 %v94
  %v413 = vunpack.c.h.b16 %v94
  %v414 = vunpack.c.l.b16 %v95
  %v415 = vunpack.c.h.b16 %v95
  %v416 = vunpack.c.l.b16 %v96
  %v417 = vunpack.c.h.b16 %v96
  %v418 = vunpack.c.l.b16 %v97
  %v419 = vunpack.c.h.b16 %v97
  %v420 = vunpack.c.l.b16 %v98
  %v421 = vunpack.c.h.b16 %v98
  %v422 = vunpack.c.l.b16 %v99
  %v423 = vunpack.c.h.b16 %v99
  %v424 = vunpack.c.l.b16 %v100
  %v425 = vunpack.c.h.b16 %v100
  %v426 = vunpack.c.l.b16 %v101
  %v427 = vunpack.c.h.b16 %v101
  %v428 = vunpack.c.l.b16 %v102
  %v429 = vunpack.c.h.b16 %v102
  %v430 = vunpack.c.l.b16 %v103
  %v431 = vunpack.c.h.b16 %v103
  %v432 = vunpack.c.l.b16 %v104
  %v433 = vunpack.c.h.b16 %v104
  %v434 = vunpack.c.l.b16 %v105
  %v435 = vunpack.c.h.b16 %v105
  %v436 = vunpack.c.l.b16 %v106
  %v437 = vunpack.c.h.b16 %v106
  %v438 = vunpack.c.l.b16 %v107
  %v439 = vunpack.c.h.b16 %v107
  %v440 = vunpack.c.l.b16 %v108
  %v441 = vunpack.c.h.b16 %v108
  %v442 = vunpack.c.l.b16 %v109
  %v443 = vunpack.c.h.b16 %v109
  %v444 = vunpack.c.l.b16 %v110
  %v445 = vunpack.c.h.b16 %v110
  %v446 = vunpack.c.l.b16 %v111
  %v447 = vunpack.c.h.b16 %v111
  %v448 = vunpack.c.l.b16 %v112
  %v449 = vunpack.c.h.b16 %v112
  %v450 = vunpack.c.l.b16 %v113
  %v451 = vunpack.c.h.b16 %v113
  %v452 = vunpack.c.l.b16 %v114
  %v453 = vunpack.c.h.b16 %v114
  %v454 = vpack.c.b16 %v256, %v254
  %v455 = vpack.c.b16 %v257, %v255
  %v456 = vpack.c.b16 %v260, %v258
  %v457 = vpack.c.b16 %v261, %v259
  %v458 = vpack.c.b16 %v264, %v262
  %v459 = vpack.c.b16 %v265, %v263
  %v460 = vpack.c.b16 %v268, %v266
  %v461 = vpack.c.b16 %v269, %v267
  %v462 = vpack.c.b16 %v272, %v270
  %v463 = vpack.c.b16 %v273, %v271
  %v464 = vpack.c.b16 %v276, %v274
  %v465 = vpack.c.b16 %v277, %v275
  %v466 = vpack.c.b16 %v280, %v278
  %v467 = vpack.c.b16 %v281, %v279
  %v468 = vpack.c.b16 %v284, %v282
  %v469 = vpack.c.b16 %v285, %v283
  %v470 = vpack.c.b16 %v288, %v286
  %v471 = vpack.c.b16 %v289, %v287
  %v472 = vpack.c.b16 %v292, %v290
  %v473 = vpack.c.b16 %v293, %v291
  %v474 = vpack.c.b16 %v296, %v294
  %v475 = vpack.c.b16 %v297, %v295
  %v476 = vpack.c.b16 %v300, %v298
  %v477 = vpack.c.b16 %v301, %v299
  %v478 = vpack.c.b16 %v304, %v302
  %v479 = vpack.c.b16 %v305, %v303
  %v480 = vpack.c.b16 %v308, %v306
  %v481 = vpack.c.b16 %v309, %v307
  %v482 = vpack.c.b16 %v312, %v310
  %v483 = vpack.c.b16 %v313, %v311
  %v484 = vpack.c.b16 %v316, %v314
  %v485 = vpack.c.b16 %v317, %v315
  %v486 = vpack.c.b16 %v320, %v318
  %v487 = vpack.c.b16 %v321, %v319
  %v488 = vpack.c.b16 %v324, %v322
  %v489 = vpack.c.b16 %v325, %v323
  %v490 = vpack.c.b16 %v328, %v326
  %v491 = vpack.c.b16 %v329, %v327
  %v492 = vpack.c.b16 %v332, %v330
  %v493 = vpack.c.b16 %v333, %v331
  %v494 = vpack.c.b16 %v336, %v334
  %v495 = vpack.c.b16 %v337, %v335
  %v496 = vpack.c.b16 %v340, %v338
  %v497 = vpack.c.b16 %v341, %v339
  %v498 = vpack.c.b16 %v344, %v342
  %v499 = vpack.c.b16 %v345, %v343
  %v500 = vpack.c.b16 %v348, %v346
  %v501 = vpack.c.b16 %v349, %v347
  %v502 = vpack.c.b16 %v352, %v350
  %v503 = vpack.c.b16 %v353, %v351
  %v504 = vpack.c.b16 %v356, %v354
  %v505 = vpack.c.b16 %v357, %v355
  %v506 = vpack.c.b16 %v360, %v358
  %v507 = vpack.c.b16 %v361, %v359
  %v508 = vpack.c.b16 %v364, %v362
  %v509 = vpack.c.b16 %v365, %v363
  %v510 = vpack.c.b16 %v368, %v366
  %v511 = vpack.c.b16 %v369, %v367
  %v512 = vpack.c.b16 %v372, %v370
  %v513 = vpack.c.b16 %v373, %v371
  %v514 = vpack.c.b16 %v376, %v374
  %v515 = vpack.c.b16 %v377, %v375
  %v516 = vpack.c.b16 %v380, %v378
  %v517 = vpack.c.b16 %v381, %v379
  %v518 = vpack.c.b16 %v384, %v382
  %v519 = vpack.c.b16 %v385, %v383
  %v520 = vpack.c.b16 %v388, %v386
  %v521 = vpack.c.b16 %v389, %v387
  %v522 = vpack.c.b16 %v392, %v390
  %v523 = vpack.c.b16 %v393, %v391
  %v524 = vpack.c.b16 %v396, %v394
  %v525 = vpack.c.b16 %v397, %v395
  %v526 = vpack.c.b16 %v400, %v398
  %v527 = vpack.c.b16 %v401, %v399
  %v528 = vpack.c.b16 %v404, %v402
  %v529 = vpack.c.b16 %v405, %v403
  %v530 = vpack.c.b16 %v408, %v406
  %v531 = vpack.c.b16 %v409, %v407
  %v532 = vpack.c.b16 %v412, %v410
  %v533 = vpack.c.b16 %v413, %v411
  %v534 = vpack.c.b16 %v416, %v414
  %v535 = vpack.c.b16 %v417, %v415
  %v536 = vpack.c.b16 %v420, %v418
  %v537 = vpack.c.b16 %v421, %v419
  %v538 = vpack.c.b16 %v424, %v422
  %v539 = vpack.c.b16 %v425, %v423
  %v540 = vpack.c.b16 %v428, %v426
  %v541 = vpack.c.b16 %v429, %v427
  %v542 = vpack.c.b16 %v432, %v430
  %v543 = vpack.c.b16 %v433, %v431
  %v544 = vpack.c.b16 %v436, %v434
  %v545 = vpack.c.b16 %v437, %v435
  %v546 = vpack.c.b16 %v440, %v438
  %v547 = vpack.c.b16 %v441, %v439
  %v548 = vpack.c.b16 %v444, %v442
  %v549 = vpack.c.b16 %v445, %v443
  %v550 = vpack.c.b16 %v448, %v446
  %v551 = vpack.c.b16 %v449, %v447
  %v552 = vpack.c.b16 %v452, %v450
  %v553 = vpack.c.b16 %v453, %v451
  %v686 = vunpack.c.l.b16 %v115
  %v687 = vunpack.c.l.b16 %v116
  %v688 = vunpack.c.l.b16 %v117
  %v689 = vunpack.c.l.b16 %v118
  %v690 = vunpack.c.l.b16 %v119
  %v691 = vunpack.c.l.b16 %v120
  %v692 = vunpack.c.l.b16 %v121
  %v693 = vunpack.c.l.b16 %v122
  %v694 = vunpack.c.l.b16 %v123
  %v695 = vunpack.c.l.b16 %v124
  %v696 = vunpack.c.l.b16 %v125
  %v697 = vunpack.c.l.b16 %v126
  %v698 = vunpack.c.l.b16 %v127
  %v699 = vunpack.c.l.b16 %v128
  %v700 = vunpack.c.l.b16 %v129
  %v701 = vunpack.c.l.b16 %v130
  %v702 = vunpack.c.l.b16 %v131
  %v703 = vunpack.c.l.b16 %v132
  %v704 = vunpack.c.l.b16 %v133
  %v705 = vunpack.c.l.b16 %v134
  %v706 = vunpack.c.l.b16 %v135
  %v707 = vunpack.c.l.b16 %v136
  %v708 = vunpack.c.l.b16 %v137
  %v709 = vunpack.c.l.b16 %v138
  %v710 = vunpack.c.l.b16 %v139
  %v711 = vunpack.c.l.b16 %v140
  %v712 = vunpack.c.l.b16 %v141
  %v713 = vunpack.c.l.b16 %v142
  %v714 = vunpack.c.l.b16 %v143
  %v715 = vunpack.c.l.b16 %v144
  %v716 = vunpack.c.l.b16 %v145
  %v717 = vunpack.c.l.b16 %v146
  %v718 = vpack.c.b16 %v687, %v686
  %v719 = vpack.c.b16 %v689, %v688
  %v720 = vpack.c.b16 %v691, %v690
  %v721 = vpack.c.b16 %v693, %v692
  %v722 = vpack.c.b16 %v695, %v694
  %v723 = vpack.c.b16 %v697, %v696
  %v724 = vpack.c.b16 %v699, %v698
  %v725 = vpack.c.b16 %v701, %v700
  %v726 = vpack.c.b16 %v703, %v702
  %v727 = vpack.c.b16 %v705, %v704
  %v728 = vpack.c.b16 %v707, %v706
  %v729 = vpack.c.b16 %v709, %v708
  %v730 = vpack.c.b16 %v711, %v710
  %v731 = vpack.c.b16 %v713, %v712
  %v732 = vpack.c.b16 %v715, %v714
  %v733 = vpack.c.b16 %v717, %v716
  %750 = vmatprep.subr.bf16.mxu0 0
  %751 = vmatpush1.bf16.msra.mxu0 %v725
  %752 = vmatprep.subr.bf16.mxu0 0
  %753 = vmatpush1.bf16.msra.mxu0 %v724
  %754 = vmatprep.subr.bf16.mxu0 0
  %755 = vmatpush1.bf16.msra.mxu0 %v723
  %756 = vmatprep.subr.bf16.mxu0 0
  %757 = vmatpush1.bf16.msra.mxu0 %v722
  %758 = vmatprep.subr.bf16.mxu0 0
  %759 = vmatpush1.bf16.msra.mxu0 %v721
  %760 = vmatprep.subr.bf16.mxu0 0
  %761 = vmatpush1.bf16.msra.mxu0 %v720
  %762 = vmatprep.subr.bf16.mxu0 0
  %763 = vmatpush1.bf16.msra.mxu0 %v719
  %764 = vmatprep.subr.bf16.mxu0 0
  %765 = vmatpush1.bf16.msra.mxu0 %v718
  %766 = vmatprep.subr.bf16.mxu0 0
  %767 = vmatpush2.bf16.msra.mxu0 %v733
  %768 = vmatprep.subr.bf16.mxu0 0
  %769 = vmatpush2.bf16.msra.mxu0 %v732
  %770 = vmatprep.subr.bf16.mxu0 0
  %771 = vmatpush2.bf16.msra.mxu0 %v731
  %772 = vmatprep.subr.bf16.mxu0 0
  %773 = vmatpush2.bf16.msra.mxu0 %v730
  %774 = vmatprep.subr.bf16.mxu0 0
  %775 = vmatpush2.bf16.msra.mxu0 %v729
  %776 = vmatprep.subr.bf16.mxu0 0
  %777 = vmatpush2.bf16.msra.mxu0 %v728
  %778 = vmatprep.subr.bf16.mxu0 0
  %779 = vmatpush2.bf16.msra.mxu0 %v727
  %780 = vmatprep.subr.bf16.mxu0 0
  %781 = vmatpush2.bf16.msra.mxu0 %v726
  %782 = vmatprep.mubr.bf16.mxu0 %v455
  %783 = vmatmul.mubr.bf16.gmra.mxu0 %v454
  %v784 = vpop.f32.mrf.mxu0
  %v785 = vadd.f32 %v152, %v784
  %v786 = vpop.f32.mrf.mxu0
  %v787 = vpop.f32.mrf.mxu0
  %v788 = vadd.f32 %v152, %v787
  %v789 = vpop.f32.mrf.mxu0
  %790 = vmatprep.mubr.bf16.mxu0 %v457
  %791 = vmatmul.mubr.bf16.gmra.mxu0 %v456
  %v792 = vpop.f32.mrf.mxu0
  %v793 = vadd.f32 %v152, %v792
  %v794 = vpop.f32.mrf.mxu0
  %v795 = vpop.f32.mrf.mxu0
  %v796 = vadd.f32 %v152, %v795
  %v797 = vpop.f32.mrf.mxu0
  %798 = vmatprep.mubr.bf16.mxu0 %v459
  %799 = vmatmul.mubr.bf16.gmra.mxu0 %v458
  %v800 = vpop.f32.mrf.mxu0
  %v801 = vadd.f32 %v152, %v800
  %v802 = vpop.f32.mrf.mxu0
  %v803 = vpop.f32.mrf.mxu0
  %v804 = vadd.f32 %v152, %v803
  %v805 = vpop.f32.mrf.mxu0
  %806 = vmatprep.mubr.bf16.mxu0 %v461
  %807 = vmatmul.mubr.bf16.gmra.mxu0 %v460
  %v808 = vpop.f32.mrf.mxu0
  %v809 = vadd.f32 %v152, %v808
  %v810 = vpop.f32.mrf.mxu0
  %v811 = vpop.f32.mrf.mxu0
  %v812 = vadd.f32 %v152, %v811
  %v813 = vpop.f32.mrf.mxu0
  %814 = vmatprep.mubr.bf16.mxu0 %v463
  %815 = vmatmul.mubr.bf16.gmra.mxu0 %v462
  %v816 = vpop.f32.mrf.mxu0
  %v817 = vadd.f32 %v152, %v816
  %v818 = vpop.f32.mrf.mxu0
  %v819 = vpop.f32.mrf.mxu0
  %v820 = vadd.f32 %v152, %v819
  %v821 = vpop.f32.mrf.mxu0
  %822 = vmatprep.mubr.bf16.mxu0 %v465
  %823 = vmatmul.mubr.bf16.gmra.mxu0 %v464
  %v824 = vpop.f32.mrf.mxu0
  %v825 = vadd.f32 %v152, %v824
  %v826 = vpop.f32.mrf.mxu0
  %v827 = vpop.f32.mrf.mxu0
  %v828 = vadd.f32 %v152, %v827
  %v829 = vpop.f32.mrf.mxu0
  %830 = vmatprep.mubr.bf16.mxu0 %v467
  %831 = vmatmul.mubr.bf16.gmra.mxu0 %v466
  %v832 = vpop.f32.mrf.mxu0
  %v833 = vadd.f32 %v152, %v832
  %v834 = vpop.f32.mrf.mxu0
  %v835 = vpop.f32.mrf.mxu0
  %v836 = vadd.f32 %v152, %v835
  %v837 = vpop.f32.mrf.mxu0
  %838 = vmatprep.mubr.bf16.mxu0 %v469
  %839 = vmatmul.mubr.bf16.gmra.mxu0 %v468
  %v840 = vpop.f32.mrf.mxu0
  %v841 = vadd.f32 %v152, %v840
  %v842 = vpop.f32.mrf.mxu0
  %v843 = vpop.f32.mrf.mxu0
  %v844 = vadd.f32 %v152, %v843
  %v845 = vpop.f32.mrf.mxu0
  %846 = vmatprep.mubr.bf16.mxu0 %v471
  %847 = vmatmul.mubr.bf16.gmra.mxu0 %v470
  %v848 = vpop.f32.mrf.mxu0
  %v849 = vadd.f32 %v152, %v848
  %v850 = vpop.f32.mrf.mxu0
  %v851 = vpop.f32.mrf.mxu0
  %v852 = vadd.f32 %v152, %v851
  %v853 = vpop.f32.mrf.mxu0
  %854 = vmatprep.mubr.bf16.mxu0 %v473
  %855 = vmatmul.mubr.bf16.gmra.mxu0 %v472
  %v856 = vpop.f32.mrf.mxu0
  %v857 = vadd.f32 %v152, %v856
  %v858 = vpop.f32.mrf.mxu0
  %v859 = vpop.f32.mrf.mxu0
  %v860 = vadd.f32 %v152, %v859
  %v861 = vpop.f32.mrf.mxu0
  %862 = vmatprep.mubr.bf16.mxu0 %v475
  %863 = vmatmul.mubr.bf16.gmra.mxu0 %v474
  %v864 = vpop.f32.mrf.mxu0
  %v865 = vadd.f32 %v152, %v864
  %v866 = vpop.f32.mrf.mxu0
  %v867 = vpop.f32.mrf.mxu0
  %v868 = vadd.f32 %v152, %v867
  %v869 = vpop.f32.mrf.mxu0
  %870 = vmatprep.mubr.bf16.mxu0 %v477
  %871 = vmatmul.mubr.bf16.gmra.mxu0 %v476
  %v872 = vpop.f32.mrf.mxu0
  %v873 = vadd.f32 %v152, %v872
  %v874 = vpop.f32.mrf.mxu0
  %v875 = vpop.f32.mrf.mxu0
  %v876 = vadd.f32 %v152, %v875
  %v877 = vpop.f32.mrf.mxu0
  %878 = vmatprep.mubr.bf16.mxu0 %v479
  %879 = vmatmul.mubr.bf16.gmra.mxu0 %v478
  %v880 = vpop.f32.mrf.mxu0
  %v881 = vadd.f32 %v152, %v880
  %v882 = vpop.f32.mrf.mxu0
  %v883 = vpop.f32.mrf.mxu0
  %v884 = vadd.f32 %v152, %v883
  %v885 = vpop.f32.mrf.mxu0
  %886 = vmatprep.mubr.bf16.mxu0 %v481
  %887 = vmatmul.mubr.bf16.gmra.mxu0 %v480
  %v888 = vpop.f32.mrf.mxu0
  %v889 = vadd.f32 %v152, %v888
  %v890 = vpop.f32.mrf.mxu0
  %v891 = vpop.f32.mrf.mxu0
  %v892 = vadd.f32 %v152, %v891
  %v893 = vpop.f32.mrf.mxu0
  %894 = vmatprep.mubr.bf16.mxu0 %v483
  %895 = vmatmul.mubr.bf16.gmra.mxu0 %v482
  %v896 = vpop.f32.mrf.mxu0
  %v897 = vadd.f32 %v152, %v896
  %v898 = vpop.f32.mrf.mxu0
  %v899 = vpop.f32.mrf.mxu0
  %v900 = vadd.f32 %v152, %v899
  %v901 = vpop.f32.mrf.mxu0
  %902 = vmatprep.mubr.bf16.mxu0 %v485
  %903 = vmatmul.mubr.bf16.gmra.mxu0 %v484
  %v904 = vpop.f32.mrf.mxu0
  %v905 = vadd.f32 %v152, %v904
  %v906 = vpop.f32.mrf.mxu0
  %v907 = vpop.f32.mrf.mxu0
  %v908 = vadd.f32 %v152, %v907
  %v909 = vpop.f32.mrf.mxu0
  %910 = vmatprep.mubr.bf16.mxu0 %v487
  %911 = vmatmul.mubr.bf16.gmra.mxu0 %v486
  %v912 = vpop.f32.mrf.mxu0
  %v913 = vadd.f32 %v152, %v912
  %v914 = vpop.f32.mrf.mxu0
  %v915 = vpop.f32.mrf.mxu0
  %v916 = vadd.f32 %v152, %v915
  %v917 = vpop.f32.mrf.mxu0
  %918 = vmatprep.mubr.bf16.mxu0 %v489
  %919 = vmatmul.mubr.bf16.gmra.mxu0 %v488
  %v920 = vpop.f32.mrf.mxu0
  %v921 = vadd.f32 %v152, %v920
  %v922 = vpop.f32.mrf.mxu0
  %v923 = vpop.f32.mrf.mxu0
  %v924 = vadd.f32 %v152, %v923
  %v925 = vpop.f32.mrf.mxu0
  %926 = vmatprep.mubr.bf16.mxu0 %v491
  %927 = vmatmul.mubr.bf16.gmra.mxu0 %v490
  %v928 = vpop.f32.mrf.mxu0
  %v929 = vadd.f32 %v152, %v928
  %v930 = vpop.f32.mrf.mxu0
  %v931 = vpop.f32.mrf.mxu0
  %v932 = vadd.f32 %v152, %v931
  %v933 = vpop.f32.mrf.mxu0
  %934 = vmatprep.mubr.bf16.mxu0 %v493
  %935 = vmatmul.mubr.bf16.gmra.mxu0 %v492
  %v936 = vpop.f32.mrf.mxu0
  %v937 = vadd.f32 %v152, %v936
  %v938 = vpop.f32.mrf.mxu0
  %v939 = vpop.f32.mrf.mxu0
  %v940 = vadd.f32 %v152, %v939
  %v941 = vpop.f32.mrf.mxu0
  %942 = vmatprep.mubr.bf16.mxu0 %v495
  %943 = vmatmul.mubr.bf16.gmra.mxu0 %v494
  %v944 = vpop.f32.mrf.mxu0
  %v945 = vadd.f32 %v152, %v944
  %v946 = vpop.f32.mrf.mxu0
  %v947 = vpop.f32.mrf.mxu0
  %v948 = vadd.f32 %v152, %v947
  %v949 = vpop.f32.mrf.mxu0
  %950 = vmatprep.mubr.bf16.mxu0 %v497
  %951 = vmatmul.mubr.bf16.gmra.mxu0 %v496
  %v952 = vpop.f32.mrf.mxu0
  %v953 = vadd.f32 %v152, %v952
  %v954 = vpop.f32.mrf.mxu0
  %v955 = vpop.f32.mrf.mxu0
  %v956 = vadd.f32 %v152, %v955
  %v957 = vpop.f32.mrf.mxu0
  %958 = vmatprep.mubr.bf16.mxu0 %v499
  %959 = vmatmul.mubr.bf16.gmra.mxu0 %v498
  %v960 = vpop.f32.mrf.mxu0
  %v961 = vadd.f32 %v152, %v960
  %v962 = vpop.f32.mrf.mxu0
  %v963 = vpop.f32.mrf.mxu0
  %v964 = vadd.f32 %v152, %v963
  %v965 = vpop.f32.mrf.mxu0
  %966 = vmatprep.mubr.bf16.mxu0 %v501
  %967 = vmatmul.mubr.bf16.gmra.mxu0 %v500
  %v968 = vpop.f32.mrf.mxu0
  %v969 = vadd.f32 %v152, %v968
  %v970 = vpop.f32.mrf.mxu0
  %v971 = vpop.f32.mrf.mxu0
  %v972 = vadd.f32 %v152, %v971
  %v973 = vpop.f32.mrf.mxu0
  %974 = vmatprep.mubr.bf16.mxu0 %v503
  %975 = vmatmul.mubr.bf16.gmra.mxu0 %v502
  %v976 = vpop.f32.mrf.mxu0
  %v977 = vadd.f32 %v152, %v976
  %v978 = vpop.f32.mrf.mxu0
  %v979 = vpop.f32.mrf.mxu0
  %v980 = vadd.f32 %v152, %v979
  %v981 = vpop.f32.mrf.mxu0
  %982 = vmatprep.mubr.bf16.mxu0 %v505
  %983 = vmatmul.mubr.bf16.gmra.mxu0 %v504
  %v984 = vpop.f32.mrf.mxu0
  %v985 = vadd.f32 %v152, %v984
  %v986 = vpop.f32.mrf.mxu0
  %v987 = vpop.f32.mrf.mxu0
  %v988 = vadd.f32 %v152, %v987
  %v989 = vpop.f32.mrf.mxu0
  %990 = vmatprep.mubr.bf16.mxu0 %v507
  %991 = vmatmul.mubr.bf16.gmra.mxu0 %v506
  %v992 = vpop.f32.mrf.mxu0
  %v993 = vadd.f32 %v152, %v992
  %v994 = vpop.f32.mrf.mxu0
  %v995 = vpop.f32.mrf.mxu0
  %v996 = vadd.f32 %v152, %v995
  %v997 = vpop.f32.mrf.mxu0
  %998 = vmatprep.mubr.bf16.mxu0 %v509
  %999 = vmatmul.mubr.bf16.gmra.mxu0 %v508
  %v1000 = vpop.f32.mrf.mxu0
  %v1001 = vadd.f32 %v152, %v1000
  %v1002 = vpop.f32.mrf.mxu0
  %v1003 = vpop.f32.mrf.mxu0
  %v1004 = vadd.f32 %v152, %v1003
  %v1005 = vpop.f32.mrf.mxu0
  %1006 = vmatprep.mubr.bf16.mxu0 %v511
  %1007 = vmatmul.mubr.bf16.gmra.mxu0 %v510
  %v1008 = vpop.f32.mrf.mxu0
  %v1009 = vadd.f32 %v152, %v1008
  %v1010 = vpop.f32.mrf.mxu0
  %v1011 = vpop.f32.mrf.mxu0
  %v1012 = vadd.f32 %v152, %v1011
  %v1013 = vpop.f32.mrf.mxu0
  %1014 = vmatprep.mubr.bf16.mxu0 %v513
  %1015 = vmatmul.mubr.bf16.gmra.mxu0 %v512
  %v1016 = vpop.f32.mrf.mxu0
  %v1017 = vadd.f32 %v152, %v1016
  %v1018 = vpop.f32.mrf.mxu0
  %v1019 = vpop.f32.mrf.mxu0
  %v1020 = vadd.f32 %v152, %v1019
  %v1021 = vpop.f32.mrf.mxu0
  %1022 = vmatprep.mubr.bf16.mxu0 %v515
  %1023 = vmatmul.mubr.bf16.gmra.mxu0 %v514
  %v1024 = vpop.f32.mrf.mxu0
  %v1025 = vadd.f32 %v152, %v1024
  %v1026 = vpop.f32.mrf.mxu0
  %v1027 = vpop.f32.mrf.mxu0
  %v1028 = vadd.f32 %v152, %v1027
  %v1029 = vpop.f32.mrf.mxu0
  %1030 = vmatprep.mubr.bf16.mxu0 %v517
  %1031 = vmatmul.mubr.bf16.gmra.mxu0 %v516
  %v1032 = vpop.f32.mrf.mxu0
  %v1033 = vadd.f32 %v152, %v1032
  %v1034 = vpop.f32.mrf.mxu0
  %v1035 = vpop.f32.mrf.mxu0
  %v1036 = vadd.f32 %v152, %v1035
  %v1037 = vpop.f32.mrf.mxu0
  %1038 = vmatprep.mubr.bf16.mxu0 %v519
  %1039 = vmatmul.mubr.bf16.gmra.mxu0 %v518
  %v1040 = vpop.f32.mrf.mxu0
  %v1041 = vadd.f32 %v152, %v1040
  %v1042 = vpop.f32.mrf.mxu0
  %v1043 = vpop.f32.mrf.mxu0
  %v1044 = vadd.f32 %v152, %v1043
  %v1045 = vpop.f32.mrf.mxu0
  %1046 = vmatprep.mubr.bf16.mxu0 %v521
  %1047 = vmatmul.mubr.bf16.gmra.mxu0 %v520
  %v1048 = vpop.f32.mrf.mxu0
  %v1049 = vadd.f32 %v152, %v1048
  %v1050 = vpop.f32.mrf.mxu0
  %v1051 = vpop.f32.mrf.mxu0
  %v1052 = vadd.f32 %v152, %v1051
  %v1053 = vpop.f32.mrf.mxu0
  %1054 = vmatprep.mubr.bf16.mxu0 %v523
  %1055 = vmatmul.mubr.bf16.gmra.mxu0 %v522
  %v1056 = vpop.f32.mrf.mxu0
  %v1057 = vadd.f32 %v152, %v1056
  %v1058 = vpop.f32.mrf.mxu0
  %v1059 = vpop.f32.mrf.mxu0
  %v1060 = vadd.f32 %v152, %v1059
  %v1061 = vpop.f32.mrf.mxu0
  %1062 = vmatprep.mubr.bf16.mxu0 %v525
  %1063 = vmatmul.mubr.bf16.gmra.mxu0 %v524
  %v1064 = vpop.f32.mrf.mxu0
  %v1065 = vadd.f32 %v152, %v1064
  %v1066 = vpop.f32.mrf.mxu0
  %v1067 = vpop.f32.mrf.mxu0
  %v1068 = vadd.f32 %v152, %v1067
  %v1069 = vpop.f32.mrf.mxu0
  %1070 = vmatprep.mubr.bf16.mxu0 %v527
  %1071 = vmatmul.mubr.bf16.gmra.mxu0 %v526
  %v1072 = vpop.f32.mrf.mxu0
  %v1073 = vadd.f32 %v152, %v1072
  %v1074 = vpop.f32.mrf.mxu0
  %v1075 = vpop.f32.mrf.mxu0
  %v1076 = vadd.f32 %v152, %v1075
  %v1077 = vpop.f32.mrf.mxu0
  %1078 = vmatprep.mubr.bf16.mxu0 %v529
  %1079 = vmatmul.mubr.bf16.gmra.mxu0 %v528
  %v1080 = vpop.f32.mrf.mxu0
  %v1081 = vadd.f32 %v152, %v1080
  %v1082 = vpop.f32.mrf.mxu0
  %v1083 = vpop.f32.mrf.mxu0
  %v1084 = vadd.f32 %v152, %v1083
  %v1085 = vpop.f32.mrf.mxu0
  %1086 = vmatprep.mubr.bf16.mxu0 %v531
  %1087 = vmatmul.mubr.bf16.gmra.mxu0 %v530
  %v1088 = vpop.f32.mrf.mxu0
  %v1089 = vadd.f32 %v152, %v1088
  %v1090 = vpop.f32.mrf.mxu0
  %v1091 = vpop.f32.mrf.mxu0
  %v1092 = vadd.f32 %v152, %v1091
  %v1093 = vpop.f32.mrf.mxu0
  %1094 = vmatprep.mubr.bf16.mxu0 %v533
  %1095 = vmatmul.mubr.bf16.gmra.mxu0 %v532
  %v1096 = vpop.f32.mrf.mxu0
  %v1097 = vadd.f32 %v152, %v1096
  %v1098 = vpop.f32.mrf.mxu0
  %v1099 = vpop.f32.mrf.mxu0
  %v1100 = vadd.f32 %v152, %v1099
  %v1101 = vpop.f32.mrf.mxu0
  %1102 = vmatprep.mubr.bf16.mxu0 %v535
  %1103 = vmatmul.mubr.bf16.gmra.mxu0 %v534
  %v1104 = vpop.f32.mrf.mxu0
  %v1105 = vadd.f32 %v152, %v1104
  %v1106 = vpop.f32.mrf.mxu0
  %v1107 = vpop.f32.mrf.mxu0
  %v1108 = vadd.f32 %v152, %v1107
  %v1109 = vpop.f32.mrf.mxu0
  %1110 = vmatprep.mubr.bf16.mxu0 %v537
  %1111 = vmatmul.mubr.bf16.gmra.mxu0 %v536
  %v1112 = vpop.f32.mrf.mxu0
  %v1113 = vadd.f32 %v152, %v1112
  %v1114 = vpop.f32.mrf.mxu0
  %v1115 = vpop.f32.mrf.mxu0
  %v1116 = vadd.f32 %v152, %v1115
  %v1117 = vpop.f32.mrf.mxu0
  %1118 = vmatprep.mubr.bf16.mxu0 %v539
  %1119 = vmatmul.mubr.bf16.gmra.mxu0 %v538
  %v1120 = vpop.f32.mrf.mxu0
  %v1121 = vadd.f32 %v152, %v1120
  %v1122 = vpop.f32.mrf.mxu0
  %v1123 = vpop.f32.mrf.mxu0
  %v1124 = vadd.f32 %v152, %v1123
  %v1125 = vpop.f32.mrf.mxu0
  %1126 = vmatprep.mubr.bf16.mxu0 %v541
  %1127 = vmatmul.mubr.bf16.gmra.mxu0 %v540
  %v1128 = vpop.f32.mrf.mxu0
  %v1129 = vadd.f32 %v152, %v1128
  %v1130 = vpop.f32.mrf.mxu0
  %v1131 = vpop.f32.mrf.mxu0
  %v1132 = vadd.f32 %v152, %v1131
  %v1133 = vpop.f32.mrf.mxu0
  %1134 = vmatprep.mubr.bf16.mxu0 %v543
  %1135 = vmatmul.mubr.bf16.gmra.mxu0 %v542
  %v1136 = vpop.f32.mrf.mxu0
  %v1137 = vadd.f32 %v152, %v1136
  %v1138 = vpop.f32.mrf.mxu0
  %v1139 = vpop.f32.mrf.mxu0
  %v1140 = vadd.f32 %v152, %v1139
  %v1141 = vpop.f32.mrf.mxu0
  %1142 = vmatprep.mubr.bf16.mxu0 %v545
  %1143 = vmatmul.mubr.bf16.gmra.mxu0 %v544
  %v1144 = vpop.f32.mrf.mxu0
  %v1145 = vadd.f32 %v152, %v1144
  %v1146 = vpop.f32.mrf.mxu0
  %v1147 = vpop.f32.mrf.mxu0
  %v1148 = vadd.f32 %v152, %v1147
  %v1149 = vpop.f32.mrf.mxu0
  %1150 = vmatprep.mubr.bf16.mxu0 %v547
  %1151 = vmatmul.mubr.bf16.gmra.mxu0 %v546
  %v1152 = vpop.f32.mrf.mxu0
  %v1153 = vadd.f32 %v152, %v1152
  %v1154 = vpop.f32.mrf.mxu0
  %v1155 = vpop.f32.mrf.mxu0
  %v1156 = vadd.f32 %v152, %v1155
  %v1157 = vpop.f32.mrf.mxu0
  %1158 = vmatprep.mubr.bf16.mxu0 %v549
  %1159 = vmatmul.mubr.bf16.gmra.mxu0 %v548
  %v1160 = vpop.f32.mrf.mxu0
  %v1161 = vadd.f32 %v152, %v1160
  %v1162 = vpop.f32.mrf.mxu0
  %v1163 = vpop.f32.mrf.mxu0
  %v1164 = vadd.f32 %v152, %v1163
  %v1165 = vpop.f32.mrf.mxu0
  %1166 = vmatprep.mubr.bf16.mxu0 %v551
  %1167 = vmatmul.mubr.bf16.gmra.mxu0 %v550
  %v1168 = vpop.f32.mrf.mxu0
  %v1169 = vadd.f32 %v152, %v1168
  %v1170 = vpop.f32.mrf.mxu0
  %v1171 = vpop.f32.mrf.mxu0
  %v1172 = vadd.f32 %v152, %v1171
  %v1173 = vpop.f32.mrf.mxu0
  %1174 = vmatprep.mubr.bf16.mxu0 %v553
  %1175 = vmatmul.mubr.bf16.gmra.mxu0 %v552
  %v1176 = vpop.f32.mrf.mxu0
  %v1177 = vadd.f32 %v152, %v1176
  %v1178 = vpop.f32.mrf.mxu0
  %v1179 = vpop.f32.mrf.mxu0
  %v1180 = vadd.f32 %v152, %v1179
  %v1181 = vpop.f32.mrf.mxu0
  %1182 = vdwg.mxu0
  %v1183 = vmax.f32 %v785, 0.0
  %v1184 = vmax.f32 %v788, 0.0
  %v1185 = vmax.f32 %v793, 0.0
  %v1186 = vmax.f32 %v796, 0.0
  %v1187 = vmax.f32 %v801, 0.0
  %v1188 = vmax.f32 %v804, 0.0
  %v1189 = vmax.f32 %v809, 0.0
  %v1190 = vmax.f32 %v812, 0.0
  %v1191 = vmax.f32 %v817, 0.0
  %v1192 = vmax.f32 %v820, 0.0
  %v1193 = vmax.f32 %v825, 0.0
  %v1194 = vmax.f32 %v828, 0.0
  %v1195 = vmax.f32 %v833, 0.0
  %v1196 = vmax.f32 %v836, 0.0
  %v1197 = vmax.f32 %v841, 0.0
  %v1198 = vmax.f32 %v844, 0.0
  %v1199 = vmax.f32 %v849, 0.0
  %v1200 = vmax.f32 %v852, 0.0
  %v1201 = vmax.f32 %v857, 0.0
  %v1202 = vmax.f32 %v860, 0.0
  %v1203 = vmax.f32 %v865, 0.0
  %v1204 = vmax.f32 %v868, 0.0
  %v1205 = vmax.f32 %v873, 0.0
  %v1206 = vmax.f32 %v876, 0.0
  %v1207 = vmax.f32 %v881, 0.0
  %v1208 = vmax.f32 %v884, 0.0
  %v1209 = vmax.f32 %v889, 0.0
  %v1210 = vmax.f32 %v892, 0.0
  %v1211 = vmax.f32 %v897, 0.0
  %v1212 = vmax.f32 %v900, 0.0
  %v1213 = vmax.f32 %v905, 0.0
  %v1214 = vmax.f32 %v908, 0.0
  %v1215 = vmax.f32 %v913, 0.0
  %v1216 = vmax.f32 %v916, 0.0
  %v1217 = vmax.f32 %v921, 0.0
  %v1218 = vmax.f32 %v924, 0.0
  %v1219 = vmax.f32 %v929, 0.0
  %v1220 = vmax.f32 %v932, 0.0
  %v1221 = vmax.f32 %v937, 0.0
  %v1222 = vmax.f32 %v940, 0.0
  %v1223 = vmax.f32 %v945, 0.0
  %v1224 = vmax.f32 %v948, 0.0
  %v1225 = vmax.f32 %v953, 0.0
  %v1226 = vmax.f32 %v956, 0.0
  %v1227 = vmax.f32 %v961, 0.0
  %v1228 = vmax.f32 %v964, 0.0
  %v1229 = vmax.f32 %v969, 0.0
  %v1230 = vmax.f32 %v972, 0.0
  %v1231 = vmax.f32 %v977, 0.0
  %v1232 = vmax.f32 %v980, 0.0
  %v1233 = vmax.f32 %v985, 0.0
  %v1234 = vmax.f32 %v988, 0.0
  %v1235 = vmax.f32 %v993, 0.0
  %v1236 = vmax.f32 %v996, 0.0
  %v1237 = vmax.f32 %v1001, 0.0
  %v1238 = vmax.f32 %v1004, 0.0
  %v1239 = vmax.f32 %v1009, 0.0
  %v1240 = vmax.f32 %v1012, 0.0
  %v1241 = vmax.f32 %v1017, 0.0
  %v1242 = vmax.f32 %v1020, 0.0
  %v1243 = vmax.f32 %v1025, 0.0
  %v1244 = vmax.f32 %v1028, 0.0
  %v1245 = vmax.f32 %v1033, 0.0
  %v1246 = vmax.f32 %v1036, 0.0
  %v1247 = vmax.f32 %v1041, 0.0
  %v1248 = vmax.f32 %v1044, 0.0
  %v1249 = vmax.f32 %v1049, 0.0
  %v1250 = vmax.f32 %v1052, 0.0
  %v1251 = vmax.f32 %v1057, 0.0
  %v1252 = vmax.f32 %v1060, 0.0
  %v1253 = vmax.f32 %v1065, 0.0
  %v1254 = vmax.f32 %v1068, 0.0
  %v1255 = vmax.f32 %v1073, 0.0
  %v1256 = vmax.f32 %v1076, 0.0
  %v1257 = vmax.f32 %v1081, 0.0
  %v1258 = vmax.f32 %v1084, 0.0
  %v1259 = vmax.f32 %v1089, 0.0
  %v1260 = vmax.f32 %v1092, 0.0
  %v1261 = vmax.f32 %v1097, 0.0
  %v1262 = vmax.f32 %v1100, 0.0
  %v1263 = vmax.f32 %v1105, 0.0
  %v1264 = vmax.f32 %v1108, 0.0
  %v1265 = vmax.f32 %v1113, 0.0
  %v1266 = vmax.f32 %v1116, 0.0
  %v1267 = vmax.f32 %v1121, 0.0
  %v1268 = vmax.f32 %v1124, 0.0
  %v1269 = vmax.f32 %v1129, 0.0
  %v1270 = vmax.f32 %v1132, 0.0
  %v1271 = vmax.f32 %v1137, 0.0
  %v1272 = vmax.f32 %v1140, 0.0
  %v1273 = vmax.f32 %v1145, 0.0
  %v1274 = vmax.f32 %v1148, 0.0
  %v1275 = vmax.f32 %v1153, 0.0
  %v1276 = vmax.f32 %v1156, 0.0
  %v1277 = vmax.f32 %v1161, 0.0
  %v1278 = vmax.f32 %v1164, 0.0
  %v1279 = vmax.f32 %v1169, 0.0
  %v1280 = vmax.f32 %v1172, 0.0
  %v1281 = vmax.f32 %v1177, 0.0
  %v1282 = vmax.f32 %v1180, 0.0
  %v1283 = vpack.c.bf16 %v1184, %v1183
  %v1284 = vpack.c.bf16 %v1186, %v1185
  %v1285 = vpack.c.bf16 %v1188, %v1187
  %v1286 = vpack.c.bf16 %v1190, %v1189
  %v1287 = vpack.c.bf16 %v1192, %v1191
  %v1288 = vpack.c.bf16 %v1194, %v1193
  %v1289 = vpack.c.bf16 %v1196, %v1195
  %v1290 = vpack.c.bf16 %v1198, %v1197
  %v1291 = vpack.c.bf16 %v1200, %v1199
  %v1292 = vpack.c.bf16 %v1202, %v1201
  %v1293 = vpack.c.bf16 %v1204, %v1203
  %v1294 = vpack.c.bf16 %v1206, %v1205
  %v1295 = vpack.c.bf16 %v1208, %v1207
  %v1296 = vpack.c.bf16 %v1210, %v1209
  %v1297 = vpack.c.bf16 %v1212, %v1211
  %v1298 = vpack.c.bf16 %v1214, %v1213
  %v1299 = vpack.c.bf16 %v1216, %v1215
  %v1300 = vpack.c.bf16 %v1218, %v1217
  %v1301 = vpack.c.bf16 %v1220, %v1219
  %v1302 = vpack.c.bf16 %v1222, %v1221
  %v1303 = vpack.c.bf16 %v1224, %v1223
  %v1304 = vpack.c.bf16 %v1226, %v1225
  %v1305 = vpack.c.bf16 %v1228, %v1227
  %v1306 = vpack.c.bf16 %v1230, %v1229
  %v1307 = vpack.c.bf16 %v1232, %v1231
  %v1308 = vpack.c.bf16 %v1234, %v1233
  %v1309 = vpack.c.bf16 %v1236, %v1235
  %v1310 = vpack.c.bf16 %v1238, %v1237
  %v1311 = vpack.c.bf16 %v1240, %v1239
  %v1312 = vpack.c.bf16 %v1242, %v1241
  %v1313 = vpack.c.bf16 %v1244, %v1243
  %v1314 = vpack.c.bf16 %v1246, %v1245
  %v1315 = vpack.c.bf16 %v1248, %v1247
  %v1316 = vpack.c.bf16 %v1250, %v1249
  %v1317 = vpack.c.bf16 %v1252, %v1251
  %v1318 = vpack.c.bf16 %v1254, %v1253
  %v1319 = vpack.c.bf16 %v1256, %v1255
  %v1320 = vpack.c.bf16 %v1258, %v1257
  %v1321 = vpack.c.bf16 %v1260, %v1259
  %v1322 = vpack.c.bf16 %v1262, %v1261
  %v1323 = vpack.c.bf16 %v1264, %v1263
  %v1324 = vpack.c.bf16 %v1266, %v1265
  %v1325 = vpack.c.bf16 %v1268, %v1267
  %v1326 = vpack.c.bf16 %v1270, %v1269
  %v1327 = vpack.c.bf16 %v1272, %v1271
  %v1328 = vpack.c.bf16 %v1274, %v1273
  %v1329 = vpack.c.bf16 %v1276, %v1275
  %v1330 = vpack.c.bf16 %v1278, %v1277
  %v1331 = vpack.c.bf16 %v1280, %v1279
  %v1332 = vpack.c.bf16 %v1282, %v1281
  %v1383 = vunpack.c.l.b16 %v1283
  %v1384 = vunpack.c.h.b16 %v1283
  %v1385 = vunpack.c.l.b16 %v1284
  %v1386 = vunpack.c.h.b16 %v1284
  %v1387 = vunpack.c.l.b16 %v1285
  %v1388 = vunpack.c.h.b16 %v1285
  %v1389 = vunpack.c.l.b16 %v1286
  %v1390 = vunpack.c.h.b16 %v1286
  %v1391 = vunpack.c.l.b16 %v1287
  %v1392 = vunpack.c.h.b16 %v1287
  %v1393 = vunpack.c.l.b16 %v1288
  %v1394 = vunpack.c.h.b16 %v1288
  %v1395 = vunpack.c.l.b16 %v1289
  %v1396 = vunpack.c.h.b16 %v1289
  %v1397 = vunpack.c.l.b16 %v1290
  %v1398 = vunpack.c.h.b16 %v1290
  %v1399 = vunpack.c.l.b16 %v1291
  %v1400 = vunpack.c.h.b16 %v1291
  %v1401 = vunpack.c.l.b16 %v1292
  %v1402 = vunpack.c.h.b16 %v1292
  %v1403 = vunpack.c.l.b16 %v1293
  %v1404 = vunpack.c.h.b16 %v1293
  %v1405 = vunpack.c.l.b16 %v1294
  %v1406 = vunpack.c.h.b16 %v1294
  %v1407 = vunpack.c.l.b16 %v1295
  %v1408 = vunpack.c.h.b16 %v1295
  %v1409 = vunpack.c.l.b16 %v1296
  %v1410 = vunpack.c.h.b16 %v1296
  %v1411 = vunpack.c.l.b16 %v1297
  %v1412 = vunpack.c.h.b16 %v1297
  %v1413 = vunpack.c.l.b16 %v1298
  %v1414 = vunpack.c.h.b16 %v1298
  %v1415 = vunpack.c.l.b16 %v1299
  %v1416 = vunpack.c.h.b16 %v1299
  %v1417 = vunpack.c.l.b16 %v1300
  %v1418 = vunpack.c.h.b16 %v1300
  %v1419 = vunpack.c.l.b16 %v1301
  %v1420 = vunpack.c.h.b16 %v1301
  %v1421 = vunpack.c.l.b16 %v1302
  %v1422 = vunpack.c.h.b16 %v1302
  %v1423 = vunpack.c.l.b16 %v1303
  %v1424 = vunpack.c.h.b16 %v1303
  %v1425 = vunpack.c.l.b16 %v1304
  %v1426 = vunpack.c.h.b16 %v1304
  %v1427 = vunpack.c.l.b16 %v1305
  %v1428 = vunpack.c.h.b16 %v1305
  %v1429 = vunpack.c.l.b16 %v1306
  %v1430 = vunpack.c.h.b16 %v1306
  %v1431 = vunpack.c.l.b16 %v1307
  %v1432 = vunpack.c.h.b16 %v1307
  %v1433 = vunpack.c.l.b16 %v1308
  %v1434 = vunpack.c.h.b16 %v1308
  %v1435 = vunpack.c.l.b16 %v1309
  %v1436 = vunpack.c.h.b16 %v1309
  %v1437 = vunpack.c.l.b16 %v1310
  %v1438 = vunpack.c.h.b16 %v1310
  %v1439 = vunpack.c.l.b16 %v1311
  %v1440 = vunpack.c.h.b16 %v1311
  %v1441 = vunpack.c.l.b16 %v1312
  %v1442 = vunpack.c.h.b16 %v1312
  %v1443 = vunpack.c.l.b16 %v1313
  %v1444 = vunpack.c.h.b16 %v1313
  %v1445 = vunpack.c.l.b16 %v1314
  %v1446 = vunpack.c.h.b16 %v1314
  %v1447 = vunpack.c.l.b16 %v1315
  %v1448 = vunpack.c.h.b16 %v1315
  %v1449 = vunpack.c.l.b16 %v1316
  %v1450 = vunpack.c.h.b16 %v1316
  %v1451 = vunpack.c.l.b16 %v1317
  %v1452 = vunpack.c.h.b16 %v1317
  %v1453 = vunpack.c.l.b16 %v1318
  %v1454 = vunpack.c.h.b16 %v1318
  %v1455 = vunpack.c.l.b16 %v1319
  %v1456 = vunpack.c.h.b16 %v1319
  %v1457 = vunpack.c.l.b16 %v1320
  %v1458 = vunpack.c.h.b16 %v1320
  %v1459 = vunpack.c.l.b16 %v1321
  %v1460 = vunpack.c.h.b16 %v1321
  %v1461 = vunpack.c.l.b16 %v1322
  %v1462 = vunpack.c.h.b16 %v1322
  %v1463 = vunpack.c.l.b16 %v1323
  %v1464 = vunpack.c.h.b16 %v1323
  %v1465 = vunpack.c.l.b16 %v1324
  %v1466 = vunpack.c.h.b16 %v1324
  %v1467 = vunpack.c.l.b16 %v1325
  %v1468 = vunpack.c.h.b16 %v1325
  %v1469 = vunpack.c.l.b16 %v1326
  %v1470 = vunpack.c.h.b16 %v1326
  %v1471 = vunpack.c.l.b16 %v1327
  %v1472 = vunpack.c.h.b16 %v1327
  %v1473 = vunpack.c.l.b16 %v1328
  %v1474 = vunpack.c.h.b16 %v1328
  %v1475 = vunpack.c.l.b16 %v1329
  %v1476 = vunpack.c.h.b16 %v1329
  %v1477 = vunpack.c.l.b16 %v1330
  %v1478 = vunpack.c.h.b16 %v1330
  %v1479 = vunpack.c.l.b16 %v1331
  %v1480 = vunpack.c.h.b16 %v1331
  %v1481 = vunpack.c.l.b16 %v1332
  %v1482 = vunpack.c.h.b16 %v1332
  %v1483 = vpack.c.b16 %v1383, %v1383
  %v1484 = vpack.c.b16 %v1384, %v1384
  %v1485 = vpack.c.b16 %v1385, %v1385
  %v1486 = vpack.c.b16 %v1386, %v1386
  %v1487 = vpack.c.b16 %v1387, %v1387
  %v1488 = vpack.c.b16 %v1388, %v1388
  %v1489 = vpack.c.b16 %v1389, %v1389
  %v1490 = vpack.c.b16 %v1390, %v1390
  %v1491 = vpack.c.b16 %v1391, %v1391
  %v1492 = vpack.c.b16 %v1392, %v1392
  %v1493 = vpack.c.b16 %v1393, %v1393
  %v1494 = vpack.c.b16 %v1394, %v1394
  %v1495 = vpack.c.b16 %v1395, %v1395
  %v1496 = vpack.c.b16 %v1396, %v1396
  %v1497 = vpack.c.b16 %v1397, %v1397
  %v1498 = vpack.c.b16 %v1398, %v1398
  %v1499 = vpack.c.b16 %v1399, %v1399
  %v1500 = vpack.c.b16 %v1400, %v1400
  %v1501 = vpack.c.b16 %v1401, %v1401
  %v1502 = vpack.c.b16 %v1402, %v1402
  %v1503 = vpack.c.b16 %v1403, %v1403
  %v1504 = vpack.c.b16 %v1404, %v1404
  %v1505 = vpack.c.b16 %v1405, %v1405
  %v1506 = vpack.c.b16 %v1406, %v1406
  %v1507 = vpack.c.b16 %v1407, %v1407
  %v1508 = vpack.c.b16 %v1408, %v1408
  %v1509 = vpack.c.b16 %v1409, %v1409
  %v1510 = vpack.c.b16 %v1410, %v1410
  %v1511 = vpack.c.b16 %v1411, %v1411
  %v1512 = vpack.c.b16 %v1412, %v1412
  %v1513 = vpack.c.b16 %v1413, %v1413
  %v1514 = vpack.c.b16 %v1414, %v1414
  %v1515 = vpack.c.b16 %v1415, %v1415
  %v1516 = vpack.c.b16 %v1416, %v1416
  %v1517 = vpack.c.b16 %v1417, %v1417
  %v1518 = vpack.c.b16 %v1418, %v1418
  %v1519 = vpack.c.b16 %v1419, %v1419
  %v1520 = vpack.c.b16 %v1420, %v1420
  %v1521 = vpack.c.b16 %v1421, %v1421
  %v1522 = vpack.c.b16 %v1422, %v1422
  %v1523 = vpack.c.b16 %v1423, %v1423
  %v1524 = vpack.c.b16 %v1424, %v1424
  %v1525 = vpack.c.b16 %v1425, %v1425
  %v1526 = vpack.c.b16 %v1426, %v1426
  %v1527 = vpack.c.b16 %v1427, %v1427
  %v1528 = vpack.c.b16 %v1428, %v1428
  %v1529 = vpack.c.b16 %v1429, %v1429
  %v1530 = vpack.c.b16 %v1430, %v1430
  %v1531 = vpack.c.b16 %v1431, %v1431
  %v1532 = vpack.c.b16 %v1432, %v1432
  %v1533 = vpack.c.b16 %v1433, %v1433
  %v1534 = vpack.c.b16 %v1434, %v1434
  %v1535 = vpack.c.b16 %v1435, %v1435
  %v1536 = vpack.c.b16 %v1436, %v1436
  %v1537 = vpack.c.b16 %v1437, %v1437
  %v1538 = vpack.c.b16 %v1438, %v1438
  %v1539 = vpack.c.b16 %v1439, %v1439
  %v1540 = vpack.c.b16 %v1440, %v1440
  %v1541 = vpack.c.b16 %v1441, %v1441
  %v1542 = vpack.c.b16 %v1442, %v1442
  %v1543 = vpack.c.b16 %v1443, %v1443
  %v1544 = vpack.c.b16 %v1444, %v1444
  %v1545 = vpack.c.b16 %v1445, %v1445
  %v1546 = vpack.c.b16 %v1446, %v1446
  %v1547 = vpack.c.b16 %v1447, %v1447
  %v1548 = vpack.c.b16 %v1448, %v1448
  %v1549 = vpack.c.b16 %v1449, %v1449
  %v1550 = vpack.c.b16 %v1450, %v1450
  %v1551 = vpack.c.b16 %v1451, %v1451
  %v1552 = vpack.c.b16 %v1452, %v1452
  %v1553 = vpack.c.b16 %v1453, %v1453
  %v1554 = vpack.c.b16 %v1454, %v1454
  %v1555 = vpack.c.b16 %v1455, %v1455
  %v1556 = vpack.c.b16 %v1456, %v1456
  %v1557 = vpack.c.b16 %v1457, %v1457
  %v1558 = vpack.c.b16 %v1458, %v1458
  %v1559 = vpack.c.b16 %v1459, %v1459
  %v1560 = vpack.c.b16 %v1460, %v1460
  %v1561 = vpack.c.b16 %v1461, %v1461
  %v1562 = vpack.c.b16 %v1462, %v1462
  %v1563 = vpack.c.b16 %v1463, %v1463
  %v1564 = vpack.c.b16 %v1464, %v1464
  %v1565 = vpack.c.b16 %v1465, %v1465
  %v1566 = vpack.c.b16 %v1466, %v1466
  %v1567 = vpack.c.b16 %v1467, %v1467
  %v1568 = vpack.c.b16 %v1468, %v1468
  %v1569 = vpack.c.b16 %v1469, %v1469
  %v1570 = vpack.c.b16 %v1470, %v1470
  %v1571 = vpack.c.b16 %v1471, %v1471
  %v1572 = vpack.c.b16 %v1472, %v1472
  %v1573 = vpack.c.b16 %v1473, %v1473
  %v1574 = vpack.c.b16 %v1474, %v1474
  %v1575 = vpack.c.b16 %v1475, %v1475
  %v1576 = vpack.c.b16 %v1476, %v1476
  %v1577 = vpack.c.b16 %v1477, %v1477
  %v1578 = vpack.c.b16 %v1478, %v1478
  %v1579 = vpack.c.b16 %v1479, %v1479
  %v1580 = vpack.c.b16 %v1480, %v1480
  %v1581 = vpack.c.b16 %v1481, %v1481
  %v1582 = vpack.c.b16 %v1482, %v1482
  %vm1683 = vcmask 257024
  %1684 = vst.msk [vmem:[%s3] sm:$0xf] %vm1683, %v1483
  %1685 = vst.msk [vmem:[%s3 + $0x4] sm:$0xf] %vm1683, %v1484
  %1686 = vst.msk [vmem:[%s3 + $0x8] sm:$0xf] %vm1683, %v1485
  %1687 = vst.msk [vmem:[%s3 + $0xc] sm:$0xf] %vm1683, %v1486
  %1688 = vst.msk [vmem:[%s3 + $0x10] sm:$0xf] %vm1683, %v1487
  %1689 = vst.msk [vmem:[%s3 + $0x14] sm:$0xf] %vm1683, %v1488
  %1690 = vst.msk [vmem:[%s3 + $0x18] sm:$0xf] %vm1683, %v1489
  %1691 = vst.msk [vmem:[%s3 + $0x1c] sm:$0xf] %vm1683, %v1490
  %1692 = vst.msk [vmem:[%s3 + $0x20] sm:$0xf] %vm1683, %v1491
  %1693 = vst.msk [vmem:[%s3 + $0x24] sm:$0xf] %vm1683, %v1492
  %1694 = vst.msk [vmem:[%s3 + $0x28] sm:$0xf] %vm1683, %v1493
  %1695 = vst.msk [vmem:[%s3 + $0x2c] sm:$0xf] %vm1683, %v1494
  %1696 = vst.msk [vmem:[%s3 + $0x30] sm:$0xf] %vm1683, %v1495
  %1697 = vst.msk [vmem:[%s3 + $0x34] sm:$0xf] %vm1683, %v1496
  %1698 = vst.msk [vmem:[%s3 + $0x38] sm:$0xf] %vm1683, %v1497
  %1699 = vst.msk [vmem:[%s3 + $0x3c] sm:$0xf] %vm1683, %v1498
  %1700 = vst.msk [vmem:[%s3 + $0x40] sm:$0xf] %vm1683, %v1499
  %1701 = vst.msk [vmem:[%s3 + $0x44] sm:$0xf] %vm1683, %v1500
  %1702 = vst.msk [vmem:[%s3 + $0x48] sm:$0xf] %vm1683, %v1501
  %1703 = vst.msk [vmem:[%s3 + $0x4c] sm:$0xf] %vm1683, %v1502
  %1704 = vst.msk [vmem:[%s3 + $0x50] sm:$0xf] %vm1683, %v1503
  %1705 = vst.msk [vmem:[%s3 + $0x54] sm:$0xf] %vm1683, %v1504
  %1706 = vst.msk [vmem:[%s3 + $0x58] sm:$0xf] %vm1683, %v1505
  %1707 = vst.msk [vmem:[%s3 + $0x5c] sm:$0xf] %vm1683, %v1506
  %1708 = vst.msk [vmem:[%s3 + $0x60] sm:$0xf] %vm1683, %v1507
  %1709 = vst.msk [vmem:[%s3 + $0x64] sm:$0xf] %vm1683, %v1508
  %1710 = vst.msk [vmem:[%s3 + $0x68] sm:$0xf] %vm1683, %v1509
  %1711 = vst.msk [vmem:[%s3 + $0x6c] sm:$0xf] %vm1683, %v1510
  %1712 = vst.msk [vmem:[%s3 + $0x70] sm:$0xf] %vm1683, %v1511
  %1713 = vst.msk [vmem:[%s3 + $0x74] sm:$0xf] %vm1683, %v1512
  %1714 = vst.msk [vmem:[%s3 + $0x78] sm:$0xf] %vm1683, %v1513
  %1715 = vst.msk [vmem:[%s3 + $0x7c] sm:$0xf] %vm1683, %v1514
  %1716 = vst.msk [vmem:[%s3 + $0x80] sm:$0xf] %vm1683, %v1515
  %1717 = vst.msk [vmem:[%s3 + $0x84] sm:$0xf] %vm1683, %v1516
  %1718 = vst.msk [vmem:[%s3 + $0x88] sm:$0xf] %vm1683, %v1517
  %1719 = vst.msk [vmem:[%s3 + $0x8c] sm:$0xf] %vm1683, %v1518
  %1720 = vst.msk [vmem:[%s3 + $0x90] sm:$0xf] %vm1683, %v1519
  %1721 = vst.msk [vmem:[%s3 + $0x94] sm:$0xf] %vm1683, %v1520
  %1722 = vst.msk [vmem:[%s3 + $0x98] sm:$0xf] %vm1683, %v1521
  %1723 = vst.msk [vmem:[%s3 + $0x9c] sm:$0xf] %vm1683, %v1522
  %1724 = vst.msk [vmem:[%s3 + $0xa0] sm:$0xf] %vm1683, %v1523
  %1725 = vst.msk [vmem:[%s3 + $0xa4] sm:$0xf] %vm1683, %v1524
  %1726 = vst.msk [vmem:[%s3 + $0xa8] sm:$0xf] %vm1683, %v1525
  %1727 = vst.msk [vmem:[%s3 + $0xac] sm:$0xf] %vm1683, %v1526
  %1728 = vst.msk [vmem:[%s3 + $0xb0] sm:$0xf] %vm1683, %v1527
  %1729 = vst.msk [vmem:[%s3 + $0xb4] sm:$0xf] %vm1683, %v1528
  %1730 = vst.msk [vmem:[%s3 + $0xb8] sm:$0xf] %vm1683, %v1529
  %1731 = vst.msk [vmem:[%s3 + $0xbc] sm:$0xf] %vm1683, %v1530
  %1732 = vst.msk [vmem:[%s3 + $0xc0] sm:$0xf] %vm1683, %v1531
  %1733 = vst.msk [vmem:[%s3 + $0xc4] sm:$0xf] %vm1683, %v1532
  %1734 = vst.msk [vmem:[%s3 + $0xc8] sm:$0xf] %vm1683, %v1533
  %1735 = vst.msk [vmem:[%s3 + $0xcc] sm:$0xf] %vm1683, %v1534
  %1736 = vst.msk [vmem:[%s3 + $0xd0] sm:$0xf] %vm1683, %v1535
  %1737 = vst.msk [vmem:[%s3 + $0xd4] sm:$0xf] %vm1683, %v1536
  %1738 = vst.msk [vmem:[%s3 + $0xd8] sm:$0xf] %vm1683, %v1537
  %1739 = vst.msk [vmem:[%s3 + $0xdc] sm:$0xf] %vm1683, %v1538
  %1740 = vst.msk [vmem:[%s3 + $0xe0] sm:$0xf] %vm1683, %v1539
  %1741 = vst.msk [vmem:[%s3 + $0xe4] sm:$0xf] %vm1683, %v1540
  %1742 = vst.msk [vmem:[%s3 + $0xe8] sm:$0xf] %vm1683, %v1541
  %1743 = vst.msk [vmem:[%s3 + $0xec] sm:$0xf] %vm1683, %v1542
  %1744 = vst.msk [vmem:[%s3 + $0xf0] sm:$0xf] %vm1683, %v1543
  %1745 = vst.msk [vmem:[%s3 + $0xf4] sm:$0xf] %vm1683, %v1544
  %1746 = vst.msk [vmem:[%s3 + $0xf8] sm:$0xf] %vm1683, %v1545
  %1747 = vst.msk [vmem:[%s3 + $0xfc] sm:$0xf] %vm1683, %v1546
  %1748 = vst.msk [vmem:[%s3 + $0x100] sm:$0xf] %vm1683, %v1547
  %1749 = vst.msk [vmem:[%s3 + $0x104] sm:$0xf] %vm1683, %v1548
  %1750 = vst.msk [vmem:[%s3 + $0x108] sm:$0xf] %vm1683, %v1549
  %1751 = vst.msk [vmem:[%s3 + $0x10c] sm:$0xf] %vm1683, %v1550
  %1752 = vst.msk [vmem:[%s3 + $0x110] sm:$0xf] %vm1683, %v1551
  %1753 = vst.msk [vmem:[%s3 + $0x114] sm:$0xf] %vm1683, %v1552
  %1754 = vst.msk [vmem:[%s3 + $0x118] sm:$0xf] %vm1683, %v1553
  %1755 = vst.msk [vmem:[%s3 + $0x11c] sm:$0xf] %vm1683, %v1554
  %1756 = vst.msk [vmem:[%s3 + $0x120] sm:$0xf] %vm1683, %v1555
  %1757 = vst.msk [vmem:[%s3 + $0x124] sm:$0xf] %vm1683, %v1556
  %1758 = vst.msk [vmem:[%s3 + $0x128] sm:$0xf] %vm1683, %v1557
  %1759 = vst.msk [vmem:[%s3 + $0x12c] sm:$0xf] %vm1683, %v1558
  %1760 = vst.msk [vmem:[%s3 + $0x130] sm:$0xf] %vm1683, %v1559
  %1761 = vst.msk [vmem:[%s3 + $0x134] sm:$0xf] %vm1683, %v1560
  %1762 = vst.msk [vmem:[%s3 + $0x138] sm:$0xf] %vm1683, %v1561
  %1763 = vst.msk [vmem:[%s3 + $0x13c] sm:$0xf] %vm1683, %v1562
  %1764 = vst.msk [vmem:[%s3 + $0x140] sm:$0xf] %vm1683, %v1563
  %1765 = vst.msk [vmem:[%s3 + $0x144] sm:$0xf] %vm1683, %v1564
  %1766 = vst.msk [vmem:[%s3 + $0x148] sm:$0xf] %vm1683, %v1565
  %1767 = vst.msk [vmem:[%s3 + $0x14c] sm:$0xf] %vm1683, %v1566
  %1768 = vst.msk [vmem:[%s3 + $0x150] sm:$0xf] %vm1683, %v1567
  %1769 = vst.msk [vmem:[%s3 + $0x154] sm:$0xf] %vm1683, %v1568
  %1770 = vst.msk [vmem:[%s3 + $0x158] sm:$0xf] %vm1683, %v1569
  %1771 = vst.msk [vmem:[%s3 + $0x15c] sm:$0xf] %vm1683, %v1570
  %1772 = vst.msk [vmem:[%s3 + $0x160] sm:$0xf] %vm1683, %v1571
  %1773 = vst.msk [vmem:[%s3 + $0x164] sm:$0xf] %vm1683, %v1572
  %1774 = vst.msk [vmem:[%s3 + $0x168] sm:$0xf] %vm1683, %v1573
  %1775 = vst.msk [vmem:[%s3 + $0x16c] sm:$0xf] %vm1683, %v1574
  %1776 = vst.msk [vmem:[%s3 + $0x170] sm:$0xf] %vm1683, %v1575
  %1777 = vst.msk [vmem:[%s3 + $0x174] sm:$0xf] %vm1683, %v1576
  %1778 = vst.msk [vmem:[%s3 + $0x178] sm:$0xf] %vm1683, %v1577
  %1779 = vst.msk [vmem:[%s3 + $0x17c] sm:$0xf] %vm1683, %v1578
  %1780 = vst.msk [vmem:[%s3 + $0x180] sm:$0xf] %vm1683, %v1579
  %1781 = vst.msk [vmem:[%s3 + $0x184] sm:$0xf] %vm1683, %v1580
  %1782 = vst.msk [vmem:[%s3 + $0x188] sm:$0xf] %vm1683, %v1581
  %1783 = vst.msk [vmem:[%s3 + $0x18c] sm:$0xf] %vm1683, %v1582
  // Predicated region
  $region14: #{cnn_base_forward.4} parent=0 // pred_check
    _
  $region15: #{cnn_base_forward.4} parent=0 // pred_check_branch
    %1785 = sbr.rel (0) target = $region17
  $region16: #{cnn_base_forward.4} parent=0 // pred_region
    _
  $region17: #{cnn_base_forward.4} parent=0 // pred_fallthru
    _
  // Predicated region
  $region18: #{cnn_base_forward.4} parent=0 // pred_check
    _
  $region19: #{cnn_base_forward.4} parent=0 // pred_check_branch
    %1787 = sbr.rel (0) target = $region21
  $region20: #{cnn_base_forward.4} parent=0 // pred_region
    _
  $region21: #{cnn_base_forward.4} parent=0 // pred_fallthru
    _

// kernel: cnn_base_forward.5
$region0: #{cnn_base_forward.5}
  #allocation0 [shape = 'u32[]', space=smem, size = 0x4, offset = 0x4, fixed_abs, tag = 'smem constant byte address 0x4 - core index']
  #allocation1 [shape = 'u32[144,128]{1,0:T(1,128)}', space=vmem, size = 0x12000, scoped, tag = 'internal scratch']
  %s0 = inlined_call_operand.vmem [shape: bf16[162,512], index: 0, kind: input, shape index: {}]
  %s1 = inlined_call_operand.vmem [shape: bf16[512,64], index: 1, kind: input, shape index: {}]
  %s2 = inlined_call_operand.vmem [shape: f32[1,64], index: 2, kind: input, shape index: {}]
  %s3 = inlined_call_operand.vmem [shape: bf16[162,64], index: 3, kind: output, shape index: {}]
  %s4 = sld [smem:[#allocation0]]
  $region59: #{cnn_base_forward.5} parent=0
    _
  %s6 = ssub.s32 1, %s4
  %s7 = scalar_select 0, %s6, %s4
  $region1: #{cnn_base_forward.5} parent=0
    #allocation2 [shape = 'u8[49152]{0}', space=vmem, size = 0xc000, scoped, tag = 'output window, operand 0, single buffered']
    // Predicated region
    $region2: #{cnn_base_forward.5} parent=1 // pred_check
      _
    $region3: #{cnn_base_forward.5} parent=1 // pred_check_branch
      %9 = sbr.rel (0) target = $region5
    $region4: #{cnn_base_forward.5} parent=1 // pred_region
      _
    $region5: #{cnn_base_forward.5} parent=1 // pred_fallthru
      _
    // Predicated region
    $region6: #{cnn_base_forward.5} parent=1 // pred_check
      _
    $region7: #{cnn_base_forward.5} parent=1 // pred_check_branch
      %11 = sbr.rel (0) target = $region9
    $region8: #{cnn_base_forward.5} parent=1 // pred_region
      _
    $region9: #{cnn_base_forward.5} parent=1 // pred_fallthru
      _
    // Predicated region
    $region10: #{cnn_base_forward.5} parent=1 // pred_check
      _
    $region11: #{cnn_base_forward.5} parent=1 // pred_check_branch
      %13 = sbr.rel (0) target = $region13
    $region12: #{cnn_base_forward.5} parent=1 // pred_region
      _
    $region13: #{cnn_base_forward.5} parent=1 // pred_fallthru
      _
    %v15 = vld [vmem:[%s0] sm:$0xff]
    %v16 = vld [vmem:[%s0 + $0x8] sm:$0xff]
    %v17 = vld [vmem:[%s0 + $0x10] sm:$0xff]
    %v18 = vld [vmem:[%s0 + $0x18] sm:$0xff]
    %v19 = vld [vmem:[%s0 + $0x20] sm:$0xff]
    %v20 = vld [vmem:[%s0 + $0x28] sm:$0xff]
    %v21 = vld [vmem:[%s0 + $0x30] sm:$0xff]
    %v22 = vld [vmem:[%s0 + $0x38] sm:$0xff]
    %v23 = vld [vmem:[%s0 + $0x40] sm:$0xff]
    %v24 = vld [vmem:[%s0 + $0x48] sm:$0xff]
    %v25 = vld [vmem:[%s0 + $0x50] sm:$0xff]
    %v26 = vld [vmem:[%s0 + $0x58] sm:$0xff]
    %v27 = vld [vmem:[%s0 + $0x60] sm:$0xff]
    %v28 = vld [vmem:[%s0 + $0x68] sm:$0xff]
    %v29 = vld [vmem:[%s0 + $0x70] sm:$0xff]
    %v30 = vld [vmem:[%s0 + $0x78] sm:$0xff]
    %v31 = vld [vmem:[%s0 + $0x80] sm:$0xff]
    %v32 = vld [vmem:[%s0 + $0x88] sm:$0xff]
    %v33 = vld [vmem:[%s0 + $0x90] sm:$0xff]
    %v34 = vld [vmem:[%s0 + $0x98] sm:$0xff]
    %v35 = vld [vmem:[%s0 + $0xa0] sm:$0xff]
    %v36 = vld [vmem:[%s0 + $0xa8] sm:$0xff]
    %v37 = vld [vmem:[%s0 + $0xb0] sm:$0xff]
    %v38 = vld [vmem:[%s0 + $0xb8] sm:$0xff]
    %v39 = vld [vmem:[%s0 + $0xc0] sm:$0xff]
    %v40 = vld [vmem:[%s0 + $0xc8] sm:$0xff]
    %v41 = vld [vmem:[%s0 + $0xd0] sm:$0xff]
    %v42 = vld [vmem:[%s0 + $0xd8] sm:$0xff]
    %v43 = vld [vmem:[%s0 + $0xe0] sm:$0xff]
    %v44 = vld [vmem:[%s0 + $0xe8] sm:$0xff]
    %v45 = vld [vmem:[%s0 + $0xf0] sm:$0xff]
    %v46 = vld [vmem:[%s0 + $0xf8] sm:$0xff]
    %v47 = vld [vmem:[%s0 + $0x100] sm:$0xff]
    %v48 = vld [vmem:[%s0 + $0x108] sm:$0xff]
    %v49 = vld [vmem:[%s0 + $0x110] sm:$0xff]
    %v50 = vld [vmem:[%s0 + $0x118] sm:$0xff]
    %v51 = vld [vmem:[%s0 + $0x120] sm:$0xff]
    %v52 = vld [vmem:[%s0 + $0x128] sm:$0xff]
    %v53 = vld [vmem:[%s0 + $0x130] sm:$0xff]
    %v54 = vld [vmem:[%s0 + $0x138] sm:$0xff]
    %v55 = vld [vmem:[%s0 + $0x140] sm:$0xff]
    %v56 = vld [vmem:[%s0 + $0x148] sm:$0xff]
    %v57 = vld [vmem:[%s0 + $0x150] sm:$0xff]
    %v58 = vld [vmem:[%s0 + $0x158] sm:$0xff]
    %v59 = vld [vmem:[%s0 + $0x160] sm:$0xff]
    %v60 = vld [vmem:[%s0 + $0x168] sm:$0xff]
    %v61 = vld [vmem:[%s0 + $0x170] sm:$0xff]
    %v62 = vld [vmem:[%s0 + $0x178] sm:$0xff]
    %v63 = vld [vmem:[%s1] sm:$0xf]
    %v64 = vld [vmem:[%s1 + $0x4] sm:$0xf]
    %v65 = vld [vmem:[%s1 + $0x8] sm:$0xf]
    %v66 = vld [vmem:[%s1 + $0xc] sm:$0xf]
    %v67 = vld [vmem:[%s1 + $0x10] sm:$0xf]
    %v68 = vld [vmem:[%s1 + $0x14] sm:$0xf]
    %v69 = vld [vmem:[%s1 + $0x18] sm:$0xf]
    %v70 = vld [vmem:[%s1 + $0x1c] sm:$0xf]
    %v71 = vld [vmem:[%s1 + $0x20] sm:$0xf]
    %v72 = vld [vmem:[%s1 + $0x24] sm:$0xf]
    %v73 = vld [vmem:[%s1 + $0x28] sm:$0xf]
    %v74 = vld [vmem:[%s1 + $0x2c] sm:$0xf]
    %v75 = vld [vmem:[%s1 + $0x30] sm:$0xf]
    %v76 = vld [vmem:[%s1 + $0x34] sm:$0xf]
    %v77 = vld [vmem:[%s1 + $0x38] sm:$0xf]
    %v78 = vld [vmem:[%s1 + $0x3c] sm:$0xf]
    %v79 = vld [vmem:[%s1 + $0x40] sm:$0xf]
    %v80 = vld [vmem:[%s1 + $0x44] sm:$0xf]
    %v81 = vld [vmem:[%s1 + $0x48] sm:$0xf]
    %v82 = vld [vmem:[%s1 + $0x4c] sm:$0xf]
    %v83 = vld [vmem:[%s1 + $0x50] sm:$0xf]
    %v84 = vld [vmem:[%s1 + $0x54] sm:$0xf]
    %v85 = vld [vmem:[%s1 + $0x58] sm:$0xf]
    %v86 = vld [vmem:[%s1 + $0x5c] sm:$0xf]
    %v87 = vld [vmem:[%s1 + $0x60] sm:$0xf]
    %v88 = vld [vmem:[%s1 + $0x64] sm:$0xf]
    %v89 = vld [vmem:[%s1 + $0x68] sm:$0xf]
    %v90 = vld [vmem:[%s1 + $0x6c] sm:$0xf]
    %v91 = vld [vmem:[%s1 + $0x70] sm:$0xf]
    %v92 = vld [vmem:[%s1 + $0x74] sm:$0xf]
    %v93 = vld [vmem:[%s1 + $0x78] sm:$0xf]
    %v94 = vld [vmem:[%s1 + $0x7c] sm:$0xf]
    %v95 = vld [vmem:[%s1 + $0x80] sm:$0xf]
    %v96 = vld [vmem:[%s1 + $0x84] sm:$0xf]
    %v97 = vld [vmem:[%s1 + $0x88] sm:$0xf]
    %v98 = vld [vmem:[%s1 + $0x8c] sm:$0xf]
    %v99 = vld [vmem:[%s1 + $0x90] sm:$0xf]
    %v100 = vld [vmem:[%s1 + $0x94] sm:$0xf]
    %v101 = vld [vmem:[%s1 + $0x98] sm:$0xf]
    %v102 = vld [vmem:[%s1 + $0x9c] sm:$0xf]
    %v103 = vld [vmem:[%s1 + $0xa0] sm:$0xf]
    %v104 = vld [vmem:[%s1 + $0xa4] sm:$0xf]
    %v105 = vld [vmem:[%s1 + $0xa8] sm:$0xf]
    %v106 = vld [vmem:[%s1 + $0xac] sm:$0xf]
    %v107 = vld [vmem:[%s1 + $0xb0] sm:$0xf]
    %v108 = vld [vmem:[%s1 + $0xb4] sm:$0xf]
    %v109 = vld [vmem:[%s1 + $0xb8] sm:$0xf]
    %v110 = vld [vmem:[%s1 + $0xbc] sm:$0xf]
    %v111 = vld [vmem:[%s1 + $0xc0] sm:$0xf]
    %v112 = vld [vmem:[%s1 + $0xc4] sm:$0xf]
    %v113 = vld [vmem:[%s1 + $0xc8] sm:$0xf]
    %v114 = vld [vmem:[%s1 + $0xcc] sm:$0xf]
    %v115 = vld [vmem:[%s1 + $0xd0] sm:$0xf]
    %v116 = vld [vmem:[%s1 + $0xd4] sm:$0xf]
    %v117 = vld [vmem:[%s1 + $0xd8] sm:$0xf]
    %v118 = vld [vmem:[%s1 + $0xdc] sm:$0xf]
    %v119 = vld [vmem:[%s1 + $0xe0] sm:$0xf]
    %v120 = vld [vmem:[%s1 + $0xe4] sm:$0xf]
    %v121 = vld [vmem:[%s1 + $0xe8] sm:$0xf]
    %v122 = vld [vmem:[%s1 + $0xec] sm:$0xf]
    %v123 = vld [vmem:[%s1 + $0xf0] sm:$0xf]
    %v124 = vld [vmem:[%s1 + $0xf4] sm:$0xf]
    %v125 = vld [vmem:[%s1 + $0xf8] sm:$0xf]
    %v126 = vld [vmem:[%s1 + $0xfc] sm:$0xf]
    %v127 = vld [vmem:[%s2] sm:$0x1]
    %v129 = vlaneseq
    %v130 = vshrl.u32 %v129, 7
    %v131 = vsub.s32 0, %v130
    %v132 = vrot.slane %v127, %v131
    %v182 = vunpack.c.l.b16 %v15
    %v183 = vunpack.c.h.b16 %v15
    %v184 = vunpack.c.l.b16 %v16
    %v185 = vunpack.c.h.b16 %v16
    %v186 = vunpack.c.l.b16 %v17
    %v187 = vunpack.c.h.b16 %v17
    %v188 = vunpack.c.l.b16 %v18
    %v189 = vunpack.c.h.b16 %v18
    %v190 = vunpack.c.l.b16 %v19
    %v191 = vunpack.c.h.b16 %v19
    %v192 = vunpack.c.l.b16 %v20
    %v193 = vunpack.c.h.b16 %v20
    %v194 = vunpack.c.l.b16 %v21
    %v195 = vunpack.c.h.b16 %v21
    %v196 = vunpack.c.l.b16 %v22
    %v197 = vunpack.c.h.b16 %v22
    %v198 = vunpack.c.l.b16 %v23
    %v199 = vunpack.c.h.b16 %v23
    %v200 = vunpack.c.l.b16 %v24
    %v201 = vunpack.c.h.b16 %v24
    %v202 = vunpack.c.l.b16 %v25
    %v203 = vunpack.c.h.b16 %v25
    %v204 = vunpack.c.l.b16 %v26
    %v205 = vunpack.c.h.b16 %v26
    %v206 = vunpack.c.l.b16 %v27
    %v207 = vunpack.c.h.b16 %v27
    %v208 = vunpack.c.l.b16 %v28
    %v209 = vunpack.c.h.b16 %v28
    %v210 = vunpack.c.l.b16 %v29
    %v211 = vunpack.c.h.b16 %v29
    %v212 = vunpack.c.l.b16 %v30
    %v213 = vunpack.c.h.b16 %v30
    %v214 = vunpack.c.l.b16 %v31
    %v215 = vunpack.c.h.b16 %v31
    %v216 = vunpack.c.l.b16 %v32
    %v217 = vunpack.c.h.b16 %v32
    %v218 = vunpack.c.l.b16 %v33
    %v219 = vunpack.c.h.b16 %v33
    %v220 = vunpack.c.l.b16 %v34
    %v221 = vunpack.c.h.b16 %v34
    %v222 = vunpack.c.l.b16 %v35
    %v223 = vunpack.c.h.b16 %v35
    %v224 = vunpack.c.l.b16 %v36
    %v225 = vunpack.c.h.b16 %v36
    %v226 = vunpack.c.l.b16 %v37
    %v227 = vunpack.c.h.b16 %v37
    %v228 = vunpack.c.l.b16 %v38
    %v229 = vunpack.c.h.b16 %v38
    %v230 = vunpack.c.l.b16 %v39
    %v231 = vunpack.c.h.b16 %v39
    %v232 = vunpack.c.l.b16 %v40
    %v233 = vunpack.c.h.b16 %v40
    %v234 = vunpack.c.l.b16 %v41
    %v235 = vunpack.c.h.b16 %v41
    %v236 = vunpack.c.l.b16 %v42
    %v237 = vunpack.c.h.b16 %v42
    %v238 = vunpack.c.l.b16 %v43
    %v239 = vunpack.c.h.b16 %v43
    %v240 = vunpack.c.l.b16 %v44
    %v241 = vunpack.c.h.b16 %v44
    %v242 = vunpack.c.l.b16 %v45
    %v243 = vunpack.c.h.b16 %v45
    %v244 = vunpack.c.l.b16 %v46
    %v245 = vunpack.c.h.b16 %v46
    %v246 = vunpack.c.l.b16 %v47
    %v247 = vunpack.c.h.b16 %v47
    %v248 = vunpack.c.l.b16 %v48
    %v249 = vunpack.c.h.b16 %v48
    %v250 = vunpack.c.l.b16 %v49
    %v251 = vunpack.c.h.b16 %v49
    %v252 = vunpack.c.l.b16 %v50
    %v253 = vunpack.c.h.b16 %v50
    %v254 = vunpack.c.l.b16 %v51
    %v255 = vunpack.c.h.b16 %v51
    %v256 = vunpack.c.l.b16 %v52
    %v257 = vunpack.c.h.b16 %v52
    %v258 = vunpack.c.l.b16 %v53
    %v259 = vunpack.c.h.b16 %v53
    %v260 = vunpack.c.l.b16 %v54
    %v261 = vunpack.c.h.b16 %v54
    %v262 = vunpack.c.l.b16 %v55
    %v263 = vunpack.c.h.b16 %v55
    %v264 = vunpack.c.l.b16 %v56
    %v265 = vunpack.c.h.b16 %v56
    %v266 = vunpack.c.l.b16 %v57
    %v267 = vunpack.c.h.b16 %v57
    %v268 = vunpack.c.l.b16 %v58
    %v269 = vunpack.c.h.b16 %v58
    %v270 = vunpack.c.l.b16 %v59
    %v271 = vunpack.c.h.b16 %v59
    %v272 = vunpack.c.l.b16 %v60
    %v273 = vunpack.c.h.b16 %v60
    %v274 = vunpack.c.l.b16 %v61
    %v275 = vunpack.c.h.b16 %v61
    %v276 = vunpack.c.l.b16 %v62
    %v277 = vunpack.c.h.b16 %v62
    %v278 = vpack.c.b16 %v186, %v182
    %v279 = vpack.c.b16 %v187, %v183
    %v280 = vpack.c.b16 %v188, %v184
    %v281 = vpack.c.b16 %v189, %v185
    %v282 = vpack.c.b16 %v194, %v190
    %v283 = vpack.c.b16 %v195, %v191
    %v284 = vpack.c.b16 %v196, %v192
    %v285 = vpack.c.b16 %v197, %v193
    %v286 = vpack.c.b16 %v202, %v198
    %v287 = vpack.c.b16 %v203, %v199
    %v288 = vpack.c.b16 %v204, %v200
    %v289 = vpack.c.b16 %v205, %v201
    %v290 = vpack.c.b16 %v210, %v206
    %v291 = vpack.c.b16 %v211, %v207
    %v292 = vpack.c.b16 %v212, %v208
    %v293 = vpack.c.b16 %v213, %v209
    %v294 = vpack.c.b16 %v218, %v214
    %v295 = vpack.c.b16 %v219, %v215
    %v296 = vpack.c.b16 %v220, %v216
    %v297 = vpack.c.b16 %v221, %v217
    %v298 = vpack.c.b16 %v226, %v222
    %v299 = vpack.c.b16 %v227, %v223
    %v300 = vpack.c.b16 %v228, %v224
    %v301 = vpack.c.b16 %v229, %v225
    %v302 = vpack.c.b16 %v234, %v230
    %v303 = vpack.c.b16 %v235, %v231
    %v304 = vpack.c.b16 %v236, %v232
    %v305 = vpack.c.b16 %v237, %v233
    %v306 = vpack.c.b16 %v242, %v238
    %v307 = vpack.c.b16 %v243, %v239
    %v308 = vpack.c.b16 %v244, %v240
    %v309 = vpack.c.b16 %v245, %v241
    %v310 = vpack.c.b16 %v250, %v246
    %v311 = vpack.c.b16 %v251, %v247
    %v312 = vpack.c.b16 %v252, %v248
    %v313 = vpack.c.b16 %v253, %v249
    %v314 = vpack.c.b16 %v258, %v254
    %v315 = vpack.c.b16 %v259, %v255
    %v316 = vpack.c.b16 %v260, %v256
    %v317 = vpack.c.b16 %v261, %v257
    %v318 = vpack.c.b16 %v266, %v262
    %v319 = vpack.c.b16 %v267, %v263
    %v320 = vpack.c.b16 %v268, %v264
    %v321 = vpack.c.b16 %v269, %v265
    %v322 = vpack.c.b16 %v274, %v270
    %v323 = vpack.c.b16 %v275, %v271
    %v324 = vpack.c.b16 %v276, %v272
    %v325 = vpack.c.b16 %v277, %v273
    %v438 = vunpack.c.l.b16 %v63
    %v439 = vunpack.c.l.b16 %v64
    %v440 = vunpack.c.l.b16 %v65
    %v441 = vunpack.c.l.b16 %v66
    %v442 = vunpack.c.l.b16 %v67
    %v443 = vunpack.c.l.b16 %v68
    %v444 = vunpack.c.l.b16 %v69
    %v445 = vunpack.c.l.b16 %v70
    %v446 = vunpack.c.l.b16 %v71
    %v447 = vunpack.c.l.b16 %v72
    %v448 = vunpack.c.l.b16 %v73
    %v449 = vunpack.c.l.b16 %v74
    %v450 = vunpack.c.l.b16 %v75
    %v451 = vunpack.c.l.b16 %v76
    %v452 = vunpack.c.l.b16 %v77
    %v453 = vunpack.c.l.b16 %v78
    %v454 = vunpack.c.l.b16 %v79
    %v455 = vunpack.c.l.b16 %v80
    %v456 = vunpack.c.l.b16 %v81
    %v457 = vunpack.c.l.b16 %v82
    %v458 = vunpack.c.l.b16 %v83
    %v459 = vunpack.c.l.b16 %v84
    %v460 = vunpack.c.l.b16 %v85
    %v461 = vunpack.c.l.b16 %v86
    %v462 = vunpack.c.l.b16 %v87
    %v463 = vunpack.c.l.b16 %v88
    %v464 = vunpack.c.l.b16 %v89
    %v465 = vunpack.c.l.b16 %v90
    %v466 = vunpack.c.l.b16 %v91
    %v467 = vunpack.c.l.b16 %v92
    %v468 = vunpack.c.l.b16 %v93
    %v469 = vunpack.c.l.b16 %v94
    %v470 = vunpack.c.l.b16 %v95
    %v471 = vunpack.c.l.b16 %v96
    %v472 = vunpack.c.l.b16 %v97
    %v473 = vunpack.c.l.b16 %v98
    %v474 = vunpack.c.l.b16 %v99
    %v475 = vunpack.c.l.b16 %v100
    %v476 = vunpack.c.l.b16 %v101
    %v477 = vunpack.c.l.b16 %v102
    %v478 = vunpack.c.l.b16 %v103
    %v479 = vunpack.c.l.b16 %v104
    %v480 = vunpack.c.l.b16 %v105
    %v481 = vunpack.c.l.b16 %v106
    %v482 = vunpack.c.l.b16 %v107
    %v483 = vunpack.c.l.b16 %v108
    %v484 = vunpack.c.l.b16 %v109
    %v485 = vunpack.c.l.b16 %v110
    %v486 = vunpack.c.l.b16 %v111
    %v487 = vunpack.c.l.b16 %v112
    %v488 = vunpack.c.l.b16 %v113
    %v489 = vunpack.c.l.b16 %v114
    %v490 = vunpack.c.l.b16 %v115
    %v491 = vunpack.c.l.b16 %v116
    %v492 = vunpack.c.l.b16 %v117
    %v493 = vunpack.c.l.b16 %v118
    %v494 = vunpack.c.l.b16 %v119
    %v495 = vunpack.c.l.b16 %v120
    %v496 = vunpack.c.l.b16 %v121
    %v497 = vunpack.c.l.b16 %v122
    %v498 = vunpack.c.l.b16 %v123
    %v499 = vunpack.c.l.b16 %v124
    %v500 = vunpack.c.l.b16 %v125
    %v501 = vunpack.c.l.b16 %v126
    %v502 = vpack.c.b16 %v439, %v438
    %v503 = vpack.c.b16 %v441, %v440
    %v504 = vpack.c.b16 %v443, %v442
    %v505 = vpack.c.b16 %v445, %v444
    %v506 = vpack.c.b16 %v447, %v446
    %v507 = vpack.c.b16 %v449, %v448
    %v508 = vpack.c.b16 %v451, %v450
    %v509 = vpack.c.b16 %v453, %v452
    %v510 = vpack.c.b16 %v455, %v454
    %v511 = vpack.c.b16 %v457, %v456
    %v512 = vpack.c.b16 %v459, %v458
    %v513 = vpack.c.b16 %v461, %v460
    %v514 = vpack.c.b16 %v463, %v462
    %v515 = vpack.c.b16 %v465, %v464
    %v516 = vpack.c.b16 %v467, %v466
    %v517 = vpack.c.b16 %v469, %v468
    %v518 = vpack.c.b16 %v471, %v470
    %v519 = vpack.c.b16 %v473, %v472
    %v520 = vpack.c.b16 %v475, %v474
    %v521 = vpack.c.b16 %v477, %v476
    %v522 = vpack.c.b16 %v479, %v478
    %v523 = vpack.c.b16 %v481, %v480
    %v524 = vpack.c.b16 %v483, %v482
    %v525 = vpack.c.b16 %v485, %v484
    %v526 = vpack.c.b16 %v487, %v486
    %v527 = vpack.c.b16 %v489, %v488
    %v528 = vpack.c.b16 %v491, %v490
    %v529 = vpack.c.b16 %v493, %v492
    %v530 = vpack.c.b16 %v495, %v494
    %v531 = vpack.c.b16 %v497, %v496
    %v532 = vpack.c.b16 %v499, %v498
    %v533 = vpack.c.b16 %v501, %v500
    %566 = vmatprep.subr.bf16.mxu0 0
    %567 = vmatpush1.bf16.msra.mxu0 %v509
    %568 = vmatprep.subr.bf16.mxu0 0
    %569 = vmatpush1.bf16.msra.mxu0 %v508
    %570 = vmatprep.subr.bf16.mxu0 0
    %571 = vmatpush1.bf16.msra.mxu0 %v507
    %572 = vmatprep.subr.bf16.mxu0 0
    %573 = vmatpush1.bf16.msra.mxu0 %v506
    %574 = vmatprep.subr.bf16.mxu0 0
    %575 = vmatpush1.bf16.msra.mxu0 %v505
    %576 = vmatprep.subr.bf16.mxu0 0
    %577 = vmatpush1.bf16.msra.mxu0 %v504
    %578 = vmatprep.subr.bf16.mxu0 0
    %579 = vmatpush1.bf16.msra.mxu0 %v503
    %580 = vmatprep.subr.bf16.mxu0 0
    %581 = vmatpush1.bf16.msra.mxu0 %v502
    %582 = vmatprep.subr.bf16.mxu0 0
    %583 = vmatpush2.bf16.msra.mxu0 %v517
    %584 = vmatprep.subr.bf16.mxu0 0
    %585 = vmatpush2.bf16.msra.mxu0 %v516
    %586 = vmatprep.subr.bf16.mxu0 0
    %587 = vmatpush2.bf16.msra.mxu0 %v515
    %588 = vmatprep.subr.bf16.mxu0 0
    %589 = vmatpush2.bf16.msra.mxu0 %v514
    %590 = vmatprep.subr.bf16.mxu0 0
    %591 = vmatpush2.bf16.msra.mxu0 %v513
    %592 = vmatprep.subr.bf16.mxu0 0
    %593 = vmatpush2.bf16.msra.mxu0 %v512
    %594 = vmatprep.subr.bf16.mxu0 0
    %595 = vmatpush2.bf16.msra.mxu0 %v511
    %596 = vmatprep.subr.bf16.mxu0 0
    %597 = vmatpush2.bf16.msra.mxu0 %v510
    %598 = vmatprep.mubr.bf16.mxu0 %v279
    %599 = vmatmul.mubr.bf16.gmra.mxu0 %v278
    %v600 = vpop.f32.mrf.mxu0
    %v601 = vadd.f32 %v132, %v600
    %v602 = vpop.f32.mrf.mxu0
    %v603 = vpop.f32.mrf.mxu0
    %v604 = vadd.f32 %v132, %v603
    %v605 = vpop.f32.mrf.mxu0
    %606 = vmatprep.mubr.bf16.mxu0 %v283
    %607 = vmatmul.mubr.bf16.gmra.mxu0 %v282
    %v608 = vpop.f32.mrf.mxu0
    %v609 = vadd.f32 %v132, %v608
    %v610 = vpop.f32.mrf.mxu0
    %v611 = vpop.f32.mrf.mxu0
    %v612 = vadd.f32 %v132, %v611
    %v613 = vpop.f32.mrf.mxu0
    %614 = vmatprep.mubr.bf16.mxu0 %v287
    %615 = vmatmul.mubr.bf16.gmra.mxu0 %v286
    %v616 = vpop.f32.mrf.mxu0
    %v617 = vadd.f32 %v132, %v616
    %v618 = vpop.f32.mrf.mxu0
    %v619 = vpop.f32.mrf.mxu0
    %v620 = vadd.f32 %v132, %v619
    %v621 = vpop.f32.mrf.mxu0
    %622 = vmatprep.mubr.bf16.mxu0 %v291
    %623 = vmatmul.mubr.bf16.gmra.mxu0 %v290
    %v624 = vpop.f32.mrf.mxu0
    %v625 = vadd.f32 %v132, %v624
    %v626 = vpop.f32.mrf.mxu0
    %v627 = vpop.f32.mrf.mxu0
    %v628 = vadd.f32 %v132, %v627
    %v629 = vpop.f32.mrf.mxu0
    %630 = vmatprep.mubr.bf16.mxu0 %v295
    %631 = vmatmul.mubr.bf16.gmra.mxu0 %v294
    %v632 = vpop.f32.mrf.mxu0
    %v633 = vadd.f32 %v132, %v632
    %v634 = vpop.f32.mrf.mxu0
    %v635 = vpop.f32.mrf.mxu0
    %v636 = vadd.f32 %v132, %v635
    %v637 = vpop.f32.mrf.mxu0
    %638 = vmatprep.mubr.bf16.mxu0 %v299
    %639 = vmatmul.mubr.bf16.gmra.mxu0 %v298
    %v640 = vpop.f32.mrf.mxu0
    %v641 = vadd.f32 %v132, %v640
    %v642 = vpop.f32.mrf.mxu0
    %v643 = vpop.f32.mrf.mxu0
    %v644 = vadd.f32 %v132, %v643
    %v645 = vpop.f32.mrf.mxu0
    %646 = vmatprep.mubr.bf16.mxu0 %v303
    %647 = vmatmul.mubr.bf16.gmra.mxu0 %v302
    %v648 = vpop.f32.mrf.mxu0
    %v649 = vadd.f32 %v132, %v648
    %v650 = vpop.f32.mrf.mxu0
    %v651 = vpop.f32.mrf.mxu0
    %v652 = vadd.f32 %v132, %v651
    %v653 = vpop.f32.mrf.mxu0
    %654 = vmatprep.mubr.bf16.mxu0 %v307
    %655 = vmatmul.mubr.bf16.gmra.mxu0 %v306
    %v656 = vpop.f32.mrf.mxu0
    %v657 = vadd.f32 %v132, %v656
    %v658 = vpop.f32.mrf.mxu0
    %v659 = vpop.f32.mrf.mxu0
    %v660 = vadd.f32 %v132, %v659
    %v661 = vpop.f32.mrf.mxu0
    %662 = vmatprep.mubr.bf16.mxu0 %v311
    %663 = vmatmul.mubr.bf16.gmra.mxu0 %v310
    %v664 = vpop.f32.mrf.mxu0
    %v665 = vadd.f32 %v132, %v664
    %v666 = vpop.f32.mrf.mxu0
    %v667 = vpop.f32.mrf.mxu0
    %v668 = vadd.f32 %v132, %v667
    %v669 = vpop.f32.mrf.mxu0
    %670 = vmatprep.mubr.bf16.mxu0 %v315
    %671 = vmatmul.mubr.bf16.gmra.mxu0 %v314
    %v672 = vpop.f32.mrf.mxu0
    %v673 = vadd.f32 %v132, %v672
    %v674 = vpop.f32.mrf.mxu0
    %v675 = vpop.f32.mrf.mxu0
    %v676 = vadd.f32 %v132, %v675
    %v677 = vpop.f32.mrf.mxu0
    %678 = vmatprep.mubr.bf16.mxu0 %v319
    %679 = vmatmul.mubr.bf16.gmra.mxu0 %v318
    %v680 = vpop.f32.mrf.mxu0
    %v681 = vadd.f32 %v132, %v680
    %v682 = vpop.f32.mrf.mxu0
    %v683 = vpop.f32.mrf.mxu0
    %v684 = vadd.f32 %v132, %v683
    %v685 = vpop.f32.mrf.mxu0
    %686 = vmatprep.mubr.bf16.mxu0 %v323
    %687 = vmatmul.mubr.bf16.gmra.mxu0 %v322
    %v688 = vpop.f32.mrf.mxu0
    %v689 = vadd.f32 %v132, %v688
    %v690 = vpop.f32.mrf.mxu0
    %v691 = vpop.f32.mrf.mxu0
    %v692 = vadd.f32 %v132, %v691
    %v693 = vpop.f32.mrf.mxu0
    %694 = vdwg.mxu0
    %695 = vmatprep.subr.bf16.mxu0 0
    %696 = vmatpush1.bf16.msra.mxu0 %v525
    %697 = vmatprep.subr.bf16.mxu0 0
    %698 = vmatpush1.bf16.msra.mxu0 %v524
    %699 = vmatprep.subr.bf16.mxu0 0
    %700 = vmatpush1.bf16.msra.mxu0 %v523
    %701 = vmatprep.subr.bf16.mxu0 0
    %702 = vmatpush1.bf16.msra.mxu0 %v522
    %703 = vmatprep.subr.bf16.mxu0 0
    %704 = vmatpush1.bf16.msra.mxu0 %v521
    %705 = vmatprep.subr.bf16.mxu0 0
    %706 = vmatpush1.bf16.msra.mxu0 %v520
    %707 = vmatprep.subr.bf16.mxu0 0
    %708 = vmatpush1.bf16.msra.mxu0 %v519
    %709 = vmatprep.subr.bf16.mxu0 0
    %710 = vmatpush1.bf16.msra.mxu0 %v518
    %711 = vmatprep.subr.bf16.mxu0 0
    %712 = vmatpush2.bf16.msra.mxu0 %v533
    %713 = vmatprep.subr.bf16.mxu0 0
    %714 = vmatpush2.bf16.msra.mxu0 %v532
    %715 = vmatprep.subr.bf16.mxu0 0
    %716 = vmatpush2.bf16.msra.mxu0 %v531
    %717 = vmatprep.subr.bf16.mxu0 0
    %718 = vmatpush2.bf16.msra.mxu0 %v530
    %719 = vmatprep.subr.bf16.mxu0 0
    %720 = vmatpush2.bf16.msra.mxu0 %v529
    %721 = vmatprep.subr.bf16.mxu0 0
    %722 = vmatpush2.bf16.msra.mxu0 %v528
    %723 = vmatprep.subr.bf16.mxu0 0
    %724 = vmatpush2.bf16.msra.mxu0 %v527
    %725 = vmatprep.subr.bf16.mxu0 0
    %726 = vmatpush2.bf16.msra.mxu0 %v526
    %727 = vmatprep.mubr.bf16.mxu0 %v281
    %728 = vmatmul.mubr.bf16.gmra.mxu0 %v280
    %v729 = vpop.f32.mrf.mxu0
    %v730 = vadd.f32 %v601, %v729
    %v731 = vpop.f32.mrf.mxu0
    %v732 = vpop.f32.mrf.mxu0
    %v733 = vadd.f32 %v604, %v732
    %v734 = vpop.f32.mrf.mxu0
    %735 = vmatprep.mubr.bf16.mxu0 %v285
    %736 = vmatmul.mubr.bf16.gmra.mxu0 %v284
    %v737 = vpop.f32.mrf.mxu0
    %v738 = vadd.f32 %v609, %v737
    %v739 = vpop.f32.mrf.mxu0
    %v740 = vpop.f32.mrf.mxu0
    %v741 = vadd.f32 %v612, %v740
    %v742 = vpop.f32.mrf.mxu0
    %743 = vmatprep.mubr.bf16.mxu0 %v289
    %744 = vmatmul.mubr.bf16.gmra.mxu0 %v288
    %v745 = vpop.f32.mrf.mxu0
    %v746 = vadd.f32 %v617, %v745
    %v747 = vpop.f32.mrf.mxu0
    %v748 = vpop.f32.mrf.mxu0
    %v749 = vadd.f32 %v620, %v748
    %v750 = vpop.f32.mrf.mxu0
    %751 = vmatprep.mubr.bf16.mxu0 %v293
    %752 = vmatmul.mubr.bf16.gmra.mxu0 %v292
    %v753 = vpop.f32.mrf.mxu0
    %v754 = vadd.f32 %v625, %v753
    %v755 = vpop.f32.mrf.mxu0
    %v756 = vpop.f32.mrf.mxu0
    %v757 = vadd.f32 %v628, %v756
    %v758 = vpop.f32.mrf.mxu0
    %759 = vmatprep.mubr.bf16.mxu0 %v297
    %760 = vmatmul.mubr.bf16.gmra.mxu0 %v296
    %v761 = vpop.f32.mrf.mxu0
    %v762 = vadd.f32 %v633, %v761
    %v763 = vpop.f32.mrf.mxu0
    %v764 = vpop.f32.mrf.mxu0
    %v765 = vadd.f32 %v636, %v764
    %v766 = vpop.f32.mrf.mxu0
    %767 = vmatprep.mubr.bf16.mxu0 %v301
    %768 = vmatmul.mubr.bf16.gmra.mxu0 %v300
    %v769 = vpop.f32.mrf.mxu0
    %v770 = vadd.f32 %v641, %v769
    %v771 = vpop.f32.mrf.mxu0
    %v772 = vpop.f32.mrf.mxu0
    %v773 = vadd.f32 %v644, %v772
    %v774 = vpop.f32.mrf.mxu0
    %775 = vmatprep.mubr.bf16.mxu0 %v305
    %776 = vmatmul.mubr.bf16.gmra.mxu0 %v304
    %v777 = vpop.f32.mrf.mxu0
    %v778 = vadd.f32 %v649, %v777
    %v779 = vpop.f32.mrf.mxu0
    %v780 = vpop.f32.mrf.mxu0
    %v781 = vadd.f32 %v652, %v780
    %v782 = vpop.f32.mrf.mxu0
    %783 = vmatprep.mubr.bf16.mxu0 %v309
    %784 = vmatmul.mubr.bf16.gmra.mxu0 %v308
    %v785 = vpop.f32.mrf.mxu0
    %v786 = vadd.f32 %v657, %v785
    %v787 = vpop.f32.mrf.mxu0
    %v788 = vpop.f32.mrf.mxu0
    %v789 = vadd.f32 %v660, %v788
    %v790 = vpop.f32.mrf.mxu0
    %791 = vmatprep.mubr.bf16.mxu0 %v313
    %792 = vmatmul.mubr.bf16.gmra.mxu0 %v312
    %v793 = vpop.f32.mrf.mxu0
    %v794 = vadd.f32 %v665, %v793
    %v795 = vpop.f32.mrf.mxu0
    %v796 = vpop.f32.mrf.mxu0
    %v797 = vadd.f32 %v668, %v796
    %v798 = vpop.f32.mrf.mxu0
    %799 = vmatprep.mubr.bf16.mxu0 %v317
    %800 = vmatmul.mubr.bf16.gmra.mxu0 %v316
    %v801 = vpop.f32.mrf.mxu0
    %v802 = vadd.f32 %v673, %v801
    %v803 = vpop.f32.mrf.mxu0
    %v804 = vpop.f32.mrf.mxu0
    %v805 = vadd.f32 %v676, %v804
    %v806 = vpop.f32.mrf.mxu0
    %807 = vmatprep.mubr.bf16.mxu0 %v321
    %808 = vmatmul.mubr.bf16.gmra.mxu0 %v320
    %v809 = vpop.f32.mrf.mxu0
    %v810 = vadd.f32 %v681, %v809
    %v811 = vpop.f32.mrf.mxu0
    %v812 = vpop.f32.mrf.mxu0
    %v813 = vadd.f32 %v684, %v812
    %v814 = vpop.f32.mrf.mxu0
    %815 = vmatprep.mubr.bf16.mxu0 %v325
    %816 = vmatmul.mubr.bf16.gmra.mxu0 %v324
    %v817 = vpop.f32.mrf.mxu0
    %v818 = vadd.f32 %v689, %v817
    %v819 = vpop.f32.mrf.mxu0
    %v820 = vpop.f32.mrf.mxu0
    %v821 = vadd.f32 %v692, %v820
    %v822 = vpop.f32.mrf.mxu0
    %823 = vdwg.mxu0
    %v824 = vmax.f32 %v730, 0.0
    %v825 = vmax.f32 %v733, 0.0
    %v826 = vmax.f32 %v738, 0.0
    %v827 = vmax.f32 %v741, 0.0
    %v828 = vmax.f32 %v746, 0.0
    %v829 = vmax.f32 %v749, 0.0
    %v830 = vmax.f32 %v754, 0.0
    %v831 = vmax.f32 %v757, 0.0
    %v832 = vmax.f32 %v762, 0.0
    %v833 = vmax.f32 %v765, 0.0
    %v834 = vmax.f32 %v770, 0.0
    %v835 = vmax.f32 %v773, 0.0
    %v836 = vmax.f32 %v778, 0.0
    %v837 = vmax.f32 %v781, 0.0
    %v838 = vmax.f32 %v786, 0.0
    %v839 = vmax.f32 %v789, 0.0
    %v840 = vmax.f32 %v794, 0.0
    %v841 = vmax.f32 %v797, 0.0
    %v842 = vmax.f32 %v802, 0.0
    %v843 = vmax.f32 %v805, 0.0
    %v844 = vmax.f32 %v810, 0.0
    %v845 = vmax.f32 %v813, 0.0
    %v846 = vmax.f32 %v818, 0.0
    %v847 = vmax.f32 %v821, 0.0
    %v848 = vpack.c.bf16 %v825, %v824
    %v849 = vpack.c.bf16 %v827, %v826
    %v850 = vpack.c.bf16 %v829, %v828
    %v851 = vpack.c.bf16 %v831, %v830
    %v852 = vpack.c.bf16 %v833, %v832
    %v853 = vpack.c.bf16 %v835, %v834
    %v854 = vpack.c.bf16 %v837, %v836
    %v855 = vpack.c.bf16 %v839, %v838
    %v856 = vpack.c.bf16 %v841, %v840
    %v857 = vpack.c.bf16 %v843, %v842
    %v858 = vpack.c.bf16 %v845, %v844
    %v859 = vpack.c.bf16 %v847, %v846
    %v872 = vunpack.c.l.b16 %v848
    %v873 = vunpack.c.h.b16 %v848
    %v874 = vunpack.c.l.b16 %v849
    %v875 = vunpack.c.h.b16 %v849
    %v876 = vunpack.c.l.b16 %v850
    %v877 = vunpack.c.h.b16 %v850
    %v878 = vunpack.c.l.b16 %v851
    %v879 = vunpack.c.h.b16 %v851
    %v880 = vunpack.c.l.b16 %v852
    %v881 = vunpack.c.h.b16 %v852
    %v882 = vunpack.c.l.b16 %v853
    %v883 = vunpack.c.h.b16 %v853
    %v884 = vunpack.c.l.b16 %v854
    %v885 = vunpack.c.h.b16 %v854
    %v886 = vunpack.c.l.b16 %v855
    %v887 = vunpack.c.h.b16 %v855
    %v888 = vunpack.c.l.b16 %v856
    %v889 = vunpack.c.h.b16 %v856
    %v890 = vunpack.c.l.b16 %v857
    %v891 = vunpack.c.h.b16 %v857
    %v892 = vunpack.c.l.b16 %v858
    %v893 = vunpack.c.h.b16 %v858
    %v894 = vunpack.c.l.b16 %v859
    %v895 = vunpack.c.h.b16 %v859
    %v896 = vpack.c.b16 %v872, %v872
    %v897 = vpack.c.b16 %v873, %v873
    %v898 = vpack.c.b16 %v874, %v874
    %v899 = vpack.c.b16 %v875, %v875
    %v900 = vpack.c.b16 %v876, %v876
    %v901 = vpack.c.b16 %v877, %v877
    %v902 = vpack.c.b16 %v878, %v878
    %v903 = vpack.c.b16 %v879, %v879
    %v904 = vpack.c.b16 %v880, %v880
    %v905 = vpack.c.b16 %v881, %v881
    %v906 = vpack.c.b16 %v882, %v882
    %v907 = vpack.c.b16 %v883, %v883
    %v908 = vpack.c.b16 %v884, %v884
    %v909 = vpack.c.b16 %v885, %v885
    %v910 = vpack.c.b16 %v886, %v886
    %v911 = vpack.c.b16 %v887, %v887
    %v912 = vpack.c.b16 %v888, %v888
    %v913 = vpack.c.b16 %v889, %v889
    %v914 = vpack.c.b16 %v890, %v890
    %v915 = vpack.c.b16 %v891, %v891
    %v916 = vpack.c.b16 %v892, %v892
    %v917 = vpack.c.b16 %v893, %v893
    %v918 = vpack.c.b16 %v894, %v894
    %v919 = vpack.c.b16 %v895, %v895
    %vm944 = vcmask 519168
    %945 = vst.msk [vmem:[#allocation2] sm:$0xf] %vm944, %v896
    %946 = vst.msk [vmem:[#allocation2 + $0x4] sm:$0xf] %vm944, %v897
    %947 = vst.msk [vmem:[#allocation2 + $0x8] sm:$0xf] %vm944, %v898
    %948 = vst.msk [vmem:[#allocation2 + $0xc] sm:$0xf] %vm944, %v899
    %949 = vst.msk [vmem:[#allocation2 + $0x10] sm:$0xf] %vm944, %v900
    %950 = vst.msk [vmem:[#allocation2 + $0x14] sm:$0xf] %vm944, %v901
    %951 = vst.msk [vmem:[#allocation2 + $0x18] sm:$0xf] %vm944, %v902
    %952 = vst.msk [vmem:[#allocation2 + $0x1c] sm:$0xf] %vm944, %v903
    %953 = vst.msk [vmem:[#allocation2 + $0x20] sm:$0xf] %vm944, %v904
    %954 = vst.msk [vmem:[#allocation2 + $0x24] sm:$0xf] %vm944, %v905
    %955 = vst.msk [vmem:[#allocation2 + $0x28] sm:$0xf] %vm944, %v906
    %956 = vst.msk [vmem:[#allocation2 + $0x2c] sm:$0xf] %vm944, %v907
    %957 = vst.msk [vmem:[#allocation2 + $0x30] sm:$0xf] %vm944, %v908
    %958 = vst.msk [vmem:[#allocation2 + $0x34] sm:$0xf] %vm944, %v909
    %959 = vst.msk [vmem:[#allocation2 + $0x38] sm:$0xf] %vm944, %v910
    %960 = vst.msk [vmem:[#allocation2 + $0x3c] sm:$0xf] %vm944, %v911
    %961 = vst.msk [vmem:[#allocation2 + $0x40] sm:$0xf] %vm944, %v912
    %962 = vst.msk [vmem:[#allocation2 + $0x44] sm:$0xf] %vm944, %v913
    %963 = vst.msk [vmem:[#allocation2 + $0x48] sm:$0xf] %vm944, %v914
    %964 = vst.msk [vmem:[#allocation2 + $0x4c] sm:$0xf] %vm944, %v915
    %965 = vst.msk [vmem:[#allocation2 + $0x50] sm:$0xf] %vm944, %v916
    %966 = vst.msk [vmem:[#allocation2 + $0x54] sm:$0xf] %vm944, %v917
    %967 = vst.msk [vmem:[#allocation2 + $0x58] sm:$0xf] %vm944, %v918
    %968 = vst.msk [vmem:[#allocation2 + $0x5c] sm:$0xf] %vm944, %v919
    // Predicated region
    $region14: #{cnn_base_forward.5} parent=1 // pred_check
      _
    $region15: #{cnn_base_forward.5} parent=1 // pred_check_branch
      %970 = sbr.rel (0) target = $region17
    $region16: #{cnn_base_forward.5} parent=1 // pred_region
      // Predicated region
      $region18: #{cnn_base_forward.5} parent=16 // pred_check
        _
      $region19: #{cnn_base_forward.5} parent=16 // pred_check_branch
        %972 = sbr.rel (0) target = $region21
      $region20: #{cnn_base_forward.5} parent=16 // pred_region
        // Predicated region
        $region22: #{cnn_base_forward.5} parent=20 // pred_check
          _
        $region23: #{cnn_base_forward.5} parent=20 // pred_check_branch
          %974 = sbr.rel target = $region25
        $region24: #{cnn_base_forward.5} parent=20 // pred_region
          // Predicated region
          $region37: #{cnn_base_forward.5} parent=24 // pred_check
            _
          $region38: #{cnn_base_forward.5} parent=24 // pred_check_branch
            %1030 = sbr.rel (0) target = $region40
          $region39: #{cnn_base_forward.5} parent=24 // pred_region
            loop: start=0, step=1, limit=1
            $region41: #{cnn_base_forward.5} parent=39 // loop_pre_header
              _
            $region42: #{cnn_base_forward.5} parent=39 // loop_header
              %s1032 = sphi 0, %s1036
              %p1033 = scmp.ge.s32.totalorder %s1032, 1
              %s1037 = sphi [#allocation2], [#allocation2]
              %s1038 = sphi %s3, %s3
            $region43: #{cnn_base_forward.5} parent=39 // loop_header_branch
              %1035 = sbr.rel (%p1033) target = $region47
            $region44: #{cnn_base_forward.5} parent=39 // loop_body
              _
            $region45: #{cnn_base_forward.5} parent=39 // loop_footer
              %s1036 = sadd.s32 1, %s1032
            $region46: #{cnn_base_forward.5} parent=39 // loop_footer_branch
              %1031 = sbr.rel target = $region42
            $region47: #{cnn_base_forward.5} parent=39 // loop_exit
              _
            %s1040 = ssub.s32 16, 1
            loop: start=0, step=1, limit=1
            $region48: #{cnn_base_forward.5} parent=39 // loop_pre_header
              _
            $region49: #{cnn_base_forward.5} parent=39 // loop_header
              %s1042 = sphi 0, %s1046
              %p1043 = scmp.ge.s32.totalorder %s1042, 1
              %s1047 = sphi [#allocation2], [#allocation2]
              %s1048 = sphi %s3, %s3
            $region50: #{cnn_base_forward.5} parent=39 // loop_header_branch
              %1045 = sbr.rel (%p1043) target = $region54
            $region51: #{cnn_base_forward.5} parent=39 // loop_body
              %v1049 = vld [vmem:[%s1047] sm:%s1040]
              %1050 = vst [vmem:[%s1048] sm:%s1040] %v1049
              %v1051 = vld [vmem:[%s1047 + $0x4] sm:%s1040]
              %1052 = vst [vmem:[%s1048 + $0x4] sm:%s1040] %v1051
              %v1053 = vld [vmem:[%s1047 + $0x8] sm:%s1040]
              %1054 = vst [vmem:[%s1048 + $0x8] sm:%s1040] %v1053
              %v1055 = vld [vmem:[%s1047 + $0xc] sm:%s1040]
              %1056 = vst [vmem:[%s1048 + $0xc] sm:%s1040] %v1055
              %v1057 = vld [vmem:[%s1047 + $0x10] sm:%s1040]
              %1058 = vst [vmem:[%s1048 + $0x10] sm:%s1040] %v1057
              %v1059 = vld [vmem:[%s1047 + $0x14] sm:%s1040]
              %1060 = vst [vmem:[%s1048 + $0x14] sm:%s1040] %v1059
              %v1061 = vld [vmem:[%s1047 + $0x18] sm:%s1040]
              %1062 = vst [vmem:[%s1048 + $0x18] sm:%s1040] %v1061
              %v1063 = vld [vmem:[%s1047 + $0x1c] sm:%s1040]
              %1064 = vst [vmem:[%s1048 + $0x1c] sm:%s1040] %v1063
              %v1065 = vld [vmem:[%s1047 + $0x20] sm:%s1040]
              %1066 = vst [vmem:[%s1048 + $0x20] sm:%s1040] %v1065
              %v1067 = vld [vmem:[%s1047 + $0x24] sm:%s1040]
              %1068 = vst [vmem:[%s1048 + $0x24] sm:%s1040] %v1067
              %v1069 = vld [vmem:[%s1047 + $0x28] sm:%s1040]
              %1070 = vst [vmem:[%s1048 + $0x28] sm:%s1040] %v1069
              %v1071 = vld [vmem:[%s1047 + $0x2c] sm:%s1040]
              %1072 = vst [vmem:[%s1048 + $0x2c] sm:%s1040] %v1071
              %v1073 = vld [vmem:[%s1047 + $0x30] sm:%s1040]
              %1074 = vst [vmem:[%s1048 + $0x30] sm:%s1040] %v1073
              %v1075 = vld [vmem:[%s1047 + $0x34] sm:%s1040]
              %1076 = vst [vmem:[%s1048 + $0x34] sm:%s1040] %v1075
              %v1077 = vld [vmem:[%s1047 + $0x38] sm:%s1040]
              %1078 = vst [vmem:[%s1048 + $0x38] sm:%s1040] %v1077
              %v1079 = vld [vmem:[%s1047 + $0x3c] sm:%s1040]
              %1080 = vst [vmem:[%s1048 + $0x3c] sm:%s1040] %v1079
              %v1081 = vld [vmem:[%s1047 + $0x40] sm:%s1040]
              %1082 = vst [vmem:[%s1048 + $0x40] sm:%s1040] %v1081
              %v1083 = vld [vmem:[%s1047 + $0x44] sm:%s1040]
              %1084 = vst [vmem:[%s1048 + $0x44] sm:%s1040] %v1083
              %v1085 = vld [vmem:[%s1047 + $0x48] sm:%s1040]
              %1086 = vst [vmem:[%s1048 + $0x48] sm:%s1040] %v1085
              %v1087 = vld [vmem:[%s1047 + $0x4c] sm:%s1040]
              %1088 = vst [vmem:[%s1048 + $0x4c] sm:%s1040] %v1087
              %v1089 = vld [vmem:[%s1047 + $0x50] sm:%s1040]
              %1090 = vst [vmem:[%s1048 + $0x50] sm:%s1040] %v1089
            $region52: #{cnn_base_forward.5} parent=39 // loop_footer
              %s1046 = sadd.s32 1, %s1042
            $region53: #{cnn_base_forward.5} parent=39 // loop_footer_branch
              %1041 = sbr.rel target = $region49
            $region54: #{cnn_base_forward.5} parent=39 // loop_exit
              _
          $region40: #{cnn_base_forward.5} parent=24 // pred_fallthru
            _
        $region25: #{cnn_base_forward.5} parent=20 // pred_fallthru
          _
        // Predicated region
        $region26: #{cnn_base_forward.5} parent=20 // pred_check
          _
        $region27: #{cnn_base_forward.5} parent=20 // pred_check_branch
          %976 = sbr.rel (0) target = $region29
        $region28: #{cnn_base_forward.5} parent=20 // pred_region
          %s978 = ssub.s32 16, 1
          loop: start=0, step=1, limit=1
          $region30: #{cnn_base_forward.5} parent=28 // loop_pre_header
            _
          $region31: #{cnn_base_forward.5} parent=28 // loop_header
            %s980 = sphi 0, %s984
            %p981 = scmp.ge.s32.totalorder %s980, 1
            %s985 = sphi [#allocation2], [#allocation2]
            %s986 = sphi %s3, %s3
          $region32: #{cnn_base_forward.5} parent=28 // loop_header_branch
            %983 = sbr.rel (%p981) target = $region36
          $region33: #{cnn_base_forward.5} parent=28 // loop_body
            %v987 = vld [vmem:[%s985] sm:%s978]
            %988 = vst [vmem:[%s986] sm:%s978] %v987
            %v989 = vld [vmem:[%s985 + $0x4] sm:%s978]
            %990 = vst [vmem:[%s986 + $0x4] sm:%s978] %v989
            %v991 = vld [vmem:[%s985 + $0x8] sm:%s978]
            %992 = vst [vmem:[%s986 + $0x8] sm:%s978] %v991
            %v993 = vld [vmem:[%s985 + $0xc] sm:%s978]
            %994 = vst [vmem:[%s986 + $0xc] sm:%s978] %v993
            %v995 = vld [vmem:[%s985 + $0x10] sm:%s978]
            %996 = vst [vmem:[%s986 + $0x10] sm:%s978] %v995
            %v997 = vld [vmem:[%s985 + $0x14] sm:%s978]
            %998 = vst [vmem:[%s986 + $0x14] sm:%s978] %v997
            %v999 = vld [vmem:[%s985 + $0x18] sm:%s978]
            %1000 = vst [vmem:[%s986 + $0x18] sm:%s978] %v999
            %v1001 = vld [vmem:[%s985 + $0x1c] sm:%s978]
            %1002 = vst [vmem:[%s986 + $0x1c] sm:%s978] %v1001
            %v1003 = vld [vmem:[%s985 + $0x20] sm:%s978]
            %1004 = vst [vmem:[%s986 + $0x20] sm:%s978] %v1003
            %v1005 = vld [vmem:[%s985 + $0x24] sm:%s978]
            %1006 = vst [vmem:[%s986 + $0x24] sm:%s978] %v1005
            %v1007 = vld [vmem:[%s985 + $0x28] sm:%s978]
            %1008 = vst [vmem:[%s986 + $0x28] sm:%s978] %v1007
            %v1009 = vld [vmem:[%s985 + $0x2c] sm:%s978]
            %1010 = vst [vmem:[%s986 + $0x2c] sm:%s978] %v1009
            %v1011 = vld [vmem:[%s985 + $0x30] sm:%s978]
            %1012 = vst [vmem:[%s986 + $0x30] sm:%s978] %v1011
            %v1013 = vld [vmem:[%s985 + $0x34] sm:%s978]
            %1014 = vst [vmem:[%s986 + $0x34] sm:%s978] %v1013
            %v1015 = vld [vmem:[%s985 + $0x38] sm:%s978]
            %1016 = vst [vmem:[%s986 + $0x38] sm:%s978] %v1015
            %v1017 = vld [vmem:[%s985 + $0x3c] sm:%s978]
            %1018 = vst [vmem:[%s986 + $0x3c] sm:%s978] %v1017
            %v1019 = vld [vmem:[%s985 + $0x40] sm:%s978]
            %1020 = vst [vmem:[%s986 + $0x40] sm:%s978] %v1019
            %v1021 = vld [vmem:[%s985 + $0x44] sm:%s978]
            %1022 = vst [vmem:[%s986 + $0x44] sm:%s978] %v1021
            %v1023 = vld [vmem:[%s985 + $0x48] sm:%s978]
            %1024 = vst [vmem:[%s986 + $0x48] sm:%s978] %v1023
            %v1025 = vld [vmem:[%s985 + $0x4c] sm:%s978]
            %1026 = vst [vmem:[%s986 + $0x4c] sm:%s978] %v1025
            %v1027 = vld [vmem:[%s985 + $0x50] sm:%s978]
            %1028 = vst [vmem:[%s986 + $0x50] sm:%s978] %v1027
          $region34: #{cnn_base_forward.5} parent=28 // loop_footer
            %s984 = sadd.s32 1, %s980
          $region35: #{cnn_base_forward.5} parent=28 // loop_footer_branch
            %979 = sbr.rel target = $region31
          $region36: #{cnn_base_forward.5} parent=28 // loop_exit
            _
        $region29: #{cnn_base_forward.5} parent=20 // pred_fallthru
          _
      $region21: #{cnn_base_forward.5} parent=16 // pred_fallthru
        _
      %1091 = vnop
    $region17: #{cnn_base_forward.5} parent=1 // pred_fallthru
      _
    // Predicated region
    $region55: #{cnn_base_forward.5} parent=1 // pred_check
      _
    $region56: #{cnn_base_forward.5} parent=1 // pred_check_branch
      %1093 = sbr.rel (0) target = $region58
    $region57: #{cnn_base_forward.5} parent=1 // pred_region
      _
    $region58: #{cnn_base_forward.5} parent=1 // pred_fallthru
      _

// kernel: cnn_base_forward.6
$region0: #{cnn_base_forward.6}
  #allocation0 [shape = 'u32[]', space=smem, size = 0x4, offset = 0x4, fixed_abs, tag = 'smem constant byte address 0x4 - core index']
  #allocation1 [shape = 'u32[144,128]{1,0:T(1,128)}', space=vmem, size = 0x12000, scoped, tag = 'internal scratch']
  %s0 = inlined_call_operand.vmem [shape: bf16[98,576], index: 0, kind: input, shape index: {}]
  %s1 = inlined_call_operand.vmem [shape: bf16[576,32], index: 1, kind: input, shape index: {}]
  %s2 = inlined_call_operand.vmem [shape: f32[1,32], index: 2, kind: input, shape index: {}]
  %s3 = inlined_call_operand.vmem [shape: bf16[98,32], index: 3, kind: output, shape index: {}]
  %s4 = sld [smem:[#allocation0]]
  $region59: #{cnn_base_forward.6} parent=0
    _
  %s6 = ssub.s32 1, %s4
  %s7 = scalar_select 0, %s6, %s4
  $region1: #{cnn_base_forward.6} parent=0
    #allocation2 [shape = 'u8[32768]{0}', space=vmem, size = 0x8000, scoped, tag = 'output window, operand 0, single buffered']
    // Predicated region
    $region2: #{cnn_base_forward.6} parent=1 // pred_check
      _
    $region3: #{cnn_base_forward.6} parent=1 // pred_check_branch
      %9 = sbr.rel (0) target = $region5
    $region4: #{cnn_base_forward.6} parent=1 // pred_region
      _
    $region5: #{cnn_base_forward.6} parent=1 // pred_fallthru
      _
    // Predicated region
    $region6: #{cnn_base_forward.6} parent=1 // pred_check
      _
    $region7: #{cnn_base_forward.6} parent=1 // pred_check_branch
      %11 = sbr.rel (0) target = $region9
    $region8: #{cnn_base_forward.6} parent=1 // pred_region
      _
    $region9: #{cnn_base_forward.6} parent=1 // pred_fallthru
      _
    // Predicated region
    $region10: #{cnn_base_forward.6} parent=1 // pred_check
      _
    $region11: #{cnn_base_forward.6} parent=1 // pred_check_branch
      %13 = sbr.rel (0) target = $region13
    $region12: #{cnn_base_forward.6} parent=1 // pred_region
      _
    $region13: #{cnn_base_forward.6} parent=1 // pred_fallthru
      _
    %v15 = vld [vmem:[%s0] sm:$0xff]
    %v16 = vld [vmem:[%s0 + $0x8] sm:$0xff]
    %v17 = vld [vmem:[%s0 + $0x10] sm:$0xf]
    %v18 = vld [vmem:[%s0 + $0x14] sm:$0xff]
    %v19 = vld [vmem:[%s0 + $0x1c] sm:$0xff]
    %v20 = vld [vmem:[%s0 + $0x24] sm:$0xf]
    %v21 = vld [vmem:[%s0 + $0x28] sm:$0xff]
    %v22 = vld [vmem:[%s0 + $0x30] sm:$0xff]
    %v23 = vld [vmem:[%s0 + $0x38] sm:$0xf]
    %v24 = vld [vmem:[%s0 + $0x3c] sm:$0xff]
    %v25 = vld [vmem:[%s0 + $0x44] sm:$0xff]
    %v26 = vld [vmem:[%s0 + $0x4c] sm:$0xf]
    %v27 = vld [vmem:[%s0 + $0x50] sm:$0xff]
    %v28 = vld [vmem:[%s0 + $0x58] sm:$0xff]
    %v29 = vld [vmem:[%s0 + $0x60] sm:$0xf]
    %v30 = vld [vmem:[%s0 + $0x64] sm:$0xff]
    %v31 = vld [vmem:[%s0 + $0x6c] sm:$0xff]
    %v32 = vld [vmem:[%s0 + $0x74] sm:$0xf]
    %v33 = vld [vmem:[%s0 + $0x78] sm:$0xff]
    %v34 = vld [vmem:[%s0 + $0x80] sm:$0xff]
    %v35 = vld [vmem:[%s0 + $0x88] sm:$0xf]
    %v36 = vld [vmem:[%s0 + $0x8c] sm:$0xff]
    %v37 = vld [vmem:[%s0 + $0x94] sm:$0xff]
    %v38 = vld [vmem:[%s0 + $0x9c] sm:$0xf]
    %v39 = vld [vmem:[%s0 + $0xa0] sm:$0xff]
    %v40 = vld [vmem:[%s0 + $0xa8] sm:$0xff]
    %v41 = vld [vmem:[%s0 + $0xb0] sm:$0xf]
    %v42 = vld [vmem:[%s0 + $0xb4] sm:$0xff]
    %v43 = vld [vmem:[%s0 + $0xbc] sm:$0xff]
    %v44 = vld [vmem:[%s0 + $0xc4] sm:$0xf]
    %v45 = vld [vmem:[%s0 + $0xc8] sm:$0xff]
    %v46 = vld [vmem:[%s0 + $0xd0] sm:$0xff]
    %v47 = vld [vmem:[%s0 + $0xd8] sm:$0xf]
    %v48 = vld [vmem:[%s0 + $0xdc] sm:$0xff]
    %v49 = vld [vmem:[%s0 + $0xe4] sm:$0xff]
    %v50 = vld [vmem:[%s0 + $0xec] sm:$0xf]
    %v51 = vld [vmem:[%s0 + $0xf0] sm:$0xff]
    %v52 = vld [vmem:[%s0 + $0xf8] sm:$0xff]
    %v53 = vld [vmem:[%s0 + $0x100] sm:$0xf]
    %v54 = vld [vmem:[%s0 + $0x104] sm:$0xff]
    %v55 = vld [vmem:[%s0 + $0x10c] sm:$0xff]
    %v56 = vld [vmem:[%s0 + $0x114] sm:$0xf]
    %v57 = vld [vmem:[%s0 + $0x118] sm:$0xff]
    %v58 = vld [vmem:[%s0 + $0x120] sm:$0xff]
    %v59 = vld [vmem:[%s0 + $0x128] sm:$0xf]
    %v60 = vld [vmem:[%s0 + $0x12c] sm:$0xff]
    %v61 = vld [vmem:[%s0 + $0x134] sm:$0xff]
    %v62 = vld [vmem:[%s0 + $0x13c] sm:$0xf]
    %v63 = vld [vmem:[%s1] sm:$0xf]
    %v64 = vld [vmem:[%s1 + $0x4] sm:$0xf]
    %v65 = vld [vmem:[%s1 + $0x8] sm:$0xf]
    %v66 = vld [vmem:[%s1 + $0xc] sm:$0xf]
    %v67 = vld [vmem:[%s1 + $0x10] sm:$0xf]
    %v68 = vld [vmem:[%s1 + $0x14] sm:$0xf]
    %v69 = vld [vmem:[%s1 + $0x18] sm:$0xf]
    %v70 = vld [vmem:[%s1 + $0x1c] sm:$0xf]
    %v71 = vld [vmem:[%s1 + $0x20] sm:$0xf]
    %v72 = vld [vmem:[%s1 + $0x24] sm:$0xf]
    %v73 = vld [vmem:[%s1 + $0x28] sm:$0xf]
    %v74 = vld [vmem:[%s1 + $0x2c] sm:$0xf]
    %v75 = vld [vmem:[%s1 + $0x30] sm:$0xf]
    %v76 = vld [vmem:[%s1 + $0x34] sm:$0xf]
    %v77 = vld [vmem:[%s1 + $0x38] sm:$0xf]
    %v78 = vld [vmem:[%s1 + $0x3c] sm:$0xf]
    %v79 = vld [vmem:[%s1 + $0x40] sm:$0xf]
    %v80 = vld [vmem:[%s1 + $0x44] sm:$0xf]
    %v81 = vld [vmem:[%s1 + $0x48] sm:$0xf]
    %v82 = vld [vmem:[%s1 + $0x4c] sm:$0xf]
    %v83 = vld [vmem:[%s1 + $0x50] sm:$0xf]
    %v84 = vld [vmem:[%s1 + $0x54] sm:$0xf]
    %v85 = vld [vmem:[%s1 + $0x58] sm:$0xf]
    %v86 = vld [vmem:[%s1 + $0x5c] sm:$0xf]
    %v87 = vld [vmem:[%s1 + $0x60] sm:$0xf]
    %v88 = vld [vmem:[%s1 + $0x64] sm:$0xf]
    %v89 = vld [vmem:[%s1 + $0x68] sm:$0xf]
    %v90 = vld [vmem:[%s1 + $0x6c] sm:$0xf]
    %v91 = vld [vmem:[%s1 + $0x70] sm:$0xf]
    %v92 = vld [vmem:[%s1 + $0x74] sm:$0xf]
    %v93 = vld [vmem:[%s1 + $0x78] sm:$0xf]
    %v94 = vld [vmem:[%s1 + $0x7c] sm:$0xf]
    %v95 = vld [vmem:[%s1 + $0x80] sm:$0xf]
    %v96 = vld [vmem:[%s1 + $0x84] sm:$0xf]
    %v97 = vld [vmem:[%s1 + $0x88] sm:$0xf]
    %v98 = vld [vmem:[%s1 + $0x8c] sm:$0xf]
    %v99 = vld [vmem:[%s1 + $0x90] sm:$0xf]
    %v100 = vld [vmem:[%s1 + $0x94] sm:$0xf]
    %v101 = vld [vmem:[%s1 + $0x98] sm:$0xf]
    %v102 = vld [vmem:[%s1 + $0x9c] sm:$0xf]
    %v103 = vld [vmem:[%s1 + $0xa0] sm:$0xf]
    %v104 = vld [vmem:[%s1 + $0xa4] sm:$0xf]
    %v105 = vld [vmem:[%s1 + $0xa8] sm:$0xf]
    %v106 = vld [vmem:[%s1 + $0xac] sm:$0xf]
    %v107 = vld [vmem:[%s1 + $0xb0] sm:$0xf]
    %v108 = vld [vmem:[%s1 + $0xb4] sm:$0xf]
    %v109 = vld [vmem:[%s1 + $0xb8] sm:$0xf]
    %v110 = vld [vmem:[%s1 + $0xbc] sm:$0xf]
    %v111 = vld [vmem:[%s1 + $0xc0] sm:$0xf]
    %v112 = vld [vmem:[%s1 + $0xc4] sm:$0xf]
    %v113 = vld [vmem:[%s1 + $0xc8] sm:$0xf]
    %v114 = vld [vmem:[%s1 + $0xcc] sm:$0xf]
    %v115 = vld [vmem:[%s1 + $0xd0] sm:$0xf]
    %v116 = vld [vmem:[%s1 + $0xd4] sm:$0xf]
    %v117 = vld [vmem:[%s1 + $0xd8] sm:$0xf]
    %v118 = vld [vmem:[%s1 + $0xdc] sm:$0xf]
    %v119 = vld [vmem:[%s1 + $0xe0] sm:$0xf]
    %v120 = vld [vmem:[%s1 + $0xe4] sm:$0xf]
    %v121 = vld [vmem:[%s1 + $0xe8] sm:$0xf]
    %v122 = vld [vmem:[%s1 + $0xec] sm:$0xf]
    %v123 = vld [vmem:[%s1 + $0xf0] sm:$0xf]
    %v124 = vld [vmem:[%s1 + $0xf4] sm:$0xf]
    %v125 = vld [vmem:[%s1 + $0xf8] sm:$0xf]
    %v126 = vld [vmem:[%s1 + $0xfc] sm:$0xf]
    %v127 = vld [vmem:[%s1 + $0x100] sm:$0xf]
    %v128 = vld [vmem:[%s1 + $0x104] sm:$0xf]
    %v129 = vld [vmem:[%s1 + $0x108] sm:$0xf]
    %v130 = vld [vmem:[%s1 + $0x10c] sm:$0xf]
    %v131 = vld [vmem:[%s1 + $0x110] sm:$0xf]
    %v132 = vld [vmem:[%s1 + $0x114] sm:$0xf]
    %v133 = vld [vmem:[%s1 + $0x118] sm:$0xf]
    %v134 = vld [vmem:[%s1 + $0x11c] sm:$0xf]
    %v135 = vld [vmem:[%s2] sm:$0x1]
    %v137 = vlaneseq
    %v138 = vshrl.u32 %v137, 7
    %v139 = vsub.s32 0, %v138
    %v140 = vrot.slane %v135, %v139
    %v190 = vunpack.c.l.b16 %v15
    %v191 = vunpack.c.h.b16 %v15
    %v192 = vunpack.c.l.b16 %v16
    %v193 = vunpack.c.h.b16 %v16
    %v194 = vunpack.c.l.b16 %v17
    %v195 = vunpack.c.l.b16 %v18
    %v196 = vunpack.c.h.b16 %v18
    %v197 = vunpack.c.l.b16 %v19
    %v198 = vunpack.c.h.b16 %v19
    %v199 = vunpack.c.l.b16 %v20
    %v200 = vunpack.c.l.b16 %v21
    %v201 = vunpack.c.h.b16 %v21
    %v202 = vunpack.c.l.b16 %v22
    %v203 = vunpack.c.h.b16 %v22
    %v204 = vunpack.c.l.b16 %v23
    %v205 = vunpack.c.l.b16 %v24
    %v206 = vunpack.c.h.b16 %v24
    %v207 = vunpack.c.l.b16 %v25
    %v208 = vunpack.c.h.b16 %v25
    %v209 = vunpack.c.l.b16 %v26
    %v210 = vunpack.c.l.b16 %v27
    %v211 = vunpack.c.h.b16 %v27
    %v212 = vunpack.c.l.b16 %v28
    %v213 = vunpack.c.h.b16 %v28
    %v214 = vunpack.c.l.b16 %v29
    %v215 = vunpack.c.l.b16 %v30
    %v216 = vunpack.c.h.b16 %v30
    %v217 = vunpack.c.l.b16 %v31
    %v218 = vunpack.c.h.b16 %v31
    %v219 = vunpack.c.l.b16 %v32
    %v220 = vunpack.c.l.b16 %v33
    %v221 = vunpack.c.h.b16 %v33
    %v222 = vunpack.c.l.b16 %v34
    %v223 = vunpack.c.h.b16 %v34
    %v224 = vunpack.c.l.b16 %v35
    %v225 = vunpack.c.l.b16 %v36
    %v226 = vunpack.c.h.b16 %v36
    %v227 = vunpack.c.l.b16 %v37
    %v228 = vunpack.c.h.b16 %v37
    %v229 = vunpack.c.l.b16 %v38
    %v230 = vunpack.c.l.b16 %v39
    %v231 = vunpack.c.h.b16 %v39
    %v232 = vunpack.c.l.b16 %v40
    %v233 = vunpack.c.h.b16 %v40
    %v234 = vunpack.c.l.b16 %v41
    %v235 = vunpack.c.l.b16 %v42
    %v236 = vunpack.c.h.b16 %v42
    %v237 = vunpack.c.l.b16 %v43
    %v238 = vunpack.c.h.b16 %v43
    %v239 = vunpack.c.l.b16 %v44
    %v240 = vunpack.c.l.b16 %v45
    %v241 = vunpack.c.h.b16 %v45
    %v242 = vunpack.c.l.b16 %v46
    %v243 = vunpack.c.h.b16 %v46
    %v244 = vunpack.c.l.b16 %v47
    %v245 = vunpack.c.l.b16 %v48
    %v246 = vunpack.c.h.b16 %v48
    %v247 = vunpack.c.l.b16 %v49
    %v248 = vunpack.c.h.b16 %v49
    %v249 = vunpack.c.l.b16 %v50
    %v250 = vunpack.c.l.b16 %v51
    %v251 = vunpack.c.h.b16 %v51
    %v252 = vunpack.c.l.b16 %v52
    %v253 = vunpack.c.h.b16 %v52
    %v254 = vunpack.c.l.b16 %v53
    %v255 = vunpack.c.l.b16 %v54
    %v256 = vunpack.c.h.b16 %v54
    %v257 = vunpack.c.l.b16 %v55
    %v258 = vunpack.c.h.b16 %v55
    %v259 = vunpack.c.l.b16 %v56
    %v260 = vunpack.c.l.b16 %v57
    %v261 = vunpack.c.h.b16 %v57
    %v262 = vunpack.c.l.b16 %v58
    %v263 = vunpack.c.h.b16 %v58
    %v264 = vunpack.c.l.b16 %v59
    %v265 = vunpack.c.l.b16 %v60
    %v266 = vunpack.c.h.b16 %v60
    %v267 = vunpack.c.l.b16 %v61
    %v268 = vunpack.c.h.b16 %v61
    %v269 = vunpack.c.l.b16 %v62
    %v270 = vpack.c.b16 %v195, %v190
    %v271 = vpack.c.b16 %v196, %v191
    %v272 = vpack.c.b16 %v197, %v192
    %v273 = vpack.c.b16 %v198, %v193
    %v274 = vpack.c.b16 %v199, %v194
    %v275 = vpack.c.b16 %v205, %v200
    %v276 = vpack.c.b16 %v206, %v201
    %v277 = vpack.c.b16 %v207, %v202
    %v278 = vpack.c.b16 %v208, %v203
    %v279 = vpack.c.b16 %v209, %v204
    %v280 = vpack.c.b16 %v215, %v210
    %v281 = vpack.c.b16 %v216, %v211
    %v282 = vpack.c.b16 %v217, %v212
    %v283 = vpack.c.b16 %v218, %v213
    %v284 = vpack.c.b16 %v219, %v214
    %v285 = vpack.c.b16 %v225, %v220
    %v286 = vpack.c.b16 %v226, %v221
    %v287 = vpack.c.b16 %v227, %v222
    %v288 = vpack.c.b16 %v228, %v223
    %v289 = vpack.c.b16 %v229, %v224
    %v290 = vpack.c.b16 %v235, %v230
    %v291 = vpack.c.b16 %v236, %v231
    %v292 = vpack.c.b16 %v237, %v232
    %v293 = vpack.c.b16 %v238, %v233
    %v294 = vpack.c.b16 %v239, %v234
    %v295 = vpack.c.b16 %v245, %v240
    %v296 = vpack.c.b16 %v246, %v241
    %v297 = vpack.c.b16 %v247, %v242
    %v298 = vpack.c.b16 %v248, %v243
    %v299 = vpack.c.b16 %v249, %v244
    %v300 = vpack.c.b16 %v255, %v250
    %v301 = vpack.c.b16 %v256, %v251
    %v302 = vpack.c.b16 %v257, %v252
    %v303 = vpack.c.b16 %v258, %v253
    %v304 = vpack.c.b16 %v259, %v254
    %v305 = vpack.c.b16 %v265, %v260
    %v306 = vpack.c.b16 %v266, %v261
    %v307 = vpack.c.b16 %v267, %v262
    %v308 = vpack.c.b16 %v268, %v263
    %v309 = vpack.c.b16 %v269, %v264
    %v414 = vunpack.c.l.b16 %v63
    %v415 = vunpack.c.l.b16 %v64
    %v416 = vunpack.c.l.b16 %v65
    %v417 = vunpack.c.l.b16 %v66
    %v418 = vunpack.c.l.b16 %v67
    %v419 = vunpack.c.l.b16 %v68
    %v420 = vunpack.c.l.b16 %v69
    %v421 = vunpack.c.l.b16 %v70
    %v422 = vunpack.c.l.b16 %v71
    %v423 = vunpack.c.l.b16 %v72
    %v424 = vunpack.c.l.b16 %v73
    %v425 = vunpack.c.l.b16 %v74
    %v426 = vunpack.c.l.b16 %v75
    %v427 = vunpack.c.l.b16 %v76
    %v428 = vunpack.c.l.b16 %v77
    %v429 = vunpack.c.l.b16 %v78
    %v430 = vunpack.c.l.b16 %v79
    %v431 = vunpack.c.l.b16 %v80
    %v432 = vunpack.c.l.b16 %v81
    %v433 = vunpack.c.l.b16 %v82
    %v434 = vunpack.c.l.b16 %v83
    %v435 = vunpack.c.l.b16 %v84
    %v436 = vunpack.c.l.b16 %v85
    %v437 = vunpack.c.l.b16 %v86
    %v438 = vunpack.c.l.b16 %v87
    %v439 = vunpack.c.l.b16 %v88
    %v440 = vunpack.c.l.b16 %v89
    %v441 = vunpack.c.l.b16 %v90
    %v442 = vunpack.c.l.b16 %v91
    %v443 = vunpack.c.l.b16 %v92
    %v444 = vunpack.c.l.b16 %v93
    %v445 = vunpack.c.l.b16 %v94
    %v446 = vunpack.c.l.b16 %v95
    %v447 = vunpack.c.l.b16 %v96
    %v448 = vunpack.c.l.b16 %v97
    %v449 = vunpack.c.l.b16 %v98
    %v450 = vunpack.c.l.b16 %v99
    %v451 = vunpack.c.l.b16 %v100
    %v452 = vunpack.c.l.b16 %v101
    %v453 = vunpack.c.l.b16 %v102
    %v454 = vunpack.c.l.b16 %v103
    %v455 = vunpack.c.l.b16 %v104
    %v456 = vunpack.c.l.b16 %v105
    %v457 = vunpack.c.l.b16 %v106
    %v458 = vunpack.c.l.b16 %v107
    %v459 = vunpack.c.l.b16 %v108
    %v460 = vunpack.c.l.b16 %v109
    %v461 = vunpack.c.l.b16 %v110
    %v462 = vunpack.c.l.b16 %v111
    %v463 = vunpack.c.l.b16 %v112
    %v464 = vunpack.c.l.b16 %v113
    %v465 = vunpack.c.l.b16 %v114
    %v466 = vunpack.c.l.b16 %v115
    %v467 = vunpack.c.l.b16 %v116
    %v468 = vunpack.c.l.b16 %v117
    %v469 = vunpack.c.l.b16 %v118
    %v470 = vunpack.c.l.b16 %v119
    %v471 = vunpack.c.l.b16 %v120
    %v472 = vunpack.c.l.b16 %v121
    %v473 = vunpack.c.l.b16 %v122
    %v474 = vunpack.c.l.b16 %v123
    %v475 = vunpack.c.l.b16 %v124
    %v476 = vunpack.c.l.b16 %v125
    %v477 = vunpack.c.l.b16 %v126
    %v478 = vunpack.c.l.b16 %v127
    %v479 = vunpack.c.l.b16 %v128
    %v480 = vunpack.c.l.b16 %v129
    %v481 = vunpack.c.l.b16 %v130
    %v482 = vunpack.c.l.b16 %v131
    %v483 = vunpack.c.l.b16 %v132
    %v484 = vunpack.c.l.b16 %v133
    %v485 = vunpack.c.l.b16 %v134
    %v486 = vpack.c.b16 %v415, %v414
    %v487 = vpack.c.b16 %v417, %v416
    %v488 = vpack.c.b16 %v419, %v418
    %v489 = vpack.c.b16 %v421, %v420
    %v490 = vpack.c.b16 %v423, %v422
    %v491 = vpack.c.b16 %v425, %v424
    %v492 = vpack.c.b16 %v427, %v426
    %v493 = vpack.c.b16 %v429, %v428
    %v494 = vpack.c.b16 %v431, %v430
    %v495 = vpack.c.b16 %v433, %v432
    %v496 = vpack.c.b16 %v435, %v434
    %v497 = vpack.c.b16 %v437, %v436
    %v498 = vpack.c.b16 %v439, %v438
    %v499 = vpack.c.b16 %v441, %v440
    %v500 = vpack.c.b16 %v443, %v442
    %v501 = vpack.c.b16 %v445, %v444
    %v502 = vpack.c.b16 %v447, %v446
    %v503 = vpack.c.b16 %v449, %v448
    %v504 = vpack.c.b16 %v451, %v450
    %v505 = vpack.c.b16 %v453, %v452
    %v506 = vpack.c.b16 %v455, %v454
    %v507 = vpack.c.b16 %v457, %v456
    %v508 = vpack.c.b16 %v459, %v458
    %v509 = vpack.c.b16 %v461, %v460
    %v510 = vpack.c.b16 %v463, %v462
    %v511 = vpack.c.b16 %v465, %v464
    %v512 = vpack.c.b16 %v467, %v466
    %v513 = vpack.c.b16 %v469, %v468
    %v514 = vpack.c.b16 %v471, %v470
    %v515 = vpack.c.b16 %v473, %v472
    %v516 = vpack.c.b16 %v475, %v474
    %v517 = vpack.c.b16 %v477, %v476
    %v518 = vpack.c.b16 %v479, %v478
    %v519 = vpack.c.b16 %v481, %v480
    %v520 = vpack.c.b16 %v483, %v482
    %v521 = vpack.c.b16 %v485, %v484
    %vm558 = vcmask 523264
    %v560 = vsel %vm558, %v274, 0
    %v563 = vsel %vm558, %v279, 0
    %v566 = vsel %vm558, %v284, 0
    %v569 = vsel %vm558, %v289, 0
    %v572 = vsel %vm558, %v294, 0
    %v575 = vsel %vm558, %v299, 0
    %v578 = vsel %vm558, %v304, 0
    %v581 = vsel %vm558, %v309, 0
    %583 = vmatprep.subr.bf16.mxu0 0
    %584 = vmatpush1.bf16.msra.mxu0 %v493
    %585 = vmatprep.subr.bf16.mxu0 0
    %586 = vmatpush1.bf16.msra.mxu0 %v492
    %587 = vmatprep.subr.bf16.mxu0 0
    %588 = vmatpush1.bf16.msra.mxu0 %v491
    %589 = vmatprep.subr.bf16.mxu0 0
    %590 = vmatpush1.bf16.msra.mxu0 %v490
    %591 = vmatprep.subr.bf16.mxu0 0
    %592 = vmatpush1.bf16.msra.mxu0 %v489
    %593 = vmatprep.subr.bf16.mxu0 0
    %594 = vmatpush1.bf16.msra.mxu0 %v488
    %595 = vmatprep.subr.bf16.mxu0 0
    %596 = vmatpush1.bf16.msra.mxu0 %v487
    %597 = vmatprep.subr.bf16.mxu0 0
    %598 = vmatpush1.bf16.msra.mxu0 %v486
    %599 = vmatprep.subr.bf16.mxu0 0
    %600 = vmatpush2.bf16.msra.mxu0 %v501
    %601 = vmatprep.subr.bf16.mxu0 0
    %602 = vmatpush2.bf16.msra.mxu0 %v500
    %603 = vmatprep.subr.bf16.mxu0 0
    %604 = vmatpush2.bf16.msra.mxu0 %v499
    %605 = vmatprep.subr.bf16.mxu0 0
    %606 = vmatpush2.bf16.msra.mxu0 %v498
    %607 = vmatprep.subr.bf16.mxu0 0
    %608 = vmatpush2.bf16.msra.mxu0 %v497
    %609 = vmatprep.subr.bf16.mxu0 0
    %610 = vmatpush2.bf16.msra.mxu0 %v496
    %611 = vmatprep.subr.bf16.mxu0 0
    %612 = vmatpush2.bf16.msra.mxu0 %v495
    %613 = vmatprep.subr.bf16.mxu0 0
    %614 = vmatpush2.bf16.msra.mxu0 %v494
    %615 = vmatprep.mubr.bf16.mxu0 %v271
    %616 = vmatmul.mubr.bf16.gmra.mxu0 %v270
    %v617 = vpop.f32.mrf.mxu0
    %v618 = vadd.f32 %v140, %v617
    %v619 = vpop.f32.mrf.mxu0
    %v620 = vpop.f32.mrf.mxu0
    %v621 = vadd.f32 %v140, %v620
    %v622 = vpop.f32.mrf.mxu0
    %623 = vmatprep.mubr.bf16.mxu0 %v276
    %624 = vmatmul.mubr.bf16.gmra.mxu0 %v275
    %v625 = vpop.f32.mrf.mxu0
    %v626 = vadd.f32 %v140, %v625
    %v627 = vpop.f32.mrf.mxu0
    %v628 = vpop.f32.mrf.mxu0
    %v629 = vadd.f32 %v140, %v628
    %v630 = vpop.f32.mrf.mxu0
    %631 = vmatprep.mubr.bf16.mxu0 %v281
    %632 = vmatmul.mubr.bf16.gmra.mxu0 %v280
    %v633 = vpop.f32.mrf.mxu0
    %v634 = vadd.f32 %v140, %v633
    %v635 = vpop.f32.mrf.mxu0
    %v636 = vpop.f32.mrf.mxu0
    %v637 = vadd.f32 %v140, %v636
    %v638 = vpop.f32.mrf.mxu0
    %639 = vmatprep.mubr.bf16.mxu0 %v286
    %640 = vmatmul.mubr.bf16.gmra.mxu0 %v285
    %v641 = vpop.f32.mrf.mxu0
    %v642 = vadd.f32 %v140, %v641
    %v643 = vpop.f32.mrf.mxu0
    %v644 = vpop.f32.mrf.mxu0
    %v645 = vadd.f32 %v140, %v644
    %v646 = vpop.f32.mrf.mxu0
    %647 = vmatprep.mubr.bf16.mxu0 %v291
    %648 = vmatmul.mubr.bf16.gmra.mxu0 %v290
    %v649 = vpop.f32.mrf.mxu0
    %v650 = vadd.f32 %v140, %v649
    %v651 = vpop.f32.mrf.mxu0
    %v652 = vpop.f32.mrf.mxu0
    %v653 = vadd.f32 %v140, %v652
    %v654 = vpop.f32.mrf.mxu0
    %655 = vmatprep.mubr.bf16.mxu0 %v296
    %656 = vmatmul.mubr.bf16.gmra.mxu0 %v295
    %v657 = vpop.f32.mrf.mxu0
    %v658 = vadd.f32 %v140, %v657
    %v659 = vpop.f32.mrf.mxu0
    %v660 = vpop.f32.mrf.mxu0
    %v661 = vadd.f32 %v140, %v660
    %v662 = vpop.f32.mrf.mxu0
    %663 = vmatprep.mubr.bf16.mxu0 %v301
    %664 = vmatmul.mubr.bf16.gmra.mxu0 %v300
    %v665 = vpop.f32.mrf.mxu0
    %v666 = vadd.f32 %v140, %v665
    %v667 = vpop.f32.mrf.mxu0
    %v668 = vpop.f32.mrf.mxu0
    %v669 = vadd.f32 %v140, %v668
    %v670 = vpop.f32.mrf.mxu0
    %671 = vmatprep.mubr.bf16.mxu0 %v306
    %672 = vmatmul.mubr.bf16.gmra.mxu0 %v305
    %v673 = vpop.f32.mrf.mxu0
    %v674 = vadd.f32 %v140, %v673
    %v675 = vpop.f32.mrf.mxu0
    %v676 = vpop.f32.mrf.mxu0
    %v677 = vadd.f32 %v140, %v676
    %v678 = vpop.f32.mrf.mxu0
    %679 = vdwg.mxu0
    %680 = vmatprep.subr.bf16.mxu0 0
    %681 = vmatpush1.bf16.msra.mxu0 %v509
    %682 = vmatprep.subr.bf16.mxu0 0
    %683 = vmatpush1.bf16.msra.mxu0 %v508
    %684 = vmatprep.subr.bf16.mxu0 0
    %685 = vmatpush1.bf16.msra.mxu0 %v507
    %686 = vmatprep.subr.bf16.mxu0 0
    %687 = vmatpush1.bf16.msra.mxu0 %v506
    %688 = vmatprep.subr.bf16.mxu0 0
    %689 = vmatpush1.bf16.msra.mxu0 %v505
    %690 = vmatprep.subr.bf16.mxu0 0
    %691 = vmatpush1.bf16.msra.mxu0 %v504
    %692 = vmatprep.subr.bf16.mxu0 0
    %693 = vmatpush1.bf16.msra.mxu0 %v503
    %694 = vmatprep.subr.bf16.mxu0 0
    %695 = vmatpush1.bf16.msra.mxu0 %v502
    %696 = vmatprep.subr.bf16.mxu0 0
    %697 = vmatpush2.bf16.msra.mxu0 %v517
    %698 = vmatprep.subr.bf16.mxu0 0
    %699 = vmatpush2.bf16.msra.mxu0 %v516
    %700 = vmatprep.subr.bf16.mxu0 0
    %701 = vmatpush2.bf16.msra.mxu0 %v515
    %702 = vmatprep.subr.bf16.mxu0 0
    %703 = vmatpush2.bf16.msra.mxu0 %v514
    %704 = vmatprep.subr.bf16.mxu0 0
    %705 = vmatpush2.bf16.msra.mxu0 %v513
    %706 = vmatprep.subr.bf16.mxu0 0
    %707 = vmatpush2.bf16.msra.mxu0 %v512
    %708 = vmatprep.subr.bf16.mxu0 0
    %709 = vmatpush2.bf16.msra.mxu0 %v511
    %710 = vmatprep.subr.bf16.mxu0 0
    %711 = vmatpush2.bf16.msra.mxu0 %v510
    %712 = vmatprep.mubr.bf16.mxu0 %v273
    %713 = vmatmul.mubr.bf16.gmra.mxu0 %v272
    %v714 = vpop.f32.mrf.mxu0
    %v715 = vadd.f32 %v618, %v714
    %v716 = vpop.f32.mrf.mxu0
    %v717 = vpop.f32.mrf.mxu0
    %v718 = vadd.f32 %v621, %v717
    %v719 = vpop.f32.mrf.mxu0
    %720 = vmatprep.mubr.bf16.mxu0 %v278
    %721 = vmatmul.mubr.bf16.gmra.mxu0 %v277
    %v722 = vpop.f32.mrf.mxu0
    %v723 = vadd.f32 %v626, %v722
    %v724 = vpop.f32.mrf.mxu0
    %v725 = vpop.f32.mrf.mxu0
    %v726 = vadd.f32 %v629, %v725
    %v727 = vpop.f32.mrf.mxu0
    %728 = vmatprep.mubr.bf16.mxu0 %v283
    %729 = vmatmul.mubr.bf16.gmra.mxu0 %v282
    %v730 = vpop.f32.mrf.mxu0
    %v731 = vadd.f32 %v634, %v730
    %v732 = vpop.f32.mrf.mxu0
    %v733 = vpop.f32.mrf.mxu0
    %v734 = vadd.f32 %v637, %v733
    %v735 = vpop.f32.mrf.mxu0
    %736 = vmatprep.mubr.bf16.mxu0 %v288
    %737 = vmatmul.mubr.bf16.gmra.mxu0 %v287
    %v738 = vpop.f32.mrf.mxu0
    %v739 = vadd.f32 %v642, %v738
    %v740 = vpop.f32.mrf.mxu0
    %v741 = vpop.f32.mrf.mxu0
    %v742 = vadd.f32 %v645, %v741
    %v743 = vpop.f32.mrf.mxu0
    %744 = vmatprep.mubr.bf16.mxu0 %v293
    %745 = vmatmul.mubr.bf16.gmra.mxu0 %v292
    %v746 = vpop.f32.mrf.mxu0
    %v747 = vadd.f32 %v650, %v746
    %v748 = vpop.f32.mrf.mxu0
    %v749 = vpop.f32.mrf.mxu0
    %v750 = vadd.f32 %v653, %v749
    %v751 = vpop.f32.mrf.mxu0
    %752 = vmatprep.mubr.bf16.mxu0 %v298
    %753 = vmatmul.mubr.bf16.gmra.mxu0 %v297
    %v754 = vpop.f32.mrf.mxu0
    %v755 = vadd.f32 %v658, %v754
    %v756 = vpop.f32.mrf.mxu0
    %v757 = vpop.f32.mrf.mxu0
    %v758 = vadd.f32 %v661, %v757
    %v759 = vpop.f32.mrf.mxu0
    %760 = vmatprep.mubr.bf16.mxu0 %v303
    %761 = vmatmul.mubr.bf16.gmra.mxu0 %v302
    %v762 = vpop.f32.mrf.mxu0
    %v763 = vadd.f32 %v666, %v762
    %v764 = vpop.f32.mrf.mxu0
    %v765 = vpop.f32.mrf.mxu0
    %v766 = vadd.f32 %v669, %v765
    %v767 = vpop.f32.mrf.mxu0
    %768 = vmatprep.mubr.bf16.mxu0 %v308
    %769 = vmatmul.mubr.bf16.gmra.mxu0 %v307
    %v770 = vpop.f32.mrf.mxu0
    %v771 = vadd.f32 %v674, %v770
    %v772 = vpop.f32.mrf.mxu0
    %v773 = vpop.f32.mrf.mxu0
    %v774 = vadd.f32 %v677, %v773
    %v775 = vpop.f32.mrf.mxu0
    %776 = vdwg.mxu0
    %777 = vmatprep.subr.bf16.mxu0 0
    %778 = vmatpush1.bf16.msra.mxu0 0
    %779 = vmatprep.subr.bf16.mxu0 0
    %780 = vmatpush1.bf16.msra.mxu0 0
    %781 = vmatprep.subr.bf16.mxu0 0
    %782 = vmatpush1.bf16.msra.mxu0 0
    %783 = vmatprep.subr.bf16.mxu0 0
    %784 = vmatpush1.bf16.msra.mxu0 0
    %785 = vmatprep.subr.bf16.mxu0 0
    %786 = vmatpush1.bf16.msra.mxu0 %v521
    %787 = vmatprep.subr.bf16.mxu0 0
    %788 = vmatpush1.bf16.msra.mxu0 %v520
    %789 = vmatprep.subr.bf16.mxu0 0
    %790 = vmatpush1.bf16.msra.mxu0 %v519
    %791 = vmatprep.subr.bf16.mxu0 0
    %792 = vmatpush1.bf16.msra.mxu0 %v518
    %793 = vmatprep.subr.bf16.mxu0 0
    %794 = vmatpush2.bf16.msra.mxu0 0
    %795 = vmatprep.subr.bf16.mxu0 0
    %796 = vmatpush2.bf16.msra.mxu0 0
    %797 = vmatprep.subr.bf16.mxu0 0
    %798 = vmatpush2.bf16.msra.mxu0 0
    %799 = vmatprep.subr.bf16.mxu0 0
    %800 = vmatpush2.bf16.msra.mxu0 0
    %801 = vmatprep.subr.bf16.mxu0 0
    %802 = vmatpush2.bf16.msra.mxu0 0
    %803 = vmatprep.subr.bf16.mxu0 0
    %804 = vmatpush2.bf16.msra.mxu0 0
    %805 = vmatprep.subr.bf16.mxu0 0
    %806 = vmatpush2.bf16.msra.mxu0 0
    %807 = vmatprep.subr.bf16.mxu0 0
    %808 = vmatpush2.bf16.msra.mxu0 0
    %809 = vmatprep.mubr.bf16.mxu0 0
    %810 = vmatmul.mubr.bf16.gmra.mxu0 %v560
    %v811 = vpop.f32.mrf.mxu0
    %v812 = vadd.f32 %v715, %v811
    %v813 = vpop.f32.mrf.mxu0
    %v814 = vpop.f32.mrf.mxu0
    %v815 = vadd.f32 %v718, %v814
    %v816 = vpop.f32.mrf.mxu0
    %817 = vmatprep.mubr.bf16.mxu0 0
    %818 = vmatmul.mubr.bf16.gmra.mxu0 %v563
    %v819 = vpop.f32.mrf.mxu0
    %v820 = vadd.f32 %v723, %v819
    %v821 = vpop.f32.mrf.mxu0
    %v822 = vpop.f32.mrf.mxu0
    %v823 = vadd.f32 %v726, %v822
    %v824 = vpop.f32.mrf.mxu0
    %825 = vmatprep.mubr.bf16.mxu0 0
    %826 = vmatmul.mubr.bf16.gmra.mxu0 %v566
    %v827 = vpop.f32.mrf.mxu0
    %v828 = vadd.f32 %v731, %v827
    %v829 = vpop.f32.mrf.mxu0
    %v830 = vpop.f32.mrf.mxu0
    %v831 = vadd.f32 %v734, %v830
    %v832 = vpop.f32.mrf.mxu0
    %833 = vmatprep.mubr.bf16.mxu0 0
    %834 = vmatmul.mubr.bf16.gmra.mxu0 %v569
    %v835 = vpop.f32.mrf.mxu0
    %v836 = vadd.f32 %v739, %v835
    %v837 = vpop.f32.mrf.mxu0
    %v838 = vpop.f32.mrf.mxu0
    %v839 = vadd.f32 %v742, %v838
    %v840 = vpop.f32.mrf.mxu0
    %841 = vmatprep.mubr.bf16.mxu0 0
    %842 = vmatmul.mubr.bf16.gmra.mxu0 %v572
    %v843 = vpop.f32.mrf.mxu0
    %v844 = vadd.f32 %v747, %v843
    %v845 = vpop.f32.mrf.mxu0
    %v846 = vpop.f32.mrf.mxu0
    %v847 = vadd.f32 %v750, %v846
    %v848 = vpop.f32.mrf.mxu0
    %849 = vmatprep.mubr.bf16.mxu0 0
    %850 = vmatmul.mubr.bf16.gmra.mxu0 %v575
    %v851 = vpop.f32.mrf.mxu0
    %v852 = vadd.f32 %v755, %v851
    %v853 = vpop.f32.mrf.mxu0
    %v854 = vpop.f32.mrf.mxu0
    %v855 = vadd.f32 %v758, %v854
    %v856 = vpop.f32.mrf.mxu0
    %857 = vmatprep.mubr.bf16.mxu0 0
    %858 = vmatmul.mubr.bf16.gmra.mxu0 %v578
    %v859 = vpop.f32.mrf.mxu0
    %v860 = vadd.f32 %v763, %v859
    %v861 = vpop.f32.mrf.mxu0
    %v862 = vpop.f32.mrf.mxu0
    %v863 = vadd.f32 %v766, %v862
    %v864 = vpop.f32.mrf.mxu0
    %865 = vmatprep.mubr.bf16.mxu0 0
    %866 = vmatmul.mubr.bf16.gmra.mxu0 %v581
    %v867 = vpop.f32.mrf.mxu0
    %v868 = vadd.f32 %v771, %v867
    %v869 = vpop.f32.mrf.mxu0
    %v870 = vpop.f32.mrf.mxu0
    %v871 = vadd.f32 %v774, %v870
    %v872 = vpop.f32.mrf.mxu0
    %873 = vdwg.mxu0
    %v874 = vmax.f32 %v812, 0.0
    %v875 = vmax.f32 %v815, 0.0
    %v876 = vmax.f32 %v820, 0.0
    %v877 = vmax.f32 %v823, 0.0
    %v878 = vmax.f32 %v828, 0.0
    %v879 = vmax.f32 %v831, 0.0
    %v880 = vmax.f32 %v836, 0.0
    %v881 = vmax.f32 %v839, 0.0
    %v882 = vmax.f32 %v844, 0.0
    %v883 = vmax.f32 %v847, 0.0
    %v884 = vmax.f32 %v852, 0.0
    %v885 = vmax.f32 %v855, 0.0
    %v886 = vmax.f32 %v860, 0.0
    %v887 = vmax.f32 %v863, 0.0
    %v888 = vmax.f32 %v868, 0.0
    %v889 = vmax.f32 %v871, 0.0
    %v890 = vpack.c.bf16 %v875, %v874
    %v891 = vpack.c.bf16 %v877, %v876
    %v892 = vpack.c.bf16 %v879, %v878
    %v893 = vpack.c.bf16 %v881, %v880
    %v894 = vpack.c.bf16 %v883, %v882
    %v895 = vpack.c.bf16 %v885, %v884
    %v896 = vpack.c.bf16 %v887, %v886
    %v897 = vpack.c.bf16 %v889, %v888
    %v906 = vunpack.c.l.b16 %v890
    %v907 = vunpack.c.h.b16 %v890
    %v908 = vunpack.c.l.b16 %v891
    %v909 = vunpack.c.h.b16 %v891
    %v910 = vunpack.c.l.b16 %v892
    %v911 = vunpack.c.h.b16 %v892
    %v912 = vunpack.c.l.b16 %v893
    %v913 = vunpack.c.h.b16 %v893
    %v914 = vunpack.c.l.b16 %v894
    %v915 = vunpack.c.h.b16 %v894
    %v916 = vunpack.c.l.b16 %v895
    %v917 = vunpack.c.h.b16 %v895
    %v918 = vunpack.c.l.b16 %v896
    %v919 = vunpack.c.h.b16 %v896
    %v920 = vunpack.c.l.b16 %v897
    %v921 = vunpack.c.h.b16 %v897
    %v922 = vpack.c.b16 %v906, %v906
    %v923 = vpack.c.b16 %v907, %v907
    %v924 = vpack.c.b16 %v908, %v908
    %v925 = vpack.c.b16 %v909, %v909
    %v926 = vpack.c.b16 %v910, %v910
    %v927 = vpack.c.b16 %v911, %v911
    %v928 = vpack.c.b16 %v912, %v912
    %v929 = vpack.c.b16 %v913, %v913
    %v930 = vpack.c.b16 %v914, %v914
    %v931 = vpack.c.b16 %v915, %v915
    %v932 = vpack.c.b16 %v916, %v916
    %v933 = vpack.c.b16 %v917, %v917
    %v934 = vpack.c.b16 %v918, %v918
    %v935 = vpack.c.b16 %v919, %v919
    %v936 = vpack.c.b16 %v920, %v920
    %v937 = vpack.c.b16 %v921, %v921
    %vm954 = vcmask 257024
    %955 = vst.msk [vmem:[#allocation2] sm:$0xf] %vm954, %v922
    %956 = vst.msk [vmem:[#allocation2 + $0x4] sm:$0xf] %vm954, %v923
    %957 = vst.msk [vmem:[#allocation2 + $0x8] sm:$0xf] %vm954, %v924
    %958 = vst.msk [vmem:[#allocation2 + $0xc] sm:$0xf] %vm954, %v925
    %959 = vst.msk [vmem:[#allocation2 + $0x10] sm:$0xf] %vm954, %v926
    %960 = vst.msk [vmem:[#allocation2 + $0x14] sm:$0xf] %vm954, %v927
    %961 = vst.msk [vmem:[#allocation2 + $0x18] sm:$0xf] %vm954, %v928
    %962 = vst.msk [vmem:[#allocation2 + $0x1c] sm:$0xf] %vm954, %v929
    %963 = vst.msk [vmem:[#allocation2 + $0x20] sm:$0xf] %vm954, %v930
    %964 = vst.msk [vmem:[#allocation2 + $0x24] sm:$0xf] %vm954, %v931
    %965 = vst.msk [vmem:[#allocation2 + $0x28] sm:$0xf] %vm954, %v932
    %966 = vst.msk [vmem:[#allocation2 + $0x2c] sm:$0xf] %vm954, %v933
    %967 = vst.msk [vmem:[#allocation2 + $0x30] sm:$0xf] %vm954, %v934
    %968 = vst.msk [vmem:[#allocation2 + $0x34] sm:$0xf] %vm954, %v935
    %969 = vst.msk [vmem:[#allocation2 + $0x38] sm:$0xf] %vm954, %v936
    %970 = vst.msk [vmem:[#allocation2 + $0x3c] sm:$0xf] %vm954, %v937
    // Predicated region
    $region14: #{cnn_base_forward.6} parent=1 // pred_check
      _
    $region15: #{cnn_base_forward.6} parent=1 // pred_check_branch
      %972 = sbr.rel (0) target = $region17
    $region16: #{cnn_base_forward.6} parent=1 // pred_region
      // Predicated region
      $region18: #{cnn_base_forward.6} parent=16 // pred_check
        _
      $region19: #{cnn_base_forward.6} parent=16 // pred_check_branch
        %974 = sbr.rel (0) target = $region21
      $region20: #{cnn_base_forward.6} parent=16 // pred_region
        // Predicated region
        $region22: #{cnn_base_forward.6} parent=20 // pred_check
          _
        $region23: #{cnn_base_forward.6} parent=20 // pred_check_branch
          %976 = sbr.rel target = $region25
        $region24: #{cnn_base_forward.6} parent=20 // pred_region
          // Predicated region
          $region37: #{cnn_base_forward.6} parent=24 // pred_check
            _
          $region38: #{cnn_base_forward.6} parent=24 // pred_check_branch
            %1016 = sbr.rel (0) target = $region40
          $region39: #{cnn_base_forward.6} parent=24 // pred_region
            loop: start=0, step=1, limit=1
            $region41: #{cnn_base_forward.6} parent=39 // loop_pre_header
              _
            $region42: #{cnn_base_forward.6} parent=39 // loop_header
              %s1018 = sphi 0, %s1022
              %p1019 = scmp.ge.s32.totalorder %s1018, 1
              %s1023 = sphi [#allocation2], [#allocation2]
              %s1024 = sphi %s3, %s3
            $region43: #{cnn_base_forward.6} parent=39 // loop_header_branch
              %1021 = sbr.rel (%p1019) target = $region47
            $region44: #{cnn_base_forward.6} parent=39 // loop_body
              _
            $region45: #{cnn_base_forward.6} parent=39 // loop_footer
              %s1022 = sadd.s32 1, %s1018
            $region46: #{cnn_base_forward.6} parent=39 // loop_footer_branch
              %1017 = sbr.rel target = $region42
            $region47: #{cnn_base_forward.6} parent=39 // loop_exit
              _
            %s1026 = ssub.s32 16, 1
            loop: start=0, step=1, limit=1
            $region48: #{cnn_base_forward.6} parent=39 // loop_pre_header
              _
            $region49: #{cnn_base_forward.6} parent=39 // loop_header
              %s1028 = sphi 0, %s1032
              %p1029 = scmp.ge.s32.totalorder %s1028, 1
              %s1033 = sphi [#allocation2], [#allocation2]
              %s1034 = sphi %s3, %s3
            $region50: #{cnn_base_forward.6} parent=39 // loop_header_branch
              %1031 = sbr.rel (%p1029) target = $region54
            $region51: #{cnn_base_forward.6} parent=39 // loop_body
              %v1035 = vld [vmem:[%s1033] sm:%s1026]
              %1036 = vst [vmem:[%s1034] sm:%s1026] %v1035
              %v1037 = vld [vmem:[%s1033 + $0x4] sm:%s1026]
              %1038 = vst [vmem:[%s1034 + $0x4] sm:%s1026] %v1037
              %v1039 = vld [vmem:[%s1033 + $0x8] sm:%s1026]
              %1040 = vst [vmem:[%s1034 + $0x8] sm:%s1026] %v1039
              %v1041 = vld [vmem:[%s1033 + $0xc] sm:%s1026]
              %1042 = vst [vmem:[%s1034 + $0xc] sm:%s1026] %v1041
              %v1043 = vld [vmem:[%s1033 + $0x10] sm:%s1026]
              %1044 = vst [vmem:[%s1034 + $0x10] sm:%s1026] %v1043
              %v1045 = vld [vmem:[%s1033 + $0x14] sm:%s1026]
              %1046 = vst [vmem:[%s1034 + $0x14] sm:%s1026] %v1045
              %v1047 = vld [vmem:[%s1033 + $0x18] sm:%s1026]
              %1048 = vst [vmem:[%s1034 + $0x18] sm:%s1026] %v1047
              %v1049 = vld [vmem:[%s1033 + $0x1c] sm:%s1026]
              %1050 = vst [vmem:[%s1034 + $0x1c] sm:%s1026] %v1049
              %v1051 = vld [vmem:[%s1033 + $0x20] sm:%s1026]
              %1052 = vst [vmem:[%s1034 + $0x20] sm:%s1026] %v1051
              %v1053 = vld [vmem:[%s1033 + $0x24] sm:%s1026]
              %1054 = vst [vmem:[%s1034 + $0x24] sm:%s1026] %v1053
              %v1055 = vld [vmem:[%s1033 + $0x28] sm:%s1026]
              %1056 = vst [vmem:[%s1034 + $0x28] sm:%s1026] %v1055
              %v1057 = vld [vmem:[%s1033 + $0x2c] sm:%s1026]
              %1058 = vst [vmem:[%s1034 + $0x2c] sm:%s1026] %v1057
              %v1059 = vld [vmem:[%s1033 + $0x30] sm:%s1026]
              %1060 = vst [vmem:[%s1034 + $0x30] sm:%s1026] %v1059
            $region52: #{cnn_base_forward.6} parent=39 // loop_footer
              %s1032 = sadd.s32 1, %s1028
            $region53: #{cnn_base_forward.6} parent=39 // loop_footer_branch
              %1027 = sbr.rel target = $region49
            $region54: #{cnn_base_forward.6} parent=39 // loop_exit
              _
          $region40: #{cnn_base_forward.6} parent=24 // pred_fallthru
            _
        $region25: #{cnn_base_forward.6} parent=20 // pred_fallthru
          _
        // Predicated region
        $region26: #{cnn_base_forward.6} parent=20 // pred_check
          _
        $region27: #{cnn_base_forward.6} parent=20 // pred_check_branch
          %978 = sbr.rel (0) target = $region29
        $region28: #{cnn_base_forward.6} parent=20 // pred_region
          %s980 = ssub.s32 16, 1
          loop: start=0, step=1, limit=1
          $region30: #{cnn_base_forward.6} parent=28 // loop_pre_header
            _
          $region31: #{cnn_base_forward.6} parent=28 // loop_header
            %s982 = sphi 0, %s986
            %p983 = scmp.ge.s32.totalorder %s982, 1
            %s987 = sphi [#allocation2], [#allocation2]
            %s988 = sphi %s3, %s3
          $region32: #{cnn_base_forward.6} parent=28 // loop_header_branch
            %985 = sbr.rel (%p983) target = $region36
          $region33: #{cnn_base_forward.6} parent=28 // loop_body
            %v989 = vld [vmem:[%s987] sm:%s980]
            %990 = vst [vmem:[%s988] sm:%s980] %v989
            %v991 = vld [vmem:[%s987 + $0x4] sm:%s980]
            %992 = vst [vmem:[%s988 + $0x4] sm:%s980] %v991
            %v993 = vld [vmem:[%s987 + $0x8] sm:%s980]
            %994 = vst [vmem:[%s988 + $0x8] sm:%s980] %v993
            %v995 = vld [vmem:[%s987 + $0xc] sm:%s980]
            %996 = vst [vmem:[%s988 + $0xc] sm:%s980] %v995
            %v997 = vld [vmem:[%s987 + $0x10] sm:%s980]
            %998 = vst [vmem:[%s988 + $0x10] sm:%s980] %v997
            %v999 = vld [vmem:[%s987 + $0x14] sm:%s980]
            %1000 = vst [vmem:[%s988 + $0x14] sm:%s980] %v999
            %v1001 = vld [vmem:[%s987 + $0x18] sm:%s980]
            %1002 = vst [vmem:[%s988 + $0x18] sm:%s980] %v1001
            %v1003 = vld [vmem:[%s987 + $0x1c] sm:%s980]
            %1004 = vst [vmem:[%s988 + $0x1c] sm:%s980] %v1003
            %v1005 = vld [vmem:[%s987 + $0x20] sm:%s980]
            %1006 = vst [vmem:[%s988 + $0x20] sm:%s980] %v1005
            %v1007 = vld [vmem:[%s987 + $0x24] sm:%s980]
            %1008 = vst [vmem:[%s988 + $0x24] sm:%s980] %v1007
            %v1009 = vld [vmem:[%s987 + $0x28] sm:%s980]
            %1010 = vst [vmem:[%s988 + $0x28] sm:%s980] %v1009
            %v1011 = vld [vmem:[%s987 + $0x2c] sm:%s980]
            %1012 = vst [vmem:[%s988 + $0x2c] sm:%s980] %v1011
            %v1013 = vld [vmem:[%s987 + $0x30] sm:%s980]
            %1014 = vst [vmem:[%s988 + $0x30] sm:%s980] %v1013
          $region34: #{cnn_base_forward.6} parent=28 // loop_footer
            %s986 = sadd.s32 1, %s982
          $region35: #{cnn_base_forward.6} parent=28 // loop_footer_branch
            %981 = sbr.rel target = $region31
          $region36: #{cnn_base_forward.6} parent=28 // loop_exit
            _
        $region29: #{cnn_base_forward.6} parent=20 // pred_fallthru
          _
      $region21: #{cnn_base_forward.6} parent=16 // pred_fallthru
        _
      %1061 = vnop
    $region17: #{cnn_base_forward.6} parent=1 // pred_fallthru
      _
    // Predicated region
    $region55: #{cnn_base_forward.6} parent=1 // pred_check
      _
    $region56: #{cnn_base_forward.6} parent=1 // pred_check_branch
      %1063 = sbr.rel (0) target = $region58
    $region57: #{cnn_base_forward.6} parent=1 // pred_region
      _
    $region58: #{cnn_base_forward.6} parent=1 // pred_fallthru
      _

// kernel: cnn_base_forward.7
$region0: #{cnn_base_forward.7}
  #allocation0 [shape = 'u32[]', space=smem, size = 0x4, offset = 0x4, fixed_abs, tag = 'smem constant byte address 0x4 - core index']
  #allocation1 [shape = 'u32[144,128]{1,0:T(1,128)}', space=vmem, size = 0x12000, scoped, tag = 'internal scratch']
  #allocation2 [shape = 'f32[32,1]{1,0:T(8,128)}', space=vmem, size = 0x4000, scoped, tag = 'scratch operand']
  #allocation3 [shape = 'f32[1,1]{1,0:T(1,128)S(1)}', space=vmem, size = 0x200, scoped, tag = 'scoped memory for cnn_base_forward.7']
  %s0 = inlined_call_operand.vmem [shape: bf16[2,1568], index: 0, kind: input, shape index: {}]
  %s1 = inlined_call_operand.vmem [shape: bf16[1568,512], index: 1, kind: input, shape index: {}]
  %s2 = inlined_call_operand.vmem [shape: f32[1,512], index: 2, kind: input, shape index: {}]
  %s3 = inlined_call_operand.vmem [shape: f32[1,512], index: 3, kind: input, shape index: {}]
  %s4 = inlined_call_operand.<no memory space> [shape: f32[1,1], index: 4, kind: input, shape index: {}]
  %s5 = inlined_call_operand.hbm [shape: bf16[2,512], index: 5, kind: output, shape index: {0}]
  %s6 = inlined_call_operand.vmem [shape: f32[2,1], index: 6, kind: output, shape index: {1}]
  %7 = xla_tuple %s5, %s6
  %s8 = sld [smem:[#allocation0]]
  $region137: #{cnn_base_forward.7} parent=0
    _
  %s10 = ssub.s32 1, %s8
  %s11 = scalar_select 0, %s10, %s8
  %v12 = vstv %s4
  %13 = vst [vmem:[#allocation3] sm:$0x1] %v12
  $region1: #{cnn_base_forward.7} parent=0
    #allocation4 [shape = 'u8[1605632]{0}', space=vmem, size = 0x188000, scoped, tag = 'input window, operand 1']
    #allocation5 [shape = 'u8[32768]{0}', space=vmem, size = 0x8000, scoped, tag = 'output window, operand 0']
    #allocation6 [shape = 's32[2]{0}', space=sflag, size = 0x8, scoped, tag = 'scoped memory for cnn_base_forward.7']
    #allocation7 [shape = 'u8[16384]{0}', space=vmem, size = 0x4000, scoped, tag = 'output window, operand 1, single buffered']
    %14 = vsyncpa [#allocation6], 0
    %s15 = scalar_lea.sflag [#allocation6], 1
    %16 = vsyncpa %s15, 0
    loop: start=0, step=1, limit=4
    $region2: #{cnn_base_forward.7} parent=1 // loop_pre_header
      _
    $region3: #{cnn_base_forward.7} parent=1 // loop_header
      %s18 = sphi 0, %s22
      %p19 = scmp.ge.s32.totalorder %s18, 4
      %s25 = sphi 0, %s37
      %s26 = sphi 0, %s33
      %s27 = sphi 0, %s25
      %s28 = sphi 0, %s26
      %s29 = sphi 0, %s27
      %s30 = sphi 0, %s28
      %s40 = sphi 0, %s42
      %s43 = sphi 0, %s40
      %s44 = sphi 0, %s43
      %s60 = sphi 0, %s44
      %s66 = sphi 0, %s68
      %s69 = sphi 0, %s66
      %s70 = sphi 0, %s69
      %s86 = sphi 0, %s70
      %s92 = sphi 0, %s94
      %s95 = sphi 0, %s92
      %s96 = sphi 0, %s95
      %s112 = sphi 0, %s96
      %s118 = sphi 0, %s120
      %s121 = sphi 0, %s118
      %s122 = sphi 0, %s121
      %s138 = sphi 0, %s122
      %s142 = sphi 0, %s142
      %s144 = sphi 0, %s142
      %s145 = sphi 0, %s144
      %s159 = sphi 0, %s145
      %s167 = sphi 0, %s169
      %s170 = sphi 0, %s167
      %s171 = sphi 0, %s170
      %s187 = sphi 0, %s171
      %s193 = sphi 0, %s195
      %s196 = sphi 0, %s193
      %s197 = sphi 0, %s196
      %s213 = sphi 0, %s197
    $region4: #{cnn_base_forward.7} parent=1 // loop_header_branch
      %21 = sbr.rel (%p19) target = $region8
    $region5: #{cnn_base_forward.7} parent=1 // loop_body
      %s23 = ssub.s32 %s18, 1
      %s24 = ssub.s32 %s18, 2
      %s31 = sadd.s32 1, %s26
      %p32 = scmp.ge.s32.totalorder %s31, 2
      %s33 = scalar_select %p32, 0, %s31
      %s34 = sadd.s32 1, %s25
      %s35 = scalar_select %p32, %s34, %s25
      %p36 = scmp.ge.s32.totalorder %s35, 1
      %s37 = scalar_select %p36, 0, %s35
      %s38 = ssub.s32 %s25, %s37
      %p39 = scmp.eq.s32.totalorder %s38, 0
      %s41 = sadd.s32 %s40, 1
      %s42 = scalar_select %p39, %s40, %s41
      %p45 = pneg %p39
      %p46 = scmp.eq.s32.totalorder %s18, 1
      %p47 = por %p45, %p46
      %p48 = scmp.ne.s32.totalorder %s40, %s43
      %p49 = scmp.eq.s32.totalorder %s18, 0
      %p50 = por %p48, %p49
      %p51 = scmp.ne.s32.totalorder %s40, %s43
      %p52 = scmp.eq.s32.totalorder %s23, 1
      %p53 = por %p51, %p52
      %p54 = scmp.ne.s32.totalorder %s43, %s44
      %p55 = scmp.eq.s32.totalorder %s23, 0
      %p56 = por %p54, %p55
      %p57 = scmp.ne.s32.totalorder %s43, %s44
      %p58 = scmp.eq.s32.totalorder %s24, 1
      %p59 = por %p57, %p58
      %p61 = scmp.ne.s32.totalorder %s44, %s60
      %p62 = scmp.eq.s32.totalorder %s24, 0
      %p63 = por %p61, %p62
      %s64 = ssub.s32 %s26, %s33
      %p65 = scmp.eq.s32.totalorder %s64, 0
      %s67 = sadd.s32 %s66, 1
      %s68 = scalar_select %p65, %s66, %s67
      %p71 = pneg %p65
      %p72 = scmp.eq.s32.totalorder %s18, 1
      %p73 = por %p71, %p72
      %p74 = scmp.ne.s32.totalorder %s66, %s69
      %p75 = scmp.eq.s32.totalorder %s18, 0
      %p76 = por %p74, %p75
      %p77 = scmp.ne.s32.totalorder %s66, %s69
      %p78 = scmp.eq.s32.totalorder %s23, 1
      %p79 = por %p77, %p78
      %p80 = scmp.ne.s32.totalorder %s69, %s70
      %p81 = scmp.eq.s32.totalorder %s23, 0
      %p82 = por %p80, %p81
      %p83 = scmp.ne.s32.totalorder %s69, %s70
      %p84 = scmp.eq.s32.totalorder %s24, 1
      %p85 = por %p83, %p84
      %p87 = scmp.ne.s32.totalorder %s70, %s86
      %p88 = scmp.eq.s32.totalorder %s24, 0
      %p89 = por %p87, %p88
      %s90 = ssub.s32 %s26, %s33
      %p91 = scmp.eq.s32.totalorder %s90, 0
      %s93 = sadd.s32 %s92, 1
      %s94 = scalar_select %p91, %s92, %s93
      %p97 = pneg %p91
      %p98 = scmp.eq.s32.totalorder %s18, 1
      %p99 = por %p97, %p98
      %p100 = scmp.ne.s32.totalorder %s92, %s95
      %p101 = scmp.eq.s32.totalorder %s18, 0
      %p102 = por %p100, %p101
      %p103 = scmp.ne.s32.totalorder %s92, %s95
      %p104 = scmp.eq.s32.totalorder %s23, 1
      %p105 = por %p103, %p104
      %p106 = scmp.ne.s32.totalorder %s95, %s96
      %p107 = scmp.eq.s32.totalorder %s23, 0
      %p108 = por %p106, %p107
      %p109 = scmp.ne.s32.totalorder %s95, %s96
      %p110 = scmp.eq.s32.totalorder %s24, 1
      %p111 = por %p109, %p110
      %p113 = scmp.ne.s32.totalorder %s96, %s112
      %p114 = scmp.eq.s32.totalorder %s24, 0
      %p115 = por %p113, %p114
      %s116 = ssub.s32 %s26, %s33
      %p117 = scmp.eq.s32.totalorder %s116, 0
      %s119 = sadd.s32 %s118, 1
      %s120 = scalar_select %p117, %s118, %s119
      %p123 = pneg %p117
      %p124 = scmp.eq.s32.totalorder %s18, 1
      %p125 = por %p123, %p124
      %p126 = scmp.ne.s32.totalorder %s118, %s121
      %p127 = scmp.eq.s32.totalorder %s18, 0
      %p128 = por %p126, %p127
      %p129 = scmp.ne.s32.totalorder %s118, %s121
      %p130 = scmp.eq.s32.totalorder %s23, 1
      %p131 = por %p129, %p130
      %p132 = scmp.ne.s32.totalorder %s121, %s122
      %p133 = scmp.eq.s32.totalorder %s23, 0
      %p134 = por %p132, %p133
      %p135 = scmp.ne.s32.totalorder %s121, %s122
      %p136 = scmp.eq.s32.totalorder %s24, 1
      %p137 = por %p135, %p136
      %p139 = scmp.ne.s32.totalorder %s122, %s138
      %p140 = scmp.eq.s32.totalorder %s24, 0
      %p141 = por %p139, %p140
      %s143 = sadd.s32 %s142, 1
      %p146 = scmp.eq.s32.totalorder %s18, 1
      %p147 = scmp.ne.s32.totalorder %s142, %s144
      %p148 = scmp.eq.s32.totalorder %s18, 0
      %p149 = por %p147, %p148
      %p150 = scmp.ne.s32.totalorder %s142, %s144
      %p151 = scmp.eq.s32.totalorder %s23, 1
      %p152 = por %p150, %p151
      %p153 = scmp.ne.s32.totalorder %s144, %s145
      %p154 = scmp.eq.s32.totalorder %s23, 0
      %p155 = por %p153, %p154
      %p156 = scmp.ne.s32.totalorder %s144, %s145
      %p157 = scmp.eq.s32.totalorder %s24, 1
      %p158 = por %p156, %p157
      %p160 = scmp.ne.s32.totalorder %s145, %s159
      %p161 = scmp.eq.s32.totalorder %s24, 0
      %p162 = por %p160, %p161
      %s163 = ssub.s32 %s25, %s37
      %s164 = ssub.s32 %s26, %s33
      %s165 = sor.u32 %s163, %s164
      %p166 = scmp.eq.s32.totalorder %s165, 0
      %s168 = sadd.s32 %s167, 1
      %s169 = scalar_select %p166, %s167, %s168
      %p172 = pneg %p166
      %p173 = scmp.eq.s32.totalorder %s18, 1
      %p174 = por %p172, %p173
      %p175 = scmp.ne.s32.totalorder %s167, %s170
      %p176 = scmp.eq.s32.totalorder %s18, 0
      %p177 = por %p175, %p176
      %p178 = scmp.ne.s32.totalorder %s167, %s170
      %p179 = scmp.eq.s32.totalorder %s23, 1
      %p180 = por %p178, %p179
      %p181 = scmp.ne.s32.totalorder %s170, %s171
      %p182 = scmp.eq.s32.totalorder %s23, 0
      %p183 = por %p181, %p182
      %p184 = scmp.ne.s32.totalorder %s170, %s171
      %p185 = scmp.eq.s32.totalorder %s24, 1
      %p186 = por %p184, %p185
      %p188 = scmp.ne.s32.totalorder %s171, %s187
      %p189 = scmp.eq.s32.totalorder %s24, 0
      %p190 = por %p188, %p189
      %s191 = ssub.s32 %s25, %s37
      %p192 = scmp.eq.s32.totalorder %s191, 0
      %s194 = sadd.s32 %s193, 1
      %s195 = scalar_select %p192, %s193, %s194
      %p198 = pneg %p192
      %p199 = scmp.eq.s32.totalorder %s18, 1
      %p200 = por %p198, %p199
      %p201 = scmp.ne.s32.totalorder %s193, %s196
      %p202 = scmp.eq.s32.totalorder %s18, 0
      %p203 = por %p201, %p202
      %p204 = scmp.ne.s32.totalorder %s193, %s196
      %p205 = scmp.eq.s32.totalorder %s23, 1
      %p206 = por %p204, %p205
      %p207 = scmp.ne.s32.totalorder %s196, %s197
      %p208 = scmp.eq.s32.totalorder %s23, 0
      %p209 = por %p207, %p208
      %p210 = scmp.ne.s32.totalorder %s196, %s197
      %p211 = scmp.eq.s32.totalorder %s24, 1
      %p212 = por %p210, %p211
      %p214 = scmp.ne.s32.totalorder %s197, %s213
      %p215 = scmp.eq.s32.totalorder %s24, 0
      %p216 = por %p214, %p215
      %p217 = scmp.le.s32.totalorder 1, %s18
      %p218 = scmp.lt.s32.totalorder %s18, 3
      %p219 = pnand %p217, %p218
      %p220 = pneg %p219
      // Predicated region
      $region9: #{cnn_base_forward.7} parent=5 // pred_check
        _
      $region10: #{cnn_base_forward.7} parent=5 // pred_check_branch
        %222 = sbr.rel (%p219) target = $region12
      $region11: #{cnn_base_forward.7} parent=5 // pred_region
        %s223 = ssub.s32 %s18, 1
        // Predicated region
        $region13: #{cnn_base_forward.7} parent=11 // pred_check
          %p224 = pneg %p56
        $region14: #{cnn_base_forward.7} parent=11 // pred_check_branch
          %226 = sbr.rel (%p224) target = $region16
        $region15: #{cnn_base_forward.7} parent=11 // pred_region
          %s227 = smul.u32 16, %s27
          %s228 = ssub.s32 1, %s227
          %s229 = smul.u32 16, %s228
          %s230 = smul.u32 %s229, 13
          %p231 = scmp.lt.s32.totalorder %s227, 0
          %s232 = scalar_select %p231, %s227, 0
          %s233 = smul.addr %s232, 13
          %s234 = scalar_lea.vmem %s0, %s233
          %s235 = smul.u32 16, %s27
          %s236 = ssub.s32 1, %s235
          %s237 = smul.u32 16, %s236
          %s238 = smul.u32 %s237, 13
        $region16: #{cnn_base_forward.7} parent=11 // pred_fallthru
          _
        // Predicated region
        $region17: #{cnn_base_forward.7} parent=11 // pred_check
          %p239 = pneg %p155
        $region18: #{cnn_base_forward.7} parent=11 // pred_check_branch
          %241 = sbr.rel (%p239) target = $region20
        $region19: #{cnn_base_forward.7} parent=11 // pred_region
          _
        $region20: #{cnn_base_forward.7} parent=11 // pred_fallthru
          _
      $region12: #{cnn_base_forward.7} parent=5 // pred_fallthru
        _
      %p242 = scmp.lt.s32.totalorder %s18, 2
      // Predicated region
      $region21: #{cnn_base_forward.7} parent=5 // pred_check
        %p243 = pneg %p242
      $region22: #{cnn_base_forward.7} parent=5 // pred_check_branch
        %245 = sbr.rel (%p243) target = $region24
      $region23: #{cnn_base_forward.7} parent=5 // pred_region
        // Predicated region
        $region25: #{cnn_base_forward.7} parent=23 // pred_check
          %p246 = pneg %p76
        $region26: #{cnn_base_forward.7} parent=23 // pred_check_branch
          %248 = sbr.rel (%p246) target = $region28
        $region27: #{cnn_base_forward.7} parent=23 // pred_region
          %s249 = sand.u32 %s66, 1
          %s250 = sand.u32 %s66, 1
          %s251 = smul.addr %s250, 1568
          %s252 = scalar_lea.vmem [#allocation4], %s251
          %s253 = smul.u32 2, %s26
          %s254 = smul.addr %s253, 4
          %s255 = scalar_lea.vmem %s1, %s254
          // Predicated region
          $region29: #{cnn_base_forward.7} parent=27 // pred_check
            _
          $region30: #{cnn_base_forward.7} parent=27 // pred_check_branch
            %257 = sbr.rel (0) target = $region32
          $region31: #{cnn_base_forward.7} parent=27 // pred_region
            // Predicated region
            $region33: #{cnn_base_forward.7} parent=31 // pred_check
              _
            $region34: #{cnn_base_forward.7} parent=31 // pred_check_branch
              %259 = sbr.rel (0) target = $region36
            $region35: #{cnn_base_forward.7} parent=31 // pred_region
              // Predicated region
              $region48: #{cnn_base_forward.7} parent=35 // pred_check
                _
              $region49: #{cnn_base_forward.7} parent=35 // pred_check_branch
                %665 = sbr.rel (0) target = $region51
              $region50: #{cnn_base_forward.7} parent=35 // pred_region
                loop: start=0, step=1, limit=1
                $region52: #{cnn_base_forward.7} parent=50 // loop_pre_header
                  _
                $region53: #{cnn_base_forward.7} parent=50 // loop_header
                  %s667 = sphi 0, %s671
                  %p668 = scmp.ge.s32.totalorder %s667, 1
                  %s672 = sphi %s255, %s255
                  %s673 = sphi %s252, %s252
                $region54: #{cnn_base_forward.7} parent=50 // loop_header_branch
                  %670 = sbr.rel (%p668) target = $region58
                $region55: #{cnn_base_forward.7} parent=50 // loop_body
                  %v674 = vld [vmem:[%s672] sm:$0xff]
                  %675 = vst [vmem:[%s673] sm:$0xff] %v674
                  %v676 = vld [vmem:[%s672 + $0x10] sm:$0xff]
                  %677 = vst [vmem:[%s673 + $0x8] sm:$0xff] %v676
                  %v678 = vld [vmem:[%s672 + $0x20] sm:$0xff]
                  %679 = vst [vmem:[%s673 + $0x10] sm:$0xff] %v678
                  %v680 = vld [vmem:[%s672 + $0x30] sm:$0xff]
                  %681 = vst [vmem:[%s673 + $0x18] sm:$0xff] %v680
                  %v682 = vld [vmem:[%s672 + $0x40] sm:$0xff]
                  %683 = vst [vmem:[%s673 + $0x20] sm:$0xff] %v682
                  %v684 = vld [vmem:[%s672 + $0x50] sm:$0xff]
                  %685 = vst [vmem:[%s673 + $0x28] sm:$0xff] %v684
                  %v686 = vld [vmem:[%s672 + $0x60] sm:$0xff]
                  %687 = vst [vmem:[%s673 + $0x30] sm:$0xff] %v686
                  %v688 = vld [vmem:[%s672 + $0x70] sm:$0xff]
                  %689 = vst [vmem:[%s673 + $0x38] sm:$0xff] %v688
                  %v690 = vld [vmem:[%s672 + $0x80] sm:$0xff]
                  %691 = vst [vmem:[%s673 + $0x40] sm:$0xff] %v690
                  %v692 = vld [vmem:[%s672 + $0x90] sm:$0xff]
                  %693 = vst [vmem:[%s673 + $0x48] sm:$0xff] %v692
                  %v694 = vld [vmem:[%s672 + $0xa0] sm:$0xff]
                  %695 = vst [vmem:[%s673 + $0x50] sm:$0xff] %v694
                  %v696 = vld [vmem:[%s672 + $0xb0] sm:$0xff]
                  %697 = vst [vmem:[%s673 + $0x58] sm:$0xff] %v696
                  %v698 = vld [vmem:[%s672 + $0xc0] sm:$0xff]
                  %699 = vst [vmem:[%s673 + $0x60] sm:$0xff] %v698
                  %v700 = vld [vmem:[%s672 + $0xd0] sm:$0xff]
                  %701 = vst [vmem:[%s673 + $0x68] sm:$0xff] %v700
                  %v702 = vld [vmem:[%s672 + $0xe0] sm:$0xff]
                  %703 = vst [vmem:[%s673 + $0x70] sm:$0xff] %v702
                  %v704 = vld [vmem:[%s672 + $0xf0] sm:$0xff]
                  %705 = vst [vmem:[%s673 + $0x78] sm:$0xff] %v704
                  %v706 = vld [vmem:[%s672 + $0x100] sm:$0xff]
                  %707 = vst [vmem:[%s673 + $0x80] sm:$0xff] %v706
                  %v708 = vld [vmem:[%s672 + $0x110] sm:$0xff]
                  %709 = vst [vmem:[%s673 + $0x88] sm:$0xff] %v708
                  %v710 = vld [vmem:[%s672 + $0x120] sm:$0xff]
                  %711 = vst [vmem:[%s673 + $0x90] sm:$0xff] %v710
                  %v712 = vld [vmem:[%s672 + $0x130] sm:$0xff]
                  %713 = vst [vmem:[%s673 + $0x98] sm:$0xff] %v712
                  %v714 = vld [vmem:[%s672 + $0x140] sm:$0xff]
                  %715 = vst [vmem:[%s673 + $0xa0] sm:$0xff] %v714
                  %v716 = vld [vmem:[%s672 + $0x150] sm:$0xff]
                  %717 = vst [vmem:[%s673 + $0xa8] sm:$0xff] %v716
                  %v718 = vld [vmem:[%s672 + $0x160] sm:$0xff]
                  %719 = vst [vmem:[%s673 + $0xb0] sm:$0xff] %v718
                  %v720 = vld [vmem:[%s672 + $0x170] sm:$0xff]
                  %721 = vst [vmem:[%s673 + $0xb8] sm:$0xff] %v720
                  %v722 = vld [vmem:[%s672 + $0x180] sm:$0xff]
                  %723 = vst [vmem:[%s673 + $0xc0] sm:$0xff] %v722
                  %v724 = vld [vmem:[%s672 + $0x190] sm:$0xff]
                  %725 = vst [vmem:[%s673 + $0xc8] sm:$0xff] %v724
                  %v726 = vld [vmem:[%s672 + $0x1a0] sm:$0xff]
                  %727 = vst [vmem:[%s673 + $0xd0] sm:$0xff] %v726
                  %v728 = vld [vmem:[%s672 + $0x1b0] sm:$0xff]
                  %729 = vst [vmem:[%s673 + $0xd8] sm:$0xff] %v728
                  %v730 = vld [vmem:[%s672 + $0x1c0] sm:$0xff]
                  %731 = vst [vmem:[%s673 + $0xe0] sm:$0xff] %v730
                  %v732 = vld [vmem:[%s672 + $0x1d0] sm:$0xff]
                  %733 = vst [vmem:[%s673 + $0xe8] sm:$0xff] %v732
                  %v734 = vld [vmem:[%s672 + $0x1e0] sm:$0xff]
                  %735 = vst [vmem:[%s673 + $0xf0] sm:$0xff] %v734
                  %v736 = vld [vmem:[%s672 + $0x1f0] sm:$0xff]
                  %737 = vst [vmem:[%s673 + $0xf8] sm:$0xff] %v736
                  %v738 = vld [vmem:[%s672 + $0x200] sm:$0xff]
                  %739 = vst [vmem:[%s673 + $0x100] sm:$0xff] %v738
                  %v740 = vld [vmem:[%s672 + $0x210] sm:$0xff]
                  %741 = vst [vmem:[%s673 + $0x108] sm:$0xff] %v740
                  %v742 = vld [vmem:[%s672 + $0x220] sm:$0xff]
                  %743 = vst [vmem:[%s673 + $0x110] sm:$0xff] %v742
                  %v744 = vld [vmem:[%s672 + $0x230] sm:$0xff]
                  %745 = vst [vmem:[%s673 + $0x118] sm:$0xff] %v744
                  %v746 = vld [vmem:[%s672 + $0x240] sm:$0xff]
                  %747 = vst [vmem:[%s673 + $0x120] sm:$0xff] %v746
                  %v748 = vld [vmem:[%s672 + $0x250] sm:$0xff]
                  %749 = vst [vmem:[%s673 + $0x128] sm:$0xff] %v748
                  %v750 = vld [vmem:[%s672 + $0x260] sm:$0xff]
                  %751 = vst [vmem:[%s673 + $0x130] sm:$0xff] %v750
                  %v752 = vld [vmem:[%s672 + $0x270] sm:$0xff]
                  %753 = vst [vmem:[%s673 + $0x138] sm:$0xff] %v752
                  %v754 = vld [vmem:[%s672 + $0x280] sm:$0xff]
                  %755 = vst [vmem:[%s673 + $0x140] sm:$0xff] %v754
                  %v756 = vld [vmem:[%s672 + $0x290] sm:$0xff]
                  %757 = vst [vmem:[%s673 + $0x148] sm:$0xff] %v756
                  %v758 = vld [vmem:[%s672 + $0x2a0] sm:$0xff]
                  %759 = vst [vmem:[%s673 + $0x150] sm:$0xff] %v758
                  %v760 = vld [vmem:[%s672 + $0x2b0] sm:$0xff]
                  %761 = vst [vmem:[%s673 + $0x158] sm:$0xff] %v760
                  %v762 = vld [vmem:[%s672 + $0x2c0] sm:$0xff]
                  %763 = vst [vmem:[%s673 + $0x160] sm:$0xff] %v762
                  %v764 = vld [vmem:[%s672 + $0x2d0] sm:$0xff]
                  %765 = vst [vmem:[%s673 + $0x168] sm:$0xff] %v764
                  %v766 = vld [vmem:[%s672 + $0x2e0] sm:$0xff]
                  %767 = vst [vmem:[%s673 + $0x170] sm:$0xff] %v766
                  %v768 = vld [vmem:[%s672 + $0x2f0] sm:$0xff]
                  %769 = vst [vmem:[%s673 + $0x178] sm:$0xff] %v768
                  %v770 = vld [vmem:[%s672 + $0x300] sm:$0xff]
                  %771 = vst [vmem:[%s673 + $0x180] sm:$0xff] %v770
                  %v772 = vld [vmem:[%s672 + $0x310] sm:$0xff]
                  %773 = vst [vmem:[%s673 + $0x188] sm:$0xff] %v772
                  %v774 = vld [vmem:[%s672 + $0x320] sm:$0xff]
                  %775 = vst [vmem:[%s673 + $0x190] sm:$0xff] %v774
                  %v776 = vld [vmem:[%s672 + $0x330] sm:$0xff]
                  %777 = vst [vmem:[%s673 + $0x198] sm:$0xff] %v776
                  %v778 = vld [vmem:[%s672 + $0x340] sm:$0xff]
                  %779 = vst [vmem:[%s673 + $0x1a0] sm:$0xff] %v778
                  %v780 = vld [vmem:[%s672 + $0x350] sm:$0xff]
                  %781 = vst [vmem:[%s673 + $0x1a8] sm:$0xff] %v780
                  %v782 = vld [vmem:[%s672 + $0x360] sm:$0xff]
                  %783 = vst [vmem:[%s673 + $0x1b0] sm:$0xff] %v782
                  %v784 = vld [vmem:[%s672 + $0x370] sm:$0xff]
                  %785 = vst [vmem:[%s673 + $0x1b8] sm:$0xff] %v784
                  %v786 = vld [vmem:[%s672 + $0x380] sm:$0xff]
                  %787 = vst [vmem:[%s673 + $0x1c0] sm:$0xff] %v786
                  %v788 = vld [vmem:[%s672 + $0x390] sm:$0xff]
                  %789 = vst [vmem:[%s673 + $0x1c8] sm:$0xff] %v788
                  %v790 = vld [vmem:[%s672 + $0x3a0] sm:$0xff]
                  %791 = vst [vmem:[%s673 + $0x1d0] sm:$0xff] %v790
                  %v792 = vld [vmem:[%s672 + $0x3b0] sm:$0xff]
                  %793 = vst [vmem:[%s673 + $0x1d8] sm:$0xff] %v792
                  %v794 = vld [vmem:[%s672 + $0x3c0] sm:$0xff]
                  %795 = vst [vmem:[%s673 + $0x1e0] sm:$0xff] %v794
                  %v796 = vld [vmem:[%s672 + $0x3d0] sm:$0xff]
                  %797 = vst [vmem:[%s673 + $0x1e8] sm:$0xff] %v796
                  %v798 = vld [vmem:[%s672 + $0x3e0] sm:$0xff]
                  %799 = vst [vmem:[%s673 + $0x1f0] sm:$0xff] %v798
                  %v800 = vld [vmem:[%s672 + $0x3f0] sm:$0xff]
                  %801 = vst [vmem:[%s673 + $0x1f8] sm:$0xff] %v800
                  %v802 = vld [vmem:[%s672 + $0x400] sm:$0xff]
                  %803 = vst [vmem:[%s673 + $0x200] sm:$0xff] %v802
                  %v804 = vld [vmem:[%s672 + $0x410] sm:$0xff]
                  %805 = vst [vmem:[%s673 + $0x208] sm:$0xff] %v804
                  %v806 = vld [vmem:[%s672 + $0x420] sm:$0xff]
                  %807 = vst [vmem:[%s673 + $0x210] sm:$0xff] %v806
                  %v808 = vld [vmem:[%s672 + $0x430] sm:$0xff]
                  %809 = vst [vmem:[%s673 + $0x218] sm:$0xff] %v808
                  %v810 = vld [vmem:[%s672 + $0x440] sm:$0xff]
                  %811 = vst [vmem:[%s673 + $0x220] sm:$0xff] %v810
                  %v812 = vld [vmem:[%s672 + $0x450] sm:$0xff]
                  %813 = vst [vmem:[%s673 + $0x228] sm:$0xff] %v812
                  %v814 = vld [vmem:[%s672 + $0x460] sm:$0xff]
                  %815 = vst [vmem:[%s673 + $0x230] sm:$0xff] %v814
                  %v816 = vld [vmem:[%s672 + $0x470] sm:$0xff]
                  %817 = vst [vmem:[%s673 + $0x238] sm:$0xff] %v816
                  %v818 = vld [vmem:[%s672 + $0x480] sm:$0xff]
                  %819 = vst [vmem:[%s673 + $0x240] sm:$0xff] %v818
                  %v820 = vld [vmem:[%s672 + $0x490] sm:$0xff]
                  %821 = vst [vmem:[%s673 + $0x248] sm:$0xff] %v820
                  %v822 = vld [vmem:[%s672 + $0x4a0] sm:$0xff]
                  %823 = vst [vmem:[%s673 + $0x250] sm:$0xff] %v822
                  %v824 = vld [vmem:[%s672 + $0x4b0] sm:$0xff]
                  %825 = vst [vmem:[%s673 + $0x258] sm:$0xff] %v824
                  %v826 = vld [vmem:[%s672 + $0x4c0] sm:$0xff]
                  %827 = vst [vmem:[%s673 + $0x260] sm:$0xff] %v826
                  %v828 = vld [vmem:[%s672 + $0x4d0] sm:$0xff]
                  %829 = vst [vmem:[%s673 + $0x268] sm:$0xff] %v828
                  %v830 = vld [vmem:[%s672 + $0x4e0] sm:$0xff]
                  %831 = vst [vmem:[%s673 + $0x270] sm:$0xff] %v830
                  %v832 = vld [vmem:[%s672 + $0x4f0] sm:$0xff]
                  %833 = vst [vmem:[%s673 + $0x278] sm:$0xff] %v832
                  %v834 = vld [vmem:[%s672 + $0x500] sm:$0xff]
                  %835 = vst [vmem:[%s673 + $0x280] sm:$0xff] %v834
                  %v836 = vld [vmem:[%s672 + $0x510] sm:$0xff]
                  %837 = vst [vmem:[%s673 + $0x288] sm:$0xff] %v836
                  %v838 = vld [vmem:[%s672 + $0x520] sm:$0xff]
                  %839 = vst [vmem:[%s673 + $0x290] sm:$0xff] %v838
                  %v840 = vld [vmem:[%s672 + $0x530] sm:$0xff]
                  %841 = vst [vmem:[%s673 + $0x298] sm:$0xff] %v840
                  %v842 = vld [vmem:[%s672 + $0x540] sm:$0xff]
                  %843 = vst [vmem:[%s673 + $0x2a0] sm:$0xff] %v842
                  %v844 = vld [vmem:[%s672 + $0x550] sm:$0xff]
                  %845 = vst [vmem:[%s673 + $0x2a8] sm:$0xff] %v844
                  %v846 = vld [vmem:[%s672 + $0x560] sm:$0xff]
                  %847 = vst [vmem:[%s673 + $0x2b0] sm:$0xff] %v846
                  %v848 = vld [vmem:[%s672 + $0x570] sm:$0xff]
                  %849 = vst [vmem:[%s673 + $0x2b8] sm:$0xff] %v848
                  %v850 = vld [vmem:[%s672 + $0x580] sm:$0xff]
                  %851 = vst [vmem:[%s673 + $0x2c0] sm:$0xff] %v850
                  %v852 = vld [vmem:[%s672 + $0x590] sm:$0xff]
                  %853 = vst [vmem:[%s673 + $0x2c8] sm:$0xff] %v852
                  %v854 = vld [vmem:[%s672 + $0x5a0] sm:$0xff]
                  %855 = vst [vmem:[%s673 + $0x2d0] sm:$0xff] %v854
                  %v856 = vld [vmem:[%s672 + $0x5b0] sm:$0xff]
                  %857 = vst [vmem:[%s673 + $0x2d8] sm:$0xff] %v856
                  %v858 = vld [vmem:[%s672 + $0x5c0] sm:$0xff]
                  %859 = vst [vmem:[%s673 + $0x2e0] sm:$0xff] %v858
                  %v860 = vld [vmem:[%s672 + $0x5d0] sm:$0xff]
                  %861 = vst [vmem:[%s673 + $0x2e8] sm:$0xff] %v860
                  %v862 = vld [vmem:[%s672 + $0x5e0] sm:$0xff]
                  %863 = vst [vmem:[%s673 + $0x2f0] sm:$0xff] %v862
                  %v864 = vld [vmem:[%s672 + $0x5f0] sm:$0xff]
                  %865 = vst [vmem:[%s673 + $0x2f8] sm:$0xff] %v864
                  %v866 = vld [vmem:[%s672 + $0x600] sm:$0xff]
                  %867 = vst [vmem:[%s673 + $0x300] sm:$0xff] %v866
                  %v868 = vld [vmem:[%s672 + $0x610] sm:$0xff]
                  %869 = vst [vmem:[%s673 + $0x308] sm:$0xff] %v868
                  %v870 = vld [vmem:[%s672 + $0x620] sm:$0xff]
                  %871 = vst [vmem:[%s673 + $0x310] sm:$0xff] %v870
                  %v872 = vld [vmem:[%s672 + $0x630] sm:$0xff]
                  %873 = vst [vmem:[%s673 + $0x318] sm:$0xff] %v872
                  %v874 = vld [vmem:[%s672 + $0x640] sm:$0xff]
                  %875 = vst [vmem:[%s673 + $0x320] sm:$0xff] %v874
                  %v876 = vld [vmem:[%s672 + $0x650] sm:$0xff]
                  %877 = vst [vmem:[%s673 + $0x328] sm:$0xff] %v876
                  %v878 = vld [vmem:[%s672 + $0x660] sm:$0xff]
                  %879 = vst [vmem:[%s673 + $0x330] sm:$0xff] %v878
                  %v880 = vld [vmem:[%s672 + $0x670] sm:$0xff]
                  %881 = vst [vmem:[%s673 + $0x338] sm:$0xff] %v880
                  %v882 = vld [vmem:[%s672 + $0x680] sm:$0xff]
                  %883 = vst [vmem:[%s673 + $0x340] sm:$0xff] %v882
                  %v884 = vld [vmem:[%s672 + $0x690] sm:$0xff]
                  %885 = vst [vmem:[%s673 + $0x348] sm:$0xff] %v884
                  %v886 = vld [vmem:[%s672 + $0x6a0] sm:$0xff]
                  %887 = vst [vmem:[%s673 + $0x350] sm:$0xff] %v886
                  %v888 = vld [vmem:[%s672 + $0x6b0] sm:$0xff]
                  %889 = vst [vmem:[%s673 + $0x358] sm:$0xff] %v888
                  %v890 = vld [vmem:[%s672 + $0x6c0] sm:$0xff]
                  %891 = vst [vmem:[%s673 + $0x360] sm:$0xff] %v890
                  %v892 = vld [vmem:[%s672 + $0x6d0] sm:$0xff]
                  %893 = vst [vmem:[%s673 + $0x368] sm:$0xff] %v892
                  %v894 = vld [vmem:[%s672 + $0x6e0] sm:$0xff]
                  %895 = vst [vmem:[%s673 + $0x370] sm:$0xff] %v894
                  %v896 = vld [vmem:[%s672 + $0x6f0] sm:$0xff]
                  %897 = vst [vmem:[%s673 + $0x378] sm:$0xff] %v896
                  %v898 = vld [vmem:[%s672 + $0x700] sm:$0xff]
                  %899 = vst [vmem:[%s673 + $0x380] sm:$0xff] %v898
                  %v900 = vld [vmem:[%s672 + $0x710] sm:$0xff]
                  %901 = vst [vmem:[%s673 + $0x388] sm:$0xff] %v900
                  %v902 = vld [vmem:[%s672 + $0x720] sm:$0xff]
                  %903 = vst [vmem:[%s673 + $0x390] sm:$0xff] %v902
                  %v904 = vld [vmem:[%s672 + $0x730] sm:$0xff]
                  %905 = vst [vmem:[%s673 + $0x398] sm:$0xff] %v904
                  %v906 = vld [vmem:[%s672 + $0x740] sm:$0xff]
                  %907 = vst [vmem:[%s673 + $0x3a0] sm:$0xff] %v906
                  %v908 = vld [vmem:[%s672 + $0x750] sm:$0xff]
                  %909 = vst [vmem:[%s673 + $0x3a8] sm:$0xff] %v908
                  %v910 = vld [vmem:[%s672 + $0x760] sm:$0xff]
                  %911 = vst [vmem:[%s673 + $0x3b0] sm:$0xff] %v910
                  %v912 = vld [vmem:[%s672 + $0x770] sm:$0xff]
                  %913 = vst [vmem:[%s673 + $0x3b8] sm:$0xff] %v912
                  %v914 = vld [vmem:[%s672 + $0x780] sm:$0xff]
                  %915 = vst [vmem:[%s673 + $0x3c0] sm:$0xff] %v914
                  %v916 = vld [vmem:[%s672 + $0x790] sm:$0xff]
                  %917 = vst [vmem:[%s673 + $0x3c8] sm:$0xff] %v916
                  %v918 = vld [vmem:[%s672 + $0x7a0] sm:$0xff]
                  %919 = vst [vmem:[%s673 + $0x3d0] sm:$0xff] %v918
                  %v920 = vld [vmem:[%s672 + $0x7b0] sm:$0xff]
                  %921 = vst [vmem:[%s673 + $0x3d8] sm:$0xff] %v920
                  %v922 = vld [vmem:[%s672 + $0x7c0] sm:$0xff]
                  %923 = vst [vmem:[%s673 + $0x3e0] sm:$0xff] %v922
                  %v924 = vld [vmem:[%s672 + $0x7d0] sm:$0xff]
                  %925 = vst [vmem:[%s673 + $0x3e8] sm:$0xff] %v924
                  %v926 = vld [vmem:[%s672 + $0x7e0] sm:$0xff]
                  %927 = vst [vmem:[%s673 + $0x3f0] sm:$0xff] %v926
                  %v928 = vld [vmem:[%s672 + $0x7f0] sm:$0xff]
                  %929 = vst [vmem:[%s673 + $0x3f8] sm:$0xff] %v928
                  %v930 = vld [vmem:[%s672 + $0x800] sm:$0xff]
                  %931 = vst [vmem:[%s673 + $0x400] sm:$0xff] %v930
                  %v932 = vld [vmem:[%s672 + $0x810] sm:$0xff]
                  %933 = vst [vmem:[%s673 + $0x408] sm:$0xff] %v932
                  %v934 = vld [vmem:[%s672 + $0x820] sm:$0xff]
                  %935 = vst [vmem:[%s673 + $0x410] sm:$0xff] %v934
                  %v936 = vld [vmem:[%s672 + $0x830] sm:$0xff]
                  %937 = vst [vmem:[%s673 + $0x418] sm:$0xff] %v936
                  %v938 = vld [vmem:[%s672 + $0x840] sm:$0xff]
                  %939 = vst [vmem:[%s673 + $0x420] sm:$0xff] %v938
                  %v940 = vld [vmem:[%s672 + $0x850] sm:$0xff]
                  %941 = vst [vmem:[%s673 + $0x428] sm:$0xff] %v940
                  %v942 = vld [vmem:[%s672 + $0x860] sm:$0xff]
                  %943 = vst [vmem:[%s673 + $0x430] sm:$0xff] %v942
                  %v944 = vld [vmem:[%s672 + $0x870] sm:$0xff]
                  %945 = vst [vmem:[%s673 + $0x438] sm:$0xff] %v944
                  %v946 = vld [vmem:[%s672 + $0x880] sm:$0xff]
                  %947 = vst [vmem:[%s673 + $0x440] sm:$0xff] %v946
                  %v948 = vld [vmem:[%s672 + $0x890] sm:$0xff]
                  %949 = vst [vmem:[%s673 + $0x448] sm:$0xff] %v948
                  %v950 = vld [vmem:[%s672 + $0x8a0] sm:$0xff]
                  %951 = vst [vmem:[%s673 + $0x450] sm:$0xff] %v950
                  %v952 = vld [vmem:[%s672 + $0x8b0] sm:$0xff]
                  %953 = vst [vmem:[%s673 + $0x458] sm:$0xff] %v952
                  %v954 = vld [vmem:[%s672 + $0x8c0] sm:$0xff]
                  %955 = vst [vmem:[%s673 + $0x460] sm:$0xff] %v954
                  %v956 = vld [vmem:[%s672 + $0x8d0] sm:$0xff]
                  %957 = vst [vmem:[%s673 + $0x468] sm:$0xff] %v956
                  %v958 = vld [vmem:[%s672 + $0x8e0] sm:$0xff]
                  %959 = vst [vmem:[%s673 + $0x470] sm:$0xff] %v958
                  %v960 = vld [vmem:[%s672 + $0x8f0] sm:$0xff]
                  %961 = vst [vmem:[%s673 + $0x478] sm:$0xff] %v960
                  %v962 = vld [vmem:[%s672 + $0x900] sm:$0xff]
                  %963 = vst [vmem:[%s673 + $0x480] sm:$0xff] %v962
                  %v964 = vld [vmem:[%s672 + $0x910] sm:$0xff]
                  %965 = vst [vmem:[%s673 + $0x488] sm:$0xff] %v964
                  %v966 = vld [vmem:[%s672 + $0x920] sm:$0xff]
                  %967 = vst [vmem:[%s673 + $0x490] sm:$0xff] %v966
                  %v968 = vld [vmem:[%s672 + $0x930] sm:$0xff]
                  %969 = vst [vmem:[%s673 + $0x498] sm:$0xff] %v968
                  %v970 = vld [vmem:[%s672 + $0x940] sm:$0xff]
                  %971 = vst [vmem:[%s673 + $0x4a0] sm:$0xff] %v970
                  %v972 = vld [vmem:[%s672 + $0x950] sm:$0xff]
                  %973 = vst [vmem:[%s673 + $0x4a8] sm:$0xff] %v972
                  %v974 = vld [vmem:[%s672 + $0x960] sm:$0xff]
                  %975 = vst [vmem:[%s673 + $0x4b0] sm:$0xff] %v974
                  %v976 = vld [vmem:[%s672 + $0x970] sm:$0xff]
                  %977 = vst [vmem:[%s673 + $0x4b8] sm:$0xff] %v976
                  %v978 = vld [vmem:[%s672 + $0x980] sm:$0xff]
                  %979 = vst [vmem:[%s673 + $0x4c0] sm:$0xff] %v978
                  %v980 = vld [vmem:[%s672 + $0x990] sm:$0xff]
                  %981 = vst [vmem:[%s673 + $0x4c8] sm:$0xff] %v980
                  %v982 = vld [vmem:[%s672 + $0x9a0] sm:$0xff]
                  %983 = vst [vmem:[%s673 + $0x4d0] sm:$0xff] %v982
                  %v984 = vld [vmem:[%s672 + $0x9b0] sm:$0xff]
                  %985 = vst [vmem:[%s673 + $0x4d8] sm:$0xff] %v984
                  %v986 = vld [vmem:[%s672 + $0x9c0] sm:$0xff]
                  %987 = vst [vmem:[%s673 + $0x4e0] sm:$0xff] %v986
                  %v988 = vld [vmem:[%s672 + $0x9d0] sm:$0xff]
                  %989 = vst [vmem:[%s673 + $0x4e8] sm:$0xff] %v988
                  %v990 = vld [vmem:[%s672 + $0x9e0] sm:$0xff]
                  %991 = vst [vmem:[%s673 + $0x4f0] sm:$0xff] %v990
                  %v992 = vld [vmem:[%s672 + $0x9f0] sm:$0xff]
                  %993 = vst [vmem:[%s673 + $0x4f8] sm:$0xff] %v992
                  %v994 = vld [vmem:[%s672 + $0xa00] sm:$0xff]
                  %995 = vst [vmem:[%s673 + $0x500] sm:$0xff] %v994
                  %v996 = vld [vmem:[%s672 + $0xa10] sm:$0xff]
                  %997 = vst [vmem:[%s673 + $0x508] sm:$0xff] %v996
                  %v998 = vld [vmem:[%s672 + $0xa20] sm:$0xff]
                  %999 = vst [vmem:[%s673 + $0x510] sm:$0xff] %v998
                  %v1000 = vld [vmem:[%s672 + $0xa30] sm:$0xff]
                  %1001 = vst [vmem:[%s673 + $0x518] sm:$0xff] %v1000
                  %v1002 = vld [vmem:[%s672 + $0xa40] sm:$0xff]
                  %1003 = vst [vmem:[%s673 + $0x520] sm:$0xff] %v1002
                  %v1004 = vld [vmem:[%s672 + $0xa50] sm:$0xff]
                  %1005 = vst [vmem:[%s673 + $0x528] sm:$0xff] %v1004
                  %v1006 = vld [vmem:[%s672 + $0xa60] sm:$0xff]
                  %1007 = vst [vmem:[%s673 + $0x530] sm:$0xff] %v1006
                  %v1008 = vld [vmem:[%s672 + $0xa70] sm:$0xff]
                  %1009 = vst [vmem:[%s673 + $0x538] sm:$0xff] %v1008
                  %v1010 = vld [vmem:[%s672 + $0xa80] sm:$0xff]
                  %1011 = vst [vmem:[%s673 + $0x540] sm:$0xff] %v1010
                  %v1012 = vld [vmem:[%s672 + $0xa90] sm:$0xff]
                  %1013 = vst [vmem:[%s673 + $0x548] sm:$0xff] %v1012
                  %v1014 = vld [vmem:[%s672 + $0xaa0] sm:$0xff]
                  %1015 = vst [vmem:[%s673 + $0x550] sm:$0xff] %v1014
                  %v1016 = vld [vmem:[%s672 + $0xab0] sm:$0xff]
                  %1017 = vst [vmem:[%s673 + $0x558] sm:$0xff] %v1016
                  %v1018 = vld [vmem:[%s672 + $0xac0] sm:$0xff]
                  %1019 = vst [vmem:[%s673 + $0x560] sm:$0xff] %v1018
                  %v1020 = vld [vmem:[%s672 + $0xad0] sm:$0xff]
                  %1021 = vst [vmem:[%s673 + $0x568] sm:$0xff] %v1020
                  %v1022 = vld [vmem:[%s672 + $0xae0] sm:$0xff]
                  %1023 = vst [vmem:[%s673 + $0x570] sm:$0xff] %v1022
                  %v1024 = vld [vmem:[%s672 + $0xaf0] sm:$0xff]
                  %1025 = vst [vmem:[%s673 + $0x578] sm:$0xff] %v1024
                  %v1026 = vld [vmem:[%s672 + $0xb00] sm:$0xff]
                  %1027 = vst [vmem:[%s673 + $0x580] sm:$0xff] %v1026
                  %v1028 = vld [vmem:[%s672 + $0xb10] sm:$0xff]
                  %1029 = vst [vmem:[%s673 + $0x588] sm:$0xff] %v1028
                  %v1030 = vld [vmem:[%s672 + $0xb20] sm:$0xff]
                  %1031 = vst [vmem:[%s673 + $0x590] sm:$0xff] %v1030
                  %v1032 = vld [vmem:[%s672 + $0xb30] sm:$0xff]
                  %1033 = vst [vmem:[%s673 + $0x598] sm:$0xff] %v1032
                  %v1034 = vld [vmem:[%s672 + $0xb40] sm:$0xff]
                  %1035 = vst [vmem:[%s673 + $0x5a0] sm:$0xff] %v1034
                  %v1036 = vld [vmem:[%s672 + $0xb50] sm:$0xff]
                  %1037 = vst [vmem:[%s673 + $0x5a8] sm:$0xff] %v1036
                  %v1038 = vld [vmem:[%s672 + $0xb60] sm:$0xff]
                  %1039 = vst [vmem:[%s673 + $0x5b0] sm:$0xff] %v1038
                  %v1040 = vld [vmem:[%s672 + $0xb70] sm:$0xff]
                  %1041 = vst [vmem:[%s673 + $0x5b8] sm:$0xff] %v1040
                  %v1042 = vld [vmem:[%s672 + $0xb80] sm:$0xff]
                  %1043 = vst [vmem:[%s673 + $0x5c0] sm:$0xff] %v1042
                  %v1044 = vld [vmem:[%s672 + $0xb90] sm:$0xff]
                  %1045 = vst [vmem:[%s673 + $0x5c8] sm:$0xff] %v1044
                  %v1046 = vld [vmem:[%s672 + $0xba0] sm:$0xff]
                  %1047 = vst [vmem:[%s673 + $0x5d0] sm:$0xff] %v1046
                  %v1048 = vld [vmem:[%s672 + $0xbb0] sm:$0xff]
                  %1049 = vst [vmem:[%s673 + $0x5d8] sm:$0xff] %v1048
                  %v1050 = vld [vmem:[%s672 + $0xbc0] sm:$0xff]
                  %1051 = vst [vmem:[%s673 + $0x5e0] sm:$0xff] %v1050
                  %v1052 = vld [vmem:[%s672 + $0xbd0] sm:$0xff]
                  %1053 = vst [vmem:[%s673 + $0x5e8] sm:$0xff] %v1052
                  %v1054 = vld [vmem:[%s672 + $0xbe0] sm:$0xff]
                  %1055 = vst [vmem:[%s673 + $0x5f0] sm:$0xff] %v1054
                  %v1056 = vld [vmem:[%s672 + $0xbf0] sm:$0xff]
                  %1057 = vst [vmem:[%s673 + $0x5f8] sm:$0xff] %v1056
                  %v1058 = vld [vmem:[%s672 + $0xc00] sm:$0xff]
                  %1059 = vst [vmem:[%s673 + $0x600] sm:$0xff] %v1058
                  %v1060 = vld [vmem:[%s672 + $0xc10] sm:$0xff]
                  %1061 = vst [vmem:[%s673 + $0x608] sm:$0xff] %v1060
                  %v1062 = vld [vmem:[%s672 + $0xc20] sm:$0xff]
                  %1063 = vst [vmem:[%s673 + $0x610] sm:$0xff] %v1062
                  %v1064 = vld [vmem:[%s672 + $0xc30] sm:$0xff]
                  %1065 = vst [vmem:[%s673 + $0x618] sm:$0xff] %v1064
                $region56: #{cnn_base_forward.7} parent=50 // loop_footer
                  %s671 = sadd.s32 1, %s667
                $region57: #{cnn_base_forward.7} parent=50 // loop_footer_branch
                  %666 = sbr.rel target = $region53
                $region58: #{cnn_base_forward.7} parent=50 // loop_exit
                  _
              $region51: #{cnn_base_forward.7} parent=35 // pred_fallthru
                _
              // Predicated region
              $region59: #{cnn_base_forward.7} parent=35 // pred_check
                _
              $region60: #{cnn_base_forward.7} parent=35 // pred_check_branch
                %1067 = sbr.rel target = $region62
              $region61: #{cnn_base_forward.7} parent=35 // pred_region
                _
              $region62: #{cnn_base_forward.7} parent=35 // pred_fallthru
                _
            $region36: #{cnn_base_forward.7} parent=31 // pred_fallthru
              _
            // Predicated region
            $region37: #{cnn_base_forward.7} parent=31 // pred_check
              _
            $region38: #{cnn_base_forward.7} parent=31 // pred_check_branch
              %261 = sbr.rel target = $region40
            $region39: #{cnn_base_forward.7} parent=31 // pred_region
              %s263 = ssub.s32 256, 1
              loop: start=0, step=1, limit=1
              $region41: #{cnn_base_forward.7} parent=39 // loop_pre_header
                _
              $region42: #{cnn_base_forward.7} parent=39 // loop_header
                %s265 = sphi 0, %s269
                %p266 = scmp.ge.s32.totalorder %s265, 1
                %s270 = sphi %s255, %s255
                %s271 = sphi %s252, %s252
              $region43: #{cnn_base_forward.7} parent=39 // loop_header_branch
                %268 = sbr.rel (%p266) target = $region47
              $region44: #{cnn_base_forward.7} parent=39 // loop_body
                %v272 = vld [vmem:[%s270] sm:%s263]
                %273 = vst [vmem:[%s271] sm:%s263] %v272
                %v274 = vld [vmem:[%s270 + $0x10] sm:%s263]
                %275 = vst [vmem:[%s271 + $0x8] sm:%s263] %v274
                %v276 = vld [vmem:[%s270 + $0x20] sm:%s263]
                %277 = vst [vmem:[%s271 + $0x10] sm:%s263] %v276
                %v278 = vld [vmem:[%s270 + $0x30] sm:%s263]
                %279 = vst [vmem:[%s271 + $0x18] sm:%s263] %v278
                %v280 = vld [vmem:[%s270 + $0x40] sm:%s263]
                %281 = vst [vmem:[%s271 + $0x20] sm:%s263] %v280
                %v282 = vld [vmem:[%s270 + $0x50] sm:%s263]
                %283 = vst [vmem:[%s271 + $0x28] sm:%s263] %v282
                %v284 = vld [vmem:[%s270 + $0x60] sm:%s263]
                %285 = vst [vmem:[%s271 + $0x30] sm:%s263] %v284
                %v286 = vld [vmem:[%s270 + $0x70] sm:%s263]
                %287 = vst [vmem:[%s271 + $0x38] sm:%s263] %v286
                %v288 = vld [vmem:[%s270 + $0x80] sm:%s263]
                %289 = vst [vmem:[%s271 + $0x40] sm:%s263] %v288
                %v290 = vld [vmem:[%s270 + $0x90] sm:%s263]
                %291 = vst [vmem:[%s271 + $0x48] sm:%s263] %v290
                %v292 = vld [vmem:[%s270 + $0xa0] sm:%s263]
                %293 = vst [vmem:[%s271 + $0x50] sm:%s263] %v292
                %v294 = vld [vmem:[%s270 + $0xb0] sm:%s263]
                %295 = vst [vmem:[%s271 + $0x58] sm:%s263] %v294
                %v296 = vld [vmem:[%s270 + $0xc0] sm:%s263]
                %297 = vst [vmem:[%s271 + $0x60] sm:%s263] %v296
                %v298 = vld [vmem:[%s270 + $0xd0] sm:%s263]
                %299 = vst [vmem:[%s271 + $0x68] sm:%s263] %v298
                %v300 = vld [vmem:[%s270 + $0xe0] sm:%s263]
                %301 = vst [vmem:[%s271 + $0x70] sm:%s263] %v300
                %v302 = vld [vmem:[%s270 + $0xf0] sm:%s263]
                %303 = vst [vmem:[%s271 + $0x78] sm:%s263] %v302
                %v304 = vld [vmem:[%s270 + $0x100] sm:%s263]
                %305 = vst [vmem:[%s271 + $0x80] sm:%s263] %v304
                %v306 = vld [vmem:[%s270 + $0x110] sm:%s263]
                %307 = vst [vmem:[%s271 + $0x88] sm:%s263] %v306
                %v308 = vld [vmem:[%s270 + $0x120] sm:%s263]
                %309 = vst [vmem:[%s271 + $0x90] sm:%s263] %v308
                %v310 = vld [vmem:[%s270 + $0x130] sm:%s263]
                %311 = vst [vmem:[%s271 + $0x98] sm:%s263] %v310
                %v312 = vld [vmem:[%s270 + $0x140] sm:%s263]
                %313 = vst [vmem:[%s271 + $0xa0] sm:%s263] %v312
                %v314 = vld [vmem:[%s270 + $0x150] sm:%s263]
                %315 = vst [vmem:[%s271 + $0xa8] sm:%s263] %v314
                %v316 = vld [vmem:[%s270 + $0x160] sm:%s263]
                %317 = vst [vmem:[%s271 + $0xb0] sm:%s263] %v316
                %v318 = vld [vmem:[%s270 + $0x170] sm:%s263]
                %319 = vst [vmem:[%s271 + $0xb8] sm:%s263] %v318
                %v320 = vld [vmem:[%s270 + $0x180] sm:%s263]
                %321 = vst [vmem:[%s271 + $0xc0] sm:%s263] %v320
                %v322 = vld [vmem:[%s270 + $0x190] sm:%s263]
                %323 = vst [vmem:[%s271 + $0xc8] sm:%s263] %v322
                %v324 = vld [vmem:[%s270 + $0x1a0] sm:%s263]
                %325 = vst [vmem:[%s271 + $0xd0] sm:%s263] %v324
                %v326 = vld [vmem:[%s270 + $0x1b0] sm:%s263]
                %327 = vst [vmem:[%s271 + $0xd8] sm:%s263] %v326
                %v328 = vld [vmem:[%s270 + $0x1c0] sm:%s263]
                %329 = vst [vmem:[%s271 + $0xe0] sm:%s263] %v328
                %v330 = vld [vmem:[%s270 + $0x1d0] sm:%s263]
                %331 = vst [vmem:[%s271 + $0xe8] sm:%s263] %v330
                %v332 = vld [vmem:[%s270 + $0x1e0] sm:%s263]
                %333 = vst [vmem:[%s271 + $0xf0] sm:%s263] %v332
                %v334 = vld [vmem:[%s270 + $0x1f0] sm:%s263]
                %335 = vst [vmem:[%s271 + $0xf8] sm:%s263] %v334
                %v336 = vld [vmem:[%s270 + $0x200] sm:%s263]
                %337 = vst [vmem:[%s271 + $0x100] sm:%s263] %v336
                %v338 = vld [vmem:[%s270 + $0x210] sm:%s263]
                %339 = vst [vmem:[%s271 + $0x108] sm:%s263] %v338
                %v340 = vld [vmem:[%s270 + $0x220] sm:%s263]
                %341 = vst [vmem:[%s271 + $0x110] sm:%s263] %v340
                %v342 = vld [vmem:[%s270 + $0x230] sm:%s263]
                %343 = vst [vmem:[%s271 + $0x118] sm:%s263] %v342
                %v344 = vld [vmem:[%s270 + $0x240] sm:%s263]
                %345 = vst [vmem:[%s271 + $0x120] sm:%s263] %v344
                %v346 = vld [vmem:[%s270 + $0x250] sm:%s263]
                %347 = vst [vmem:[%s271 + $0x128] sm:%s263] %v346
                %v348 = vld [vmem:[%s270 + $0x260] sm:%s263]
                %349 = vst [vmem:[%s271 + $0x130] sm:%s263] %v348
                %v350 = vld [vmem:[%s270 + $0x270] sm:%s263]
                %351 = vst [vmem:[%s271 + $0x138] sm:%s263] %v350
                %v352 = vld [vmem:[%s270 + $0x280] sm:%s263]
                %353 = vst [vmem:[%s271 + $0x140] sm:%s263] %v352
                %v354 = vld [vmem:[%s270 + $0x290] sm:%s263]
                %355 = vst [vmem:[%s271 + $0x148] sm:%s263] %v354
                %v356 = vld [vmem:[%s270 + $0x2a0] sm:%s263]
                %357 = vst [vmem:[%s271 + $0x150] sm:%s263] %v356
                %v358 = vld [vmem:[%s270 + $0x2b0] sm:%s263]
                %359 = vst [vmem:[%s271 + $0x158] sm:%s263] %v358
                %v360 = vld [vmem:[%s270 + $0x2c0] sm:%s263]
                %361 = vst [vmem:[%s271 + $0x160] sm:%s263] %v360
                %v362 = vld [vmem:[%s270 + $0x2d0] sm:%s263]
                %363 = vst [vmem:[%s271 + $0x168] sm:%s263] %v362
                %v364 = vld [vmem:[%s270 + $0x2e0] sm:%s263]
                %365 = vst [vmem:[%s271 + $0x170] sm:%s263] %v364
                %v366 = vld [vmem:[%s270 + $0x2f0] sm:%s263]
                %367 = vst [vmem:[%s271 + $0x178] sm:%s263] %v366
                %v368 = vld [vmem:[%s270 + $0x300] sm:%s263]
                %369 = vst [vmem:[%s271 + $0x180] sm:%s263] %v368
                %v370 = vld [vmem:[%s270 + $0x310] sm:%s263]
                %371 = vst [vmem:[%s271 + $0x188] sm:%s263] %v370
                %v372 = vld [vmem:[%s270 + $0x320] sm:%s263]
                %373 = vst [vmem:[%s271 + $0x190] sm:%s263] %v372
                %v374 = vld [vmem:[%s270 + $0x330] sm:%s263]
                %375 = vst [vmem:[%s271 + $0x198] sm:%s263] %v374
                %v376 = vld [vmem:[%s270 + $0x340] sm:%s263]
                %377 = vst [vmem:[%s271 + $0x1a0] sm:%s263] %v376
                %v378 = vld [vmem:[%s270 + $0x350] sm:%s263]
                %379 = vst [vmem:[%s271 + $0x1a8] sm:%s263] %v378
                %v380 = vld [vmem:[%s270 + $0x360] sm:%s263]
                %381 = vst [vmem:[%s271 + $0x1b0] sm:%s263] %v380
                %v382 = vld [vmem:[%s270 + $0x370] sm:%s263]
                %383 = vst [vmem:[%s271 + $0x1b8] sm:%s263] %v382
                %v384 = vld [vmem:[%s270 + $0x380] sm:%s263]
                %385 = vst [vmem:[%s271 + $0x1c0] sm:%s263] %v384
                %v386 = vld [vmem:[%s270 + $0x390] sm:%s263]
                %387 = vst [vmem:[%s271 + $0x1c8] sm:%s263] %v386
                %v388 = vld [vmem:[%s270 + $0x3a0] sm:%s263]
                %389 = vst [vmem:[%s271 + $0x1d0] sm:%s263] %v388
                %v390 = vld [vmem:[%s270 + $0x3b0] sm:%s263]
                %391 = vst [vmem:[%s271 + $0x1d8] sm:%s263] %v390
                %v392 = vld [vmem:[%s270 + $0x3c0] sm:%s263]
                %393 = vst [vmem:[%s271 + $0x1e0] sm:%s263] %v392
                %v394 = vld [vmem:[%s270 + $0x3d0] sm:%s263]
                %395 = vst [vmem:[%s271 + $0x1e8] sm:%s263] %v394
                %v396 = vld [vmem:[%s270 + $0x3e0] sm:%s263]
                %397 = vst [vmem:[%s271 + $0x1f0] sm:%s263] %v396
                %v398 = vld [vmem:[%s270 + $0x3f0] sm:%s263]
                %399 = vst [vmem:[%s271 + $0x1f8] sm:%s263] %v398
                %v400 = vld [vmem:[%s270 + $0x400] sm:%s263]
                %401 = vst [vmem:[%s271 + $0x200] sm:%s263] %v400
                %v402 = vld [vmem:[%s270 + $0x410] sm:%s263]
                %403 = vst [vmem:[%s271 + $0x208] sm:%s263] %v402
                %v404 = vld [vmem:[%s270 + $0x420] sm:%s263]
                %405 = vst [vmem:[%s271 + $0x210] sm:%s263] %v404
                %v406 = vld [vmem:[%s270 + $0x430] sm:%s263]
                %407 = vst [vmem:[%s271 + $0x218] sm:%s263] %v406
                %v408 = vld [vmem:[%s270 + $0x440] sm:%s263]
                %409 = vst [vmem:[%s271 + $0x220] sm:%s263] %v408
                %v410 = vld [vmem:[%s270 + $0x450] sm:%s263]
                %411 = vst [vmem:[%s271 + $0x228] sm:%s263] %v410
                %v412 = vld [vmem:[%s270 + $0x460] sm:%s263]
                %413 = vst [vmem:[%s271 + $0x230] sm:%s263] %v412
                %v414 = vld [vmem:[%s270 + $0x470] sm:%s263]
                %415 = vst [vmem:[%s271 + $0x238] sm:%s263] %v414
                %v416 = vld [vmem:[%s270 + $0x480] sm:%s263]
                %417 = vst [vmem:[%s271 + $0x240] sm:%s263] %v416
                %v418 = vld [vmem:[%s270 + $0x490] sm:%s263]
                %419 = vst [vmem:[%s271 + $0x248] sm:%s263] %v418
                %v420 = vld [vmem:[%s270 + $0x4a0] sm:%s263]
                %421 = vst [vmem:[%s271 + $0x250] sm:%s263] %v420
                %v422 = vld [vmem:[%s270 + $0x4b0] sm:%s263]
                %423 = vst [vmem:[%s271 + $0x258] sm:%s263] %v422
                %v424 = vld [vmem:[%s270 + $0x4c0] sm:%s263]
                %425 = vst [vmem:[%s271 + $0x260] sm:%s263] %v424
                %v426 = vld [vmem:[%s270 + $0x4d0] sm:%s263]
                %427 = vst [vmem:[%s271 + $0x268] sm:%s263] %v426
                %v428 = vld [vmem:[%s270 + $0x4e0] sm:%s263]
                %429 = vst [vmem:[%s271 + $0x270] sm:%s263] %v428
                %v430 = vld [vmem:[%s270 + $0x4f0] sm:%s263]
                %431 = vst [vmem:[%s271 + $0x278] sm:%s263] %v430
                %v432 = vld [vmem:[%s270 + $0x500] sm:%s263]
                %433 = vst [vmem:[%s271 + $0x280] sm:%s263] %v432
                %v434 = vld [vmem:[%s270 + $0x510] sm:%s263]
                %435 = vst [vmem:[%s271 + $0x288] sm:%s263] %v434
                %v436 = vld [vmem:[%s270 + $0x520] sm:%s263]
                %437 = vst [vmem:[%s271 + $0x290] sm:%s263] %v436
                %v438 = vld [vmem:[%s270 + $0x530] sm:%s263]
                %439 = vst [vmem:[%s271 + $0x298] sm:%s263] %v438
                %v440 = vld [vmem:[%s270 + $0x540] sm:%s263]
                %441 = vst [vmem:[%s271 + $0x2a0] sm:%s263] %v440
                %v442 = vld [vmem:[%s270 + $0x550] sm:%s263]
                %443 = vst [vmem:[%s271 + $0x2a8] sm:%s263] %v442
                %v444 = vld [vmem:[%s270 + $0x560] sm:%s263]
                %445 = vst [vmem:[%s271 + $0x2b0] sm:%s263] %v444
                %v446 = vld [vmem:[%s270 + $0x570] sm:%s263]
                %447 = vst [vmem:[%s271 + $0x2b8] sm:%s263] %v446
                %v448 = vld [vmem:[%s270 + $0x580] sm:%s263]
                %449 = vst [vmem:[%s271 + $0x2c0] sm:%s263] %v448
                %v450 = vld [vmem:[%s270 + $0x590] sm:%s263]
                %451 = vst [vmem:[%s271 + $0x2c8] sm:%s263] %v450
                %v452 = vld [vmem:[%s270 + $0x5a0] sm:%s263]
                %453 = vst [vmem:[%s271 + $0x2d0] sm:%s263] %v452
                %v454 = vld [vmem:[%s270 + $0x5b0] sm:%s263]
                %455 = vst [vmem:[%s271 + $0x2d8] sm:%s263] %v454
                %v456 = vld [vmem:[%s270 + $0x5c0] sm:%s263]
                %457 = vst [vmem:[%s271 + $0x2e0] sm:%s263] %v456
                %v458 = vld [vmem:[%s270 + $0x5d0] sm:%s263]
                %459 = vst [vmem:[%s271 + $0x2e8] sm:%s263] %v458
                %v460 = vld [vmem:[%s270 + $0x5e0] sm:%s263]
                %461 = vst [vmem:[%s271 + $0x2f0] sm:%s263] %v460
                %v462 = vld [vmem:[%s270 + $0x5f0] sm:%s263]
                %463 = vst [vmem:[%s271 + $0x2f8] sm:%s263] %v462
                %v464 = vld [vmem:[%s270 + $0x600] sm:%s263]
                %465 = vst [vmem:[%s271 + $0x300] sm:%s263] %v464
                %v466 = vld [vmem:[%s270 + $0x610] sm:%s263]
                %467 = vst [vmem:[%s271 + $0x308] sm:%s263] %v466
                %v468 = vld [vmem:[%s270 + $0x620] sm:%s263]
                %469 = vst [vmem:[%s271 + $0x310] sm:%s263] %v468
                %v470 = vld [vmem:[%s270 + $0x630] sm:%s263]
                %471 = vst [vmem:[%s271 + $0x318] sm:%s263] %v470
                %v472 = vld [vmem:[%s270 + $0x640] sm:%s263]
                %473 = vst [vmem:[%s271 + $0x320] sm:%s263] %v472
                %v474 = vld [vmem:[%s270 + $0x650] sm:%s263]
                %475 = vst [vmem:[%s271 + $0x328] sm:%s263] %v474
                %v476 = vld [vmem:[%s270 + $0x660] sm:%s263]
                %477 = vst [vmem:[%s271 + $0x330] sm:%s263] %v476
                %v478 = vld [vmem:[%s270 + $0x670] sm:%s263]
                %479 = vst [vmem:[%s271 + $0x338] sm:%s263] %v478
                %v480 = vld [vmem:[%s270 + $0x680] sm:%s263]
                %481 = vst [vmem:[%s271 + $0x340] sm:%s263] %v480
                %v482 = vld [vmem:[%s270 + $0x690] sm:%s263]
                %483 = vst [vmem:[%s271 + $0x348] sm:%s263] %v482
                %v484 = vld [vmem:[%s270 + $0x6a0] sm:%s263]
                %485 = vst [vmem:[%s271 + $0x350] sm:%s263] %v484
                %v486 = vld [vmem:[%s270 + $0x6b0] sm:%s263]
                %487 = vst [vmem:[%s271 + $0x358] sm:%s263] %v486
                %v488 = vld [vmem:[%s270 + $0x6c0] sm:%s263]
                %489 = vst [vmem:[%s271 + $0x360] sm:%s263] %v488
                %v490 = vld [vmem:[%s270 + $0x6d0] sm:%s263]
                %491 = vst [vmem:[%s271 + $0x368] sm:%s263] %v490
                %v492 = vld [vmem:[%s270 + $0x6e0] sm:%s263]
                %493 = vst [vmem:[%s271 + $0x370] sm:%s263] %v492
                %v494 = vld [vmem:[%s270 + $0x6f0] sm:%s263]
                %495 = vst [vmem:[%s271 + $0x378] sm:%s263] %v494
                %v496 = vld [vmem:[%s270 + $0x700] sm:%s263]
                %497 = vst [vmem:[%s271 + $0x380] sm:%s263] %v496
                %v498 = vld [vmem:[%s270 + $0x710] sm:%s263]
                %499 = vst [vmem:[%s271 + $0x388] sm:%s263] %v498
                %v500 = vld [vmem:[%s270 + $0x720] sm:%s263]
                %501 = vst [vmem:[%s271 + $0x390] sm:%s263] %v500
                %v502 = vld [vmem:[%s270 + $0x730] sm:%s263]
                %503 = vst [vmem:[%s271 + $0x398] sm:%s263] %v502
                %v504 = vld [vmem:[%s270 + $0x740] sm:%s263]
                %505 = vst [vmem:[%s271 + $0x3a0] sm:%s263] %v504
                %v506 = vld [vmem:[%s270 + $0x750] sm:%s263]
                %507 = vst [vmem:[%s271 + $0x3a8] sm:%s263] %v506
                %v508 = vld [vmem:[%s270 + $0x760] sm:%s263]
                %509 = vst [vmem:[%s271 + $0x3b0] sm:%s263] %v508
                %v510 = vld [vmem:[%s270 + $0x770] sm:%s263]
                %511 = vst [vmem:[%s271 + $0x3b8] sm:%s263] %v510
                %v512 = vld [vmem:[%s270 + $0x780] sm:%s263]
                %513 = vst [vmem:[%s271 + $0x3c0] sm:%s263] %v512
                %v514 = vld [vmem:[%s270 + $0x790] sm:%s263]
                %515 = vst [vmem:[%s271 + $0x3c8] sm:%s263] %v514
                %v516 = vld [vmem:[%s270 + $0x7a0] sm:%s263]
                %517 = vst [vmem:[%s271 + $0x3d0] sm:%s263] %v516
                %v518 = vld [vmem:[%s270 + $0x7b0] sm:%s263]
                %519 = vst [vmem:[%s271 + $0x3d8] sm:%s263] %v518
                %v520 = vld [vmem:[%s270 + $0x7c0] sm:%s263]
                %521 = vst [vmem:[%s271 + $0x3e0] sm:%s263] %v520
                %v522 = vld [vmem:[%s270 + $0x7d0] sm:%s263]
                %523 = vst [vmem:[%s271 + $0x3e8] sm:%s263] %v522
                %v524 = vld [vmem:[%s270 + $0x7e0] sm:%s263]
                %525 = vst [vmem:[%s271 + $0x3f0] sm:%s263] %v524
                %v526 = vld [vmem:[%s270 + $0x7f0] sm:%s263]
                %527 = vst [vmem:[%s271 + $0x3f8] sm:%s263] %v526
                %v528 = vld [vmem:[%s270 + $0x800] sm:%s263]
                %529 = vst [vmem:[%s271 + $0x400] sm:%s263] %v528
                %v530 = vld [vmem:[%s270 + $0x810] sm:%s263]
                %531 = vst [vmem:[%s271 + $0x408] sm:%s263] %v530
                %v532 = vld [vmem:[%s270 + $0x820] sm:%s263]
                %533 = vst [vmem:[%s271 + $0x410] sm:%s263] %v532
                %v534 = vld [vmem:[%s270 + $0x830] sm:%s263]
                %535 = vst [vmem:[%s271 + $0x418] sm:%s263] %v534
                %v536 = vld [vmem:[%s270 + $0x840] sm:%s263]
                %537 = vst [vmem:[%s271 + $0x420] sm:%s263] %v536
                %v538 = vld [vmem:[%s270 + $0x850] sm:%s263]
                %539 = vst [vmem:[%s271 + $0x428] sm:%s263] %v538
                %v540 = vld [vmem:[%s270 + $0x860] sm:%s263]
                %541 = vst [vmem:[%s271 + $0x430] sm:%s263] %v540
                %v542 = vld [vmem:[%s270 + $0x870] sm:%s263]
                %543 = vst [vmem:[%s271 + $0x438] sm:%s263] %v542
                %v544 = vld [vmem:[%s270 + $0x880] sm:%s263]
                %545 = vst [vmem:[%s271 + $0x440] sm:%s263] %v544
                %v546 = vld [vmem:[%s270 + $0x890] sm:%s263]
                %547 = vst [vmem:[%s271 + $0x448] sm:%s263] %v546
                %v548 = vld [vmem:[%s270 + $0x8a0] sm:%s263]
                %549 = vst [vmem:[%s271 + $0x450] sm:%s263] %v548
                %v550 = vld [vmem:[%s270 + $0x8b0] sm:%s263]
                %551 = vst [vmem:[%s271 + $0x458] sm:%s263] %v550
                %v552 = vld [vmem:[%s270 + $0x8c0] sm:%s263]
                %553 = vst [vmem:[%s271 + $0x460] sm:%s263] %v552
                %v554 = vld [vmem:[%s270 + $0x8d0] sm:%s263]
                %555 = vst [vmem:[%s271 + $0x468] sm:%s263] %v554
                %v556 = vld [vmem:[%s270 + $0x8e0] sm:%s263]
                %557 = vst [vmem:[%s271 + $0x470] sm:%s263] %v556
                %v558 = vld [vmem:[%s270 + $0x8f0] sm:%s263]
                %559 = vst [vmem:[%s271 + $0x478] sm:%s263] %v558
                %v560 = vld [vmem:[%s270 + $0x900] sm:%s263]
                %561 = vst [vmem:[%s271 + $0x480] sm:%s263] %v560
                %v562 = vld [vmem:[%s270 + $0x910] sm:%s263]
                %563 = vst [vmem:[%s271 + $0x488] sm:%s263] %v562
                %v564 = vld [vmem:[%s270 + $0x920] sm:%s263]
                %565 = vst [vmem:[%s271 + $0x490] sm:%s263] %v564
                %v566 = vld [vmem:[%s270 + $0x930] sm:%s263]
                %567 = vst [vmem:[%s271 + $0x498] sm:%s263] %v566
                %v568 = vld [vmem:[%s270 + $0x940] sm:%s263]
                %569 = vst [vmem:[%s271 + $0x4a0] sm:%s263] %v568
                %v570 = vld [vmem:[%s270 + $0x950] sm:%s263]
                %571 = vst [vmem:[%s271 + $0x4a8] sm:%s263] %v570
                %v572 = vld [vmem:[%s270 + $0x960] sm:%s263]
                %573 = vst [vmem:[%s271 + $0x4b0] sm:%s263] %v572
                %v574 = vld [vmem:[%s270 + $0x970] sm:%s263]
                %575 = vst [vmem:[%s271 + $0x4b8] sm:%s263] %v574
                %v576 = vld [vmem:[%s270 + $0x980] sm:%s263]
                %577 = vst [vmem:[%s271 + $0x4c0] sm:%s263] %v576
                %v578 = vld [vmem:[%s270 + $0x990] sm:%s263]
                %579 = vst [vmem:[%s271 + $0x4c8] sm:%s263] %v578
                %v580 = vld [vmem:[%s270 + $0x9a0] sm:%s263]
                %581 = vst [vmem:[%s271 + $0x4d0] sm:%s263] %v580
                %v582 = vld [vmem:[%s270 + $0x9b0] sm:%s263]
                %583 = vst [vmem:[%s271 + $0x4d8] sm:%s263] %v582
                %v584 = vld [vmem:[%s270 + $0x9c0] sm:%s263]
                %585 = vst [vmem:[%s271 + $0x4e0] sm:%s263] %v584
                %v586 = vld [vmem:[%s270 + $0x9d0] sm:%s263]
                %587 = vst [vmem:[%s271 + $0x4e8] sm:%s263] %v586
                %v588 = vld [vmem:[%s270 + $0x9e0] sm:%s263]
                %589 = vst [vmem:[%s271 + $0x4f0] sm:%s263] %v588
                %v590 = vld [vmem:[%s270 + $0x9f0] sm:%s263]
                %591 = vst [vmem:[%s271 + $0x4f8] sm:%s263] %v590
                %v592 = vld [vmem:[%s270 + $0xa00] sm:%s263]
                %593 = vst [vmem:[%s271 + $0x500] sm:%s263] %v592
                %v594 = vld [vmem:[%s270 + $0xa10] sm:%s263]
                %595 = vst [vmem:[%s271 + $0x508] sm:%s263] %v594
                %v596 = vld [vmem:[%s270 + $0xa20] sm:%s263]
                %597 = vst [vmem:[%s271 + $0x510] sm:%s263] %v596
                %v598 = vld [vmem:[%s270 + $0xa30] sm:%s263]
                %599 = vst [vmem:[%s271 + $0x518] sm:%s263] %v598
                %v600 = vld [vmem:[%s270 + $0xa40] sm:%s263]
                %601 = vst [vmem:[%s271 + $0x520] sm:%s263] %v600
                %v602 = vld [vmem:[%s270 + $0xa50] sm:%s263]
                %603 = vst [vmem:[%s271 + $0x528] sm:%s263] %v602
                %v604 = vld [vmem:[%s270 + $0xa60] sm:%s263]
                %605 = vst [vmem:[%s271 + $0x530] sm:%s263] %v604
                %v606 = vld [vmem:[%s270 + $0xa70] sm:%s263]
                %607 = vst [vmem:[%s271 + $0x538] sm:%s263] %v606
                %v608 = vld [vmem:[%s270 + $0xa80] sm:%s263]
                %609 = vst [vmem:[%s271 + $0x540] sm:%s263] %v608
                %v610 = vld [vmem:[%s270 + $0xa90] sm:%s263]
                %611 = vst [vmem:[%s271 + $0x548] sm:%s263] %v610
                %v612 = vld [vmem:[%s270 + $0xaa0] sm:%s263]
                %613 = vst [vmem:[%s271 + $0x550] sm:%s263] %v612
                %v614 = vld [vmem:[%s270 + $0xab0] sm:%s263]
                %615 = vst [vmem:[%s271 + $0x558] sm:%s263] %v614
                %v616 = vld [vmem:[%s270 + $0xac0] sm:%s263]
                %617 = vst [vmem:[%s271 + $0x560] sm:%s263] %v616
                %v618 = vld [vmem:[%s270 + $0xad0] sm:%s263]
                %619 = vst [vmem:[%s271 + $0x568] sm:%s263] %v618
                %v620 = vld [vmem:[%s270 + $0xae0] sm:%s263]
                %621 = vst [vmem:[%s271 + $0x570] sm:%s263] %v620
                %v622 = vld [vmem:[%s270 + $0xaf0] sm:%s263]
                %623 = vst [vmem:[%s271 + $0x578] sm:%s263] %v622
                %v624 = vld [vmem:[%s270 + $0xb00] sm:%s263]
                %625 = vst [vmem:[%s271 + $0x580] sm:%s263] %v624
                %v626 = vld [vmem:[%s270 + $0xb10] sm:%s263]
                %627 = vst [vmem:[%s271 + $0x588] sm:%s263] %v626
                %v628 = vld [vmem:[%s270 + $0xb20] sm:%s263]
                %629 = vst [vmem:[%s271 + $0x590] sm:%s263] %v628
                %v630 = vld [vmem:[%s270 + $0xb30] sm:%s263]
                %631 = vst [vmem:[%s271 + $0x598] sm:%s263] %v630
                %v632 = vld [vmem:[%s270 + $0xb40] sm:%s263]
                %633 = vst [vmem:[%s271 + $0x5a0] sm:%s263] %v632
                %v634 = vld [vmem:[%s270 + $0xb50] sm:%s263]
                %635 = vst [vmem:[%s271 + $0x5a8] sm:%s263] %v634
                %v636 = vld [vmem:[%s270 + $0xb60] sm:%s263]
                %637 = vst [vmem:[%s271 + $0x5b0] sm:%s263] %v636
                %v638 = vld [vmem:[%s270 + $0xb70] sm:%s263]
                %639 = vst [vmem:[%s271 + $0x5b8] sm:%s263] %v638
                %v640 = vld [vmem:[%s270 + $0xb80] sm:%s263]
                %641 = vst [vmem:[%s271 + $0x5c0] sm:%s263] %v640
                %v642 = vld [vmem:[%s270 + $0xb90] sm:%s263]
                %643 = vst [vmem:[%s271 + $0x5c8] sm:%s263] %v642
                %v644 = vld [vmem:[%s270 + $0xba0] sm:%s263]
                %645 = vst [vmem:[%s271 + $0x5d0] sm:%s263] %v644
                %v646 = vld [vmem:[%s270 + $0xbb0] sm:%s263]
                %647 = vst [vmem:[%s271 + $0x5d8] sm:%s263] %v646
                %v648 = vld [vmem:[%s270 + $0xbc0] sm:%s263]
                %649 = vst [vmem:[%s271 + $0x5e0] sm:%s263] %v648
                %v650 = vld [vmem:[%s270 + $0xbd0] sm:%s263]
                %651 = vst [vmem:[%s271 + $0x5e8] sm:%s263] %v650
                %v652 = vld [vmem:[%s270 + $0xbe0] sm:%s263]
                %653 = vst [vmem:[%s271 + $0x5f0] sm:%s263] %v652
                %v654 = vld [vmem:[%s270 + $0xbf0] sm:%s263]
                %655 = vst [vmem:[%s271 + $0x5f8] sm:%s263] %v654
                %v656 = vld [vmem:[%s270 + $0xc00] sm:%s263]
                %657 = vst [vmem:[%s271 + $0x600] sm:%s263] %v656
                %v658 = vld [vmem:[%s270 + $0xc10] sm:%s263]
                %659 = vst [vmem:[%s271 + $0x608] sm:%s263] %v658
                %v660 = vld [vmem:[%s270 + $0xc20] sm:%s263]
                %661 = vst [vmem:[%s271 + $0x610] sm:%s263] %v660
                %v662 = vld [vmem:[%s270 + $0xc30] sm:%s263]
                %663 = vst [vmem:[%s271 + $0x618] sm:%s263] %v662
              $region45: #{cnn_base_forward.7} parent=39 // loop_footer
                %s269 = sadd.s32 1, %s265
              $region46: #{cnn_base_forward.7} parent=39 // loop_footer_branch
                %264 = sbr.rel target = $region42
              $region47: #{cnn_base_forward.7} parent=39 // loop_exit
                _
            $region40: #{cnn_base_forward.7} parent=31 // pred_fallthru
              _
          $region32: #{cnn_base_forward.7} parent=27 // pred_fallthru
            _
          %1068 = vnop
        $region28: #{cnn_base_forward.7} parent=23 // pred_fallthru
          _
        // Predicated region
        $region63: #{cnn_base_forward.7} parent=23 // pred_check
          %p1069 = pneg %p102
        $region64: #{cnn_base_forward.7} parent=23 // pred_check_branch
          %1071 = sbr.rel (%p1069) target = $region66
        $region65: #{cnn_base_forward.7} parent=23 // pred_region
          %s1072 = smul.u32 2, %s26
          %p1073 = scmp.lt.s32.totalorder %s1072, 3
          %s1074 = scalar_select %p1073, %s1072, 3
          %s1075 = scalar_lea.vmem %s2, %s1074
          %s1076 = smul.u32 2, %s26
        $region66: #{cnn_base_forward.7} parent=23 // pred_fallthru
          _
        // Predicated region
        $region67: #{cnn_base_forward.7} parent=23 // pred_check
          %p1077 = pneg %p128
        $region68: #{cnn_base_forward.7} parent=23 // pred_check_branch
          %1079 = sbr.rel (%p1077) target = $region70
        $region69: #{cnn_base_forward.7} parent=23 // pred_region
          %s1080 = smul.u32 2, %s26
          %p1081 = scmp.lt.s32.totalorder %s1080, 3
          %s1082 = scalar_select %p1081, %s1080, 3
          %s1083 = scalar_lea.vmem %s3, %s1082
          %s1084 = smul.u32 2, %s26
        $region70: #{cnn_base_forward.7} parent=23 // pred_fallthru
          _
      $region24: #{cnn_base_forward.7} parent=5 // pred_fallthru
        _
      %p1085 = scmp.le.s32.totalorder 1, %s18
      %p1086 = scmp.lt.s32.totalorder %s18, 3
      %p1087 = pnand %p1085, %p1086
      %p1088 = pneg %p1087
      // Predicated region
      $region71: #{cnn_base_forward.7} parent=5 // pred_check
        _
      $region72: #{cnn_base_forward.7} parent=5 // pred_check_branch
        %1090 = sbr.rel (%p1087) target = $region74
      $region73: #{cnn_base_forward.7} parent=5 // pred_region
        %s1091 = ssub.s32 %s18, 1
        %s1092 = sand.u32 %s69, 1
        %s1093 = sand.u32 %s69, 1
        %s1094 = smul.addr %s1093, 1568
        %s1095 = scalar_lea.vmem [#allocation4], %s1094
        // Predicated region
        $region75: #{cnn_base_forward.7} parent=73 // pred_check
          %p1096 = pneg %p82
        $region76: #{cnn_base_forward.7} parent=73 // pred_check_branch
          %1098 = sbr.rel (%p1096) target = $region78
        $region77: #{cnn_base_forward.7} parent=73 // pred_region
          _
        $region78: #{cnn_base_forward.7} parent=73 // pred_fallthru
          _
        %s1099 = smul.u32 16, %s27
        %s1100 = ssub.s32 1, %s1099
        %s1101 = smul.u32 16, %s1100
        %s1102 = smul.u32 %s1101, 13
        %p1103 = scmp.lt.s32.totalorder %s1099, 0
        %s1104 = scalar_select %p1103, %s1099, 0
        %s1105 = smul.addr %s1104, 13
        %s1106 = scalar_lea.vmem %s0, %s1105
        %p1107 = pneg %p56
        %p1108 = pneg %p53
        %s1109 = sand.u32 %s69, 1
        %s1110 = sand.u32 %s69, 1
        %s1111 = smul.addr %s1110, 1568
        %s1112 = scalar_lea.vmem [#allocation4], %s1111
        %p1113 = pneg %p82
        %p1114 = pneg %p79
        %s1115 = smul.u32 2, %s28
        %p1116 = scmp.lt.s32.totalorder %s1115, 3
        %s1117 = scalar_select %p1116, %s1115, 3
        %s1118 = scalar_lea.vmem %s2, %s1117
        %p1119 = pneg %p108
        %p1120 = pneg %p105
        %s1121 = smul.u32 2, %s28
        %p1122 = scmp.lt.s32.totalorder %s1121, 3
        %s1123 = scalar_select %p1122, %s1121, 3
        %s1124 = scalar_lea.vmem %s3, %s1123
        %p1125 = pneg %p134
        %p1126 = pneg %p131
        %p1127 = pneg %p155
        %p1128 = pneg %p152
        %p1129 = pneg %p183
        %p1130 = pneg %p180
        %s1131 = sand.u32 %s170, 1
        %s1132 = scalar_lea.sflag [#allocation6], %s1131
        %s1133 = sand.u32 %s170, 1
        %s1134 = smul.addr %s1133, 32
        %s1135 = scalar_lea.vmem [#allocation5], %s1134
        %p1136 = pneg %p209
        %p1137 = pneg %p206
        %s1138 = smul.u32 16, %s27
        %s1139 = ssub.s32 1, %s1138
        %s1140 = smul.u32 16, %s1139
        %s1141 = smul.u32 %s1140, 13
        %p1142 = scmp.lt.s32.totalorder %s1138, 0
        %s1143 = scalar_select %p1142, %s1138, 0
        %s1144 = smul.addr %s1143, 13
        %s1145 = scalar_lea.vmem %s0, %s1144
        %s1146 = smul.u32 16, %s27
        %s1147 = ssub.s32 1, %s1146
        %s1148 = smul.u32 16, %s1147
        %s1149 = smul.u32 %s1148, 13
        %s1150 = smul.u32 2, %s28
        %s1151 = smul.u32 2, %s28
        %p1152 = scmp.lt.s32.totalorder %s1151, 3
        %s1153 = scalar_select %p1152, %s1151, 3
        %s1154 = scalar_lea.vmem %s2, %s1153
        %s1155 = smul.u32 2, %s28
        %s1156 = smul.u32 2, %s28
        %p1157 = scmp.lt.s32.totalorder %s1156, 3
        %s1158 = scalar_select %p1157, %s1156, 3
        %s1159 = scalar_lea.vmem %s3, %s1158
        %s1160 = smul.u32 2, %s28
        %s1161 = smul.u32 16, %s27
        %s1162 = smul.u32 2, %s28
        %s1163 = ssub.s32 1, %s1161
        %s1164 = smul.u32 16, %s1163
        %s1165 = smul.u32 %s1164, 2
        %s1166 = smul.u32 16, %s27
        %s1167 = ssub.s32 1, %s1166
        %s1168 = smul.u32 32, %s1167
        %p1170 = scmp.eq.s32.totalorder %s28, 0
        // Predicated region
        $region79: #{cnn_base_forward.7} parent=73 // pred_check
          %p1171 = pneg %p1170
        $region80: #{cnn_base_forward.7} parent=73 // pred_check_branch
          %1173 = sbr.rel (%p1171) target = $region82
        $region81: #{cnn_base_forward.7} parent=73 // pred_region
          %vm1174 = vcmask 7168
          %1175 = vst.msk [vmem:[#allocation2] sm:$0xff] %vm1174, 0.0
          %1176 = vst.msk [vmem:[#allocation2 + $0x8] sm:$0xff] %vm1174, 0.0
          %1177 = vst.msk [vmem:[#allocation2 + $0x10] sm:$0xff] %vm1174, 0.0
          %1178 = vst.msk [vmem:[#allocation2 + $0x18] sm:$0xff] %vm1174, 0.0
        $region82: #{cnn_base_forward.7} parent=73 // pred_fallthru
          _
        %v1179 = vld [vmem:[%s1145] sm:$0xff]
        %v1180 = vld [vmem:[%s1145 + $0x8] sm:$0x1f]
        %v1181 = vld [vmem:[%s1145 + $0xd] sm:$0xff]
        %v1182 = vld [vmem:[%s1145 + $0x15] sm:$0x1f]
        %v1183 = vld [vmem:[%s1145 + $0x1a] sm:$0xff]
        %v1184 = vld [vmem:[%s1145 + $0x22] sm:$0x1f]
        %v1185 = vld [vmem:[%s1145 + $0x27] sm:$0xff]
        %v1186 = vld [vmem:[%s1145 + $0x2f] sm:$0x1f]
        %v1187 = vld [vmem:[%s1145 + $0x34] sm:$0xff]
        %v1188 = vld [vmem:[%s1145 + $0x3c] sm:$0x1f]
        %v1189 = vld [vmem:[%s1145 + $0x41] sm:$0xff]
        %v1190 = vld [vmem:[%s1145 + $0x49] sm:$0x1f]
        %v1191 = vld [vmem:[%s1145 + $0x4e] sm:$0xff]
        %v1192 = vld [vmem:[%s1145 + $0x56] sm:$0x1f]
        %v1193 = vld [vmem:[%s1145 + $0x5b] sm:$0xff]
        %v1194 = vld [vmem:[%s1145 + $0x63] sm:$0x1f]
        %v1195 = vld [vmem:[%s1145 + $0x68] sm:$0xff]
        %v1196 = vld [vmem:[%s1145 + $0x70] sm:$0x1f]
        %v1197 = vld [vmem:[%s1145 + $0x75] sm:$0xff]
        %v1198 = vld [vmem:[%s1145 + $0x7d] sm:$0x1f]
        %v1199 = vld [vmem:[%s1145 + $0x82] sm:$0xff]
        %v1200 = vld [vmem:[%s1145 + $0x8a] sm:$0x1f]
        %v1201 = vld [vmem:[%s1145 + $0x8f] sm:$0xff]
        %v1202 = vld [vmem:[%s1145 + $0x97] sm:$0x1f]
        %v1203 = vld [vmem:[%s1145 + $0x9c] sm:$0xff]
        %v1204 = vld [vmem:[%s1145 + $0xa4] sm:$0x1f]
        %v1205 = vld [vmem:[%s1145 + $0xa9] sm:$0xff]
        %v1206 = vld [vmem:[%s1145 + $0xb1] sm:$0x1f]
        %v1207 = vld [vmem:[%s1145 + $0xb6] sm:$0xff]
        %v1208 = vld [vmem:[%s1145 + $0xbe] sm:$0x1f]
        %v1209 = vld [vmem:[%s1145 + $0xc3] sm:$0xff]
        %v1210 = vld [vmem:[%s1145 + $0xcb] sm:$0x1f]
        %v1211 = vld [vmem:[%s1095] sm:$0xff]
        %v1212 = vld [vmem:[%s1095 + $0x8] sm:$0xff]
        %v1213 = vld [vmem:[%s1095 + $0x10] sm:$0xff]
        %v1214 = vld [vmem:[%s1095 + $0x18] sm:$0xff]
        %v1215 = vld [vmem:[%s1095 + $0x20] sm:$0xff]
        %v1216 = vld [vmem:[%s1095 + $0x28] sm:$0xff]
        %v1217 = vld [vmem:[%s1095 + $0x30] sm:$0xff]
        %v1218 = vld [vmem:[%s1095 + $0x38] sm:$0xff]
        %v1219 = vld [vmem:[%s1095 + $0x40] sm:$0xff]
        %v1220 = vld [vmem:[%s1095 + $0x48] sm:$0xff]
        %v1221 = vld [vmem:[%s1095 + $0x50] sm:$0xff]
        %v1222 = vld [vmem:[%s1095 + $0x58] sm:$0xff]
        %v1223 = vld [vmem:[%s1095 + $0x60] sm:$0xff]
        %v1224 = vld [vmem:[%s1095 + $0x68] sm:$0xff]
        %v1225 = vld [vmem:[%s1095 + $0x70] sm:$0xff]
        %v1226 = vld [vmem:[%s1095 + $0x78] sm:$0xff]
        %v1227 = vld [vmem:[%s1095 + $0x80] sm:$0xff]
        %v1228 = vld [vmem:[%s1095 + $0x88] sm:$0xff]
        %v1229 = vld [vmem:[%s1095 + $0x90] sm:$0xff]
        %v1230 = vld [vmem:[%s1095 + $0x98] sm:$0xff]
        %v1231 = vld [vmem:[%s1095 + $0xa0] sm:$0xff]
        %v1232 = vld [vmem:[%s1095 + $0xa8] sm:$0xff]
        %v1233 = vld [vmem:[%s1095 + $0xb0] sm:$0xff]
        %v1234 = vld [vmem:[%s1095 + $0xb8] sm:$0xff]
        %v1235 = vld [vmem:[%s1095 + $0xc0] sm:$0xff]
        %v1236 = vld [vmem:[%s1095 + $0xc8] sm:$0xff]
        %v1237 = vld [vmem:[%s1095 + $0xd0] sm:$0xff]
        %v1238 = vld [vmem:[%s1095 + $0xd8] sm:$0xff]
        %v1239 = vld [vmem:[%s1095 + $0xe0] sm:$0xff]
        %v1240 = vld [vmem:[%s1095 + $0xe8] sm:$0xff]
        %v1241 = vld [vmem:[%s1095 + $0xf0] sm:$0xff]
        %v1242 = vld [vmem:[%s1095 + $0xf8] sm:$0xff]
        %v1243 = vld [vmem:[%s1095 + $0x100] sm:$0xff]
        %v1244 = vld [vmem:[%s1095 + $0x108] sm:$0xff]
        %v1245 = vld [vmem:[%s1095 + $0x110] sm:$0xff]
        %v1246 = vld [vmem:[%s1095 + $0x118] sm:$0xff]
        %v1247 = vld [vmem:[%s1095 + $0x120] sm:$0xff]
        %v1248 = vld [vmem:[%s1095 + $0x128] sm:$0xff]
        %v1249 = vld [vmem:[%s1095 + $0x130] sm:$0xff]
        %v1250 = vld [vmem:[%s1095 + $0x138] sm:$0xff]
        %v1251 = vld [vmem:[%s1095 + $0x140] sm:$0xff]
        %v1252 = vld [vmem:[%s1095 + $0x148] sm:$0xff]
        %v1253 = vld [vmem:[%s1095 + $0x150] sm:$0xff]
        %v1254 = vld [vmem:[%s1095 + $0x158] sm:$0xff]
        %v1255 = vld [vmem:[%s1095 + $0x160] sm:$0xff]
        %v1256 = vld [vmem:[%s1095 + $0x168] sm:$0xff]
        %v1257 = vld [vmem:[%s1095 + $0x170] sm:$0xff]
        %v1258 = vld [vmem:[%s1095 + $0x178] sm:$0xff]
        %v1259 = vld [vmem:[%s1095 + $0x180] sm:$0xff]
        %v1260 = vld [vmem:[%s1095 + $0x188] sm:$0xff]
        %v1261 = vld [vmem:[%s1095 + $0x190] sm:$0xff]
        %v1262 = vld [vmem:[%s1095 + $0x198] sm:$0xff]
        %v1263 = vld [vmem:[%s1095 + $0x1a0] sm:$0xff]
        %v1264 = vld [vmem:[%s1095 + $0x1a8] sm:$0xff]
        %v1265 = vld [vmem:[%s1095 + $0x1b0] sm:$0xff]
        %v1266 = vld [vmem:[%s1095 + $0x1b8] sm:$0xff]
        %v1267 = vld [vmem:[%s1095 + $0x1c0] sm:$0xff]
        %v1268 = vld [vmem:[%s1095 + $0x1c8] sm:$0xff]
        %v1269 = vld [vmem:[%s1095 + $0x1d0] sm:$0xff]
        %v1270 = vld [vmem:[%s1095 + $0x1d8] sm:$0xff]
        %v1271 = vld [vmem:[%s1095 + $0x1e0] sm:$0xff]
        %v1272 = vld [vmem:[%s1095 + $0x1e8] sm:$0xff]
        %v1273 = vld [vmem:[%s1095 + $0x1f0] sm:$0xff]
        %v1274 = vld [vmem:[%s1095 + $0x1f8] sm:$0xff]
        %v1275 = vld [vmem:[%s1095 + $0x200] sm:$0xff]
        %v1276 = vld [vmem:[%s1095 + $0x208] sm:$0xff]
        %v1277 = vld [vmem:[%s1095 + $0x210] sm:$0xff]
        %v1278 = vld [vmem:[%s1095 + $0x218] sm:$0xff]
        %v1279 = vld [vmem:[%s1095 + $0x220] sm:$0xff]
        %v1280 = vld [vmem:[%s1095 + $0x228] sm:$0xff]
        %v1281 = vld [vmem:[%s1095 + $0x230] sm:$0xff]
        %v1282 = vld [vmem:[%s1095 + $0x238] sm:$0xff]
        %v1283 = vld [vmem:[%s1095 + $0x240] sm:$0xff]
        %v1284 = vld [vmem:[%s1095 + $0x248] sm:$0xff]
        %v1285 = vld [vmem:[%s1095 + $0x250] sm:$0xff]
        %v1286 = vld [vmem:[%s1095 + $0x258] sm:$0xff]
        %v1287 = vld [vmem:[%s1095 + $0x260] sm:$0xff]
        %v1288 = vld [vmem:[%s1095 + $0x268] sm:$0xff]
        %v1289 = vld [vmem:[%s1095 + $0x270] sm:$0xff]
        %v1290 = vld [vmem:[%s1095 + $0x278] sm:$0xff]
        %v1291 = vld [vmem:[%s1095 + $0x280] sm:$0xff]
        %v1292 = vld [vmem:[%s1095 + $0x288] sm:$0xff]
        %v1293 = vld [vmem:[%s1095 + $0x290] sm:$0xff]
        %v1294 = vld [vmem:[%s1095 + $0x298] sm:$0xff]
        %v1295 = vld [vmem:[%s1095 + $0x2a0] sm:$0xff]
        %v1296 = vld [vmem:[%s1095 + $0x2a8] sm:$0xff]
        %v1297 = vld [vmem:[%s1095 + $0x2b0] sm:$0xff]
        %v1298 = vld [vmem:[%s1095 + $0x2b8] sm:$0xff]
        %v1299 = vld [vmem:[%s1095 + $0x2c0] sm:$0xff]
        %v1300 = vld [vmem:[%s1095 + $0x2c8] sm:$0xff]
        %v1301 = vld [vmem:[%s1095 + $0x2d0] sm:$0xff]
        %v1302 = vld [vmem:[%s1095 + $0x2d8] sm:$0xff]
        %v1303 = vld [vmem:[%s1095 + $0x2e0] sm:$0xff]
        %v1304 = vld [vmem:[%s1095 + $0x2e8] sm:$0xff]
        %v1305 = vld [vmem:[%s1095 + $0x2f0] sm:$0xff]
        %v1306 = vld [vmem:[%s1095 + $0x2f8] sm:$0xff]
        %v1307 = vld [vmem:[%s1095 + $0x300] sm:$0xff]
        %v1308 = vld [vmem:[%s1095 + $0x308] sm:$0xff]
        %v1309 = vld [vmem:[%s1095 + $0x310] sm:$0xff]
        %v1310 = vld [vmem:[%s1095 + $0x318] sm:$0xff]
        %v1311 = vld [vmem:[%s1095 + $0x320] sm:$0xff]
        %v1312 = vld [vmem:[%s1095 + $0x328] sm:$0xff]
        %v1313 = vld [vmem:[%s1095 + $0x330] sm:$0xff]
        %v1314 = vld [vmem:[%s1095 + $0x338] sm:$0xff]
        %v1315 = vld [vmem:[%s1095 + $0x340] sm:$0xff]
        %v1316 = vld [vmem:[%s1095 + $0x348] sm:$0xff]
        %v1317 = vld [vmem:[%s1095 + $0x350] sm:$0xff]
        %v1318 = vld [vmem:[%s1095 + $0x358] sm:$0xff]
        %v1319 = vld [vmem:[%s1095 + $0x360] sm:$0xff]
        %v1320 = vld [vmem:[%s1095 + $0x368] sm:$0xff]
        %v1321 = vld [vmem:[%s1095 + $0x370] sm:$0xff]
        %v1322 = vld [vmem:[%s1095 + $0x378] sm:$0xff]
        %v1323 = vld [vmem:[%s1095 + $0x380] sm:$0xff]
        %v1324 = vld [vmem:[%s1095 + $0x388] sm:$0xff]
        %v1325 = vld [vmem:[%s1095 + $0x390] sm:$0xff]
        %v1326 = vld [vmem:[%s1095 + $0x398] sm:$0xff]
        %v1327 = vld [vmem:[%s1095 + $0x3a0] sm:$0xff]
        %v1328 = vld [vmem:[%s1095 + $0x3a8] sm:$0xff]
        %v1329 = vld [vmem:[%s1095 + $0x3b0] sm:$0xff]
        %v1330 = vld [vmem:[%s1095 + $0x3b8] sm:$0xff]
        %v1331 = vld [vmem:[%s1095 + $0x3c0] sm:$0xff]
        %v1332 = vld [vmem:[%s1095 + $0x3c8] sm:$0xff]
        %v1333 = vld [vmem:[%s1095 + $0x3d0] sm:$0xff]
        %v1334 = vld [vmem:[%s1095 + $0x3d8] sm:$0xff]
        %v1335 = vld [vmem:[%s1095 + $0x3e0] sm:$0xff]
        %v1336 = vld [vmem:[%s1095 + $0x3e8] sm:$0xff]
        %v1337 = vld [vmem:[%s1095 + $0x3f0] sm:$0xff]
        %v1338 = vld [vmem:[%s1095 + $0x3f8] sm:$0xff]
        %v1339 = vld [vmem:[%s1095 + $0x400] sm:$0xff]
        %v1340 = vld [vmem:[%s1095 + $0x408] sm:$0xff]
        %v1341 = vld [vmem:[%s1095 + $0x410] sm:$0xff]
        %v1342 = vld [vmem:[%s1095 + $0x418] sm:$0xff]
        %v1343 = vld [vmem:[%s1095 + $0x420] sm:$0xff]
        %v1344 = vld [vmem:[%s1095 + $0x428] sm:$0xff]
        %v1345 = vld [vmem:[%s1095 + $0x430] sm:$0xff]
        %v1346 = vld [vmem:[%s1095 + $0x438] sm:$0xff]
        %v1347 = vld [vmem:[%s1095 + $0x440] sm:$0xff]
        %v1348 = vld [vmem:[%s1095 + $0x448] sm:$0xff]
        %v1349 = vld [vmem:[%s1095 + $0x450] sm:$0xff]
        %v1350 = vld [vmem:[%s1095 + $0x458] sm:$0xff]
        %v1351 = vld [vmem:[%s1095 + $0x460] sm:$0xff]
        %v1352 = vld [vmem:[%s1095 + $0x468] sm:$0xff]
        %v1353 = vld [vmem:[%s1095 + $0x470] sm:$0xff]
        %v1354 = vld [vmem:[%s1095 + $0x478] sm:$0xff]
        %v1355 = vld [vmem:[%s1095 + $0x480] sm:$0xff]
        %v1356 = vld [vmem:[%s1095 + $0x488] sm:$0xff]
        %v1357 = vld [vmem:[%s1095 + $0x490] sm:$0xff]
        %v1358 = vld [vmem:[%s1095 + $0x498] sm:$0xff]
        %v1359 = vld [vmem:[%s1095 + $0x4a0] sm:$0xff]
        %v1360 = vld [vmem:[%s1095 + $0x4a8] sm:$0xff]
        %v1361 = vld [vmem:[%s1095 + $0x4b0] sm:$0xff]
        %v1362 = vld [vmem:[%s1095 + $0x4b8] sm:$0xff]
        %v1363 = vld [vmem:[%s1095 + $0x4c0] sm:$0xff]
        %v1364 = vld [vmem:[%s1095 + $0x4c8] sm:$0xff]
        %v1365 = vld [vmem:[%s1095 + $0x4d0] sm:$0xff]
        %v1366 = vld [vmem:[%s1095 + $0x4d8] sm:$0xff]
        %v1367 = vld [vmem:[%s1095 + $0x4e0] sm:$0xff]
        %v1368 = vld [vmem:[%s1095 + $0x4e8] sm:$0xff]
        %v1369 = vld [vmem:[%s1095 + $0x4f0] sm:$0xff]
        %v1370 = vld [vmem:[%s1095 + $0x4f8] sm:$0xff]
        %v1371 = vld [vmem:[%s1095 + $0x500] sm:$0xff]
        %v1372 = vld [vmem:[%s1095 + $0x508] sm:$0xff]
        %v1373 = vld [vmem:[%s1095 + $0x510] sm:$0xff]
        %v1374 = vld [vmem:[%s1095 + $0x518] sm:$0xff]
        %v1375 = vld [vmem:[%s1095 + $0x520] sm:$0xff]
        %v1376 = vld [vmem:[%s1095 + $0x528] sm:$0xff]
        %v1377 = vld [vmem:[%s1095 + $0x530] sm:$0xff]
        %v1378 = vld [vmem:[%s1095 + $0x538] sm:$0xff]
        %v1379 = vld [vmem:[%s1095 + $0x540] sm:$0xff]
        %v1380 = vld [vmem:[%s1095 + $0x548] sm:$0xff]
        %v1381 = vld [vmem:[%s1095 + $0x550] sm:$0xff]
        %v1382 = vld [vmem:[%s1095 + $0x558] sm:$0xff]
        %v1383 = vld [vmem:[%s1095 + $0x560] sm:$0xff]
        %v1384 = vld [vmem:[%s1095 + $0x568] sm:$0xff]
        %v1385 = vld [vmem:[%s1095 + $0x570] sm:$0xff]
        %v1386 = vld [vmem:[%s1095 + $0x578] sm:$0xff]
        %v1387 = vld [vmem:[%s1095 + $0x580] sm:$0xff]
        %v1388 = vld [vmem:[%s1095 + $0x588] sm:$0xff]
        %v1389 = vld [vmem:[%s1095 + $0x590] sm:$0xff]
        %v1390 = vld [vmem:[%s1095 + $0x598] sm:$0xff]
        %v1391 = vld [vmem:[%s1095 + $0x5a0] sm:$0xff]
        %v1392 = vld [vmem:[%s1095 + $0x5a8] sm:$0xff]
        %v1393 = vld [vmem:[%s1095 + $0x5b0] sm:$0xff]
        %v1394 = vld [vmem:[%s1095 + $0x5b8] sm:$0xff]
        %v1395 = vld [vmem:[%s1095 + $0x5c0] sm:$0xff]
        %v1396 = vld [vmem:[%s1095 + $0x5c8] sm:$0xff]
        %v1397 = vld [vmem:[%s1095 + $0x5d0] sm:$0xff]
        %v1398 = vld [vmem:[%s1095 + $0x5d8] sm:$0xff]
        %v1399 = vld [vmem:[%s1095 + $0x5e0] sm:$0xff]
        %v1400 = vld [vmem:[%s1095 + $0x5e8] sm:$0xff]
        %v1401 = vld [vmem:[%s1095 + $0x5f0] sm:$0xff]
        %v1402 = vld [vmem:[%s1095 + $0x5f8] sm:$0xff]
        %v1403 = vld [vmem:[%s1095 + $0x600] sm:$0xff]
        %v1404 = vld [vmem:[%s1095 + $0x608] sm:$0xff]
        %v1405 = vld [vmem:[%s1095 + $0x610] sm:$0xff]
        %v1406 = vld [vmem:[%s1095 + $0x618] sm:$0xff]
        %v1407 = vld [vmem:[%s1154] sm:$0x3]
        %v1409 = vlaneseq
        %v1410 = vshrl.u32 %v1409, 7
        %v1411 = vsub.s32 0, %v1410
        %v1412 = vrot.slane %v1407, %v1411
        %v1413 = vlaneseq
        %v1414 = vshrl.u32 %v1413, 7
        %v1415 = vsub.s32 1, %v1414
        %v1416 = vrot.slane %v1407, %v1415
        %v1451 = vcombine.low %v1179, %v1181
        %v1452 = vcombine.high %v1179, %v1181
        %v1453 = vcombine.low %v1183, %v1185
        %v1454 = vcombine.high %v1183, %v1185
        %v1455 = vcombine.low %v1187, %v1189
        %v1456 = vcombine.high %v1187, %v1189
        %v1457 = vcombine.low %v1191, %v1193
        %v1458 = vcombine.high %v1191, %v1193
        %v1460 = vunpack.c.l.s4 1966171168
        %v1461 = vunpack.c.0.s8 %v1460
        %v1462 = vlaneseq
        %v1463 = vshrl.u32 %v1462, 7
        %v1464 = vsub.s32 %v1461, %v1463
        %v1465 = vrot.slane %v1451, %v1464
        %v1467 = vunpack.c.l.s4 1966171168
        %v1468 = vunpack.c.0.s8 %v1467
        %v1469 = vlaneseq
        %v1470 = vshrl.u32 %v1469, 7
        %v1471 = vsub.s32 %v1468, %v1470
        %v1472 = vrot.slane %v1452, %v1471
        %v1474 = vunpack.c.l.s4 1966171168
        %v1475 = vunpack.c.0.s8 %v1474
        %v1476 = vlaneseq
        %v1477 = vshrl.u32 %v1476, 7
        %v1478 = vsub.s32 %v1475, %v1477
        %v1479 = vrot.slane %v1453, %v1478
        %v1481 = vunpack.c.l.s4 1966171168
        %v1482 = vunpack.c.0.s8 %v1481
        %v1483 = vlaneseq
        %v1484 = vshrl.u32 %v1483, 7
        %v1485 = vsub.s32 %v1482, %v1484
        %v1486 = vrot.slane %v1454, %v1485
        %v1488 = vunpack.c.l.s4 1966171168
        %v1489 = vunpack.c.0.s8 %v1488
        %v1490 = vlaneseq
        %v1491 = vshrl.u32 %v1490, 7
        %v1492 = vsub.s32 %v1489, %v1491
        %v1493 = vrot.slane %v1455, %v1492
        %v1495 = vunpack.c.l.s4 1966171168
        %v1496 = vunpack.c.0.s8 %v1495
        %v1497 = vlaneseq
        %v1498 = vshrl.u32 %v1497, 7
        %v1499 = vsub.s32 %v1496, %v1498
        %v1500 = vrot.slane %v1456, %v1499
        %v1502 = vunpack.c.l.s4 1966171168
        %v1503 = vunpack.c.0.s8 %v1502
        %v1504 = vlaneseq
        %v1505 = vshrl.u32 %v1504, 7
        %v1506 = vsub.s32 %v1503, %v1505
        %v1507 = vrot.slane %v1457, %v1506
        %v1509 = vunpack.c.l.s4 1966171168
        %v1510 = vunpack.c.0.s8 %v1509
        %v1511 = vlaneseq
        %v1512 = vshrl.u32 %v1511, 7
        %v1513 = vsub.s32 %v1510, %v1512
        %v1514 = vrot.slane %v1458, %v1513
        %v1515 = vcombine.low %v1465, %v1479
        %v1516 = vcombine.high %v1465, %v1479
        %v1517 = vcombine.low %v1472, %v1486
        %v1518 = vcombine.high %v1472, %v1486
        %v1519 = vcombine.low %v1493, %v1507
        %v1520 = vcombine.high %v1493, %v1507
        %v1521 = vcombine.low %v1500, %v1514
        %v1522 = vcombine.high %v1500, %v1514
        %v1524 = vunpack.c.l.s4 1966171168
        %v1525 = vunpack.c.0.s8 %v1524
        %v1526 = vlaneseq
        %v1527 = vshrl.u32 %v1526, 7
        %v1528 = vsub.s32 %v1525, %v1527
        %v1529 = vrot.slane %v1515, %v1528
        %v1531 = vunpack.c.l.s4 1966171168
        %v1532 = vunpack.c.0.s8 %v1531
        %v1533 = vlaneseq
        %v1534 = vshrl.u32 %v1533, 7
        %v1535 = vsub.s32 %v1532, %v1534
        %v1536 = vrot.slane %v1517, %v1535
        %v1538 = vunpack.c.l.s4 1966171168
        %v1539 = vunpack.c.0.s8 %v1538
        %v1540 = vlaneseq
        %v1541 = vshrl.u32 %v1540, 7
        %v1542 = vsub.s32 %v1539, %v1541
        %v1543 = vrot.slane %v1516, %v1542
        %v1545 = vunpack.c.l.s4 1966171168
        %v1546 = vunpack.c.0.s8 %v1545
        %v1547 = vlaneseq
        %v1548 = vshrl.u32 %v1547, 7
        %v1549 = vsub.s32 %v1546, %v1548
        %v1550 = vrot.slane %v1518, %v1549
        %v1552 = vunpack.c.l.s4 1966171168
        %v1553 = vunpack.c.0.s8 %v1552
        %v1554 = vlaneseq
        %v1555 = vshrl.u32 %v1554, 7
        %v1556 = vsub.s32 %v1553, %v1555
        %v1557 = vrot.slane %v1519, %v1556
        %v1559 = vunpack.c.l.s4 1966171168
        %v1560 = vunpack.c.0.s8 %v1559
        %v1561 = vlaneseq
        %v1562 = vshrl.u32 %v1561, 7
        %v1563 = vsub.s32 %v1560, %v1562
        %v1564 = vrot.slane %v1521, %v1563
        %v1566 = vunpack.c.l.s4 1966171168
        %v1567 = vunpack.c.0.s8 %v1566
        %v1568 = vlaneseq
        %v1569 = vshrl.u32 %v1568, 7
        %v1570 = vsub.s32 %v1567, %v1569
        %v1571 = vrot.slane %v1520, %v1570
        %v1573 = vunpack.c.l.s4 1966171168
        %v1574 = vunpack.c.0.s8 %v1573
        %v1575 = vlaneseq
        %v1576 = vshrl.u32 %v1575, 7
        %v1577 = vsub.s32 %v1574, %v1576
        %v1578 = vrot.slane %v1522, %v1577
        %v1579 = vcombine.low %v1529, %v1557
        %v1580 = vcombine.high %v1529, %v1557
        %v1581 = vcombine.low %v1536, %v1564
        %v1582 = vcombine.high %v1536, %v1564
        %v1583 = vcombine.low %v1543, %v1571
        %v1584 = vcombine.high %v1543, %v1571
        %v1585 = vcombine.low %v1550, %v1578
        %v1586 = vcombine.high %v1550, %v1578
        %v1587 = vcombine.low %v1180, %v1182
        %v1588 = vcombine.high %v1180, %v1182
        %v1589 = vcombine.low %v1184, %v1186
        %v1590 = vcombine.high %v1184, %v1186
        %v1591 = vcombine.low %v1188, %v1190
        %v1592 = vcombine.high %v1188, %v1190
        %v1593 = vcombine.low %v1192, %v1194
        %v1594 = vcombine.high %v1192, %v1194
        %v1596 = vunpack.c.l.s4 1966171168
        %v1597 = vunpack.c.0.s8 %v1596
        %v1598 = vlaneseq
        %v1599 = vshrl.u32 %v1598, 7
        %v1600 = vsub.s32 %v1597, %v1599
        %v1601 = vrot.slane %v1587, %v1600
        %v1603 = vunpack.c.l.s4 1966171168
        %v1604 = vunpack.c.0.s8 %v1603
        %v1605 = vlaneseq
        %v1606 = vshrl.u32 %v1605, 7
        %v1607 = vsub.s32 %v1604, %v1606
        %v1608 = vrot.slane %v1588, %v1607
        %v1610 = vunpack.c.l.s4 1966171168
        %v1611 = vunpack.c.0.s8 %v1610
        %v1612 = vlaneseq
        %v1613 = vshrl.u32 %v1612, 7
        %v1614 = vsub.s32 %v1611, %v1613
        %v1615 = vrot.slane %v1589, %v1614
        %v1617 = vunpack.c.l.s4 1966171168
        %v1618 = vunpack.c.0.s8 %v1617
        %v1619 = vlaneseq
        %v1620 = vshrl.u32 %v1619, 7
        %v1621 = vsub.s32 %v1618, %v1620
        %v1622 = vrot.slane %v1590, %v1621
        %v1624 = vunpack.c.l.s4 1966171168
        %v1625 = vunpack.c.0.s8 %v1624
        %v1626 = vlaneseq
        %v1627 = vshrl.u32 %v1626, 7
        %v1628 = vsub.s32 %v1625, %v1627
        %v1629 = vrot.slane %v1591, %v1628
        %v1631 = vunpack.c.l.s4 1966171168
        %v1632 = vunpack.c.0.s8 %v1631
        %v1633 = vlaneseq
        %v1634 = vshrl.u32 %v1633, 7
        %v1635 = vsub.s32 %v1632, %v1634
        %v1636 = vrot.slane %v1592, %v1635
        %v1638 = vunpack.c.l.s4 1966171168
        %v1639 = vunpack.c.0.s8 %v1638
        %v1640 = vlaneseq
        %v1641 = vshrl.u32 %v1640, 7
        %v1642 = vsub.s32 %v1639, %v1641
        %v1643 = vrot.slane %v1593, %v1642
        %v1645 = vunpack.c.l.s4 1966171168
        %v1646 = vunpack.c.0.s8 %v1645
        %v1647 = vlaneseq
        %v1648 = vshrl.u32 %v1647, 7
        %v1649 = vsub.s32 %v1646, %v1648
        %v1650 = vrot.slane %v1594, %v1649
        %v1651 = vcombine.low %v1601, %v1615
        %v1652 = vcombine.high %v1601, %v1615
        %v1653 = vcombine.low %v1608, %v1622
        %v1654 = vcombine.low %v1629, %v1643
        %v1655 = vcombine.high %v1629, %v1643
        %v1656 = vcombine.low %v1636, %v1650
        %v1658 = vunpack.c.l.s4 1966171168
        %v1659 = vunpack.c.0.s8 %v1658
        %v1660 = vlaneseq
        %v1661 = vshrl.u32 %v1660, 7
        %v1662 = vsub.s32 %v1659, %v1661
        %v1663 = vrot.slane %v1651, %v1662
        %v1665 = vunpack.c.l.s4 1966171168
        %v1666 = vunpack.c.0.s8 %v1665
        %v1667 = vlaneseq
        %v1668 = vshrl.u32 %v1667, 7
        %v1669 = vsub.s32 %v1666, %v1668
        %v1670 = vrot.slane %v1653, %v1669
        %v1672 = vunpack.c.l.s4 1966171168
        %v1673 = vunpack.c.0.s8 %v1672
        %v1674 = vlaneseq
        %v1675 = vshrl.u32 %v1674, 7
        %v1676 = vsub.s32 %v1673, %v1675
        %v1677 = vrot.slane %v1652, %v1676
        %v1679 = vunpack.c.l.s4 1966171168
        %v1680 = vunpack.c.0.s8 %v1679
        %v1681 = vlaneseq
        %v1682 = vshrl.u32 %v1681, 7
        %v1683 = vsub.s32 %v1680, %v1682
        %v1684 = vrot.slane %v1654, %v1683
        %v1686 = vunpack.c.l.s4 1966171168
        %v1687 = vunpack.c.0.s8 %v1686
        %v1688 = vlaneseq
        %v1689 = vshrl.u32 %v1688, 7
        %v1690 = vsub.s32 %v1687, %v1689
        %v1691 = vrot.slane %v1656, %v1690
        %v1693 = vunpack.c.l.s4 1966171168
        %v1694 = vunpack.c.0.s8 %v1693
        %v1695 = vlaneseq
        %v1696 = vshrl.u32 %v1695, 7
        %v1697 = vsub.s32 %v1694, %v1696
        %v1698 = vrot.slane %v1655, %v1697
        %v1699 = vcombine.low %v1663, %v1684
        %v1700 = vcombine.high %v1663, %v1684
        %v1701 = vcombine.low %v1670, %v1691
        %v1702 = vcombine.low %v1677, %v1698
        %v1703 = vcombine.high %v1677, %v1698
        %v1704 = vcombine.low %v1195, %v1197
        %v1705 = vcombine.high %v1195, %v1197
        %v1706 = vcombine.low %v1199, %v1201
        %v1707 = vcombine.high %v1199, %v1201
        %v1708 = vcombine.low %v1203, %v1205
        %v1709 = vcombine.high %v1203, %v1205
        %v1710 = vcombine.low %v1207, %v1209
        %v1711 = vcombine.high %v1207, %v1209
        %v1713 = vunpack.c.l.s4 1966171168
        %v1714 = vunpack.c.0.s8 %v1713
        %v1715 = vlaneseq
        %v1716 = vshrl.u32 %v1715, 7
        %v1717 = vsub.s32 %v1714, %v1716
        %v1718 = vrot.slane %v1704, %v1717
        %v1720 = vunpack.c.l.s4 1966171168
        %v1721 = vunpack.c.0.s8 %v1720
        %v1722 = vlaneseq
        %v1723 = vshrl.u32 %v1722, 7
        %v1724 = vsub.s32 %v1721, %v1723
        %v1725 = vrot.slane %v1705, %v1724
        %v1727 = vunpack.c.l.s4 1966171168
        %v1728 = vunpack.c.0.s8 %v1727
        %v1729 = vlaneseq
        %v1730 = vshrl.u32 %v1729, 7
        %v1731 = vsub.s32 %v1728, %v1730
        %v1732 = vrot.slane %v1706, %v1731
        %v1734 = vunpack.c.l.s4 1966171168
        %v1735 = vunpack.c.0.s8 %v1734
        %v1736 = vlaneseq
        %v1737 = vshrl.u32 %v1736, 7
        %v1738 = vsub.s32 %v1735, %v1737
        %v1739 = vrot.slane %v1707, %v1738
        %v1741 = vunpack.c.l.s4 1966171168
        %v1742 = vunpack.c.0.s8 %v1741
        %v1743 = vlaneseq
        %v1744 = vshrl.u32 %v1743, 7
        %v1745 = vsub.s32 %v1742, %v1744
        %v1746 = vrot.slane %v1708, %v1745
        %v1748 = vunpack.c.l.s4 1966171168
        %v1749 = vunpack.c.0.s8 %v1748
        %v1750 = vlaneseq
        %v1751 = vshrl.u32 %v1750, 7
        %v1752 = vsub.s32 %v1749, %v1751
        %v1753 = vrot.slane %v1709, %v1752
        %v1755 = vunpack.c.l.s4 1966171168
        %v1756 = vunpack.c.0.s8 %v1755
        %v1757 = vlaneseq
        %v1758 = vshrl.u32 %v1757, 7
        %v1759 = vsub.s32 %v1756, %v1758
        %v1760 = vrot.slane %v1710, %v1759
        %v1762 = vunpack.c.l.s4 1966171168
        %v1763 = vunpack.c.0.s8 %v1762
        %v1764 = vlaneseq
        %v1765 = vshrl.u32 %v1764, 7
        %v1766 = vsub.s32 %v1763, %v1765
        %v1767 = vrot.slane %v1711, %v1766
        %v1768 = vcombine.low %v1718, %v1732
        %v1769 = vcombine.high %v1718, %v1732
        %v1770 = vcombine.low %v1725, %v1739
        %v1771 = vcombine.high %v1725, %v1739
        %v1772 = vcombine.low %v1746, %v1760
        %v1773 = vcombine.high %v1746, %v1760
        %v1774 = vcombine.low %v1753, %v1767
        %v1775 = vcombine.high %v1753, %v1767
        %v1777 = vunpack.c.l.s4 1966171168
        %v1778 = vunpack.c.0.s8 %v1777
        %v1779 = vlaneseq
        %v1780 = vshrl.u32 %v1779, 7
        %v1781 = vsub.s32 %v1778, %v1780
        %v1782 = vrot.slane %v1768, %v1781
        %v1784 = vunpack.c.l.s4 1966171168
        %v1785 = vunpack.c.0.s8 %v1784
        %v1786 = vlaneseq
        %v1787 = vshrl.u32 %v1786, 7
        %v1788 = vsub.s32 %v1785, %v1787
        %v1789 = vrot.slane %v1770, %v1788
        %v1791 = vunpack.c.l.s4 1966171168
        %v1792 = vunpack.c.0.s8 %v1791
        %v1793 = vlaneseq
        %v1794 = vshrl.u32 %v1793, 7
        %v1795 = vsub.s32 %v1792, %v1794
        %v1796 = vrot.slane %v1769, %v1795
        %v1798 = vunpack.c.l.s4 1966171168
        %v1799 = vunpack.c.0.s8 %v1798
        %v1800 = vlaneseq
        %v1801 = vshrl.u32 %v1800, 7
        %v1802 = vsub.s32 %v1799, %v1801
        %v1803 = vrot.slane %v1771, %v1802
        %v1805 = vunpack.c.l.s4 1966171168
        %v1806 = vunpack.c.0.s8 %v1805
        %v1807 = vlaneseq
        %v1808 = vshrl.u32 %v1807, 7
        %v1809 = vsub.s32 %v1806, %v1808
        %v1810 = vrot.slane %v1772, %v1809
        %v1812 = vunpack.c.l.s4 1966171168
        %v1813 = vunpack.c.0.s8 %v1812
        %v1814 = vlaneseq
        %v1815 = vshrl.u32 %v1814, 7
        %v1816 = vsub.s32 %v1813, %v1815
        %v1817 = vrot.slane %v1774, %v1816
        %v1819 = vunpack.c.l.s4 1966171168
        %v1820 = vunpack.c.0.s8 %v1819
        %v1821 = vlaneseq
        %v1822 = vshrl.u32 %v1821, 7
        %v1823 = vsub.s32 %v1820, %v1822
        %v1824 = vrot.slane %v1773, %v1823
        %v1826 = vunpack.c.l.s4 1966171168
        %v1827 = vunpack.c.0.s8 %v1826
        %v1828 = vlaneseq
        %v1829 = vshrl.u32 %v1828, 7
        %v1830 = vsub.s32 %v1827, %v1829
        %v1831 = vrot.slane %v1775, %v1830
        %v1832 = vcombine.low %v1782, %v1810
        %v1833 = vcombine.high %v1782, %v1810
        %v1834 = vcombine.low %v1789, %v1817
        %v1835 = vcombine.high %v1789, %v1817
        %v1836 = vcombine.low %v1796, %v1824
        %v1837 = vcombine.high %v1796, %v1824
        %v1838 = vcombine.low %v1803, %v1831
        %v1839 = vcombine.high %v1803, %v1831
        %v1840 = vcombine.low %v1196, %v1198
        %v1841 = vcombine.high %v1196, %v1198
        %v1842 = vcombine.low %v1200, %v1202
        %v1843 = vcombine.high %v1200, %v1202
        %v1844 = vcombine.low %v1204, %v1206
        %v1845 = vcombine.high %v1204, %v1206
        %v1846 = vcombine.low %v1208, %v1210
        %v1847 = vcombine.high %v1208, %v1210
        %v1849 = vunpack.c.l.s4 1966171168
        %v1850 = vunpack.c.0.s8 %v1849
        %v1851 = vlaneseq
        %v1852 = vshrl.u32 %v1851, 7
        %v1853 = vsub.s32 %v1850, %v1852
        %v1854 = vrot.slane %v1840, %v1853
        %v1856 = vunpack.c.l.s4 1966171168
        %v1857 = vunpack.c.0.s8 %v1856
        %v1858 = vlaneseq
        %v1859 = vshrl.u32 %v1858, 7
        %v1860 = vsub.s32 %v1857, %v1859
        %v1861 = vrot.slane %v1841, %v1860
        %v1863 = vunpack.c.l.s4 1966171168
        %v1864 = vunpack.c.0.s8 %v1863
        %v1865 = vlaneseq
        %v1866 = vshrl.u32 %v1865, 7
        %v1867 = vsub.s32 %v1864, %v1866
        %v1868 = vrot.slane %v1842, %v1867
        %v1870 = vunpack.c.l.s4 1966171168
        %v1871 = vunpack.c.0.s8 %v1870
        %v1872 = vlaneseq
        %v1873 = vshrl.u32 %v1872, 7
        %v1874 = vsub.s32 %v1871, %v1873
        %v1875 = vrot.slane %v1843, %v1874
        %v1877 = vunpack.c.l.s4 1966171168
        %v1878 = vunpack.c.0.s8 %v1877
        %v1879 = vlaneseq
        %v1880 = vshrl.u32 %v1879, 7
        %v1881 = vsub.s32 %v1878, %v1880
        %v1882 = vrot.slane %v1844, %v1881
        %v1884 = vunpack.c.l.s4 1966171168
        %v1885 = vunpack.c.0.s8 %v1884
        %v1886 = vlaneseq
        %v1887 = vshrl.u32 %v1886, 7
        %v1888 = vsub.s32 %v1885, %v1887
        %v1889 = vrot.slane %v1845, %v1888
        %v1891 = vunpack.c.l.s4 1966171168
        %v1892 = vunpack.c.0.s8 %v1891
        %v1893 = vlaneseq
        %v1894 = vshrl.u32 %v1893, 7
        %v1895 = vsub.s32 %v1892, %v1894
        %v1896 = vrot.slane %v1846, %v1895
        %v1898 = vunpack.c.l.s4 1966171168
        %v1899 = vunpack.c.0.s8 %v1898
        %v1900 = vlaneseq
        %v1901 = vshrl.u32 %v1900, 7
        %v1902 = vsub.s32 %v1899, %v1901
        %v1903 = vrot.slane %v1847, %v1902
        %v1904 = vcombine.low %v1854, %v1868
        %v1905 = vcombine.high %v1854, %v1868
        %v1906 = vcombine.low %v1861, %v1875
        %v1907 = vcombine.low %v1882, %v1896
        %v1908 = vcombine.high %v1882, %v1896
        %v1909 = vcombine.low %v1889, %v1903
        %v1911 = vunpack.c.l.s4 1966171168
        %v1912 = vunpack.c.0.s8 %v1911
        %v1913 = vlaneseq
        %v1914 = vshrl.u32 %v1913, 7
        %v1915 = vsub.s32 %v1912, %v1914
        %v1916 = vrot.slane %v1904, %v1915
        %v1918 = vunpack.c.l.s4 1966171168
        %v1919 = vunpack.c.0.s8 %v1918
        %v1920 = vlaneseq
        %v1921 = vshrl.u32 %v1920, 7
        %v1922 = vsub.s32 %v1919, %v1921
        %v1923 = vrot.slane %v1906, %v1922
        %v1925 = vunpack.c.l.s4 1966171168
        %v1926 = vunpack.c.0.s8 %v1925
        %v1927 = vlaneseq
        %v1928 = vshrl.u32 %v1927, 7
        %v1929 = vsub.s32 %v1926, %v1928
        %v1930 = vrot.slane %v1905, %v1929
        %v1932 = vunpack.c.l.s4 1966171168
        %v1933 = vunpack.c.0.s8 %v1932
        %v1934 = vlaneseq
        %v1935 = vshrl.u32 %v1934, 7
        %v1936 = vsub.s32 %v1933, %v1935
        %v1937 = vrot.slane %v1907, %v1936
        %v1939 = vunpack.c.l.s4 1966171168
        %v1940 = vunpack.c.0.s8 %v1939
        %v1941 = vlaneseq
        %v1942 = vshrl.u32 %v1941, 7
        %v1943 = vsub.s32 %v1940, %v1942
        %v1944 = vrot.slane %v1909, %v1943
        %v1946 = vunpack.c.l.s4 1966171168
        %v1947 = vunpack.c.0.s8 %v1946
        %v1948 = vlaneseq
        %v1949 = vshrl.u32 %v1948, 7
        %v1950 = vsub.s32 %v1947, %v1949
        %v1951 = vrot.slane %v1908, %v1950
        %v1952 = vcombine.low %v1916, %v1937
        %v1953 = vcombine.high %v1916, %v1937
        %v1954 = vcombine.low %v1923, %v1944
        %v1955 = vcombine.low %v1930, %v1951
        %v1956 = vcombine.high %v1930, %v1951
        %v2177 = vunpack.c.l.b16 %v1211
        %v2178 = vunpack.c.h.b16 %v1211
        %v2179 = vunpack.c.l.b16 %v1212
        %v2180 = vunpack.c.h.b16 %v1212
        %v2181 = vunpack.c.l.b16 %v1213
        %v2182 = vunpack.c.h.b16 %v1213
        %v2183 = vunpack.c.l.b16 %v1214
        %v2184 = vunpack.c.h.b16 %v1214
        %v2185 = vunpack.c.l.b16 %v1215
        %v2186 = vunpack.c.h.b16 %v1215
        %v2187 = vunpack.c.l.b16 %v1216
        %v2188 = vunpack.c.h.b16 %v1216
        %v2189 = vunpack.c.l.b16 %v1217
        %v2190 = vunpack.c.h.b16 %v1217
        %v2191 = vunpack.c.l.b16 %v1218
        %v2192 = vunpack.c.h.b16 %v1218
        %v2193 = vunpack.c.l.b16 %v1219
        %v2194 = vunpack.c.h.b16 %v1219
        %v2195 = vunpack.c.l.b16 %v1220
        %v2196 = vunpack.c.h.b16 %v1220
        %v2197 = vunpack.c.l.b16 %v1221
        %v2198 = vunpack.c.h.b16 %v1221
        %v2199 = vunpack.c.l.b16 %v1222
        %v2200 = vunpack.c.h.b16 %v1222
        %v2201 = vunpack.c.l.b16 %v1223
        %v2202 = vunpack.c.h.b16 %v1223
        %v2203 = vunpack.c.l.b16 %v1224
        %v2204 = vunpack.c.h.b16 %v1224
        %v2205 = vunpack.c.l.b16 %v1225
        %v2206 = vunpack.c.h.b16 %v1225
        %v2207 = vunpack.c.l.b16 %v1226
        %v2208 = vunpack.c.h.b16 %v1226
        %v2209 = vunpack.c.l.b16 %v1227
        %v2210 = vunpack.c.h.b16 %v1227
        %v2211 = vunpack.c.l.b16 %v1228
        %v2212 = vunpack.c.h.b16 %v1228
        %v2213 = vunpack.c.l.b16 %v1229
        %v2214 = vunpack.c.h.b16 %v1229
        %v2215 = vunpack.c.l.b16 %v1230
        %v2216 = vunpack.c.h.b16 %v1230
        %v2217 = vunpack.c.l.b16 %v1231
        %v2218 = vunpack.c.h.b16 %v1231
        %v2219 = vunpack.c.l.b16 %v1232
        %v2220 = vunpack.c.h.b16 %v1232
        %v2221 = vunpack.c.l.b16 %v1233
        %v2222 = vunpack.c.h.b16 %v1233
        %v2223 = vunpack.c.l.b16 %v1234
        %v2224 = vunpack.c.h.b16 %v1234
        %v2225 = vunpack.c.l.b16 %v1235
        %v2226 = vunpack.c.h.b16 %v1235
        %v2227 = vunpack.c.l.b16 %v1236
        %v2228 = vunpack.c.h.b16 %v1236
        %v2229 = vunpack.c.l.b16 %v1237
        %v2230 = vunpack.c.h.b16 %v1237
        %v2231 = vunpack.c.l.b16 %v1238
        %v2232 = vunpack.c.h.b16 %v1238
        %v2233 = vunpack.c.l.b16 %v1239
        %v2234 = vunpack.c.h.b16 %v1239
        %v2235 = vunpack.c.l.b16 %v1240
        %v2236 = vunpack.c.h.b16 %v1240
        %v2237 = vunpack.c.l.b16 %v1241
        %v2238 = vunpack.c.h.b16 %v1241
        %v2239 = vunpack.c.l.b16 %v1242
        %v2240 = vunpack.c.h.b16 %v1242
        %v2241 = vunpack.c.l.b16 %v1243
        %v2242 = vunpack.c.h.b16 %v1243
        %v2243 = vunpack.c.l.b16 %v1244
        %v2244 = vunpack.c.h.b16 %v1244
        %v2245 = vunpack.c.l.b16 %v1245
        %v2246 = vunpack.c.h.b16 %v1245
        %v2247 = vunpack.c.l.b16 %v1246
        %v2248 = vunpack.c.h.b16 %v1246
        %v2249 = vunpack.c.l.b16 %v1247
        %v2250 = vunpack.c.h.b16 %v1247
        %v2251 = vunpack.c.l.b16 %v1248
        %v2252 = vunpack.c.h.b16 %v1248
        %v2253 = vunpack.c.l.b16 %v1249
        %v2254 = vunpack.c.h.b16 %v1249
        %v2255 = vunpack.c.l.b16 %v1250
        %v2256 = vunpack.c.h.b16 %v1250
        %v2257 = vunpack.c.l.b16 %v1251
        %v2258 = vunpack.c.h.b16 %v1251
        %v2259 = vunpack.c.l.b16 %v1252
        %v2260 = vunpack.c.h.b16 %v1252
        %v2261 = vunpack.c.l.b16 %v1253
        %v2262 = vunpack.c.h.b16 %v1253
        %v2263 = vunpack.c.l.b16 %v1254
        %v2264 = vunpack.c.h.b16 %v1254
        %v2265 = vunpack.c.l.b16 %v1255
        %v2266 = vunpack.c.h.b16 %v1255
        %v2267 = vunpack.c.l.b16 %v1256
        %v2268 = vunpack.c.h.b16 %v1256
        %v2269 = vunpack.c.l.b16 %v1257
        %v2270 = vunpack.c.h.b16 %v1257
        %v2271 = vunpack.c.l.b16 %v1258
        %v2272 = vunpack.c.h.b16 %v1258
        %v2273 = vunpack.c.l.b16 %v1259
        %v2274 = vunpack.c.h.b16 %v1259
        %v2275 = vunpack.c.l.b16 %v1260
        %v2276 = vunpack.c.h.b16 %v1260
        %v2277 = vunpack.c.l.b16 %v1261
        %v2278 = vunpack.c.h.b16 %v1261
        %v2279 = vunpack.c.l.b16 %v1262
        %v2280 = vunpack.c.h.b16 %v1262
        %v2281 = vunpack.c.l.b16 %v1263
        %v2282 = vunpack.c.h.b16 %v1263
        %v2283 = vunpack.c.l.b16 %v1264
        %v2284 = vunpack.c.h.b16 %v1264
        %v2285 = vunpack.c.l.b16 %v1265
        %v2286 = vunpack.c.h.b16 %v1265
        %v2287 = vunpack.c.l.b16 %v1266
        %v2288 = vunpack.c.h.b16 %v1266
        %v2289 = vunpack.c.l.b16 %v1267
        %v2290 = vunpack.c.h.b16 %v1267
        %v2291 = vunpack.c.l.b16 %v1268
        %v2292 = vunpack.c.h.b16 %v1268
        %v2293 = vunpack.c.l.b16 %v1269
        %v2294 = vunpack.c.h.b16 %v1269
        %v2295 = vunpack.c.l.b16 %v1270
        %v2296 = vunpack.c.h.b16 %v1270
        %v2297 = vunpack.c.l.b16 %v1271
        %v2298 = vunpack.c.h.b16 %v1271
        %v2299 = vunpack.c.l.b16 %v1272
        %v2300 = vunpack.c.h.b16 %v1272
        %v2301 = vunpack.c.l.b16 %v1273
        %v2302 = vunpack.c.h.b16 %v1273
        %v2303 = vunpack.c.l.b16 %v1274
        %v2304 = vunpack.c.h.b16 %v1274
        %v2305 = vunpack.c.l.b16 %v1275
        %v2306 = vunpack.c.h.b16 %v1275
        %v2307 = vunpack.c.l.b16 %v1276
        %v2308 = vunpack.c.h.b16 %v1276
        %v2309 = vunpack.c.l.b16 %v1277
        %v2310 = vunpack.c.h.b16 %v1277
        %v2311 = vunpack.c.l.b16 %v1278
        %v2312 = vunpack.c.h.b16 %v1278
        %v2313 = vunpack.c.l.b16 %v1279
        %v2314 = vunpack.c.h.b16 %v1279
        %v2315 = vunpack.c.l.b16 %v1280
        %v2316 = vunpack.c.h.b16 %v1280
        %v2317 = vunpack.c.l.b16 %v1281
        %v2318 = vunpack.c.h.b16 %v1281
        %v2319 = vunpack.c.l.b16 %v1282
        %v2320 = vunpack.c.h.b16 %v1282
        %v2321 = vunpack.c.l.b16 %v1283
        %v2322 = vunpack.c.h.b16 %v1283
        %v2323 = vunpack.c.l.b16 %v1284
        %v2324 = vunpack.c.h.b16 %v1284
        %v2325 = vunpack.c.l.b16 %v1285
        %v2326 = vunpack.c.h.b16 %v1285
        %v2327 = vunpack.c.l.b16 %v1286
        %v2328 = vunpack.c.h.b16 %v1286
        %v2329 = vunpack.c.l.b16 %v1287
        %v2330 = vunpack.c.h.b16 %v1287
        %v2331 = vunpack.c.l.b16 %v1288
        %v2332 = vunpack.c.h.b16 %v1288
        %v2333 = vunpack.c.l.b16 %v1289
        %v2334 = vunpack.c.h.b16 %v1289
        %v2335 = vunpack.c.l.b16 %v1290
        %v2336 = vunpack.c.h.b16 %v1290
        %v2337 = vunpack.c.l.b16 %v1291
        %v2338 = vunpack.c.h.b16 %v1291
        %v2339 = vunpack.c.l.b16 %v1292
        %v2340 = vunpack.c.h.b16 %v1292
        %v2341 = vunpack.c.l.b16 %v1293
        %v2342 = vunpack.c.h.b16 %v1293
        %v2343 = vunpack.c.l.b16 %v1294
        %v2344 = vunpack.c.h.b16 %v1294
        %v2345 = vunpack.c.l.b16 %v1295
        %v2346 = vunpack.c.h.b16 %v1295
        %v2347 = vunpack.c.l.b16 %v1296
        %v2348 = vunpack.c.h.b16 %v1296
        %v2349 = vunpack.c.l.b16 %v1297
        %v2350 = vunpack.c.h.b16 %v1297
        %v2351 = vunpack.c.l.b16 %v1298
        %v2352 = vunpack.c.h.b16 %v1298
        %v2353 = vunpack.c.l.b16 %v1299
        %v2354 = vunpack.c.h.b16 %v1299
        %v2355 = vunpack.c.l.b16 %v1300
        %v2356 = vunpack.c.h.b16 %v1300
        %v2357 = vunpack.c.l.b16 %v1301
        %v2358 = vunpack.c.h.b16 %v1301
        %v2359 = vunpack.c.l.b16 %v1302
        %v2360 = vunpack.c.h.b16 %v1302
        %v2361 = vunpack.c.l.b16 %v1303
        %v2362 = vunpack.c.h.b16 %v1303
        %v2363 = vunpack.c.l.b16 %v1304
        %v2364 = vunpack.c.h.b16 %v1304
        %v2365 = vunpack.c.l.b16 %v1305
        %v2366 = vunpack.c.h.b16 %v1305
        %v2367 = vunpack.c.l.b16 %v1306
        %v2368 = vunpack.c.h.b16 %v1306
        %v2369 = vunpack.c.l.b16 %v1307
        %v2370 = vunpack.c.h.b16 %v1307
        %v2371 = vunpack.c.l.b16 %v1308
        %v2372 = vunpack.c.h.b16 %v1308
        %v2373 = vunpack.c.l.b16 %v1309
        %v2374 = vunpack.c.h.b16 %v1309
        %v2375 = vunpack.c.l.b16 %v1310
        %v2376 = vunpack.c.h.b16 %v1310
        %v2377 = vunpack.c.l.b16 %v1311
        %v2378 = vunpack.c.h.b16 %v1311
        %v2379 = vunpack.c.l.b16 %v1312
        %v2380 = vunpack.c.h.b16 %v1312
        %v2381 = vunpack.c.l.b16 %v1313
        %v2382 = vunpack.c.h.b16 %v1313
        %v2383 = vunpack.c.l.b16 %v1314
        %v2384 = vunpack.c.h.b16 %v1314
        %v2385 = vunpack.c.l.b16 %v1315
        %v2386 = vunpack.c.h.b16 %v1315
        %v2387 = vunpack.c.l.b16 %v1316
        %v2388 = vunpack.c.h.b16 %v1316
        %v2389 = vunpack.c.l.b16 %v1317
        %v2390 = vunpack.c.h.b16 %v1317
        %v2391 = vunpack.c.l.b16 %v1318
        %v2392 = vunpack.c.h.b16 %v1318
        %v2393 = vunpack.c.l.b16 %v1319
        %v2394 = vunpack.c.h.b16 %v1319
        %v2395 = vunpack.c.l.b16 %v1320
        %v2396 = vunpack.c.h.b16 %v1320
        %v2397 = vunpack.c.l.b16 %v1321
        %v2398 = vunpack.c.h.b16 %v1321
        %v2399 = vunpack.c.l.b16 %v1322
        %v2400 = vunpack.c.h.b16 %v1322
        %v2401 = vunpack.c.l.b16 %v1323
        %v2402 = vunpack.c.h.b16 %v1323
        %v2403 = vunpack.c.l.b16 %v1324
        %v2404 = vunpack.c.h.b16 %v1324
        %v2405 = vunpack.c.l.b16 %v1325
        %v2406 = vunpack.c.h.b16 %v1325
        %v2407 = vunpack.c.l.b16 %v1326
        %v2408 = vunpack.c.h.b16 %v1326
        %v2409 = vunpack.c.l.b16 %v1327
        %v2410 = vunpack.c.h.b16 %v1327
        %v2411 = vunpack.c.l.b16 %v1328
        %v2412 = vunpack.c.h.b16 %v1328
        %v2413 = vunpack.c.l.b16 %v1329
        %v2414 = vunpack.c.h.b16 %v1329
        %v2415 = vunpack.c.l.b16 %v1330
        %v2416 = vunpack.c.h.b16 %v1330
        %v2417 = vunpack.c.l.b16 %v1331
        %v2418 = vunpack.c.h.b16 %v1331
        %v2419 = vunpack.c.l.b16 %v1332
        %v2420 = vunpack.c.h.b16 %v1332
        %v2421 = vunpack.c.l.b16 %v1333
        %v2422 = vunpack.c.h.b16 %v1333
        %v2423 = vunpack.c.l.b16 %v1334
        %v2424 = vunpack.c.h.b16 %v1334
        %v2425 = vunpack.c.l.b16 %v1335
        %v2426 = vunpack.c.h.b16 %v1335
        %v2427 = vunpack.c.l.b16 %v1336
        %v2428 = vunpack.c.h.b16 %v1336
        %v2429 = vunpack.c.l.b16 %v1337
        %v2430 = vunpack.c.h.b16 %v1337
        %v2431 = vunpack.c.l.b16 %v1338
        %v2432 = vunpack.c.h.b16 %v1338
        %v2433 = vunpack.c.l.b16 %v1339
        %v2434 = vunpack.c.h.b16 %v1339
        %v2435 = vunpack.c.l.b16 %v1340
        %v2436 = vunpack.c.h.b16 %v1340
        %v2437 = vunpack.c.l.b16 %v1341
        %v2438 = vunpack.c.h.b16 %v1341
        %v2439 = vunpack.c.l.b16 %v1342
        %v2440 = vunpack.c.h.b16 %v1342
        %v2441 = vunpack.c.l.b16 %v1343
        %v2442 = vunpack.c.h.b16 %v1343
        %v2443 = vunpack.c.l.b16 %v1344
        %v2444 = vunpack.c.h.b16 %v1344
        %v2445 = vunpack.c.l.b16 %v1345
        %v2446 = vunpack.c.h.b16 %v1345
        %v2447 = vunpack.c.l.b16 %v1346
        %v2448 = vunpack.c.h.b16 %v1346
        %v2449 = vunpack.c.l.b16 %v1347
        %v2450 = vunpack.c.h.b16 %v1347
        %v2451 = vunpack.c.l.b16 %v1348
        %v2452 = vunpack.c.h.b16 %v1348
        %v2453 = vunpack.c.l.b16 %v1349
        %v2454 = vunpack.c.h.b16 %v1349
        %v2455 = vunpack.c.l.b16 %v1350
        %v2456 = vunpack.c.h.b16 %v1350
        %v2457 = vunpack.c.l.b16 %v1351
        %v2458 = vunpack.c.h.b16 %v1351
        %v2459 = vunpack.c.l.b16 %v1352
        %v2460 = vunpack.c.h.b16 %v1352
        %v2461 = vunpack.c.l.b16 %v1353
        %v2462 = vunpack.c.h.b16 %v1353
        %v2463 = vunpack.c.l.b16 %v1354
        %v2464 = vunpack.c.h.b16 %v1354
        %v2465 = vunpack.c.l.b16 %v1355
        %v2466 = vunpack.c.h.b16 %v1355
        %v2467 = vunpack.c.l.b16 %v1356
        %v2468 = vunpack.c.h.b16 %v1356
        %v2469 = vunpack.c.l.b16 %v1357
        %v2470 = vunpack.c.h.b16 %v1357
        %v2471 = vunpack.c.l.b16 %v1358
        %v2472 = vunpack.c.h.b16 %v1358
        %v2473 = vunpack.c.l.b16 %v1359
        %v2474 = vunpack.c.h.b16 %v1359
        %v2475 = vunpack.c.l.b16 %v1360
        %v2476 = vunpack.c.h.b16 %v1360
        %v2477 = vunpack.c.l.b16 %v1361
        %v2478 = vunpack.c.h.b16 %v1361
        %v2479 = vunpack.c.l.b16 %v1362
        %v2480 = vunpack.c.h.b16 %v1362
        %v2481 = vunpack.c.l.b16 %v1363
        %v2482 = vunpack.c.h.b16 %v1363
        %v2483 = vunpack.c.l.b16 %v1364
        %v2484 = vunpack.c.h.b16 %v1364
        %v2485 = vunpack.c.l.b16 %v1365
        %v2486 = vunpack.c.h.b16 %v1365
        %v2487 = vunpack.c.l.b16 %v1366
        %v2488 = vunpack.c.h.b16 %v1366
        %v2489 = vunpack.c.l.b16 %v1367
        %v2490 = vunpack.c.h.b16 %v1367
        %v2491 = vunpack.c.l.b16 %v1368
        %v2492 = vunpack.c.h.b16 %v1368
        %v2493 = vunpack.c.l.b16 %v1369
        %v2494 = vunpack.c.h.b16 %v1369
        %v2495 = vunpack.c.l.b16 %v1370
        %v2496 = vunpack.c.h.b16 %v1370
        %v2497 = vunpack.c.l.b16 %v1371
        %v2498 = vunpack.c.h.b16 %v1371
        %v2499 = vunpack.c.l.b16 %v1372
        %v2500 = vunpack.c.h.b16 %v1372
        %v2501 = vunpack.c.l.b16 %v1373
        %v2502 = vunpack.c.h.b16 %v1373
        %v2503 = vunpack.c.l.b16 %v1374
        %v2504 = vunpack.c.h.b16 %v1374
        %v2505 = vunpack.c.l.b16 %v1375
        %v2506 = vunpack.c.h.b16 %v1375
        %v2507 = vunpack.c.l.b16 %v1376
        %v2508 = vunpack.c.h.b16 %v1376
        %v2509 = vunpack.c.l.b16 %v1377
        %v2510 = vunpack.c.h.b16 %v1377
        %v2511 = vunpack.c.l.b16 %v1378
        %v2512 = vunpack.c.h.b16 %v1378
        %v2513 = vunpack.c.l.b16 %v1379
        %v2514 = vunpack.c.h.b16 %v1379
        %v2515 = vunpack.c.l.b16 %v1380
        %v2516 = vunpack.c.h.b16 %v1380
        %v2517 = vunpack.c.l.b16 %v1381
        %v2518 = vunpack.c.h.b16 %v1381
        %v2519 = vunpack.c.l.b16 %v1382
        %v2520 = vunpack.c.h.b16 %v1382
        %v2521 = vunpack.c.l.b16 %v1383
        %v2522 = vunpack.c.h.b16 %v1383
        %v2523 = vunpack.c.l.b16 %v1384
        %v2524 = vunpack.c.h.b16 %v1384
        %v2525 = vunpack.c.l.b16 %v1385
        %v2526 = vunpack.c.h.b16 %v1385
        %v2527 = vunpack.c.l.b16 %v1386
        %v2528 = vunpack.c.h.b16 %v1386
        %v2529 = vunpack.c.l.b16 %v1387
        %v2530 = vunpack.c.h.b16 %v1387
        %v2531 = vunpack.c.l.b16 %v1388
        %v2532 = vunpack.c.h.b16 %v1388
        %v2533 = vunpack.c.l.b16 %v1389
        %v2534 = vunpack.c.h.b16 %v1389
        %v2535 = vunpack.c.l.b16 %v1390
        %v2536 = vunpack.c.h.b16 %v1390
        %v2537 = vunpack.c.l.b16 %v1391
        %v2538 = vunpack.c.h.b16 %v1391
        %v2539 = vunpack.c.l.b16 %v1392
        %v2540 = vunpack.c.h.b16 %v1392
        %v2541 = vunpack.c.l.b16 %v1393
        %v2542 = vunpack.c.h.b16 %v1393
        %v2543 = vunpack.c.l.b16 %v1394
        %v2544 = vunpack.c.h.b16 %v1394
        %v2545 = vunpack.c.l.b16 %v1395
        %v2546 = vunpack.c.h.b16 %v1395
        %v2547 = vunpack.c.l.b16 %v1396
        %v2548 = vunpack.c.h.b16 %v1396
        %v2549 = vunpack.c.l.b16 %v1397
        %v2550 = vunpack.c.h.b16 %v1397
        %v2551 = vunpack.c.l.b16 %v1398
        %v2552 = vunpack.c.h.b16 %v1398
        %v2553 = vunpack.c.l.b16 %v1399
        %v2554 = vunpack.c.h.b16 %v1399
        %v2555 = vunpack.c.l.b16 %v1400
        %v2556 = vunpack.c.h.b16 %v1400
        %v2557 = vunpack.c.l.b16 %v1401
        %v2558 = vunpack.c.h.b16 %v1401
        %v2559 = vunpack.c.l.b16 %v1402
        %v2560 = vunpack.c.h.b16 %v1402
        %v2561 = vunpack.c.l.b16 %v1403
        %v2562 = vunpack.c.h.b16 %v1403
        %v2563 = vunpack.c.l.b16 %v1404
        %v2564 = vunpack.c.h.b16 %v1404
        %v2565 = vunpack.c.l.b16 %v1405
        %v2566 = vunpack.c.h.b16 %v1405
        %v2567 = vunpack.c.l.b16 %v1406
        %v2568 = vunpack.c.h.b16 %v1406
        %v2569 = vpack.c.b16 %v2179, %v2177
        %v2570 = vpack.c.b16 %v2180, %v2178
        %v2571 = vpack.c.b16 %v2183, %v2181
        %v2572 = vpack.c.b16 %v2184, %v2182
        %v2573 = vpack.c.b16 %v2187, %v2185
        %v2574 = vpack.c.b16 %v2188, %v2186
        %v2575 = vpack.c.b16 %v2191, %v2189
        %v2576 = vpack.c.b16 %v2192, %v2190
        %v2577 = vpack.c.b16 %v2195, %v2193
        %v2578 = vpack.c.b16 %v2196, %v2194
        %v2579 = vpack.c.b16 %v2199, %v2197
        %v2580 = vpack.c.b16 %v2200, %v2198
        %v2581 = vpack.c.b16 %v2203, %v2201
        %v2582 = vpack.c.b16 %v2204, %v2202
        %v2583 = vpack.c.b16 %v2207, %v2205
        %v2584 = vpack.c.b16 %v2208, %v2206
        %v2585 = vpack.c.b16 %v2211, %v2209
        %v2586 = vpack.c.b16 %v2212, %v2210
        %v2587 = vpack.c.b16 %v2215, %v2213
        %v2588 = vpack.c.b16 %v2216, %v2214
        %v2589 = vpack.c.b16 %v2219, %v2217
        %v2590 = vpack.c.b16 %v2220, %v2218
        %v2591 = vpack.c.b16 %v2223, %v2221
        %v2592 = vpack.c.b16 %v2224, %v2222
        %v2593 = vpack.c.b16 %v2227, %v2225
        %v2594 = vpack.c.b16 %v2228, %v2226
        %v2595 = vpack.c.b16 %v2231, %v2229
        %v2596 = vpack.c.b16 %v2232, %v2230
        %v2597 = vpack.c.b16 %v2235, %v2233
        %v2598 = vpack.c.b16 %v2236, %v2234
        %v2599 = vpack.c.b16 %v2239, %v2237
        %v2600 = vpack.c.b16 %v2240, %v2238
        %v2601 = vpack.c.b16 %v2243, %v2241
        %v2602 = vpack.c.b16 %v2244, %v2242
        %v2603 = vpack.c.b16 %v2247, %v2245
        %v2604 = vpack.c.b16 %v2248, %v2246
        %v2605 = vpack.c.b16 %v2251, %v2249
        %v2606 = vpack.c.b16 %v2252, %v2250
        %v2607 = vpack.c.b16 %v2255, %v2253
        %v2608 = vpack.c.b16 %v2256, %v2254
        %v2609 = vpack.c.b16 %v2259, %v2257
        %v2610 = vpack.c.b16 %v2260, %v2258
        %v2611 = vpack.c.b16 %v2263, %v2261
        %v2612 = vpack.c.b16 %v2264, %v2262
        %v2613 = vpack.c.b16 %v2267, %v2265
        %v2614 = vpack.c.b16 %v2268, %v2266
        %v2615 = vpack.c.b16 %v2271, %v2269
        %v2616 = vpack.c.b16 %v2272, %v2270
        %v2617 = vpack.c.b16 %v2275, %v2273
        %v2618 = vpack.c.b16 %v2276, %v2274
        %v2619 = vpack.c.b16 %v2279, %v2277
        %v2620 = vpack.c.b16 %v2280, %v2278
        %v2621 = vpack.c.b16 %v2283, %v2281
        %v2622 = vpack.c.b16 %v2284, %v2282
        %v2623 = vpack.c.b16 %v2287, %v2285
        %v2624 = vpack.c.b16 %v2288, %v2286
        %v2625 = vpack.c.b16 %v2291, %v2289
        %v2626 = vpack.c.b16 %v2292, %v2290
        %v2627 = vpack.c.b16 %v2295, %v2293
        %v2628 = vpack.c.b16 %v2296, %v2294
        %v2629 = vpack.c.b16 %v2299, %v2297
        %v2630 = vpack.c.b16 %v2300, %v2298
        %v2631 = vpack.c.b16 %v2303, %v2301
        %v2632 = vpack.c.b16 %v2304, %v2302
        %v2633 = vpack.c.b16 %v2307, %v2305
        %v2634 = vpack.c.b16 %v2308, %v2306
        %v2635 = vpack.c.b16 %v2311, %v2309
        %v2636 = vpack.c.b16 %v2312, %v2310
        %v2637 = vpack.c.b16 %v2315, %v2313
        %v2638 = vpack.c.b16 %v2316, %v2314
        %v2639 = vpack.c.b16 %v2319, %v2317
        %v2640 = vpack.c.b16 %v2320, %v2318
        %v2641 = vpack.c.b16 %v2323, %v2321
        %v2642 = vpack.c.b16 %v2324, %v2322
        %v2643 = vpack.c.b16 %v2327, %v2325
        %v2644 = vpack.c.b16 %v2328, %v2326
        %v2645 = vpack.c.b16 %v2331, %v2329
        %v2646 = vpack.c.b16 %v2332, %v2330
        %v2647 = vpack.c.b16 %v2335, %v2333
        %v2648 = vpack.c.b16 %v2336, %v2334
        %v2649 = vpack.c.b16 %v2339, %v2337
        %v2650 = vpack.c.b16 %v2340, %v2338
        %v2651 = vpack.c.b16 %v2343, %v2341
        %v2652 = vpack.c.b16 %v2344, %v2342
        %v2653 = vpack.c.b16 %v2347, %v2345
        %v2654 = vpack.c.b16 %v2348, %v2346
        %v2655 = vpack.c.b16 %v2351, %v2349
        %v2656 = vpack.c.b16 %v2352, %v2350
        %v2657 = vpack.c.b16 %v2355, %v2353
        %v2658 = vpack.c.b16 %v2356, %v2354
        %v2659 = vpack.c.b16 %v2359, %v2357
        %v2660 = vpack.c.b16 %v2360, %v2358
        %v2661 = vpack.c.b16 %v2363, %v2361
        %v2662 = vpack.c.b16 %v2364, %v2362
        %v2663 = vpack.c.b16 %v2367, %v2365
        %v2664 = vpack.c.b16 %v2368, %v2366
        %v2665 = vpack.c.b16 %v2371, %v2369
        %v2666 = vpack.c.b16 %v2372, %v2370
        %v2667 = vpack.c.b16 %v2375, %v2373
        %v2668 = vpack.c.b16 %v2376, %v2374
        %v2669 = vpack.c.b16 %v2379, %v2377
        %v2670 = vpack.c.b16 %v2380, %v2378
        %v2671 = vpack.c.b16 %v2383, %v2381
        %v2672 = vpack.c.b16 %v2384, %v2382
        %v2673 = vpack.c.b16 %v2387, %v2385
        %v2674 = vpack.c.b16 %v2388, %v2386
        %v2675 = vpack.c.b16 %v2391, %v2389
        %v2676 = vpack.c.b16 %v2392, %v2390
        %v2677 = vpack.c.b16 %v2395, %v2393
        %v2678 = vpack.c.b16 %v2396, %v2394
        %v2679 = vpack.c.b16 %v2399, %v2397
        %v2680 = vpack.c.b16 %v2400, %v2398
        %v2681 = vpack.c.b16 %v2403, %v2401
        %v2682 = vpack.c.b16 %v2404, %v2402
        %v2683 = vpack.c.b16 %v2407, %v2405
        %v2684 = vpack.c.b16 %v2408, %v2406
        %v2685 = vpack.c.b16 %v2411, %v2409
        %v2686 = vpack.c.b16 %v2412, %v2410
        %v2687 = vpack.c.b16 %v2415, %v2413
        %v2688 = vpack.c.b16 %v2416, %v2414
        %v2689 = vpack.c.b16 %v2419, %v2417
        %v2690 = vpack.c.b16 %v2420, %v2418
        %v2691 = vpack.c.b16 %v2423, %v2421
        %v2692 = vpack.c.b16 %v2424, %v2422
        %v2693 = vpack.c.b16 %v2427, %v2425
        %v2694 = vpack.c.b16 %v2428, %v2426
        %v2695 = vpack.c.b16 %v2431, %v2429
        %v2696 = vpack.c.b16 %v2432, %v2430
        %v2697 = vpack.c.b16 %v2435, %v2433
        %v2698 = vpack.c.b16 %v2436, %v2434
        %v2699 = vpack.c.b16 %v2439, %v2437
        %v2700 = vpack.c.b16 %v2440, %v2438
        %v2701 = vpack.c.b16 %v2443, %v2441
        %v2702 = vpack.c.b16 %v2444, %v2442
        %v2703 = vpack.c.b16 %v2447, %v2445
        %v2704 = vpack.c.b16 %v2448, %v2446
        %v2705 = vpack.c.b16 %v2451, %v2449
        %v2706 = vpack.c.b16 %v2452, %v2450
        %v2707 = vpack.c.b16 %v2455, %v2453
        %v2708 = vpack.c.b16 %v2456, %v2454
        %v2709 = vpack.c.b16 %v2459, %v2457
        %v2710 = vpack.c.b16 %v2460, %v2458
        %v2711 = vpack.c.b16 %v2463, %v2461
        %v2712 = vpack.c.b16 %v2464, %v2462
        %v2713 = vpack.c.b16 %v2467, %v2465
        %v2714 = vpack.c.b16 %v2468, %v2466
        %v2715 = vpack.c.b16 %v2471, %v2469
        %v2716 = vpack.c.b16 %v2472, %v2470
        %v2717 = vpack.c.b16 %v2475, %v2473
        %v2718 = vpack.c.b16 %v2476, %v2474
        %v2719 = vpack.c.b16 %v2479, %v2477
        %v2720 = vpack.c.b16 %v2480, %v2478
        %v2721 = vpack.c.b16 %v2483, %v2481
        %v2722 = vpack.c.b16 %v2484, %v2482
        %v2723 = vpack.c.b16 %v2487, %v2485
        %v2724 = vpack.c.b16 %v2488, %v2486
        %v2725 = vpack.c.b16 %v2491, %v2489
        %v2726 = vpack.c.b16 %v2492, %v2490
        %v2727 = vpack.c.b16 %v2495, %v2493
        %v2728 = vpack.c.b16 %v2496, %v2494
        %v2729 = vpack.c.b16 %v2499, %v2497
        %v2730 = vpack.c.b16 %v2500, %v2498
        %v2731 = vpack.c.b16 %v2503, %v2501
        %v2732 = vpack.c.b16 %v2504, %v2502
        %v2733 = vpack.c.b16 %v2507, %v2505
        %v2734 = vpack.c.b16 %v2508, %v2506
        %v2735 = vpack.c.b16 %v2511, %v2509
        %v2736 = vpack.c.b16 %v2512, %v2510
        %v2737 = vpack.c.b16 %v2515, %v2513
        %v2738 = vpack.c.b16 %v2516, %v2514
        %v2739 = vpack.c.b16 %v2519, %v2517
        %v2740 = vpack.c.b16 %v2520, %v2518
        %v2741 = vpack.c.b16 %v2523, %v2521
        %v2742 = vpack.c.b16 %v2524, %v2522
        %v2743 = vpack.c.b16 %v2527, %v2525
        %v2744 = vpack.c.b16 %v2528, %v2526
        %v2745 = vpack.c.b16 %v2531, %v2529
        %v2746 = vpack.c.b16 %v2532, %v2530
        %v2747 = vpack.c.b16 %v2535, %v2533
        %v2748 = vpack.c.b16 %v2536, %v2534
        %v2749 = vpack.c.b16 %v2539, %v2537
        %v2750 = vpack.c.b16 %v2540, %v2538
        %v2751 = vpack.c.b16 %v2543, %v2541
        %v2752 = vpack.c.b16 %v2544, %v2542
        %v2753 = vpack.c.b16 %v2547, %v2545
        %v2754 = vpack.c.b16 %v2548, %v2546
        %v2755 = vpack.c.b16 %v2551, %v2549
        %v2756 = vpack.c.b16 %v2552, %v2550
        %v2757 = vpack.c.b16 %v2555, %v2553
        %v2758 = vpack.c.b16 %v2556, %v2554
        %v2759 = vpack.c.b16 %v2559, %v2557
        %v2760 = vpack.c.b16 %v2560, %v2558
        %v2761 = vpack.c.b16 %v2563, %v2561
        %v2762 = vpack.c.b16 %v2564, %v2562
        %v2763 = vpack.c.b16 %v2567, %v2565
        %v2764 = vpack.c.b16 %v2568, %v2566
        %vm2961 = vcmask 261120
        %v2963 = vsel %vm2961, %v1701, 0
        %v2966 = vsel %vm2961, %v1954, 0
        %2968 = vmatprep.subr.bf16.mxu0 %v2584
        %2969 = vmatpush1.bf16.msra.mxu0 %v2583
        %2970 = vmatprep.subr.bf16.mxu0 %v2582
        %2971 = vmatpush1.bf16.msra.mxu0 %v2581
        %2972 = vmatprep.subr.bf16.mxu0 %v2580
        %2973 = vmatpush1.bf16.msra.mxu0 %v2579
        %2974 = vmatprep.subr.bf16.mxu0 %v2578
        %2975 = vmatpush1.bf16.msra.mxu0 %v2577
        %2976 = vmatprep.subr.bf16.mxu0 %v2576
        %2977 = vmatpush1.bf16.msra.mxu0 %v2575
        %2978 = vmatprep.subr.bf16.mxu0 %v2574
        %2979 = vmatpush1.bf16.msra.mxu0 %v2573
        %2980 = vmatprep.subr.bf16.mxu0 %v2572
        %2981 = vmatpush1.bf16.msra.mxu0 %v2571
        %2982 = vmatprep.subr.bf16.mxu0 %v2570
        %2983 = vmatpush1.bf16.msra.mxu0 %v2569
        %2984 = vmatprep.subr.bf16.mxu0 %v2600
        %2985 = vmatpush2.bf16.msra.mxu0 %v2599
        %2986 = vmatprep.subr.bf16.mxu0 %v2598
        %2987 = vmatpush2.bf16.msra.mxu0 %v2597
        %2988 = vmatprep.subr.bf16.mxu0 %v2596
        %2989 = vmatpush2.bf16.msra.mxu0 %v2595
        %2990 = vmatprep.subr.bf16.mxu0 %v2594
        %2991 = vmatpush2.bf16.msra.mxu0 %v2593
        %2992 = vmatprep.subr.bf16.mxu0 %v2592
        %2993 = vmatpush2.bf16.msra.mxu0 %v2591
        %2994 = vmatprep.subr.bf16.mxu0 %v2590
        %2995 = vmatpush2.bf16.msra.mxu0 %v2589
        %2996 = vmatprep.subr.bf16.mxu0 %v2588
        %2997 = vmatpush2.bf16.msra.mxu0 %v2587
        %2998 = vmatprep.subr.bf16.mxu0 %v2586
        %2999 = vmatpush2.bf16.msra.mxu0 %v2585
        %3000 = vmatprep.mubr.bf16.mxu0 %v1583
        %3001 = vmatmul.mubr.bf16.gmra.mxu0 %v1579
        %v3002 = vpop.f32.mrf.mxu0
        %v3003 = vadd.f32 %v1412, %v3002
        %v3004 = vpop.f32.mrf.mxu0
        %v3005 = vadd.f32 %v1416, %v3004
        %v3006 = vpop.f32.mrf.mxu0
        %v3007 = vadd.f32 %v1412, %v3006
        %v3008 = vpop.f32.mrf.mxu0
        %v3009 = vadd.f32 %v1416, %v3008
        %3010 = vmatprep.mubr.bf16.mxu0 %v1836
        %3011 = vmatmul.mubr.bf16.gmra.mxu0 %v1832
        %v3012 = vpop.f32.mrf.mxu0
        %v3013 = vadd.f32 %v1412, %v3012
        %v3014 = vpop.f32.mrf.mxu0
        %v3015 = vadd.f32 %v1416, %v3014
        %v3016 = vpop.f32.mrf.mxu0
        %v3017 = vadd.f32 %v1412, %v3016
        %v3018 = vpop.f32.mrf.mxu0
        %v3019 = vadd.f32 %v1416, %v3018
        %3020 = vdwg.mxu0
        %3021 = vmatprep.subr.bf16.mxu0 %v2616
        %3022 = vmatpush1.bf16.msra.mxu0 %v2615
        %3023 = vmatprep.subr.bf16.mxu0 %v2614
        %3024 = vmatpush1.bf16.msra.mxu0 %v2613
        %3025 = vmatprep.subr.bf16.mxu0 %v2612
        %3026 = vmatpush1.bf16.msra.mxu0 %v2611
        %3027 = vmatprep.subr.bf16.mxu0 %v2610
        %3028 = vmatpush1.bf16.msra.mxu0 %v2609
        %3029 = vmatprep.subr.bf16.mxu0 %v2608
        %3030 = vmatpush1.bf16.msra.mxu0 %v2607
        %3031 = vmatprep.subr.bf16.mxu0 %v2606
        %3032 = vmatpush1.bf16.msra.mxu0 %v2605
        %3033 = vmatprep.subr.bf16.mxu0 %v2604
        %3034 = vmatpush1.bf16.msra.mxu0 %v2603
        %3035 = vmatprep.subr.bf16.mxu0 %v2602
        %3036 = vmatpush1.bf16.msra.mxu0 %v2601
        %3037 = vmatprep.subr.bf16.mxu0 %v2632
        %3038 = vmatpush2.bf16.msra.mxu0 %v2631
        %3039 = vmatprep.subr.bf16.mxu0 %v2630
        %3040 = vmatpush2.bf16.msra.mxu0 %v2629
        %3041 = vmatprep.subr.bf16.mxu0 %v2628
        %3042 = vmatpush2.bf16.msra.mxu0 %v2627
        %3043 = vmatprep.subr.bf16.mxu0 %v2626
        %3044 = vmatpush2.bf16.msra.mxu0 %v2625
        %3045 = vmatprep.subr.bf16.mxu0 %v2624
        %3046 = vmatpush2.bf16.msra.mxu0 %v2623
        %3047 = vmatprep.subr.bf16.mxu0 %v2622
        %3048 = vmatpush2.bf16.msra.mxu0 %v2621
        %3049 = vmatprep.subr.bf16.mxu0 %v2620
        %3050 = vmatpush2.bf16.msra.mxu0 %v2619
        %3051 = vmatprep.subr.bf16.mxu0 %v2618
        %3052 = vmatpush2.bf16.msra.mxu0 %v2617
        %3053 = vmatprep.mubr.bf16.mxu0 %v1584
        %3054 = vmatmul.mubr.bf16.gmra.mxu0 %v1580
        %v3055 = vpop.f32.mrf.mxu0
        %v3056 = vadd.f32 %v3003, %v3055
        %v3057 = vpop.f32.mrf.mxu0
        %v3058 = vadd.f32 %v3005, %v3057
        %v3059 = vpop.f32.mrf.mxu0
        %v3060 = vadd.f32 %v3007, %v3059
        %v3061 = vpop.f32.mrf.mxu0
        %v3062 = vadd.f32 %v3009, %v3061
        %3063 = vmatprep.mubr.bf16.mxu0 %v1837
        %3064 = vmatmul.mubr.bf16.gmra.mxu0 %v1833
        %v3065 = vpop.f32.mrf.mxu0
        %v3066 = vadd.f32 %v3013, %v3065
        %v3067 = vpop.f32.mrf.mxu0
        %v3068 = vadd.f32 %v3015, %v3067
        %v3069 = vpop.f32.mrf.mxu0
        %v3070 = vadd.f32 %v3017, %v3069
        %v3071 = vpop.f32.mrf.mxu0
        %v3072 = vadd.f32 %v3019, %v3071
        %3073 = vdwg.mxu0
        %3074 = vmatprep.subr.bf16.mxu0 %v2648
        %3075 = vmatpush1.bf16.msra.mxu0 %v2647
        %3076 = vmatprep.subr.bf16.mxu0 %v2646
        %3077 = vmatpush1.bf16.msra.mxu0 %v2645
        %3078 = vmatprep.subr.bf16.mxu0 %v2644
        %3079 = vmatpush1.bf16.msra.mxu0 %v2643
        %3080 = vmatprep.subr.bf16.mxu0 %v2642
        %3081 = vmatpush1.bf16.msra.mxu0 %v2641
        %3082 = vmatprep.subr.bf16.mxu0 %v2640
        %3083 = vmatpush1.bf16.msra.mxu0 %v2639
        %3084 = vmatprep.subr.bf16.mxu0 %v2638
        %3085 = vmatpush1.bf16.msra.mxu0 %v2637
        %3086 = vmatprep.subr.bf16.mxu0 %v2636
        %3087 = vmatpush1.bf16.msra.mxu0 %v2635
        %3088 = vmatprep.subr.bf16.mxu0 %v2634
        %3089 = vmatpush1.bf16.msra.mxu0 %v2633
        %3090 = vmatprep.subr.bf16.mxu0 %v2664
        %3091 = vmatpush2.bf16.msra.mxu0 %v2663
        %3092 = vmatprep.subr.bf16.mxu0 %v2662
        %3093 = vmatpush2.bf16.msra.mxu0 %v2661
        %3094 = vmatprep.subr.bf16.mxu0 %v2660
        %3095 = vmatpush2.bf16.msra.mxu0 %v2659
        %3096 = vmatprep.subr.bf16.mxu0 %v2658
        %3097 = vmatpush2.bf16.msra.mxu0 %v2657
        %3098 = vmatprep.subr.bf16.mxu0 %v2656
        %3099 = vmatpush2.bf16.msra.mxu0 %v2655
        %3100 = vmatprep.subr.bf16.mxu0 %v2654
        %3101 = vmatpush2.bf16.msra.mxu0 %v2653
        %3102 = vmatprep.subr.bf16.mxu0 %v2652
        %3103 = vmatpush2.bf16.msra.mxu0 %v2651
        %3104 = vmatprep.subr.bf16.mxu0 %v2650
        %3105 = vmatpush2.bf16.msra.mxu0 %v2649
        %3106 = vmatprep.mubr.bf16.mxu0 %v1585
        %3107 = vmatmul.mubr.bf16.gmra.mxu0 %v1581
        %v3108 = vpop.f32.mrf.mxu0
        %v3109 = vadd.f32 %v3056, %v3108
        %v3110 = vpop.f32.mrf.mxu0
        %v3111 = vadd.f32 %v3058, %v3110
        %v3112 = vpop.f32.mrf.mxu0
        %v3113 = vadd.f32 %v3060, %v3112
        %v3114 = vpop.f32.mrf.mxu0
        %v3115 = vadd.f32 %v3062, %v3114
        %3116 = vmatprep.mubr.bf16.mxu0 %v1838
        %3117 = vmatmul.mubr.bf16.gmra.mxu0 %v1834
        %v3118 = vpop.f32.mrf.mxu0
        %v3119 = vadd.f32 %v3066, %v3118
        %v3120 = vpop.f32.mrf.mxu0
        %v3121 = vadd.f32 %v3068, %v3120
        %v3122 = vpop.f32.mrf.mxu0
        %v3123 = vadd.f32 %v3070, %v3122
        %v3124 = vpop.f32.mrf.mxu0
        %v3125 = vadd.f32 %v3072, %v3124
        %3126 = vdwg.mxu0
        %3127 = vmatprep.subr.bf16.mxu0 %v2680
        %3128 = vmatpush1.bf16.msra.mxu0 %v2679
        %3129 = vmatprep.subr.bf16.mxu0 %v2678
        %3130 = vmatpush1.bf16.msra.mxu0 %v2677
        %3131 = vmatprep.subr.bf16.mxu0 %v2676
        %3132 = vmatpush1.bf16.msra.mxu0 %v2675
        %3133 = vmatprep.subr.bf16.mxu0 %v2674
        %3134 = vmatpush1.bf16.msra.mxu0 %v2673
        %3135 = vmatprep.subr.bf16.mxu0 %v2672
        %3136 = vmatpush1.bf16.msra.mxu0 %v2671
        %3137 = vmatprep.subr.bf16.mxu0 %v2670
        %3138 = vmatpush1.bf16.msra.mxu0 %v2669
        %3139 = vmatprep.subr.bf16.mxu0 %v2668
        %3140 = vmatpush1.bf16.msra.mxu0 %v2667
        %3141 = vmatprep.subr.bf16.mxu0 %v2666
        %3142 = vmatpush1.bf16.msra.mxu0 %v2665
        %3143 = vmatprep.subr.bf16.mxu0 %v2696
        %3144 = vmatpush2.bf16.msra.mxu0 %v2695
        %3145 = vmatprep.subr.bf16.mxu0 %v2694
        %3146 = vmatpush2.bf16.msra.mxu0 %v2693
        %3147 = vmatprep.subr.bf16.mxu0 %v2692
        %3148 = vmatpush2.bf16.msra.mxu0 %v2691
        %3149 = vmatprep.subr.bf16.mxu0 %v2690
        %3150 = vmatpush2.bf16.msra.mxu0 %v2689
        %3151 = vmatprep.subr.bf16.mxu0 %v2688
        %3152 = vmatpush2.bf16.msra.mxu0 %v2687
        %3153 = vmatprep.subr.bf16.mxu0 %v2686
        %3154 = vmatpush2.bf16.msra.mxu0 %v2685
        %3155 = vmatprep.subr.bf16.mxu0 %v2684
        %3156 = vmatpush2.bf16.msra.mxu0 %v2683
        %3157 = vmatprep.subr.bf16.mxu0 %v2682
        %3158 = vmatpush2.bf16.msra.mxu0 %v2681
        %3159 = vmatprep.mubr.bf16.mxu0 %v1586
        %3160 = vmatmul.mubr.bf16.gmra.mxu0 %v1582
        %v3161 = vpop.f32.mrf.mxu0
        %v3162 = vadd.f32 %v3109, %v3161
        %v3163 = vpop.f32.mrf.mxu0
        %v3164 = vadd.f32 %v3111, %v3163
        %v3165 = vpop.f32.mrf.mxu0
        %v3166 = vadd.f32 %v3113, %v3165
        %v3167 = vpop.f32.mrf.mxu0
        %v3168 = vadd.f32 %v3115, %v3167
        %3169 = vmatprep.mubr.bf16.mxu0 %v1839
        %3170 = vmatmul.mubr.bf16.gmra.mxu0 %v1835
        %v3171 = vpop.f32.mrf.mxu0
        %v3172 = vadd.f32 %v3119, %v3171
        %v3173 = vpop.f32.mrf.mxu0
        %v3174 = vadd.f32 %v3121, %v3173
        %v3175 = vpop.f32.mrf.mxu0
        %v3176 = vadd.f32 %v3123, %v3175
        %v3177 = vpop.f32.mrf.mxu0
        %v3178 = vadd.f32 %v3125, %v3177
        %3179 = vdwg.mxu0
        %3180 = vmatprep.subr.bf16.mxu0 %v2712
        %3181 = vmatpush1.bf16.msra.mxu0 %v2711
        %3182 = vmatprep.subr.bf16.mxu0 %v2710
        %3183 = vmatpush1.bf16.msra.mxu0 %v2709
        %3184 = vmatprep.subr.bf16.mxu0 %v2708
        %3185 = vmatpush1.bf16.msra.mxu0 %v2707
        %3186 = vmatprep.subr.bf16.mxu0 %v2706
        %3187 = vmatpush1.bf16.msra.mxu0 %v2705
        %3188 = vmatprep.subr.bf16.mxu0 %v2704
        %3189 = vmatpush1.bf16.msra.mxu0 %v2703
        %3190 = vmatprep.subr.bf16.mxu0 %v2702
        %3191 = vmatpush1.bf16.msra.mxu0 %v2701
        %3192 = vmatprep.subr.bf16.mxu0 %v2700
        %3193 = vmatpush1.bf16.msra.mxu0 %v2699
        %3194 = vmatprep.subr.bf16.mxu0 %v2698
        %3195 = vmatpush1.bf16.msra.mxu0 %v2697
        %3196 = vmatprep.subr.bf16.mxu0 %v2728
        %3197 = vmatpush2.bf16.msra.mxu0 %v2727
        %3198 = vmatprep.subr.bf16.mxu0 %v2726
        %3199 = vmatpush2.bf16.msra.mxu0 %v2725
        %3200 = vmatprep.subr.bf16.mxu0 %v2724
        %3201 = vmatpush2.bf16.msra.mxu0 %v2723
        %3202 = vmatprep.subr.bf16.mxu0 %v2722
        %3203 = vmatpush2.bf16.msra.mxu0 %v2721
        %3204 = vmatprep.subr.bf16.mxu0 %v2720
        %3205 = vmatpush2.bf16.msra.mxu0 %v2719
        %3206 = vmatprep.subr.bf16.mxu0 %v2718
        %3207 = vmatpush2.bf16.msra.mxu0 %v2717
        %3208 = vmatprep.subr.bf16.mxu0 %v2716
        %3209 = vmatpush2.bf16.msra.mxu0 %v2715
        %3210 = vmatprep.subr.bf16.mxu0 %v2714
        %3211 = vmatpush2.bf16.msra.mxu0 %v2713
        %3212 = vmatprep.mubr.bf16.mxu0 %v1702
        %3213 = vmatmul.mubr.bf16.gmra.mxu0 %v1699
        %v3214 = vpop.f32.mrf.mxu0
        %v3215 = vadd.f32 %v3162, %v3214
        %v3216 = vpop.f32.mrf.mxu0
        %v3217 = vadd.f32 %v3164, %v3216
        %v3218 = vpop.f32.mrf.mxu0
        %v3219 = vadd.f32 %v3166, %v3218
        %v3220 = vpop.f32.mrf.mxu0
        %v3221 = vadd.f32 %v3168, %v3220
        %3222 = vmatprep.mubr.bf16.mxu0 %v1955
        %3223 = vmatmul.mubr.bf16.gmra.mxu0 %v1952
        %v3224 = vpop.f32.mrf.mxu0
        %v3225 = vadd.f32 %v3172, %v3224
        %v3226 = vpop.f32.mrf.mxu0
        %v3227 = vadd.f32 %v3174, %v3226
        %v3228 = vpop.f32.mrf.mxu0
        %v3229 = vadd.f32 %v3176, %v3228
        %v3230 = vpop.f32.mrf.mxu0
        %v3231 = vadd.f32 %v3178, %v3230
        %3232 = vdwg.mxu0
        %3233 = vmatprep.subr.bf16.mxu0 %v2744
        %3234 = vmatpush1.bf16.msra.mxu0 %v2743
        %3235 = vmatprep.subr.bf16.mxu0 %v2742
        %3236 = vmatpush1.bf16.msra.mxu0 %v2741
        %3237 = vmatprep.subr.bf16.mxu0 %v2740
        %3238 = vmatpush1.bf16.msra.mxu0 %v2739
        %3239 = vmatprep.subr.bf16.mxu0 %v2738
        %3240 = vmatpush1.bf16.msra.mxu0 %v2737
        %3241 = vmatprep.subr.bf16.mxu0 %v2736
        %3242 = vmatpush1.bf16.msra.mxu0 %v2735
        %3243 = vmatprep.subr.bf16.mxu0 %v2734
        %3244 = vmatpush1.bf16.msra.mxu0 %v2733
        %3245 = vmatprep.subr.bf16.mxu0 %v2732
        %3246 = vmatpush1.bf16.msra.mxu0 %v2731
        %3247 = vmatprep.subr.bf16.mxu0 %v2730
        %3248 = vmatpush1.bf16.msra.mxu0 %v2729
        %3249 = vmatprep.subr.bf16.mxu0 %v2760
        %3250 = vmatpush2.bf16.msra.mxu0 %v2759
        %3251 = vmatprep.subr.bf16.mxu0 %v2758
        %3252 = vmatpush2.bf16.msra.mxu0 %v2757
        %3253 = vmatprep.subr.bf16.mxu0 %v2756
        %3254 = vmatpush2.bf16.msra.mxu0 %v2755
        %3255 = vmatprep.subr.bf16.mxu0 %v2754
        %3256 = vmatpush2.bf16.msra.mxu0 %v2753
        %3257 = vmatprep.subr.bf16.mxu0 %v2752
        %3258 = vmatpush2.bf16.msra.mxu0 %v2751
        %3259 = vmatprep.subr.bf16.mxu0 %v2750
        %3260 = vmatpush2.bf16.msra.mxu0 %v2749
        %3261 = vmatprep.subr.bf16.mxu0 %v2748
        %3262 = vmatpush2.bf16.msra.mxu0 %v2747
        %3263 = vmatprep.subr.bf16.mxu0 %v2746
        %3264 = vmatpush2.bf16.msra.mxu0 %v2745
        %3265 = vmatprep.mubr.bf16.mxu0 %v1703
        %3266 = vmatmul.mubr.bf16.gmra.mxu0 %v1700
        %v3267 = vpop.f32.mrf.mxu0
        %v3268 = vadd.f32 %v3215, %v3267
        %v3269 = vpop.f32.mrf.mxu0
        %v3270 = vadd.f32 %v3217, %v3269
        %v3271 = vpop.f32.mrf.mxu0
        %v3272 = vadd.f32 %v3219, %v3271
        %v3273 = vpop.f32.mrf.mxu0
        %v3274 = vadd.f32 %v3221, %v3273
        %3275 = vmatprep.mubr.bf16.mxu0 %v1956
        %3276 = vmatmul.mubr.bf16.gmra.mxu0 %v1953
        %v3277 = vpop.f32.mrf.mxu0
        %v3278 = vadd.f32 %v3225, %v3277
        %v3279 = vpop.f32.mrf.mxu0
        %v3280 = vadd.f32 %v3227, %v3279
        %v3281 = vpop.f32.mrf.mxu0
        %v3282 = vadd.f32 %v3229, %v3281
        %v3283 = vpop.f32.mrf.mxu0
        %v3284 = vadd.f32 %v3231, %v3283
        %3285 = vdwg.mxu0
        %3286 = vmatprep.subr.bf16.mxu0 0
        %3287 = vmatpush1.bf16.msra.mxu0 0
        %3288 = vmatprep.subr.bf16.mxu0 0
        %3289 = vmatpush1.bf16.msra.mxu0 0
        %3290 = vmatprep.subr.bf16.mxu0 0
        %3291 = vmatpush1.bf16.msra.mxu0 0
        %3292 = vmatprep.subr.bf16.mxu0 0
        %3293 = vmatpush1.bf16.msra.mxu0 0
        %3294 = vmatprep.subr.bf16.mxu0 0
        %3295 = vmatpush1.bf16.msra.mxu0 0
        %3296 = vmatprep.subr.bf16.mxu0 0
        %3297 = vmatpush1.bf16.msra.mxu0 0
        %3298 = vmatprep.subr.bf16.mxu0 %v2764
        %3299 = vmatpush1.bf16.msra.mxu0 %v2763
        %3300 = vmatprep.subr.bf16.mxu0 %v2762
        %3301 = vmatpush1.bf16.msra.mxu0 %v2761
        %3302 = vmatprep.subr.bf16.mxu0 0
        %3303 = vmatpush2.bf16.msra.mxu0 0
        %3304 = vmatprep.subr.bf16.mxu0 0
        %3305 = vmatpush2.bf16.msra.mxu0 0
        %3306 = vmatprep.subr.bf16.mxu0 0
        %3307 = vmatpush2.bf16.msra.mxu0 0
        %3308 = vmatprep.subr.bf16.mxu0 0
        %3309 = vmatpush2.bf16.msra.mxu0 0
        %3310 = vmatprep.subr.bf16.mxu0 0
        %3311 = vmatpush2.bf16.msra.mxu0 0
        %3312 = vmatprep.subr.bf16.mxu0 0
        %3313 = vmatpush2.bf16.msra.mxu0 0
        %3314 = vmatprep.subr.bf16.mxu0 0
        %3315 = vmatpush2.bf16.msra.mxu0 0
        %3316 = vmatprep.subr.bf16.mxu0 0
        %3317 = vmatpush2.bf16.msra.mxu0 0
        %3318 = vmatprep.mubr.bf16.mxu0 0
        %3319 = vmatmul.mubr.bf16.gmra.mxu0 %v2963
        %v3320 = vpop.f32.mrf.mxu0
        %v3321 = vadd.f32 %v3268, %v3320
        %v3322 = vpop.f32.mrf.mxu0
        %v3323 = vadd.f32 %v3270, %v3322
        %v3324 = vpop.f32.mrf.mxu0
        %v3325 = vadd.f32 %v3272, %v3324
        %v3326 = vpop.f32.mrf.mxu0
        %v3327 = vadd.f32 %v3274, %v3326
        %3328 = vmatprep.mubr.bf16.mxu0 0
        %3329 = vmatmul.mubr.bf16.gmra.mxu0 %v2966
        %v3330 = vpop.f32.mrf.mxu0
        %v3331 = vadd.f32 %v3278, %v3330
        %v3332 = vpop.f32.mrf.mxu0
        %v3333 = vadd.f32 %v3280, %v3332
        %v3334 = vpop.f32.mrf.mxu0
        %v3335 = vadd.f32 %v3282, %v3334
        %v3336 = vpop.f32.mrf.mxu0
        %v3337 = vadd.f32 %v3284, %v3336
        %3338 = vdwg.mxu0
        %v3339 = vmax.f32 %v3321, 0.0
        %v3340 = vmax.f32 %v3323, 0.0
        %v3341 = vmax.f32 %v3325, 0.0
        %v3342 = vmax.f32 %v3327, 0.0
        %v3343 = vmax.f32 %v3331, 0.0
        %v3344 = vmax.f32 %v3333, 0.0
        %v3345 = vmax.f32 %v3335, 0.0
        %v3346 = vmax.f32 %v3337, 0.0
        %v3347 = vpack.c.bf16 %v3341, %v3339
        %v3348 = vpack.c.bf16 %v3342, %v3340
        %v3349 = vpack.c.bf16 %v3345, %v3343
        %v3350 = vpack.c.bf16 %v3346, %v3344
        %v3355 = vcombine.low %v3347, %v3348
        %v3356 = vcombine.high %v3347, %v3348
        %v3358 = vunpack.c.l.s4 1966171168
        %v3359 = vunpack.c.0.s8 %v3358
        %v3360 = vlaneseq
        %v3361 = vshrl.u32 %v3360, 7
        %v3362 = vsub.s32 %v3359, %v3361
        %v3363 = vrot.slane %v3355, %v3362
        %v3365 = vunpack.c.l.s4 1966171168
        %v3366 = vunpack.c.0.s8 %v3365
        %v3367 = vlaneseq
        %v3368 = vshrl.u32 %v3367, 7
        %v3369 = vsub.s32 %v3366, %v3368
        %v3370 = vrot.slane %v3356, %v3369
        %v3371 = vcombine.high %v3363, %v3363
        %v3372 = vcombine.high %v3370, %v3370
        %v3374 = vunpack.c.l.s4 1966171168
        %v3375 = vunpack.c.0.s8 %v3374
        %v3376 = vlaneseq
        %v3377 = vshrl.u32 %v3376, 7
        %v3378 = vsub.s32 %v3375, %v3377
        %v3379 = vrot.slane %v3363, %v3378
        %v3381 = vunpack.c.l.s4 1966171168
        %v3382 = vunpack.c.0.s8 %v3381
        %v3383 = vlaneseq
        %v3384 = vshrl.u32 %v3383, 7
        %v3385 = vsub.s32 %v3382, %v3384
        %v3386 = vrot.slane %v3370, %v3385
        %v3388 = vunpack.c.l.s4 1966171168
        %v3389 = vunpack.c.0.s8 %v3388
        %v3390 = vlaneseq
        %v3391 = vshrl.u32 %v3390, 7
        %v3392 = vsub.s32 %v3389, %v3391
        %v3393 = vrot.slane %v3371, %v3392
        %v3395 = vunpack.c.l.s4 1966171168
        %v3396 = vunpack.c.0.s8 %v3395
        %v3397 = vlaneseq
        %v3398 = vshrl.u32 %v3397, 7
        %v3399 = vsub.s32 %v3396, %v3398
        %v3400 = vrot.slane %v3372, %v3399
        %v3401 = vcombine.high %v3379, %v3379
        %v3402 = vcombine.high %v3386, %v3386
        %v3403 = vcombine.high %v3393, %v3393
        %v3404 = vcombine.high %v3400, %v3400
        %v3405 = vcombine.low %v3349, %v3350
        %v3406 = vcombine.high %v3349, %v3350
        %v3408 = vunpack.c.l.s4 1966171168
        %v3409 = vunpack.c.0.s8 %v3408
        %v3410 = vlaneseq
        %v3411 = vshrl.u32 %v3410, 7
        %v3412 = vsub.s32 %v3409, %v3411
        %v3413 = vrot.slane %v3405, %v3412
        %v3415 = vunpack.c.l.s4 1966171168
        %v3416 = vunpack.c.0.s8 %v3415
        %v3417 = vlaneseq
        %v3418 = vshrl.u32 %v3417, 7
        %v3419 = vsub.s32 %v3416, %v3418
        %v3420 = vrot.slane %v3406, %v3419
        %v3421 = vcombine.high %v3413, %v3413
        %v3422 = vcombine.high %v3420, %v3420
        %v3424 = vunpack.c.l.s4 1966171168
        %v3425 = vunpack.c.0.s8 %v3424
        %v3426 = vlaneseq
        %v3427 = vshrl.u32 %v3426, 7
        %v3428 = vsub.s32 %v3425, %v3427
        %v3429 = vrot.slane %v3413, %v3428
        %v3431 = vunpack.c.l.s4 1966171168
        %v3432 = vunpack.c.0.s8 %v3431
        %v3433 = vlaneseq
        %v3434 = vshrl.u32 %v3433, 7
        %v3435 = vsub.s32 %v3432, %v3434
        %v3436 = vrot.slane %v3420, %v3435
        %v3438 = vunpack.c.l.s4 1966171168
        %v3439 = vunpack.c.0.s8 %v3438
        %v3440 = vlaneseq
        %v3441 = vshrl.u32 %v3440, 7
        %v3442 = vsub.s32 %v3439, %v3441
        %v3443 = vrot.slane %v3421, %v3442
        %v3445 = vunpack.c.l.s4 1966171168
        %v3446 = vunpack.c.0.s8 %v3445
        %v3447 = vlaneseq
        %v3448 = vshrl.u32 %v3447, 7
        %v3449 = vsub.s32 %v3446, %v3448
        %v3450 = vrot.slane %v3422, %v3449
        %v3451 = vcombine.high %v3429, %v3429
        %v3452 = vcombine.high %v3436, %v3436
        %v3453 = vcombine.high %v3443, %v3443
        %v3454 = vcombine.high %v3450, %v3450
        %3471 = vst [vmem:[%s1135] sm:$0x3] %v3379
        %3472 = vst [vmem:[%s1135 + $0x2] sm:$0x3] %v3393
        %3473 = vst [vmem:[%s1135 + $0x4] sm:$0x3] %v3401
        %3474 = vst [vmem:[%s1135 + $0x6] sm:$0x3] %v3403
        %3475 = vst [vmem:[%s1135 + $0x8] sm:$0x3] %v3386
        %3476 = vst [vmem:[%s1135 + $0xa] sm:$0x3] %v3400
        %3477 = vst [vmem:[%s1135 + $0xc] sm:$0x3] %v3402
        %3478 = vst [vmem:[%s1135 + $0xe] sm:$0x3] %v3404
        %3479 = vst [vmem:[%s1135 + $0x10] sm:$0x3] %v3429
        %3480 = vst [vmem:[%s1135 + $0x12] sm:$0x3] %v3443
        %3481 = vst [vmem:[%s1135 + $0x14] sm:$0x3] %v3451
        %3482 = vst [vmem:[%s1135 + $0x16] sm:$0x3] %v3453
        %3483 = vst [vmem:[%s1135 + $0x18] sm:$0x3] %v3436
        %3484 = vst [vmem:[%s1135 + $0x1a] sm:$0x3] %v3450
        %3485 = vst [vmem:[%s1135 + $0x1c] sm:$0x3] %v3452
        %3486 = vst [vmem:[%s1135 + $0x1e] sm:$0x3] %v3454
        %v3487 = vld [vmem:[#allocation2] sm:$0xff]
        %v3488 = vld [vmem:[#allocation2 + $0x8] sm:$0xff]
        %v3489 = vld [vmem:[#allocation2 + $0x10] sm:$0xff]
        %v3490 = vld [vmem:[#allocation2 + $0x18] sm:$0xff]
        %v3491 = vld [vmem:[%s1159] sm:$0x3]
        %v3493 = vlaneseq
        %v3494 = vshrl.u32 %v3493, 7
        %v3495 = vsub.s32 0, %v3494
        %v3496 = vrot.slane %v3491, %v3495
        %v3497 = vlaneseq
        %v3498 = vshrl.u32 %v3497, 7
        %v3499 = vsub.s32 1, %v3498
        %v3500 = vrot.slane %v3491, %v3499
        %v3503 = vmul.f32 %v3339, %v3496
        %v3504 = vmul.f32 %v3340, %v3500
        %v3505 = vmul.f32 %v3341, %v3496
        %v3506 = vmul.f32 %v3342, %v3500
        %v3507 = vmul.f32 %v3343, %v3496
        %v3508 = vmul.f32 %v3344, %v3500
        %v3509 = vmul.f32 %v3345, %v3496
        %v3510 = vmul.f32 %v3346, %v3500
        %v3511 = vadd.f32 %v3503, %v3504
        %3512 = vadd.xlane.f32.xlu0 %v3511
        %v3513 = vpop.xlane.xlu0 %3512
        %v3514 = vadd.f32 %v3505, %v3506
        %3515 = vadd.xlane.f32.xlu0 %v3514
        %v3516 = vpop.xlane.xlu0 %3515
        %v3517 = vadd.f32 %v3507, %v3508
        %3518 = vadd.xlane.f32.xlu0 %v3517
        %v3519 = vpop.xlane.xlu0 %3518
        %v3520 = vadd.f32 %v3509, %v3510
        %3521 = vadd.xlane.f32.xlu0 %v3520
        %v3522 = vpop.xlane.xlu0 %3521
        %v3523 = vadd.f32 %v3487, %v3513
        %v3524 = vadd.f32 %v3488, %v3516
        %v3525 = vadd.f32 %v3489, %v3519
        %v3526 = vadd.f32 %v3490, %v3522
        %vm3527 = vcmask 7168
        %3528 = vst.msk [vmem:[#allocation2] sm:$0xff] %vm3527, %v3523
        %3529 = vst.msk [vmem:[#allocation2 + $0x8] sm:$0xff] %vm3527, %v3524
        %3530 = vst.msk [vmem:[#allocation2 + $0x10] sm:$0xff] %vm3527, %v3525
        %3531 = vst.msk [vmem:[#allocation2 + $0x18] sm:$0xff] %vm3527, %v3526
        %p3532 = scmp.eq.s32.totalorder %s28, 1
        // Predicated region
        $region83: #{cnn_base_forward.7} parent=73 // pred_check
          %p3533 = pneg %p3532
        $region84: #{cnn_base_forward.7} parent=73 // pred_check_branch
          %3535 = sbr.rel (%p3533) target = $region86
        $region85: #{cnn_base_forward.7} parent=73 // pred_region
          %v3536 = vld [vmem:[#allocation2] sm:$0xff]
          %v3537 = vld [vmem:[#allocation2 + $0x8] sm:$0xff]
          %v3538 = vld [vmem:[#allocation2 + $0x10] sm:$0xff]
          %v3539 = vld [vmem:[#allocation2 + $0x18] sm:$0xff]
          %v3540 = vld [vmem:[#allocation3] sm:$0x1]
          %v3542 = vlaneseq
          %v3543 = vshrl.u32 %v3542, 7
          %v3544 = vsub.s32 0, %v3543
          %v3545 = vrot.slane %v3540, %v3544
          %v3547 = vadd.f32 %v3536, %v3545
          %v3548 = vadd.f32 %v3537, %v3545
          %v3549 = vadd.f32 %v3538, %v3545
          %v3550 = vadd.f32 %v3539, %v3545
          %3551 = vst.msk [vmem:[#allocation7] sm:$0xff] %vm3527, %v3547
          %3552 = vst.msk [vmem:[#allocation7 + $0x8] sm:$0xff] %vm3527, %v3548
          %3553 = vst.msk [vmem:[#allocation7 + $0x10] sm:$0xff] %vm3527, %v3549
          %3554 = vst.msk [vmem:[#allocation7 + $0x18] sm:$0xff] %vm3527, %v3550
        $region86: #{cnn_base_forward.7} parent=73 // pred_fallthru
          _
        %s3555 = sand.u32 %s170, 1
        %s3556 = scalar_lea.sflag [#allocation6], %s3555
        %s3557 = sand.u32 %s170, 1
        %s3558 = smul.addr %s3557, 32
        %s3559 = scalar_lea.vmem [#allocation5], %s3558
        // Predicated region
        $region87: #{cnn_base_forward.7} parent=73 // pred_check
          %p3560 = pneg %p180
        $region88: #{cnn_base_forward.7} parent=73 // pred_check_branch
          %3562 = sbr.rel (%p3560) target = $region90
        $region89: #{cnn_base_forward.7} parent=73 // pred_region
          %s3563 = smul.u32 16, %s27
          %s3564 = smul.u32 2, %s28
          %s3565 = ssub.s32 1, %s3563
          %s3566 = smul.u32 16, %s3565
          %s3567 = smul.u32 %s3566, 2
          %s3569 = ssub.s32 512, %s3567
          %3570 = vsyncadd %s3556, %s3569
          %p3571 = scmp.ne.s32.totalorder 0, %s3567
          %s3572 = smul.addr %s3563, 4
          %s3573 = sadd.s32 %s3564, %s3572
          %s3574 = smul.addr %s3573, 16
          %s3575 = scalar_lea.hbm %s5, %s3574
          %s3576 = smul.u32 2, %s3565
          %s3577 = sshll.u32 %s3559, 4
          %s3578 = int_to_ptr.vmem [resolvable:$true] %s3577
          %s3579 = sshll.u32 %s3576, 4
          %3583 = dma.vmem_to_hbm [thread:$0]  (%p3571), %s3578, %s3579, %s3575, %s3556, 32, 64, 2
        $region90: #{cnn_base_forward.7} parent=73 // pred_fallthru
          _
        // Predicated region
        $region91: #{cnn_base_forward.7} parent=73 // pred_check
          %p3584 = pneg %p206
        $region92: #{cnn_base_forward.7} parent=73 // pred_check_branch
          %3586 = sbr.rel (%p3584) target = $region94
        $region93: #{cnn_base_forward.7} parent=73 // pred_region
          %s3587 = smul.u32 16, %s27
          %s3588 = ssub.s32 1, %s3587
          %s3589 = smul.u32 32, %s3588
          %p3590 = scmp.ne.s32.totalorder 0, %s3589
          %s3591 = smul.addr %s3587, 2
          %s3592 = scalar_lea.vmem %s6, %s3591
          // Predicated region
          $region95: #{cnn_base_forward.7} parent=93 // pred_check
            %p3593 = pneg %p3590
          $region96: #{cnn_base_forward.7} parent=93 // pred_check_branch
            %3595 = sbr.rel (%p3593) target = $region98
          $region97: #{cnn_base_forward.7} parent=93 // pred_region
            // Predicated region
            $region99: #{cnn_base_forward.7} parent=97 // pred_check
              _
            $region100: #{cnn_base_forward.7} parent=97 // pred_check_branch
              %3597 = sbr.rel target = $region102
            $region101: #{cnn_base_forward.7} parent=97 // pred_region
              // Predicated region
              $region114: #{cnn_base_forward.7} parent=101 // pred_check
                _
              $region115: #{cnn_base_forward.7} parent=101 // pred_check_branch
                %3621 = sbr.rel (0) target = $region117
              $region116: #{cnn_base_forward.7} parent=101 // pred_region
                %s3623 = ssub.s32 4, 1
                // While loop
                $region118: #{cnn_base_forward.7} parent=116 // loop_pre_header
                  _
                $region119: #{cnn_base_forward.7} parent=116 // loop_header
                  %s3625 = sphi 0, %s3627
                  %p3626 = scmp.ge.s32.totalorder %s3625, %s3588
                  %s3630 = sphi 0, %s3637
                  %s3631 = sphi [#allocation7], %s3640
                  %s3632 = sphi %s3592, %s3641
                $region120: #{cnn_base_forward.7} parent=116 // loop_header_branch
                  %3629 = sbr.rel (%p3626) target = $region124
                $region121: #{cnn_base_forward.7} parent=116 // loop_body
                  %v3633 = vld [vmem:[%s3631] sm:%s3623]
                  %3634 = vst [vmem:[%s3632] sm:%s3623] %v3633
                  %s3635 = sadd.s32 1, %s3630
                  %p3636 = scmp.ge.s32.totalorder %s3635, %s3588
                  %s3637 = scalar_select %p3636, 0, %s3635
                  %s3638 = smul.u32 %s3637, 2
                  %s3639 = smul.u32 %s3637, 2
                  %s3640 = scalar_lea.vmem [#allocation7], %s3638
                  %s3641 = scalar_lea.vmem %s3592, %s3639
                $region122: #{cnn_base_forward.7} parent=116 // loop_footer
                  %s3627 = sadd.s32 %s3625, 1
                $region123: #{cnn_base_forward.7} parent=116 // loop_footer_branch
                  %3624 = sbr.rel target = $region119
                $region124: #{cnn_base_forward.7} parent=116 // loop_exit
                  _
              $region117: #{cnn_base_forward.7} parent=101 // pred_fallthru
                _
            $region102: #{cnn_base_forward.7} parent=97 // pred_fallthru
              _
            // Predicated region
            $region103: #{cnn_base_forward.7} parent=97 // pred_check
              _
            $region104: #{cnn_base_forward.7} parent=97 // pred_check_branch
              %3599 = sbr.rel (0) target = $region106
            $region105: #{cnn_base_forward.7} parent=97 // pred_region
              %s3601 = ssub.s32 4, 1
              // While loop
              $region107: #{cnn_base_forward.7} parent=105 // loop_pre_header
                _
              $region108: #{cnn_base_forward.7} parent=105 // loop_header
                %s3603 = sphi 0, %s3605
                %p3604 = scmp.ge.s32.totalorder %s3603, %s3588
                %s3608 = sphi 0, %s3615
                %s3609 = sphi [#allocation7], %s3618
                %s3610 = sphi %s3592, %s3619
              $region109: #{cnn_base_forward.7} parent=105 // loop_header_branch
                %3607 = sbr.rel (%p3604) target = $region113
              $region110: #{cnn_base_forward.7} parent=105 // loop_body
                %v3611 = vld [vmem:[%s3609] sm:%s3601]
                %3612 = vst [vmem:[%s3610] sm:%s3601] %v3611
                %s3613 = sadd.s32 1, %s3608
                %p3614 = scmp.ge.s32.totalorder %s3613, %s3588
                %s3615 = scalar_select %p3614, 0, %s3613
                %s3616 = smul.u32 %s3615, 2
                %s3617 = smul.u32 %s3615, 2
                %s3618 = scalar_lea.vmem [#allocation7], %s3616
                %s3619 = scalar_lea.vmem %s3592, %s3617
              $region111: #{cnn_base_forward.7} parent=105 // loop_footer
                %s3605 = sadd.s32 %s3603, 1
              $region112: #{cnn_base_forward.7} parent=105 // loop_footer_branch
                %3602 = sbr.rel target = $region108
              $region113: #{cnn_base_forward.7} parent=105 // loop_exit
                _
            $region106: #{cnn_base_forward.7} parent=97 // pred_fallthru
              _
          $region98: #{cnn_base_forward.7} parent=93 // pred_fallthru
            _
          %3642 = vnop
        $region94: #{cnn_base_forward.7} parent=73 // pred_fallthru
          _
        // Predicated region
        $region125: #{cnn_base_forward.7} parent=73 // pred_check
          %p3643 = pneg %p206
        $region126: #{cnn_base_forward.7} parent=73 // pred_check_branch
          %3645 = sbr.rel (%p3643) target = $region128
        $region127: #{cnn_base_forward.7} parent=73 // pred_region
          _
        $region128: #{cnn_base_forward.7} parent=73 // pred_fallthru
          _
      $region74: #{cnn_base_forward.7} parent=5 // pred_fallthru
        _
      %p3646 = scmp.le.s32.totalorder 2, %s18
      // Predicated region
      $region129: #{cnn_base_forward.7} parent=5 // pred_check
        %p3647 = pneg %p3646
      $region130: #{cnn_base_forward.7} parent=5 // pred_check_branch
        %3649 = sbr.rel (%p3647) target = $region132
      $region131: #{cnn_base_forward.7} parent=5 // pred_region
        %s3650 = ssub.s32 %s18, 2
        // Predicated region
        $region133: #{cnn_base_forward.7} parent=131 // pred_check
          %p3651 = pneg %p186
        $region134: #{cnn_base_forward.7} parent=131 // pred_check_branch
          %3653 = sbr.rel (%p3651) target = $region136
        $region135: #{cnn_base_forward.7} parent=131 // pred_region
          %s3654 = sand.u32 %s171, 1
          %s3655 = scalar_lea.sflag [#allocation6], %s3654
          %s3656 = sand.u32 %s171, 1
          %s3657 = smul.addr %s3656, 32
          %s3658 = scalar_lea.vmem [#allocation5], %s3657
          %3659 = dma.done %s3655, 512
        $region136: #{cnn_base_forward.7} parent=131 // pred_fallthru
          _
      $region132: #{cnn_base_forward.7} parent=5 // pred_fallthru
        _
    $region6: #{cnn_base_forward.7} parent=1 // loop_footer
      %s22 = sadd.s32 1, %s18
    $region7: #{cnn_base_forward.7} parent=1 // loop_footer_branch
      %17 = sbr.rel target = $region3
    $region8: #{cnn_base_forward.7} parent=1 // loop_exit
      _
    %3660 = vsyncpa [#allocation6], 1
    %s3661 = scalar_lea.sflag [#allocation6], 1
    %3662 = vsyncpa %s3661, 1

</llo_original>
